<compile_context>
chip_gen: v6e
topology: v6e:2x2x1
jax: 0.10.0
libtpu: 0.0.40
codegen_flags: <defaults>
</compile_context>

<pallas_src>
import functools

import jax
import jax.numpy as jnp
from jax import lax
from jax.experimental import pallas as pl
from jax.experimental.pallas import tpu as pltpu


def _round_up(x, m):
    return ((x + m - 1) // m) * m


# ----------------------------------------------------------------------------
# One-time weight packing (hoisted out of the forward pass)
# ----------------------------------------------------------------------------
def prepare_params(params, num_classes):
    """Pack f32 params into bf16, padded, block-diagonal conv matrices."""

    def conv_pack(w_hwio, b, kpad, cp):
        kh, kw, cin, cout = w_hwio.shape
        K = kh * kw * cin
        wmat = w_hwio.reshape(K, cout).astype(jnp.float32)
        wmat = jnp.pad(wmat, ((0, kpad - K), (0, cp - cout)))
        wdiag = jnp.zeros((2 * kpad, 2 * cp), jnp.float32)
        wdiag = wdiag.at[:kpad, :cp].set(wmat).at[kpad:, cp:].set(wmat)
        bp = jnp.pad(b.astype(jnp.float32), (0, cp - cout))
        bias2 = jnp.concatenate([bp, bp]).reshape(1, 2 * cp)
        return wdiag.astype(jnp.bfloat16), bias2

    c1_w, c1_b = conv_pack(params["conv1_w"], params["conv1_b"], 128, 128)
    c2_w, c2_b = conv_pack(params["conv2_w"], params["conv2_b"], 1664, 128)

    np3 = _round_up(num_classes, 128)
    fc3_w = jnp.pad(params["fc3_w"], ((0, 0), (0, np3 - num_classes)))
    fc3_b = jnp.pad(params["fc3_b"], (0, np3 - num_classes))

    # TODO(synk): loading real PyTorch fc1 weights requires permuting rows from
    # PyTorch's (C, H, W) flatten order to this (H, W, C) flatten order.
    return {
        "c1_w": c1_w, "c1_b": c1_b,
        "c2_w": c2_w, "c2_b": c2_b,
        "fc1_w": params["fc1_w"].astype(jnp.bfloat16),
        "fc1_b": params["fc1_b"].reshape(1, -1).astype(jnp.float32),
        "fc2_w": params["fc2_w"].astype(jnp.bfloat16),
        "fc2_b": params["fc2_b"].reshape(1, -1).astype(jnp.float32),
        "fc3_w": fc3_w.astype(jnp.bfloat16),
        "fc3_b": fc3_b.reshape(1, -1).astype(jnp.float32),
    }


# ----------------------------------------------------------------------------
# Pallas kernel 1: conv-as-matmul + bias + ReLU + 2x2 max-pool (fused epilogue)
# ----------------------------------------------------------------------------
def _conv_pool_kernel(a_ref, b_ref, bias_ref, o_ref, *, w_half, cp):
    # a_ref : (tm, 2*Kp)  paired patches (even-w patch | odd-w patch)
    # b_ref : (2*Kp, 2*cp) block-diagonal weights
    # out cols [0:cp] = conv output at even w, [cp:2cp] = conv output at odd w.
    acc = jnp.dot(a_ref[...], b_ref[...], preferred_element_type=jnp.float32)
    acc = jnp.maximum(acc + bias_ref[...], 0.0)        # bias + ReLU in f32
    xw = jnp.maximum(acc[:, :cp], acc[:, cp:])         # pool over W (lane slices)
    tm = xw.shape[0]
    hb = tm // w_half                                  # rows are (h, w_pair)
    xw = xw.reshape(hb // 2, 2, w_half, cp)            # leading-dim split: free
    xp = jnp.max(xw, axis=1)                           # pool over H
    o_ref[...] = xp.reshape(tm // 2, cp).astype(o_ref.dtype)


def _im2col_paired(x, k, pad, cin_take, kpad):
    """x: (N,H,W,C) -> (N*H*(W//2), 2*kpad) bf16 patch matrix.

    Adjacent W columns' patches are concatenated along the last axis (free
    row-major reshape); K zero-padding and the input-channel slice are fused
    into the same concatenate (no extra HBM passes)."""
    N, H, W, _ = x.shape
    xp = jnp.pad(x, ((0, 0), (pad, pad), (pad, pad), (0, 0)))
    cols = [xp[:, dy:dy + H, dx:dx + W, :cin_take]
            for dy in range(k) for dx in range(k)]
    kraw = k * k * cin_take
    if kpad > kraw:
        cols.append(jnp.zeros((N, H, W, kpad - kraw), x.dtype))
    patches = jnp.concatenate(cols, axis=-1)           # (N, H, W, kpad)
    return patches.reshape(N * H * (W // 2), 2 * kpad)


def conv5x5_pool_relu(x, wdiag, bias2, *, cin_take, kpad, cp):
    """5x5 SAME conv + bias + ReLU + 2x2 maxpool, one pallas_call.

    x: (N, H, W, Cin-ish) bf16 -> (N, H//2, W//2, cp) bf16."""
    N, H, W, _ = x.shape
    w_half = W // 2
    a = _im2col_paired(x, 5, 2, cin_take, kpad)        # (N*H*w_half, 2*kpad)
    M = a.shape[0]
    rows_img = H * w_half

    # Tile picker: whole images per tile, A tile <= ~2 MiB, keep >=2 grid
    # steps when N >= 2 so v7x's two TensorCores both get work.
    ipt = 1
    while True:
        cand = ipt * 2
        if N % cand != 0 or N // cand < 2:
            break
        if rows_img * cand * (2 * kpad) * 2 > 2 * 1024 * 1024:
            break
        ipt = cand
    tm = rows_img * ipt

    kernel = functools.partial(_conv_pool_kernel, w_half=w_half, cp=cp)
    out = pl.pallas_call(
        kernel,
        out_shape=jax.ShapeDtypeStruct((M // 2, cp), jnp.bfloat16),
        grid=(M // tm,),
        in_specs=[
            pl.BlockSpec((tm, 2 * kpad), lambda i: (i, 0)),
            pl.BlockSpec((2 * kpad, 2 * cp), lambda i: (0, 0)),
            pl.BlockSpec((1, 2 * cp), lambda i: (0, 0)),
        ],
        out_specs=pl.BlockSpec((tm // 2, cp), lambda i: (i, 0)),
        compiler_params=pltpu.CompilerParams(
            dimension_semantics=("parallel",)),
    )(a, wdiag, bias2)
    return out.reshape(N, H // 2, w_half, cp)


# ----------------------------------------------------------------------------
# Pallas kernel 2: fc1 -> relu -> fc2 -> relu -> fc3, fc1's K split on the grid
# ----------------------------------------------------------------------------
def _fc_fused_kernel(x_ref, w1_ref, b1_ref, w2_ref, b2_ref, w3_ref, b3_ref,
                     o_ref, h_ref):
    k = pl.program_id(0)

    @pl.when(k == 0)
    def _():
        h_ref[...] = jnp.zeros_like(h_ref)

    h_ref[...] += jnp.dot(x_ref[...], w1_ref[...],
                          preferred_element_type=jnp.float32)

    @pl.when(k == pl.num_programs(0) - 1)
    def _():
        h = jnp.maximum(h_ref[...] + b1_ref[...], 0.0)
        # TODO(synk): F.dropout(training=self.training) is identity in eval mode.
        h = jnp.dot(h.astype(w2_ref.dtype), w2_ref[...],
                    preferred_element_type=jnp.float32)
        h = jnp.maximum(h + b2_ref[...], 0.0)
        # TODO(synk): second dropout likewise identity in eval mode.
        h = jnp.dot(h.astype(w3_ref.dtype), w3_ref[...],
                    preferred_element_type=jnp.float32)
        o_ref[...] = (h + b3_ref[...]).astype(o_ref.dtype)


def fc_fused(x, p, num_classes):
    """x: (N, 8192) bf16 -> logits (N, num_classes) f32."""
    M, K = x.shape
    Mp = _round_up(M, 8)
    if Mp != M:
        x = jnp.pad(x, ((0, Mp - M), (0, 0)))
    kc = 1024 if K % 1024 == 0 else K
    n1 = p["fc1_w"].shape[1]
    n2 = p["fc2_w"].shape[1]
    np3 = p["fc3_w"].shape[1]

    out = pl.pallas_call(
        _fc_fused_kernel,
        out_shape=jax.ShapeDtypeStruct((Mp, np3), jnp.float32),
        grid=(K // kc,),
        in_specs=[
            pl.BlockSpec((Mp, kc), lambda k: (0, k)),
            pl.BlockSpec((kc, n1), lambda k: (k, 0)),
            pl.BlockSpec((1, n1), lambda k: (0, 0)),
            pl.BlockSpec((n1, n2), lambda k: (0, 0)),
            pl.BlockSpec((1, n2), lambda k: (0, 0)),
            pl.BlockSpec((n2, np3), lambda k: (0, 0)),
            pl.BlockSpec((1, np3), lambda k: (0, 0)),
        ],
        out_specs=pl.BlockSpec((Mp, np3), lambda k: (0, 0)),
        scratch_shapes=[pltpu.VMEM((Mp, n1), jnp.float32)],
        compiler_params=pltpu.CompilerParams(
            dimension_semantics=("arbitrary",)),
    )(x, p["fc1_w"], p["fc1_b"], p["fc2_w"], p["fc2_b"],
      p["fc3_w"], p["fc3_b"])
    return out[:M, :num_classes]


# ----------------------------------------------------------------------------
# Full forward pass (eval-mode inference)
# ----------------------------------------------------------------------------
def cnn_femnist_forward(x_nchw, packed, num_classes):
    x = jnp.transpose(x_nchw, (0, 2, 3, 1)).astype(jnp.bfloat16)   # -> NHWC
    # conv1 (+relu+pool) -> (N,16,16,128); channels 64..127 are zero padding
    x = conv5x5_pool_relu(x, packed["c1_w"], packed["c1_b"],
                          cin_take=3, kpad=128, cp=128)
    # conv2 takes only the 64 real channels (slice fused into im2col concat)
    x = conv5x5_pool_relu(x, packed["c2_w"], packed["c2_b"],
                          cin_take=64, kpad=1664, cp=128)          # (N,8,8,128)
    N = x.shape[0]
    x = x.reshape(N, 8 * 8 * 128)                                   # (H,W,C) flatten
    return fc_fused(x, packed, num_classes)


# ----------------------------------------------------------------------------
# Deterministic synthetic parameters (shapes per CNNFEmnist.__init__)
# ----------------------------------------------------------------------------
def init_params(key, num_classes):
    ks = jax.random.split(key, 10)

    def w(k, shape, fan_in):
        return jax.random.normal(k, shape, jnp.float32) / jnp.sqrt(fan_in)

    return {
        "conv1_w": w(ks[0], (5, 5, 3, 64), 5 * 5 * 3),
        "conv1_b": w(ks[1], (64,), 64.0),
        "conv2_w": w(ks[2], (5, 5, 64, 128), 5 * 5 * 64),
        "conv2_b": w(ks[3], (128,), 128.0),
        "fc1_w": w(ks[4], (8 * 8 * 128, 384), 8 * 8 * 128),
        "fc1_b": w(ks[5], (384,), 384.0),
        "fc2_w": w(ks[6], (384, 192), 384),
        "fc2_b": w(ks[7], (192,), 192.0),
        "fc3_w": w(ks[8], (192, num_classes), 192),
        "fc3_b": w(ks[9], (num_classes,), float(num_classes)),
    }


# ----------------------------------------------------------------------------
# Pure-JAX f32 reference (silent correctness check)
# ----------------------------------------------------------------------------
def reference_forward(x_nchw, params):
    x = jnp.transpose(x_nchw, (0, 2, 3, 1))
    dn = ("NHWC", "HWIO", "NHWC")

    def conv(v, w, b):
        return lax.conv_general_dilated(v, w, (1, 1), "SAME",
                                        dimension_numbers=dn) + b

    def pool_relu(v):
        p = lax.reduce_window(v, -jnp.inf, lax.max,
                              (1, 2, 2, 1), (1, 2, 2, 1), "VALID")
        return jnp.maximum(p, 0.0)

    x = pool_relu(conv(x, params["conv1_w"], params["conv1_b"]))
    x = pool_relu(conv(x, params["conv2_w"], params["conv2_b"]))
    x = x.reshape(x.shape[0], -1)
    x = jnp.maximum(x @ params["fc1_w"] + params["fc1_b"], 0.0)
    x = jnp.maximum(x @ params["fc2_w"] + params["fc2_b"], 0.0)
    return x @ params["fc3_w"] + params["fc3_b"]


if __name__ == "__main__":
    num_classes = 10
    key = jax.random.PRNGKey(0)
    k_x, k_p = jax.random.split(key)
    # Spatial size fixed by the architecture: 32x32x3 -> two /2 pools -> 8x8x128.
    x = jax.random.normal(k_x, (2, 3, 32, 32), jnp.float32)
    params = init_params(k_p, num_classes)
    packed = prepare_params(params, num_classes)   # one-time weight packing

    fwd = jax.jit(functools.partial(cnn_femnist_forward, num_classes=num_classes))
    out = jax.block_until_ready(fwd(x, packed))
    assert out.shape == (2, num_classes)
    assert out.dtype == jnp.float32

    ref = jax.block_until_ready(reference_forward(x, params))
    # bf16 MXU operands (f32 accumulate) -> bf16-appropriate tolerance vs f32 ref.
    assert jnp.allclose(out, ref, rtol=5e-2, atol=5e-2), "mismatch vs reference"

    print("KERNEL_OK")
</pallas_src>

<mosaic_0001>
module attributes {stable_mosaic.version = 11 : i64} {
  func.func @_conv_pool_kernel(%arg0: i32, %arg1: memref<512x256xbf16, #tpu.memory_space<vmem>>, %arg2: memref<256x256xbf16, #tpu.memory_space<vmem>>, %arg3: memref<1x256xf32, #tpu.memory_space<vmem>>, %arg4: memref<256x128xbf16, #tpu.memory_space<vmem>>) attributes {dimension_semantics = [#tpu.dimension_semantics<parallel>], iteration_bounds = array<i64: 2>, scalar_prefetch = 0 : i64, scratch_operands = 0 : i64, tpu.core_type = #tpu.core_type<tc>, window_params = [{transform_indices = @transform_0, window_bounds = array<i64: 512, 256>}, {pipeline_mode = #tpu.pipeline_mode<synchronous>, transform_indices = @transform_1, window_bounds = array<i64: 256, 256>}, {pipeline_mode = #tpu.pipeline_mode<synchronous>, transform_indices = @transform_2, window_bounds = array<i64: 1, 256>}, {transform_indices = @transform_3, window_bounds = array<i64: 256, 128>}]} {
    %c0 = arith.constant 0 : index
    %c0_0 = arith.constant 0 : index
    %0 = vector.load %arg1[%c0, %c0_0] : memref<512x256xbf16, #tpu.memory_space<vmem>>, vector<512x256xbf16>
    %c0_1 = arith.constant 0 : index
    %c0_2 = arith.constant 0 : index
    %1 = vector.load %arg2[%c0_1, %c0_2] : memref<256x256xbf16, #tpu.memory_space<vmem>>, vector<256x256xbf16>
    %cst = arith.constant dense<0.000000e+00> : vector<512x256xf32>
    %2 = tpu.matmul %0, %1, %cst {dimension_numbers = #tpu.dot_dimension_numbers<[1], [0], [0], [1], [0, 0, 1, 1], [], []>} : vector<512x256xbf16>, vector<256x256xbf16>, vector<512x256xf32> -> vector<512x256xf32>
    %c0_3 = arith.constant 0 : index
    %c0_4 = arith.constant 0 : index
    %3 = vector.load %arg3[%c0_3, %c0_4] : memref<1x256xf32, #tpu.memory_space<vmem>>, vector<1x256xf32>
    %4 = vector.broadcast %3 : vector<1x256xf32> to vector<512x256xf32>
    %5 = arith.addf %2, %4 : vector<512x256xf32>
    %cst_5 = arith.constant 0.000000e+00 : f32
    %6 = vector.broadcast %cst_5 : f32 to vector<512x256xf32>
    %7 = arith.maximumf %5, %6 : vector<512x256xf32>
    %8 = vector.extract_strided_slice %7 {offsets = [0, 0], sizes = [512, 128], strides = [1, 1]} : vector<512x256xf32> to vector<512x128xf32>
    %9 = vector.extract_strided_slice %7 {offsets = [0, 128], sizes = [512, 128], strides = [1, 1]} : vector<512x256xf32> to vector<512x128xf32>
    %10 = arith.maximumf %8, %9 : vector<512x128xf32>
    %11 = vector.shape_cast %10 : vector<512x128xf32> to vector<16x2x16x128xf32>
    %cst_6 = arith.constant dense<0xFF800000> : vector<16x16x128xf32>
    %12 = vector.multi_reduction <maximumf>, %11, %cst_6 [1] : vector<16x2x16x128xf32> to vector<16x16x128xf32>
    %13 = vector.shape_cast %12 : vector<16x16x128xf32> to vector<256x128xf32>
    %14 = arith.truncf %13 : vector<256x128xf32> to vector<256x128xbf16>
    %c0_7 = arith.constant 0 : index
    %c0_8 = arith.constant 0 : index
    %15 = vector.load %arg4[%c0_7, %c0_8] : memref<256x128xbf16, #tpu.memory_space<vmem>>, vector<256x128xbf16>
    tpu.vector_store %arg4[%c0_7, %c0_8], %14 {strides = array<i32>} : memref<256x128xbf16, #tpu.memory_space<vmem>>, vector<256x128xbf16>,
    return
  }
  func.func @transform_0(%arg0: i32) -> (i32, i32) {
    %c0_i32 = arith.constant 0 : i32
    %c0_i32_0 = arith.constant 0 : i32
    return %arg0, %c0_i32 : i32, i32
  }
  func.func @transform_1(%arg0: i32) -> (i32, i32) {
    %c0_i32 = arith.constant 0 : i32
    %c0_i32_0 = arith.constant 0 : i32
    %c0_i32_1 = arith.constant 0 : i32
    return %c0_i32, %c0_i32_0 : i32, i32
  }
  func.func @transform_2(%arg0: i32) -> (i32, i32) {
    %c0_i32 = arith.constant 0 : i32
    %c0_i32_0 = arith.constant 0 : i32
    %c0_i32_1 = arith.constant 0 : i32
    return %c0_i32, %c0_i32_0 : i32, i32
  }
  func.func @transform_3(%arg0: i32) -> (i32, i32) {
    %c0_i32 = arith.constant 0 : i32
    %c0_i32_0 = arith.constant 0 : i32
    return %arg0, %c0_i32 : i32, i32
  }
}

module attributes {stable_mosaic.version = 11 : i64} {
  func.func @_conv_pool_kernel(%arg0: i32, %arg1: memref<128x3328xbf16, #tpu.memory_space<vmem>>, %arg2: memref<3328x256xbf16, #tpu.memory_space<vmem>>, %arg3: memref<1x256xf32, #tpu.memory_space<vmem>>, %arg4: memref<64x128xbf16, #tpu.memory_space<vmem>>) attributes {dimension_semantics = [#tpu.dimension_semantics<parallel>], iteration_bounds = array<i64: 2>, scalar_prefetch = 0 : i64, scratch_operands = 0 : i64, tpu.core_type = #tpu.core_type<tc>, window_params = [{transform_indices = @transform_0, window_bounds = array<i64: 128, 3328>}, {pipeline_mode = #tpu.pipeline_mode<synchronous>, transform_indices = @transform_1, window_bounds = array<i64: 3328, 256>}, {pipeline_mode = #tpu.pipeline_mode<synchronous>, transform_indices = @transform_2, window_bounds = array<i64: 1, 256>}, {transform_indices = @transform_3, window_bounds = array<i64: 64, 128>}]} {
    %c0 = arith.constant 0 : index
    %c0_0 = arith.constant 0 : index
    %0 = vector.load %arg1[%c0, %c0_0] : memref<128x3328xbf16, #tpu.memory_space<vmem>>, vector<128x3328xbf16>
    %c0_1 = arith.constant 0 : index
    %c0_2 = arith.constant 0 : index
    %1 = vector.load %arg2[%c0_1, %c0_2] : memref<3328x256xbf16, #tpu.memory_space<vmem>>, vector<3328x256xbf16>
    %cst = arith.constant dense<0.000000e+00> : vector<128x256xf32>
    %2 = tpu.matmul %0, %1, %cst {dimension_numbers = #tpu.dot_dimension_numbers<[1], [0], [0], [1], [0, 0, 1, 1], [], []>} : vector<128x3328xbf16>, vector<3328x256xbf16>, vector<128x256xf32> -> vector<128x256xf32>
    %c0_3 = arith.constant 0 : index
    %c0_4 = arith.constant 0 : index
    %3 = vector.load %arg3[%c0_3, %c0_4] : memref<1x256xf32, #tpu.memory_space<vmem>>, vector<1x256xf32>
    %4 = vector.broadcast %3 : vector<1x256xf32> to vector<128x256xf32>
    %5 = arith.addf %2, %4 : vector<128x256xf32>
    %cst_5 = arith.constant 0.000000e+00 : f32
    %6 = vector.broadcast %cst_5 : f32 to vector<128x256xf32>
    %7 = arith.maximumf %5, %6 : vector<128x256xf32>
    %8 = vector.extract_strided_slice %7 {offsets = [0, 0], sizes = [128, 128], strides = [1, 1]} : vector<128x256xf32> to vector<128x128xf32>
    %9 = vector.extract_strided_slice %7 {offsets = [0, 128], sizes = [128, 128], strides = [1, 1]} : vector<128x256xf32> to vector<128x128xf32>
    %10 = arith.maximumf %8, %9 : vector<128x128xf32>
    %11 = vector.shape_cast %10 : vector<128x128xf32> to vector<8x2x8x128xf32>
    %cst_6 = arith.constant dense<0xFF800000> : vector<8x8x128xf32>
    %12 = vector.multi_reduction <maximumf>, %11, %cst_6 [1] : vector<8x2x8x128xf32> to vector<8x8x128xf32>
    %13 = vector.shape_cast %12 : vector<8x8x128xf32> to vector<64x128xf32>
    %14 = arith.truncf %13 : vector<64x128xf32> to vector<64x128xbf16>
    %c0_7 = arith.constant 0 : index
    %c0_8 = arith.constant 0 : index
    %15 = vector.load %arg4[%c0_7, %c0_8] : memref<64x128xbf16, #tpu.memory_space<vmem>>, vector<64x128xbf16>
    tpu.vector_store %arg4[%c0_7, %c0_8], %14 {strides = array<i32>} : memref<64x128xbf16, #tpu.memory_space<vmem>>, vector<64x128xbf16>,
    return
  }
  func.func @transform_0(%arg0: i32) -> (i32, i32) {
    %c0_i32 = arith.constant 0 : i32
    %c0_i32_0 = arith.constant 0 : i32
    return %arg0, %c0_i32 : i32, i32
  }
  func.func @transform_1(%arg0: i32) -> (i32, i32) {
    %c0_i32 = arith.constant 0 : i32
    %c0_i32_0 = arith.constant 0 : i32
    %c0_i32_1 = arith.constant 0 : i32
    return %c0_i32, %c0_i32_0 : i32, i32
  }
  func.func @transform_2(%arg0: i32) -> (i32, i32) {
    %c0_i32 = arith.constant 0 : i32
    %c0_i32_0 = arith.constant 0 : i32
    %c0_i32_1 = arith.constant 0 : i32
    return %c0_i32, %c0_i32_0 : i32, i32
  }
  func.func @transform_3(%arg0: i32) -> (i32, i32) {
    %c0_i32 = arith.constant 0 : i32
    %c0_i32_0 = arith.constant 0 : i32
    return %arg0, %c0_i32 : i32, i32
  }
}

module attributes {stable_mosaic.version = 11 : i64} {
  func.func @_fc_fused_kernel(%arg0: i32, %arg1: memref<8x1024xbf16, #tpu.memory_space<vmem>>, %arg2: memref<1024x384xbf16, #tpu.memory_space<vmem>>, %arg3: memref<1x384xf32, #tpu.memory_space<vmem>>, %arg4: memref<384x192xbf16, #tpu.memory_space<vmem>>, %arg5: memref<1x192xf32, #tpu.memory_space<vmem>>, %arg6: memref<192x128xbf16, #tpu.memory_space<vmem>>, %arg7: memref<1x128xf32, #tpu.memory_space<vmem>>, %arg8: memref<8x128xf32, #tpu.memory_space<vmem>>, %arg9: memref<8x384xf32, #tpu.memory_space<vmem>>) attributes {dimension_semantics = [#tpu.dimension_semantics<arbitrary>], iteration_bounds = array<i64: 8>, scalar_prefetch = 0 : i64, scratch_operands = 1 : i64, tpu.core_type = #tpu.core_type<tc>, window_params = [{transform_indices = @transform_0, window_bounds = array<i64: 8, 1024>}, {transform_indices = @transform_1, window_bounds = array<i64: 1024, 384>}, {pipeline_mode = #tpu.pipeline_mode<synchronous>, transform_indices = @transform_2, window_bounds = array<i64: 1, 384>}, {pipeline_mode = #tpu.pipeline_mode<synchronous>, transform_indices = @transform_3, window_bounds = array<i64: 384, 192>}, {pipeline_mode = #tpu.pipeline_mode<synchronous>, transform_indices = @transform_4, window_bounds = array<i64: 1, 192>}, {pipeline_mode = #tpu.pipeline_mode<synchronous>, transform_indices = @transform_5, window_bounds = array<i64: 192, 128>}, {pipeline_mode = #tpu.pipeline_mode<synchronous>, transform_indices = @transform_6, window_bounds = array<i64: 1, 128>}, {pipeline_mode = #tpu.pipeline_mode<synchronous>, transform_indices = @transform_7, window_bounds = array<i64: 8, 128>}]} {
    %c0_i32 = arith.constant 0 : i32
    %0 = arith.cmpi eq, %arg0, %c0_i32 : i32
    %1 = arith.extui %0 : i1 to i32
    %c0_i32_0 = arith.constant 0 : i32
    %2 = arith.cmpi ne, %1, %c0_i32_0 : i32
    scf.if %2 {
      %cst_9 = arith.constant 0.000000e+00 : f32
      %12 = vector.broadcast %cst_9 : f32 to vector<8x384xf32>
      %c0_10 = arith.constant 0 : index
      %c0_11 = arith.constant 0 : index
      %13 = vector.load %arg9[%c0_10, %c0_11] : memref<8x384xf32, #tpu.memory_space<vmem>>, vector<8x384xf32>
      tpu.vector_store %arg9[%c0_10, %c0_11], %12 {strides = array<i32>} : memref<8x384xf32, #tpu.memory_space<vmem>>, vector<8x384xf32>,
    } else {
    }
    %c0 = arith.constant 0 : index
    %c0_1 = arith.constant 0 : index
    %3 = vector.load %arg9[%c0, %c0_1] : memref<8x384xf32, #tpu.memory_space<vmem>>, vector<8x384xf32>
    %c0_2 = arith.constant 0 : index
    %c0_3 = arith.constant 0 : index
    %4 = vector.load %arg1[%c0_2, %c0_3] : memref<8x1024xbf16, #tpu.memory_space<vmem>>, vector<8x1024xbf16>
    %c0_4 = arith.constant 0 : index
    %c0_5 = arith.constant 0 : index
    %5 = vector.load %arg2[%c0_4, %c0_5] : memref<1024x384xbf16, #tpu.memory_space<vmem>>, vector<1024x384xbf16>
    %cst = arith.constant dense<0.000000e+00> : vector<8x384xf32>
    %6 = tpu.matmul %4, %5, %cst {dimension_numbers = #tpu.dot_dimension_numbers<[1], [0], [0], [1], [0, 0, 1, 1], [], []>} : vector<8x1024xbf16>, vector<1024x384xbf16>, vector<8x384xf32> -> vector<8x384xf32>
    %7 = arith.addf %3, %6 : vector<8x384xf32>
    %c0_6 = arith.constant 0 : index
    %c0_7 = arith.constant 0 : index
    %8 = vector.load %arg9[%c0_6, %c0_7] : memref<8x384xf32, #tpu.memory_space<vmem>>, vector<8x384xf32>
    tpu.vector_store %arg9[%c0_6, %c0_7], %7 {strides = array<i32>} : memref<8x384xf32, #tpu.memory_space<vmem>>, vector<8x384xf32>,
    %c7_i32 = arith.constant 7 : i32
    %9 = arith.cmpi eq, %arg0, %c7_i32 : i32
    %10 = arith.extui %9 : i1 to i32
    %c0_i32_8 = arith.constant 0 : i32
    %11 = arith.cmpi ne, %10, %c0_i32_8 : i32
    scf.if %11 {
      %c0_9 = arith.constant 0 : index
      %c0_10 = arith.constant 0 : index
      %12 = vector.load %arg9[%c0_9, %c0_10] : memref<8x384xf32, #tpu.memory_space<vmem>>, vector<8x384xf32>
      %c0_11 = arith.constant 0 : index
      %c0_12 = arith.constant 0 : index
      %13 = vector.load %arg3[%c0_11, %c0_12] : memref<1x384xf32, #tpu.memory_space<vmem>>, vector<1x384xf32>
      %14 = vector.broadcast %13 : vector<1x384xf32> to vector<8x384xf32>
      %15 = arith.addf %12, %14 : vector<8x384xf32>
      %cst_13 = arith.constant 0.000000e+00 : f32
      %16 = vector.broadcast %cst_13 : f32 to vector<8x384xf32>
      %17 = arith.maximumf %15, %16 : vector<8x384xf32>
      %18 = arith.truncf %17 : vector<8x384xf32> to vector<8x384xbf16>
      %c0_14 = arith.constant 0 : index
      %c0_15 = arith.constant 0 : index
      %19 = vector.load %arg4[%c0_14, %c0_15] : memref<384x192xbf16, #tpu.memory_space<vmem>>, vector<384x192xbf16>
      %cst_16 = arith.constant dense<0.000000e+00> : vector<8x192xf32>
      %20 = tpu.matmul %18, %19, %cst_16 {dimension_numbers = #tpu.dot_dimension_numbers<[1], [0], [0], [1], [0, 0, 1, 1], [], []>} : vector<8x384xbf16>, vector<384x192xbf16>, vector<8x192xf32> -> vector<8x192xf32>
      %c0_17 = arith.constant 0 : index
      %c0_18 = arith.constant 0 : index
      %21 = vector.load %arg5[%c0_17, %c0_18] : memref<1x192xf32, #tpu.memory_space<vmem>>, vector<1x192xf32>
      %22 = vector.broadcast %21 : vector<1x192xf32> to vector<8x192xf32>
      %23 = arith.addf %20, %22 : vector<8x192xf32>
      %cst_19 = arith.constant 0.000000e+00 : f32
      %24 = vector.broadcast %cst_19 : f32 to vector<8x192xf32>
      %25 = arith.maximumf %23, %24 : vector<8x192xf32>
      %26 = arith.truncf %25 : vector<8x192xf32> to vector<8x192xbf16>
      %c0_20 = arith.constant 0 : index
      %c0_21 = arith.constant 0 : index
      %27 = vector.load %arg6[%c0_20, %c0_21] : memref<192x128xbf16, #tpu.memory_space<vmem>>, vector<192x128xbf16>
      %cst_22 = arith.constant dense<0.000000e+00> : vector<8x128xf32>
      %28 = tpu.matmul %26, %27, %cst_22 {dimension_numbers = #tpu.dot_dimension_numbers<[1], [0], [0], [1], [0, 0, 1, 1], [], []>} : vector<8x192xbf16>, vector<192x128xbf16>, vector<8x128xf32> -> vector<8x128xf32>
      %c0_23 = arith.constant 0 : index
      %c0_24 = arith.constant 0 : index
      %29 = vector.load %arg7[%c0_23, %c0_24] : memref<1x128xf32, #tpu.memory_space<vmem>>, vector<1x128xf32>
      %30 = vector.broadcast %29 : vector<1x128xf32> to vector<8x128xf32>
      %31 = arith.addf %28, %30 : vector<8x128xf32>
      %c0_25 = arith.constant 0 : index
      %c0_26 = arith.constant 0 : index
      %32 = vector.load %arg8[%c0_25, %c0_26] : memref<8x128xf32, #tpu.memory_space<vmem>>, vector<8x128xf32>
      tpu.vector_store %arg8[%c0_25, %c0_26], %31 {strides = array<i32>} : memref<8x128xf32, #tpu.memory_space<vmem>>, vector<8x128xf32>,
    } else {
    }
    return
  }
  func.func @transform_0(%arg0: i32) -> (i32, i32) {
    %c0_i32 = arith.constant 0 : i32
    %c0_i32_0 = arith.constant 0 : i32
    return %c0_i32, %arg0 : i32, i32
  }
  func.func @transform_1(%arg0: i32) -> (i32, i32) {
    %c0_i32 = arith.constant 0 : i32
    %c0_i32_0 = arith.constant 0 : i32
    return %arg0, %c0_i32 : i32, i32
  }
  func.func @transform_2(%arg0: i32) -> (i32, i32) {
    %c0_i32 = arith.constant 0 : i32
    %c0_i32_0 = arith.constant 0 : i32
    %c0_i32_1 = arith.constant 0 : i32
    return %c0_i32, %c0_i32_0 : i32, i32
  }
  func.func @transform_3(%arg0: i32) -> (i32, i32) {
    %c0_i32 = arith.constant 0 : i32
    %c0_i32_0 = arith.constant 0 : i32
    %c0_i32_1 = arith.constant 0 : i32
    return %c0_i32, %c0_i32_0 : i32, i32
  }
  func.func @transform_4(%arg0: i32) -> (i32, i32) {
    %c0_i32 = arith.constant 0 : i32
    %c0_i32_0 = arith.constant 0 : i32
    %c0_i32_1 = arith.constant 0 : i32
    return %c0_i32, %c0_i32_0 : i32, i32
  }
  func.func @transform_5(%arg0: i32) -> (i32, i32) {
    %c0_i32 = arith.constant 0 : i32
    %c0_i32_0 = arith.constant 0 : i32
    %c0_i32_1 = arith.constant 0 : i32
    return %c0_i32, %c0_i32_0 : i32, i32
  }
  func.func @transform_6(%arg0: i32) -> (i32, i32) {
    %c0_i32 = arith.constant 0 : i32
    %c0_i32_0 = arith.constant 0 : i32
    %c0_i32_1 = arith.constant 0 : i32
    return %c0_i32, %c0_i32_0 : i32, i32
  }
  func.func @transform_7(%arg0: i32) -> (i32, i32) {
    %c0_i32 = arith.constant 0 : i32
    %c0_i32_0 = arith.constant 0 : i32
    %c0_i32_1 = arith.constant 0 : i32
    return %c0_i32, %c0_i32_0 : i32, i32
  }
}

</mosaic_0001>

<llo_original>
// kernel: cnn_femnist_forward.3
$region0: #{cnn_femnist_forward.3}
  #allocation0 [shape = 'u32[]', space=smem, size = 0x4, offset = 0x4, fixed_abs, tag = 'smem constant byte address 0x4 - core index']
  #allocation1 [shape = 'u32[144,128]{1,0:T(1,128)}', space=vmem, size = 0x12000, scoped, tag = 'internal scratch']
  %s0 = inlined_call_operand.vmem [shape: bf16[1024,256], index: 0, kind: input, shape index: {}]
  %s1 = inlined_call_operand.vmem [shape: bf16[256,256], index: 1, kind: input, shape index: {}]
  %s2 = inlined_call_operand.vmem [shape: f32[1,256], index: 2, kind: input, shape index: {}]
  %s3 = inlined_call_operand.vmem [shape: bf16[512,128], index: 3, kind: output, shape index: {}]
  %s4 = sld [smem:[#allocation0]]
  $region45: #{cnn_femnist_forward.3} parent=0
    _
  %s6 = ssub.s32 1, %s4
  %s7 = scalar_select 0, %s6, %s4
  loop: start=0, step=1, limit=4
  $region2: #{cnn_femnist_forward.3} parent=0 // loop_pre_header
    _
  $region3: #{cnn_femnist_forward.3} parent=0 // loop_header
    %s9 = sphi 0, %s13
    %p10 = scmp.ge.s32.totalorder %s9, 4
    %s19 = sphi 0, %s21
    %s22 = sphi 0, %s19
    %s23 = sphi 0, %s22
    %s39 = sphi 0, %s23
    %s43 = sphi 0, %s43
    %s45 = sphi 0, %s43
    %s46 = sphi 0, %s45
    %s60 = sphi 0, %s46
    %s64 = sphi 0, %s64
    %s66 = sphi 0, %s64
    %s67 = sphi 0, %s66
    %s81 = sphi 0, %s67
    %s87 = sphi 0, %s89
    %s90 = sphi 0, %s87
    %s91 = sphi 0, %s90
    %s107 = sphi 0, %s91
  $region4: #{cnn_femnist_forward.3} parent=0 // loop_header_branch
    %12 = sbr.rel (%p10) target = $region8
  $region5: #{cnn_femnist_forward.3} parent=0 // loop_body
    %s14 = ssub.s32 %s9, 1
    %s15 = ssub.s32 %s9, 2
    %s16 = sadd.s32 %s9, 1
    %s17 = ssub.s32 %s9, %s16
    %p18 = scmp.eq.s32.totalorder %s17, 0
    %s20 = sadd.s32 %s19, 1
    %s21 = scalar_select %p18, %s19, %s20
    %p24 = pneg %p18
    %p25 = scmp.eq.s32.totalorder %s9, 1
    %p26 = por %p24, %p25
    %p27 = scmp.ne.s32.totalorder %s19, %s22
    %p28 = scmp.eq.s32.totalorder %s9, 0
    %p29 = por %p27, %p28
    %p30 = scmp.ne.s32.totalorder %s19, %s22
    %p31 = scmp.eq.s32.totalorder %s14, 1
    %p32 = por %p30, %p31
    %p33 = scmp.ne.s32.totalorder %s22, %s23
    %p34 = scmp.eq.s32.totalorder %s14, 0
    %p35 = por %p33, %p34
    %p36 = scmp.ne.s32.totalorder %s22, %s23
    %p37 = scmp.eq.s32.totalorder %s15, 1
    %p38 = por %p36, %p37
    %p40 = scmp.ne.s32.totalorder %s23, %s39
    %p41 = scmp.eq.s32.totalorder %s15, 0
    %p42 = por %p40, %p41
    %s44 = sadd.s32 %s43, 1
    %p47 = scmp.eq.s32.totalorder %s9, 1
    %p48 = scmp.ne.s32.totalorder %s43, %s45
    %p49 = scmp.eq.s32.totalorder %s9, 0
    %p50 = por %p48, %p49
    %p51 = scmp.ne.s32.totalorder %s43, %s45
    %p52 = scmp.eq.s32.totalorder %s14, 1
    %p53 = por %p51, %p52
    %p54 = scmp.ne.s32.totalorder %s45, %s46
    %p55 = scmp.eq.s32.totalorder %s14, 0
    %p56 = por %p54, %p55
    %p57 = scmp.ne.s32.totalorder %s45, %s46
    %p58 = scmp.eq.s32.totalorder %s15, 1
    %p59 = por %p57, %p58
    %p61 = scmp.ne.s32.totalorder %s46, %s60
    %p62 = scmp.eq.s32.totalorder %s15, 0
    %p63 = por %p61, %p62
    %s65 = sadd.s32 %s64, 1
    %p68 = scmp.eq.s32.totalorder %s9, 1
    %p69 = scmp.ne.s32.totalorder %s64, %s66
    %p70 = scmp.eq.s32.totalorder %s9, 0
    %p71 = por %p69, %p70
    %p72 = scmp.ne.s32.totalorder %s64, %s66
    %p73 = scmp.eq.s32.totalorder %s14, 1
    %p74 = por %p72, %p73
    %p75 = scmp.ne.s32.totalorder %s66, %s67
    %p76 = scmp.eq.s32.totalorder %s14, 0
    %p77 = por %p75, %p76
    %p78 = scmp.ne.s32.totalorder %s66, %s67
    %p79 = scmp.eq.s32.totalorder %s15, 1
    %p80 = por %p78, %p79
    %p82 = scmp.ne.s32.totalorder %s67, %s81
    %p83 = scmp.eq.s32.totalorder %s15, 0
    %p84 = por %p82, %p83
    %s85 = ssub.s32 %s9, %s16
    %p86 = scmp.eq.s32.totalorder %s85, 0
    %s88 = sadd.s32 %s87, 1
    %s89 = scalar_select %p86, %s87, %s88
    %p92 = pneg %p86
    %p93 = scmp.eq.s32.totalorder %s9, 1
    %p94 = por %p92, %p93
    %p95 = scmp.ne.s32.totalorder %s87, %s90
    %p96 = scmp.eq.s32.totalorder %s9, 0
    %p97 = por %p95, %p96
    %p98 = scmp.ne.s32.totalorder %s87, %s90
    %p99 = scmp.eq.s32.totalorder %s14, 1
    %p100 = por %p98, %p99
    %p101 = scmp.ne.s32.totalorder %s90, %s91
    %p102 = scmp.eq.s32.totalorder %s14, 0
    %p103 = por %p101, %p102
    %p104 = scmp.ne.s32.totalorder %s90, %s91
    %p105 = scmp.eq.s32.totalorder %s15, 1
    %p106 = por %p104, %p105
    %p108 = scmp.ne.s32.totalorder %s91, %s107
    %p109 = scmp.eq.s32.totalorder %s15, 0
    %p110 = por %p108, %p109
    %p111 = scmp.le.s32.totalorder 1, %s9
    %p112 = scmp.lt.s32.totalorder %s9, 3
    %p113 = pnand %p111, %p112
    %p114 = pneg %p113
    // Predicated region
    $region9: #{cnn_femnist_forward.3} parent=5 // pred_check
      _
    $region10: #{cnn_femnist_forward.3} parent=5 // pred_check_branch
      %116 = sbr.rel (%p113) target = $region12
    $region11: #{cnn_femnist_forward.3} parent=5 // pred_region
      %s117 = ssub.s32 %s9, 1
      // Predicated region
      $region13: #{cnn_femnist_forward.3} parent=11 // pred_check
        %p118 = pneg %p56
      $region14: #{cnn_femnist_forward.3} parent=11 // pred_check_branch
        %120 = sbr.rel (%p118) target = $region16
      $region15: #{cnn_femnist_forward.3} parent=11 // pred_region
        _
      $region16: #{cnn_femnist_forward.3} parent=11 // pred_fallthru
        _
      // Predicated region
      $region17: #{cnn_femnist_forward.3} parent=11 // pred_check
        %p121 = pneg %p77
      $region18: #{cnn_femnist_forward.3} parent=11 // pred_check_branch
        %123 = sbr.rel (%p121) target = $region20
      $region19: #{cnn_femnist_forward.3} parent=11 // pred_region
        _
      $region20: #{cnn_femnist_forward.3} parent=11 // pred_fallthru
        _
    $region12: #{cnn_femnist_forward.3} parent=5 // pred_fallthru
      _
    %p124 = scmp.lt.s32.totalorder %s9, 2
    // Predicated region
    $region21: #{cnn_femnist_forward.3} parent=5 // pred_check
      %p125 = pneg %p124
    $region22: #{cnn_femnist_forward.3} parent=5 // pred_check_branch
      %127 = sbr.rel (%p125) target = $region24
    $region23: #{cnn_femnist_forward.3} parent=5 // pred_region
      // Predicated region
      $region25: #{cnn_femnist_forward.3} parent=23 // pred_check
        %p128 = pneg %p29
      $region26: #{cnn_femnist_forward.3} parent=23 // pred_check_branch
        %130 = sbr.rel (%p128) target = $region28
      $region27: #{cnn_femnist_forward.3} parent=23 // pred_region
        %s131 = smul.u32 64, %s9
        %p132 = scmp.lt.s32.totalorder %s131, 127
        %s133 = scalar_select %p132, %s131, 127
        %s134 = smul.addr %s133, 2
        %s135 = smul.addr %s134, 4
        %s136 = scalar_lea.vmem %s0, %s135
        %s137 = smul.u32 64, %s9
      $region28: #{cnn_femnist_forward.3} parent=23 // pred_fallthru
        _
    $region24: #{cnn_femnist_forward.3} parent=5 // pred_fallthru
      _
    %p138 = scmp.le.s32.totalorder 1, %s9
    %p139 = scmp.lt.s32.totalorder %s9, 3
    %p140 = pnand %p138, %p139
    %p141 = pneg %p140
    // Predicated region
    $region29: #{cnn_femnist_forward.3} parent=5 // pred_check
      _
    $region30: #{cnn_femnist_forward.3} parent=5 // pred_check_branch
      %143 = sbr.rel (%p140) target = $region32
    $region31: #{cnn_femnist_forward.3} parent=5 // pred_region
      %s144 = ssub.s32 %s9, 1
      %s145 = smul.u32 64, %s14
      %p146 = scmp.lt.s32.totalorder %s145, 127
      %s147 = scalar_select %p146, %s145, 127
      %s148 = smul.addr %s147, 2
      %s149 = smul.addr %s148, 4
      %s150 = scalar_lea.vmem %s0, %s149
      %p151 = pneg %p35
      %p152 = pneg %p32
      %p153 = pneg %p56
      %p154 = pneg %p53
      %p155 = pneg %p77
      %p156 = pneg %p74
      %p157 = pneg %p103
      %p158 = pneg %p100
      %s159 = smul.u32 32, %s14
      %p160 = scmp.lt.s32.totalorder %s159, 63
      %s161 = scalar_select %p160, %s159, 63
      %s162 = smul.addr %s161, 4
      %s163 = scalar_lea.vmem %s3, %s162
      %s164 = smul.u32 64, %s14
      %p165 = scmp.lt.s32.totalorder %s164, 127
      %s166 = scalar_select %p165, %s164, 127
      %s167 = smul.addr %s166, 2
      %s168 = smul.addr %s167, 4
      %s169 = scalar_lea.vmem %s0, %s168
      %s170 = smul.u32 64, %s14
      %s171 = smul.u32 32, %s14
      %p172 = scmp.lt.s32.totalorder %s171, 63
      %s173 = scalar_select %p172, %s171, 63
      %s174 = smul.addr %s173, 4
      %s175 = scalar_lea.vmem %s3, %s174
      %s176 = smul.u32 32, %s14
      %v177 = vld [vmem:[%s169] sm:$0xff]
      %v178 = vld [vmem:[%s169 + $0x8] sm:$0xff]
      %v179 = vld [vmem:[%s169 + $0x10] sm:$0xff]
      %v180 = vld [vmem:[%s169 + $0x18] sm:$0xff]
      %v181 = vld [vmem:[%s169 + $0x20] sm:$0xff]
      %v182 = vld [vmem:[%s169 + $0x28] sm:$0xff]
      %v183 = vld [vmem:[%s169 + $0x30] sm:$0xff]
      %v184 = vld [vmem:[%s169 + $0x38] sm:$0xff]
      %v185 = vld [vmem:[%s169 + $0x40] sm:$0xff]
      %v186 = vld [vmem:[%s169 + $0x48] sm:$0xff]
      %v187 = vld [vmem:[%s169 + $0x50] sm:$0xff]
      %v188 = vld [vmem:[%s169 + $0x58] sm:$0xff]
      %v189 = vld [vmem:[%s169 + $0x60] sm:$0xff]
      %v190 = vld [vmem:[%s169 + $0x68] sm:$0xff]
      %v191 = vld [vmem:[%s169 + $0x70] sm:$0xff]
      %v192 = vld [vmem:[%s169 + $0x78] sm:$0xff]
      %v193 = vld [vmem:[%s169 + $0x80] sm:$0xff]
      %v194 = vld [vmem:[%s169 + $0x88] sm:$0xff]
      %v195 = vld [vmem:[%s169 + $0x90] sm:$0xff]
      %v196 = vld [vmem:[%s169 + $0x98] sm:$0xff]
      %v197 = vld [vmem:[%s169 + $0xa0] sm:$0xff]
      %v198 = vld [vmem:[%s169 + $0xa8] sm:$0xff]
      %v199 = vld [vmem:[%s169 + $0xb0] sm:$0xff]
      %v200 = vld [vmem:[%s169 + $0xb8] sm:$0xff]
      %v201 = vld [vmem:[%s169 + $0xc0] sm:$0xff]
      %v202 = vld [vmem:[%s169 + $0xc8] sm:$0xff]
      %v203 = vld [vmem:[%s169 + $0xd0] sm:$0xff]
      %v204 = vld [vmem:[%s169 + $0xd8] sm:$0xff]
      %v205 = vld [vmem:[%s169 + $0xe0] sm:$0xff]
      %v206 = vld [vmem:[%s169 + $0xe8] sm:$0xff]
      %v207 = vld [vmem:[%s169 + $0xf0] sm:$0xff]
      %v208 = vld [vmem:[%s169 + $0xf8] sm:$0xff]
      %v209 = vld [vmem:[%s169 + $0x100] sm:$0xff]
      %v210 = vld [vmem:[%s169 + $0x108] sm:$0xff]
      %v211 = vld [vmem:[%s169 + $0x110] sm:$0xff]
      %v212 = vld [vmem:[%s169 + $0x118] sm:$0xff]
      %v213 = vld [vmem:[%s169 + $0x120] sm:$0xff]
      %v214 = vld [vmem:[%s169 + $0x128] sm:$0xff]
      %v215 = vld [vmem:[%s169 + $0x130] sm:$0xff]
      %v216 = vld [vmem:[%s169 + $0x138] sm:$0xff]
      %v217 = vld [vmem:[%s169 + $0x140] sm:$0xff]
      %v218 = vld [vmem:[%s169 + $0x148] sm:$0xff]
      %v219 = vld [vmem:[%s169 + $0x150] sm:$0xff]
      %v220 = vld [vmem:[%s169 + $0x158] sm:$0xff]
      %v221 = vld [vmem:[%s169 + $0x160] sm:$0xff]
      %v222 = vld [vmem:[%s169 + $0x168] sm:$0xff]
      %v223 = vld [vmem:[%s169 + $0x170] sm:$0xff]
      %v224 = vld [vmem:[%s169 + $0x178] sm:$0xff]
      %v225 = vld [vmem:[%s169 + $0x180] sm:$0xff]
      %v226 = vld [vmem:[%s169 + $0x188] sm:$0xff]
      %v227 = vld [vmem:[%s169 + $0x190] sm:$0xff]
      %v228 = vld [vmem:[%s169 + $0x198] sm:$0xff]
      %v229 = vld [vmem:[%s169 + $0x1a0] sm:$0xff]
      %v230 = vld [vmem:[%s169 + $0x1a8] sm:$0xff]
      %v231 = vld [vmem:[%s169 + $0x1b0] sm:$0xff]
      %v232 = vld [vmem:[%s169 + $0x1b8] sm:$0xff]
      %v233 = vld [vmem:[%s169 + $0x1c0] sm:$0xff]
      %v234 = vld [vmem:[%s169 + $0x1c8] sm:$0xff]
      %v235 = vld [vmem:[%s169 + $0x1d0] sm:$0xff]
      %v236 = vld [vmem:[%s169 + $0x1d8] sm:$0xff]
      %v237 = vld [vmem:[%s169 + $0x1e0] sm:$0xff]
      %v238 = vld [vmem:[%s169 + $0x1e8] sm:$0xff]
      %v239 = vld [vmem:[%s169 + $0x1f0] sm:$0xff]
      %v240 = vld [vmem:[%s169 + $0x1f8] sm:$0xff]
      %v241 = vld [vmem:[%s1] sm:$0xff]
      %v242 = vld [vmem:[%s1 + $0x8] sm:$0xff]
      %v243 = vld [vmem:[%s1 + $0x10] sm:$0xff]
      %v244 = vld [vmem:[%s1 + $0x18] sm:$0xff]
      %v245 = vld [vmem:[%s1 + $0x20] sm:$0xff]
      %v246 = vld [vmem:[%s1 + $0x28] sm:$0xff]
      %v247 = vld [vmem:[%s1 + $0x30] sm:$0xff]
      %v248 = vld [vmem:[%s1 + $0x38] sm:$0xff]
      %v249 = vld [vmem:[%s1 + $0x40] sm:$0xff]
      %v250 = vld [vmem:[%s1 + $0x48] sm:$0xff]
      %v251 = vld [vmem:[%s1 + $0x50] sm:$0xff]
      %v252 = vld [vmem:[%s1 + $0x58] sm:$0xff]
      %v253 = vld [vmem:[%s1 + $0x60] sm:$0xff]
      %v254 = vld [vmem:[%s1 + $0x68] sm:$0xff]
      %v255 = vld [vmem:[%s1 + $0x70] sm:$0xff]
      %v256 = vld [vmem:[%s1 + $0x78] sm:$0xff]
      %v257 = vld [vmem:[%s1 + $0x80] sm:$0xff]
      %v258 = vld [vmem:[%s1 + $0x88] sm:$0xff]
      %v259 = vld [vmem:[%s1 + $0x90] sm:$0xff]
      %v260 = vld [vmem:[%s1 + $0x98] sm:$0xff]
      %v261 = vld [vmem:[%s1 + $0xa0] sm:$0xff]
      %v262 = vld [vmem:[%s1 + $0xa8] sm:$0xff]
      %v263 = vld [vmem:[%s1 + $0xb0] sm:$0xff]
      %v264 = vld [vmem:[%s1 + $0xb8] sm:$0xff]
      %v265 = vld [vmem:[%s1 + $0xc0] sm:$0xff]
      %v266 = vld [vmem:[%s1 + $0xc8] sm:$0xff]
      %v267 = vld [vmem:[%s1 + $0xd0] sm:$0xff]
      %v268 = vld [vmem:[%s1 + $0xd8] sm:$0xff]
      %v269 = vld [vmem:[%s1 + $0xe0] sm:$0xff]
      %v270 = vld [vmem:[%s1 + $0xe8] sm:$0xff]
      %v271 = vld [vmem:[%s1 + $0xf0] sm:$0xff]
      %v272 = vld [vmem:[%s1 + $0xf8] sm:$0xff]
      %v273 = vld [vmem:[%s2] sm:$0x3]
      %v275 = vlaneseq
      %v276 = vshrl.u32 %v275, 7
      %v277 = vsub.s32 0, %v276
      %v278 = vrot.slane %v273, %v277
      %v279 = vlaneseq
      %v280 = vshrl.u32 %v279, 7
      %v281 = vsub.s32 1, %v280
      %v282 = vrot.slane %v273, %v281
      %v349 = vunpack.c.l.b16 %v177
      %v350 = vunpack.c.h.b16 %v177
      %v351 = vunpack.c.l.b16 %v178
      %v352 = vunpack.c.h.b16 %v178
      %v353 = vunpack.c.l.b16 %v179
      %v354 = vunpack.c.h.b16 %v179
      %v355 = vunpack.c.l.b16 %v180
      %v356 = vunpack.c.h.b16 %v180
      %v357 = vunpack.c.l.b16 %v181
      %v358 = vunpack.c.h.b16 %v181
      %v359 = vunpack.c.l.b16 %v182
      %v360 = vunpack.c.h.b16 %v182
      %v361 = vunpack.c.l.b16 %v183
      %v362 = vunpack.c.h.b16 %v183
      %v363 = vunpack.c.l.b16 %v184
      %v364 = vunpack.c.h.b16 %v184
      %v365 = vunpack.c.l.b16 %v185
      %v366 = vunpack.c.h.b16 %v185
      %v367 = vunpack.c.l.b16 %v186
      %v368 = vunpack.c.h.b16 %v186
      %v369 = vunpack.c.l.b16 %v187
      %v370 = vunpack.c.h.b16 %v187
      %v371 = vunpack.c.l.b16 %v188
      %v372 = vunpack.c.h.b16 %v188
      %v373 = vunpack.c.l.b16 %v189
      %v374 = vunpack.c.h.b16 %v189
      %v375 = vunpack.c.l.b16 %v190
      %v376 = vunpack.c.h.b16 %v190
      %v377 = vunpack.c.l.b16 %v191
      %v378 = vunpack.c.h.b16 %v191
      %v379 = vunpack.c.l.b16 %v192
      %v380 = vunpack.c.h.b16 %v192
      %v381 = vunpack.c.l.b16 %v193
      %v382 = vunpack.c.h.b16 %v193
      %v383 = vunpack.c.l.b16 %v194
      %v384 = vunpack.c.h.b16 %v194
      %v385 = vunpack.c.l.b16 %v195
      %v386 = vunpack.c.h.b16 %v195
      %v387 = vunpack.c.l.b16 %v196
      %v388 = vunpack.c.h.b16 %v196
      %v389 = vunpack.c.l.b16 %v197
      %v390 = vunpack.c.h.b16 %v197
      %v391 = vunpack.c.l.b16 %v198
      %v392 = vunpack.c.h.b16 %v198
      %v393 = vunpack.c.l.b16 %v199
      %v394 = vunpack.c.h.b16 %v199
      %v395 = vunpack.c.l.b16 %v200
      %v396 = vunpack.c.h.b16 %v200
      %v397 = vunpack.c.l.b16 %v201
      %v398 = vunpack.c.h.b16 %v201
      %v399 = vunpack.c.l.b16 %v202
      %v400 = vunpack.c.h.b16 %v202
      %v401 = vunpack.c.l.b16 %v203
      %v402 = vunpack.c.h.b16 %v203
      %v403 = vunpack.c.l.b16 %v204
      %v404 = vunpack.c.h.b16 %v204
      %v405 = vunpack.c.l.b16 %v205
      %v406 = vunpack.c.h.b16 %v205
      %v407 = vunpack.c.l.b16 %v206
      %v408 = vunpack.c.h.b16 %v206
      %v409 = vunpack.c.l.b16 %v207
      %v410 = vunpack.c.h.b16 %v207
      %v411 = vunpack.c.l.b16 %v208
      %v412 = vunpack.c.h.b16 %v208
      %v413 = vunpack.c.l.b16 %v209
      %v414 = vunpack.c.h.b16 %v209
      %v415 = vunpack.c.l.b16 %v210
      %v416 = vunpack.c.h.b16 %v210
      %v417 = vunpack.c.l.b16 %v211
      %v418 = vunpack.c.h.b16 %v211
      %v419 = vunpack.c.l.b16 %v212
      %v420 = vunpack.c.h.b16 %v212
      %v421 = vunpack.c.l.b16 %v213
      %v422 = vunpack.c.h.b16 %v213
      %v423 = vunpack.c.l.b16 %v214
      %v424 = vunpack.c.h.b16 %v214
      %v425 = vunpack.c.l.b16 %v215
      %v426 = vunpack.c.h.b16 %v215
      %v427 = vunpack.c.l.b16 %v216
      %v428 = vunpack.c.h.b16 %v216
      %v429 = vunpack.c.l.b16 %v217
      %v430 = vunpack.c.h.b16 %v217
      %v431 = vunpack.c.l.b16 %v218
      %v432 = vunpack.c.h.b16 %v218
      %v433 = vunpack.c.l.b16 %v219
      %v434 = vunpack.c.h.b16 %v219
      %v435 = vunpack.c.l.b16 %v220
      %v436 = vunpack.c.h.b16 %v220
      %v437 = vunpack.c.l.b16 %v221
      %v438 = vunpack.c.h.b16 %v221
      %v439 = vunpack.c.l.b16 %v222
      %v440 = vunpack.c.h.b16 %v222
      %v441 = vunpack.c.l.b16 %v223
      %v442 = vunpack.c.h.b16 %v223
      %v443 = vunpack.c.l.b16 %v224
      %v444 = vunpack.c.h.b16 %v224
      %v445 = vunpack.c.l.b16 %v225
      %v446 = vunpack.c.h.b16 %v225
      %v447 = vunpack.c.l.b16 %v226
      %v448 = vunpack.c.h.b16 %v226
      %v449 = vunpack.c.l.b16 %v227
      %v450 = vunpack.c.h.b16 %v227
      %v451 = vunpack.c.l.b16 %v228
      %v452 = vunpack.c.h.b16 %v228
      %v453 = vunpack.c.l.b16 %v229
      %v454 = vunpack.c.h.b16 %v229
      %v455 = vunpack.c.l.b16 %v230
      %v456 = vunpack.c.h.b16 %v230
      %v457 = vunpack.c.l.b16 %v231
      %v458 = vunpack.c.h.b16 %v231
      %v459 = vunpack.c.l.b16 %v232
      %v460 = vunpack.c.h.b16 %v232
      %v461 = vunpack.c.l.b16 %v233
      %v462 = vunpack.c.h.b16 %v233
      %v463 = vunpack.c.l.b16 %v234
      %v464 = vunpack.c.h.b16 %v234
      %v465 = vunpack.c.l.b16 %v235
      %v466 = vunpack.c.h.b16 %v235
      %v467 = vunpack.c.l.b16 %v236
      %v468 = vunpack.c.h.b16 %v236
      %v469 = vunpack.c.l.b16 %v237
      %v470 = vunpack.c.h.b16 %v237
      %v471 = vunpack.c.l.b16 %v238
      %v472 = vunpack.c.h.b16 %v238
      %v473 = vunpack.c.l.b16 %v239
      %v474 = vunpack.c.h.b16 %v239
      %v475 = vunpack.c.l.b16 %v240
      %v476 = vunpack.c.h.b16 %v240
      %v477 = vpack.c.b16 %v351, %v349
      %v478 = vpack.c.b16 %v352, %v350
      %v479 = vpack.c.b16 %v355, %v353
      %v480 = vpack.c.b16 %v356, %v354
      %v481 = vpack.c.b16 %v359, %v357
      %v482 = vpack.c.b16 %v360, %v358
      %v483 = vpack.c.b16 %v363, %v361
      %v484 = vpack.c.b16 %v364, %v362
      %v485 = vpack.c.b16 %v367, %v365
      %v486 = vpack.c.b16 %v368, %v366
      %v487 = vpack.c.b16 %v371, %v369
      %v488 = vpack.c.b16 %v372, %v370
      %v489 = vpack.c.b16 %v375, %v373
      %v490 = vpack.c.b16 %v376, %v374
      %v491 = vpack.c.b16 %v379, %v377
      %v492 = vpack.c.b16 %v380, %v378
      %v493 = vpack.c.b16 %v383, %v381
      %v494 = vpack.c.b16 %v384, %v382
      %v495 = vpack.c.b16 %v387, %v385
      %v496 = vpack.c.b16 %v388, %v386
      %v497 = vpack.c.b16 %v391, %v389
      %v498 = vpack.c.b16 %v392, %v390
      %v499 = vpack.c.b16 %v395, %v393
      %v500 = vpack.c.b16 %v396, %v394
      %v501 = vpack.c.b16 %v399, %v397
      %v502 = vpack.c.b16 %v400, %v398
      %v503 = vpack.c.b16 %v403, %v401
      %v504 = vpack.c.b16 %v404, %v402
      %v505 = vpack.c.b16 %v407, %v405
      %v506 = vpack.c.b16 %v408, %v406
      %v507 = vpack.c.b16 %v411, %v409
      %v508 = vpack.c.b16 %v412, %v410
      %v509 = vpack.c.b16 %v415, %v413
      %v510 = vpack.c.b16 %v416, %v414
      %v511 = vpack.c.b16 %v419, %v417
      %v512 = vpack.c.b16 %v420, %v418
      %v513 = vpack.c.b16 %v423, %v421
      %v514 = vpack.c.b16 %v424, %v422
      %v515 = vpack.c.b16 %v427, %v425
      %v516 = vpack.c.b16 %v428, %v426
      %v517 = vpack.c.b16 %v431, %v429
      %v518 = vpack.c.b16 %v432, %v430
      %v519 = vpack.c.b16 %v435, %v433
      %v520 = vpack.c.b16 %v436, %v434
      %v521 = vpack.c.b16 %v439, %v437
      %v522 = vpack.c.b16 %v440, %v438
      %v523 = vpack.c.b16 %v443, %v441
      %v524 = vpack.c.b16 %v444, %v442
      %v525 = vpack.c.b16 %v447, %v445
      %v526 = vpack.c.b16 %v448, %v446
      %v527 = vpack.c.b16 %v451, %v449
      %v528 = vpack.c.b16 %v452, %v450
      %v529 = vpack.c.b16 %v455, %v453
      %v530 = vpack.c.b16 %v456, %v454
      %v531 = vpack.c.b16 %v459, %v457
      %v532 = vpack.c.b16 %v460, %v458
      %v533 = vpack.c.b16 %v463, %v461
      %v534 = vpack.c.b16 %v464, %v462
      %v535 = vpack.c.b16 %v467, %v465
      %v536 = vpack.c.b16 %v468, %v466
      %v537 = vpack.c.b16 %v471, %v469
      %v538 = vpack.c.b16 %v472, %v470
      %v539 = vpack.c.b16 %v475, %v473
      %v540 = vpack.c.b16 %v476, %v474
      %v637 = vunpack.c.l.b16 %v241
      %v638 = vunpack.c.h.b16 %v241
      %v639 = vunpack.c.l.b16 %v242
      %v640 = vunpack.c.h.b16 %v242
      %v641 = vunpack.c.l.b16 %v243
      %v642 = vunpack.c.h.b16 %v243
      %v643 = vunpack.c.l.b16 %v244
      %v644 = vunpack.c.h.b16 %v244
      %v645 = vunpack.c.l.b16 %v245
      %v646 = vunpack.c.h.b16 %v245
      %v647 = vunpack.c.l.b16 %v246
      %v648 = vunpack.c.h.b16 %v246
      %v649 = vunpack.c.l.b16 %v247
      %v650 = vunpack.c.h.b16 %v247
      %v651 = vunpack.c.l.b16 %v248
      %v652 = vunpack.c.h.b16 %v248
      %v653 = vunpack.c.l.b16 %v249
      %v654 = vunpack.c.h.b16 %v249
      %v655 = vunpack.c.l.b16 %v250
      %v656 = vunpack.c.h.b16 %v250
      %v657 = vunpack.c.l.b16 %v251
      %v658 = vunpack.c.h.b16 %v251
      %v659 = vunpack.c.l.b16 %v252
      %v660 = vunpack.c.h.b16 %v252
      %v661 = vunpack.c.l.b16 %v253
      %v662 = vunpack.c.h.b16 %v253
      %v663 = vunpack.c.l.b16 %v254
      %v664 = vunpack.c.h.b16 %v254
      %v665 = vunpack.c.l.b16 %v255
      %v666 = vunpack.c.h.b16 %v255
      %v667 = vunpack.c.l.b16 %v256
      %v668 = vunpack.c.h.b16 %v256
      %v669 = vunpack.c.l.b16 %v257
      %v670 = vunpack.c.h.b16 %v257
      %v671 = vunpack.c.l.b16 %v258
      %v672 = vunpack.c.h.b16 %v258
      %v673 = vunpack.c.l.b16 %v259
      %v674 = vunpack.c.h.b16 %v259
      %v675 = vunpack.c.l.b16 %v260
      %v676 = vunpack.c.h.b16 %v260
      %v677 = vunpack.c.l.b16 %v261
      %v678 = vunpack.c.h.b16 %v261
      %v679 = vunpack.c.l.b16 %v262
      %v680 = vunpack.c.h.b16 %v262
      %v681 = vunpack.c.l.b16 %v263
      %v682 = vunpack.c.h.b16 %v263
      %v683 = vunpack.c.l.b16 %v264
      %v684 = vunpack.c.h.b16 %v264
      %v685 = vunpack.c.l.b16 %v265
      %v686 = vunpack.c.h.b16 %v265
      %v687 = vunpack.c.l.b16 %v266
      %v688 = vunpack.c.h.b16 %v266
      %v689 = vunpack.c.l.b16 %v267
      %v690 = vunpack.c.h.b16 %v267
      %v691 = vunpack.c.l.b16 %v268
      %v692 = vunpack.c.h.b16 %v268
      %v693 = vunpack.c.l.b16 %v269
      %v694 = vunpack.c.h.b16 %v269
      %v695 = vunpack.c.l.b16 %v270
      %v696 = vunpack.c.h.b16 %v270
      %v697 = vunpack.c.l.b16 %v271
      %v698 = vunpack.c.h.b16 %v271
      %v699 = vunpack.c.l.b16 %v272
      %v700 = vunpack.c.h.b16 %v272
      %v701 = vpack.c.b16 %v639, %v637
      %v702 = vpack.c.b16 %v640, %v638
      %v703 = vpack.c.b16 %v643, %v641
      %v704 = vpack.c.b16 %v644, %v642
      %v705 = vpack.c.b16 %v647, %v645
      %v706 = vpack.c.b16 %v648, %v646
      %v707 = vpack.c.b16 %v651, %v649
      %v708 = vpack.c.b16 %v652, %v650
      %v709 = vpack.c.b16 %v655, %v653
      %v710 = vpack.c.b16 %v656, %v654
      %v711 = vpack.c.b16 %v659, %v657
      %v712 = vpack.c.b16 %v660, %v658
      %v713 = vpack.c.b16 %v663, %v661
      %v714 = vpack.c.b16 %v664, %v662
      %v715 = vpack.c.b16 %v667, %v665
      %v716 = vpack.c.b16 %v668, %v666
      %v717 = vpack.c.b16 %v671, %v669
      %v718 = vpack.c.b16 %v672, %v670
      %v719 = vpack.c.b16 %v675, %v673
      %v720 = vpack.c.b16 %v676, %v674
      %v721 = vpack.c.b16 %v679, %v677
      %v722 = vpack.c.b16 %v680, %v678
      %v723 = vpack.c.b16 %v683, %v681
      %v724 = vpack.c.b16 %v684, %v682
      %v725 = vpack.c.b16 %v687, %v685
      %v726 = vpack.c.b16 %v688, %v686
      %v727 = vpack.c.b16 %v691, %v689
      %v728 = vpack.c.b16 %v692, %v690
      %v729 = vpack.c.b16 %v695, %v693
      %v730 = vpack.c.b16 %v696, %v694
      %v731 = vpack.c.b16 %v699, %v697
      %v732 = vpack.c.b16 %v700, %v698
      %765 = vmatprep.subr.bf16.mxu0 %v716
      %766 = vmatpush1.bf16.msra.mxu0 %v715
      %767 = vmatprep.subr.bf16.mxu0 %v714
      %768 = vmatpush1.bf16.msra.mxu0 %v713
      %769 = vmatprep.subr.bf16.mxu0 %v712
      %770 = vmatpush1.bf16.msra.mxu0 %v711
      %771 = vmatprep.subr.bf16.mxu0 %v710
      %772 = vmatpush1.bf16.msra.mxu0 %v709
      %773 = vmatprep.subr.bf16.mxu0 %v708
      %774 = vmatpush1.bf16.msra.mxu0 %v707
      %775 = vmatprep.subr.bf16.mxu0 %v706
      %776 = vmatpush1.bf16.msra.mxu0 %v705
      %777 = vmatprep.subr.bf16.mxu0 %v704
      %778 = vmatpush1.bf16.msra.mxu0 %v703
      %779 = vmatprep.subr.bf16.mxu0 %v702
      %780 = vmatpush1.bf16.msra.mxu0 %v701
      %781 = vmatprep.subr.bf16.mxu0 %v732
      %782 = vmatpush2.bf16.msra.mxu0 %v731
      %783 = vmatprep.subr.bf16.mxu0 %v730
      %784 = vmatpush2.bf16.msra.mxu0 %v729
      %785 = vmatprep.subr.bf16.mxu0 %v728
      %786 = vmatpush2.bf16.msra.mxu0 %v727
      %787 = vmatprep.subr.bf16.mxu0 %v726
      %788 = vmatpush2.bf16.msra.mxu0 %v725
      %789 = vmatprep.subr.bf16.mxu0 %v724
      %790 = vmatpush2.bf16.msra.mxu0 %v723
      %791 = vmatprep.subr.bf16.mxu0 %v722
      %792 = vmatpush2.bf16.msra.mxu0 %v721
      %793 = vmatprep.subr.bf16.mxu0 %v720
      %794 = vmatpush2.bf16.msra.mxu0 %v719
      %795 = vmatprep.subr.bf16.mxu0 %v718
      %796 = vmatpush2.bf16.msra.mxu0 %v717
      %797 = vmatprep.mubr.bf16.mxu0 %v478
      %798 = vmatmul.mubr.bf16.gmra.mxu0 %v477
      %v799 = vpop.f32.mrf.mxu0
      %v800 = vadd.f32 %v278, %v799
      %v801 = vpop.f32.mrf.mxu0
      %v802 = vadd.f32 %v282, %v801
      %v803 = vpop.f32.mrf.mxu0
      %v804 = vadd.f32 %v278, %v803
      %v805 = vpop.f32.mrf.mxu0
      %v806 = vadd.f32 %v282, %v805
      %807 = vmatprep.mubr.bf16.mxu0 %v480
      %808 = vmatmul.mubr.bf16.gmra.mxu0 %v479
      %v809 = vpop.f32.mrf.mxu0
      %v810 = vadd.f32 %v278, %v809
      %v811 = vpop.f32.mrf.mxu0
      %v812 = vadd.f32 %v282, %v811
      %v813 = vpop.f32.mrf.mxu0
      %v814 = vadd.f32 %v278, %v813
      %v815 = vpop.f32.mrf.mxu0
      %v816 = vadd.f32 %v282, %v815
      %817 = vmatprep.mubr.bf16.mxu0 %v482
      %818 = vmatmul.mubr.bf16.gmra.mxu0 %v481
      %v819 = vpop.f32.mrf.mxu0
      %v820 = vadd.f32 %v278, %v819
      %v821 = vpop.f32.mrf.mxu0
      %v822 = vadd.f32 %v282, %v821
      %v823 = vpop.f32.mrf.mxu0
      %v824 = vadd.f32 %v278, %v823
      %v825 = vpop.f32.mrf.mxu0
      %v826 = vadd.f32 %v282, %v825
      %827 = vmatprep.mubr.bf16.mxu0 %v484
      %828 = vmatmul.mubr.bf16.gmra.mxu0 %v483
      %v829 = vpop.f32.mrf.mxu0
      %v830 = vadd.f32 %v278, %v829
      %v831 = vpop.f32.mrf.mxu0
      %v832 = vadd.f32 %v282, %v831
      %v833 = vpop.f32.mrf.mxu0
      %v834 = vadd.f32 %v278, %v833
      %v835 = vpop.f32.mrf.mxu0
      %v836 = vadd.f32 %v282, %v835
      %837 = vmatprep.mubr.bf16.mxu0 %v486
      %838 = vmatmul.mubr.bf16.gmra.mxu0 %v485
      %v839 = vpop.f32.mrf.mxu0
      %v840 = vadd.f32 %v278, %v839
      %v841 = vpop.f32.mrf.mxu0
      %v842 = vadd.f32 %v282, %v841
      %v843 = vpop.f32.mrf.mxu0
      %v844 = vadd.f32 %v278, %v843
      %v845 = vpop.f32.mrf.mxu0
      %v846 = vadd.f32 %v282, %v845
      %847 = vmatprep.mubr.bf16.mxu0 %v488
      %848 = vmatmul.mubr.bf16.gmra.mxu0 %v487
      %v849 = vpop.f32.mrf.mxu0
      %v850 = vadd.f32 %v278, %v849
      %v851 = vpop.f32.mrf.mxu0
      %v852 = vadd.f32 %v282, %v851
      %v853 = vpop.f32.mrf.mxu0
      %v854 = vadd.f32 %v278, %v853
      %v855 = vpop.f32.mrf.mxu0
      %v856 = vadd.f32 %v282, %v855
      %857 = vmatprep.mubr.bf16.mxu0 %v490
      %858 = vmatmul.mubr.bf16.gmra.mxu0 %v489
      %v859 = vpop.f32.mrf.mxu0
      %v860 = vadd.f32 %v278, %v859
      %v861 = vpop.f32.mrf.mxu0
      %v862 = vadd.f32 %v282, %v861
      %v863 = vpop.f32.mrf.mxu0
      %v864 = vadd.f32 %v278, %v863
      %v865 = vpop.f32.mrf.mxu0
      %v866 = vadd.f32 %v282, %v865
      %867 = vmatprep.mubr.bf16.mxu0 %v492
      %868 = vmatmul.mubr.bf16.gmra.mxu0 %v491
      %v869 = vpop.f32.mrf.mxu0
      %v870 = vadd.f32 %v278, %v869
      %v871 = vpop.f32.mrf.mxu0
      %v872 = vadd.f32 %v282, %v871
      %v873 = vpop.f32.mrf.mxu0
      %v874 = vadd.f32 %v278, %v873
      %v875 = vpop.f32.mrf.mxu0
      %v876 = vadd.f32 %v282, %v875
      %877 = vmatprep.mubr.bf16.mxu0 %v494
      %878 = vmatmul.mubr.bf16.gmra.mxu0 %v493
      %v879 = vpop.f32.mrf.mxu0
      %v880 = vadd.f32 %v278, %v879
      %v881 = vpop.f32.mrf.mxu0
      %v882 = vadd.f32 %v282, %v881
      %v883 = vpop.f32.mrf.mxu0
      %v884 = vadd.f32 %v278, %v883
      %v885 = vpop.f32.mrf.mxu0
      %v886 = vadd.f32 %v282, %v885
      %887 = vmatprep.mubr.bf16.mxu0 %v496
      %888 = vmatmul.mubr.bf16.gmra.mxu0 %v495
      %v889 = vpop.f32.mrf.mxu0
      %v890 = vadd.f32 %v278, %v889
      %v891 = vpop.f32.mrf.mxu0
      %v892 = vadd.f32 %v282, %v891
      %v893 = vpop.f32.mrf.mxu0
      %v894 = vadd.f32 %v278, %v893
      %v895 = vpop.f32.mrf.mxu0
      %v896 = vadd.f32 %v282, %v895
      %897 = vmatprep.mubr.bf16.mxu0 %v498
      %898 = vmatmul.mubr.bf16.gmra.mxu0 %v497
      %v899 = vpop.f32.mrf.mxu0
      %v900 = vadd.f32 %v278, %v899
      %v901 = vpop.f32.mrf.mxu0
      %v902 = vadd.f32 %v282, %v901
      %v903 = vpop.f32.mrf.mxu0
      %v904 = vadd.f32 %v278, %v903
      %v905 = vpop.f32.mrf.mxu0
      %v906 = vadd.f32 %v282, %v905
      %907 = vmatprep.mubr.bf16.mxu0 %v500
      %908 = vmatmul.mubr.bf16.gmra.mxu0 %v499
      %v909 = vpop.f32.mrf.mxu0
      %v910 = vadd.f32 %v278, %v909
      %v911 = vpop.f32.mrf.mxu0
      %v912 = vadd.f32 %v282, %v911
      %v913 = vpop.f32.mrf.mxu0
      %v914 = vadd.f32 %v278, %v913
      %v915 = vpop.f32.mrf.mxu0
      %v916 = vadd.f32 %v282, %v915
      %917 = vmatprep.mubr.bf16.mxu0 %v502
      %918 = vmatmul.mubr.bf16.gmra.mxu0 %v501
      %v919 = vpop.f32.mrf.mxu0
      %v920 = vadd.f32 %v278, %v919
      %v921 = vpop.f32.mrf.mxu0
      %v922 = vadd.f32 %v282, %v921
      %v923 = vpop.f32.mrf.mxu0
      %v924 = vadd.f32 %v278, %v923
      %v925 = vpop.f32.mrf.mxu0
      %v926 = vadd.f32 %v282, %v925
      %927 = vmatprep.mubr.bf16.mxu0 %v504
      %928 = vmatmul.mubr.bf16.gmra.mxu0 %v503
      %v929 = vpop.f32.mrf.mxu0
      %v930 = vadd.f32 %v278, %v929
      %v931 = vpop.f32.mrf.mxu0
      %v932 = vadd.f32 %v282, %v931
      %v933 = vpop.f32.mrf.mxu0
      %v934 = vadd.f32 %v278, %v933
      %v935 = vpop.f32.mrf.mxu0
      %v936 = vadd.f32 %v282, %v935
      %937 = vmatprep.mubr.bf16.mxu0 %v506
      %938 = vmatmul.mubr.bf16.gmra.mxu0 %v505
      %v939 = vpop.f32.mrf.mxu0
      %v940 = vadd.f32 %v278, %v939
      %v941 = vpop.f32.mrf.mxu0
      %v942 = vadd.f32 %v282, %v941
      %v943 = vpop.f32.mrf.mxu0
      %v944 = vadd.f32 %v278, %v943
      %v945 = vpop.f32.mrf.mxu0
      %v946 = vadd.f32 %v282, %v945
      %947 = vmatprep.mubr.bf16.mxu0 %v508
      %948 = vmatmul.mubr.bf16.gmra.mxu0 %v507
      %v949 = vpop.f32.mrf.mxu0
      %v950 = vadd.f32 %v278, %v949
      %v951 = vpop.f32.mrf.mxu0
      %v952 = vadd.f32 %v282, %v951
      %v953 = vpop.f32.mrf.mxu0
      %v954 = vadd.f32 %v278, %v953
      %v955 = vpop.f32.mrf.mxu0
      %v956 = vadd.f32 %v282, %v955
      %957 = vmatprep.mubr.bf16.mxu0 %v510
      %958 = vmatmul.mubr.bf16.gmra.mxu0 %v509
      %v959 = vpop.f32.mrf.mxu0
      %v960 = vadd.f32 %v278, %v959
      %v961 = vpop.f32.mrf.mxu0
      %v962 = vadd.f32 %v282, %v961
      %v963 = vpop.f32.mrf.mxu0
      %v964 = vadd.f32 %v278, %v963
      %v965 = vpop.f32.mrf.mxu0
      %v966 = vadd.f32 %v282, %v965
      %967 = vmatprep.mubr.bf16.mxu0 %v512
      %968 = vmatmul.mubr.bf16.gmra.mxu0 %v511
      %v969 = vpop.f32.mrf.mxu0
      %v970 = vadd.f32 %v278, %v969
      %v971 = vpop.f32.mrf.mxu0
      %v972 = vadd.f32 %v282, %v971
      %v973 = vpop.f32.mrf.mxu0
      %v974 = vadd.f32 %v278, %v973
      %v975 = vpop.f32.mrf.mxu0
      %v976 = vadd.f32 %v282, %v975
      %977 = vmatprep.mubr.bf16.mxu0 %v514
      %978 = vmatmul.mubr.bf16.gmra.mxu0 %v513
      %v979 = vpop.f32.mrf.mxu0
      %v980 = vadd.f32 %v278, %v979
      %v981 = vpop.f32.mrf.mxu0
      %v982 = vadd.f32 %v282, %v981
      %v983 = vpop.f32.mrf.mxu0
      %v984 = vadd.f32 %v278, %v983
      %v985 = vpop.f32.mrf.mxu0
      %v986 = vadd.f32 %v282, %v985
      %987 = vmatprep.mubr.bf16.mxu0 %v516
      %988 = vmatmul.mubr.bf16.gmra.mxu0 %v515
      %v989 = vpop.f32.mrf.mxu0
      %v990 = vadd.f32 %v278, %v989
      %v991 = vpop.f32.mrf.mxu0
      %v992 = vadd.f32 %v282, %v991
      %v993 = vpop.f32.mrf.mxu0
      %v994 = vadd.f32 %v278, %v993
      %v995 = vpop.f32.mrf.mxu0
      %v996 = vadd.f32 %v282, %v995
      %997 = vmatprep.mubr.bf16.mxu0 %v518
      %998 = vmatmul.mubr.bf16.gmra.mxu0 %v517
      %v999 = vpop.f32.mrf.mxu0
      %v1000 = vadd.f32 %v278, %v999
      %v1001 = vpop.f32.mrf.mxu0
      %v1002 = vadd.f32 %v282, %v1001
      %v1003 = vpop.f32.mrf.mxu0
      %v1004 = vadd.f32 %v278, %v1003
      %v1005 = vpop.f32.mrf.mxu0
      %v1006 = vadd.f32 %v282, %v1005
      %1007 = vmatprep.mubr.bf16.mxu0 %v520
      %1008 = vmatmul.mubr.bf16.gmra.mxu0 %v519
      %v1009 = vpop.f32.mrf.mxu0
      %v1010 = vadd.f32 %v278, %v1009
      %v1011 = vpop.f32.mrf.mxu0
      %v1012 = vadd.f32 %v282, %v1011
      %v1013 = vpop.f32.mrf.mxu0
      %v1014 = vadd.f32 %v278, %v1013
      %v1015 = vpop.f32.mrf.mxu0
      %v1016 = vadd.f32 %v282, %v1015
      %1017 = vmatprep.mubr.bf16.mxu0 %v522
      %1018 = vmatmul.mubr.bf16.gmra.mxu0 %v521
      %v1019 = vpop.f32.mrf.mxu0
      %v1020 = vadd.f32 %v278, %v1019
      %v1021 = vpop.f32.mrf.mxu0
      %v1022 = vadd.f32 %v282, %v1021
      %v1023 = vpop.f32.mrf.mxu0
      %v1024 = vadd.f32 %v278, %v1023
      %v1025 = vpop.f32.mrf.mxu0
      %v1026 = vadd.f32 %v282, %v1025
      %1027 = vmatprep.mubr.bf16.mxu0 %v524
      %1028 = vmatmul.mubr.bf16.gmra.mxu0 %v523
      %v1029 = vpop.f32.mrf.mxu0
      %v1030 = vadd.f32 %v278, %v1029
      %v1031 = vpop.f32.mrf.mxu0
      %v1032 = vadd.f32 %v282, %v1031
      %v1033 = vpop.f32.mrf.mxu0
      %v1034 = vadd.f32 %v278, %v1033
      %v1035 = vpop.f32.mrf.mxu0
      %v1036 = vadd.f32 %v282, %v1035
      %1037 = vmatprep.mubr.bf16.mxu0 %v526
      %1038 = vmatmul.mubr.bf16.gmra.mxu0 %v525
      %v1039 = vpop.f32.mrf.mxu0
      %v1040 = vadd.f32 %v278, %v1039
      %v1041 = vpop.f32.mrf.mxu0
      %v1042 = vadd.f32 %v282, %v1041
      %v1043 = vpop.f32.mrf.mxu0
      %v1044 = vadd.f32 %v278, %v1043
      %v1045 = vpop.f32.mrf.mxu0
      %v1046 = vadd.f32 %v282, %v1045
      %1047 = vmatprep.mubr.bf16.mxu0 %v528
      %1048 = vmatmul.mubr.bf16.gmra.mxu0 %v527
      %v1049 = vpop.f32.mrf.mxu0
      %v1050 = vadd.f32 %v278, %v1049
      %v1051 = vpop.f32.mrf.mxu0
      %v1052 = vadd.f32 %v282, %v1051
      %v1053 = vpop.f32.mrf.mxu0
      %v1054 = vadd.f32 %v278, %v1053
      %v1055 = vpop.f32.mrf.mxu0
      %v1056 = vadd.f32 %v282, %v1055
      %1057 = vmatprep.mubr.bf16.mxu0 %v530
      %1058 = vmatmul.mubr.bf16.gmra.mxu0 %v529
      %v1059 = vpop.f32.mrf.mxu0
      %v1060 = vadd.f32 %v278, %v1059
      %v1061 = vpop.f32.mrf.mxu0
      %v1062 = vadd.f32 %v282, %v1061
      %v1063 = vpop.f32.mrf.mxu0
      %v1064 = vadd.f32 %v278, %v1063
      %v1065 = vpop.f32.mrf.mxu0
      %v1066 = vadd.f32 %v282, %v1065
      %1067 = vmatprep.mubr.bf16.mxu0 %v532
      %1068 = vmatmul.mubr.bf16.gmra.mxu0 %v531
      %v1069 = vpop.f32.mrf.mxu0
      %v1070 = vadd.f32 %v278, %v1069
      %v1071 = vpop.f32.mrf.mxu0
      %v1072 = vadd.f32 %v282, %v1071
      %v1073 = vpop.f32.mrf.mxu0
      %v1074 = vadd.f32 %v278, %v1073
      %v1075 = vpop.f32.mrf.mxu0
      %v1076 = vadd.f32 %v282, %v1075
      %1077 = vmatprep.mubr.bf16.mxu0 %v534
      %1078 = vmatmul.mubr.bf16.gmra.mxu0 %v533
      %v1079 = vpop.f32.mrf.mxu0
      %v1080 = vadd.f32 %v278, %v1079
      %v1081 = vpop.f32.mrf.mxu0
      %v1082 = vadd.f32 %v282, %v1081
      %v1083 = vpop.f32.mrf.mxu0
      %v1084 = vadd.f32 %v278, %v1083
      %v1085 = vpop.f32.mrf.mxu0
      %v1086 = vadd.f32 %v282, %v1085
      %1087 = vmatprep.mubr.bf16.mxu0 %v536
      %1088 = vmatmul.mubr.bf16.gmra.mxu0 %v535
      %v1089 = vpop.f32.mrf.mxu0
      %v1090 = vadd.f32 %v278, %v1089
      %v1091 = vpop.f32.mrf.mxu0
      %v1092 = vadd.f32 %v282, %v1091
      %v1093 = vpop.f32.mrf.mxu0
      %v1094 = vadd.f32 %v278, %v1093
      %v1095 = vpop.f32.mrf.mxu0
      %v1096 = vadd.f32 %v282, %v1095
      %1097 = vmatprep.mubr.bf16.mxu0 %v538
      %1098 = vmatmul.mubr.bf16.gmra.mxu0 %v537
      %v1099 = vpop.f32.mrf.mxu0
      %v1100 = vadd.f32 %v278, %v1099
      %v1101 = vpop.f32.mrf.mxu0
      %v1102 = vadd.f32 %v282, %v1101
      %v1103 = vpop.f32.mrf.mxu0
      %v1104 = vadd.f32 %v278, %v1103
      %v1105 = vpop.f32.mrf.mxu0
      %v1106 = vadd.f32 %v282, %v1105
      %1107 = vmatprep.mubr.bf16.mxu0 %v540
      %1108 = vmatmul.mubr.bf16.gmra.mxu0 %v539
      %v1109 = vpop.f32.mrf.mxu0
      %v1110 = vadd.f32 %v278, %v1109
      %v1111 = vpop.f32.mrf.mxu0
      %v1112 = vadd.f32 %v282, %v1111
      %v1113 = vpop.f32.mrf.mxu0
      %v1114 = vadd.f32 %v278, %v1113
      %v1115 = vpop.f32.mrf.mxu0
      %v1116 = vadd.f32 %v282, %v1115
      %1117 = vdwg.mxu0
      %v1118 = vmax.f32 %v800, 0.0
      %v1119 = vmax.f32 %v802, 0.0
      %v1120 = vmax.f32 %v804, 0.0
      %v1121 = vmax.f32 %v806, 0.0
      %v1122 = vmax.f32 %v810, 0.0
      %v1123 = vmax.f32 %v812, 0.0
      %v1124 = vmax.f32 %v814, 0.0
      %v1125 = vmax.f32 %v816, 0.0
      %v1126 = vmax.f32 %v820, 0.0
      %v1127 = vmax.f32 %v822, 0.0
      %v1128 = vmax.f32 %v824, 0.0
      %v1129 = vmax.f32 %v826, 0.0
      %v1130 = vmax.f32 %v830, 0.0
      %v1131 = vmax.f32 %v832, 0.0
      %v1132 = vmax.f32 %v834, 0.0
      %v1133 = vmax.f32 %v836, 0.0
      %v1134 = vmax.f32 %v840, 0.0
      %v1135 = vmax.f32 %v842, 0.0
      %v1136 = vmax.f32 %v844, 0.0
      %v1137 = vmax.f32 %v846, 0.0
      %v1138 = vmax.f32 %v850, 0.0
      %v1139 = vmax.f32 %v852, 0.0
      %v1140 = vmax.f32 %v854, 0.0
      %v1141 = vmax.f32 %v856, 0.0
      %v1142 = vmax.f32 %v860, 0.0
      %v1143 = vmax.f32 %v862, 0.0
      %v1144 = vmax.f32 %v864, 0.0
      %v1145 = vmax.f32 %v866, 0.0
      %v1146 = vmax.f32 %v870, 0.0
      %v1147 = vmax.f32 %v872, 0.0
      %v1148 = vmax.f32 %v874, 0.0
      %v1149 = vmax.f32 %v876, 0.0
      %v1150 = vmax.f32 %v880, 0.0
      %v1151 = vmax.f32 %v882, 0.0
      %v1152 = vmax.f32 %v884, 0.0
      %v1153 = vmax.f32 %v886, 0.0
      %v1154 = vmax.f32 %v890, 0.0
      %v1155 = vmax.f32 %v892, 0.0
      %v1156 = vmax.f32 %v894, 0.0
      %v1157 = vmax.f32 %v896, 0.0
      %v1158 = vmax.f32 %v900, 0.0
      %v1159 = vmax.f32 %v902, 0.0
      %v1160 = vmax.f32 %v904, 0.0
      %v1161 = vmax.f32 %v906, 0.0
      %v1162 = vmax.f32 %v910, 0.0
      %v1163 = vmax.f32 %v912, 0.0
      %v1164 = vmax.f32 %v914, 0.0
      %v1165 = vmax.f32 %v916, 0.0
      %v1166 = vmax.f32 %v920, 0.0
      %v1167 = vmax.f32 %v922, 0.0
      %v1168 = vmax.f32 %v924, 0.0
      %v1169 = vmax.f32 %v926, 0.0
      %v1170 = vmax.f32 %v930, 0.0
      %v1171 = vmax.f32 %v932, 0.0
      %v1172 = vmax.f32 %v934, 0.0
      %v1173 = vmax.f32 %v936, 0.0
      %v1174 = vmax.f32 %v940, 0.0
      %v1175 = vmax.f32 %v942, 0.0
      %v1176 = vmax.f32 %v944, 0.0
      %v1177 = vmax.f32 %v946, 0.0
      %v1178 = vmax.f32 %v950, 0.0
      %v1179 = vmax.f32 %v952, 0.0
      %v1180 = vmax.f32 %v954, 0.0
      %v1181 = vmax.f32 %v956, 0.0
      %v1182 = vmax.f32 %v960, 0.0
      %v1183 = vmax.f32 %v962, 0.0
      %v1184 = vmax.f32 %v964, 0.0
      %v1185 = vmax.f32 %v966, 0.0
      %v1186 = vmax.f32 %v970, 0.0
      %v1187 = vmax.f32 %v972, 0.0
      %v1188 = vmax.f32 %v974, 0.0
      %v1189 = vmax.f32 %v976, 0.0
      %v1190 = vmax.f32 %v980, 0.0
      %v1191 = vmax.f32 %v982, 0.0
      %v1192 = vmax.f32 %v984, 0.0
      %v1193 = vmax.f32 %v986, 0.0
      %v1194 = vmax.f32 %v990, 0.0
      %v1195 = vmax.f32 %v992, 0.0
      %v1196 = vmax.f32 %v994, 0.0
      %v1197 = vmax.f32 %v996, 0.0
      %v1198 = vmax.f32 %v1000, 0.0
      %v1199 = vmax.f32 %v1002, 0.0
      %v1200 = vmax.f32 %v1004, 0.0
      %v1201 = vmax.f32 %v1006, 0.0
      %v1202 = vmax.f32 %v1010, 0.0
      %v1203 = vmax.f32 %v1012, 0.0
      %v1204 = vmax.f32 %v1014, 0.0
      %v1205 = vmax.f32 %v1016, 0.0
      %v1206 = vmax.f32 %v1020, 0.0
      %v1207 = vmax.f32 %v1022, 0.0
      %v1208 = vmax.f32 %v1024, 0.0
      %v1209 = vmax.f32 %v1026, 0.0
      %v1210 = vmax.f32 %v1030, 0.0
      %v1211 = vmax.f32 %v1032, 0.0
      %v1212 = vmax.f32 %v1034, 0.0
      %v1213 = vmax.f32 %v1036, 0.0
      %v1214 = vmax.f32 %v1040, 0.0
      %v1215 = vmax.f32 %v1042, 0.0
      %v1216 = vmax.f32 %v1044, 0.0
      %v1217 = vmax.f32 %v1046, 0.0
      %v1218 = vmax.f32 %v1050, 0.0
      %v1219 = vmax.f32 %v1052, 0.0
      %v1220 = vmax.f32 %v1054, 0.0
      %v1221 = vmax.f32 %v1056, 0.0
      %v1222 = vmax.f32 %v1060, 0.0
      %v1223 = vmax.f32 %v1062, 0.0
      %v1224 = vmax.f32 %v1064, 0.0
      %v1225 = vmax.f32 %v1066, 0.0
      %v1226 = vmax.f32 %v1070, 0.0
      %v1227 = vmax.f32 %v1072, 0.0
      %v1228 = vmax.f32 %v1074, 0.0
      %v1229 = vmax.f32 %v1076, 0.0
      %v1230 = vmax.f32 %v1080, 0.0
      %v1231 = vmax.f32 %v1082, 0.0
      %v1232 = vmax.f32 %v1084, 0.0
      %v1233 = vmax.f32 %v1086, 0.0
      %v1234 = vmax.f32 %v1090, 0.0
      %v1235 = vmax.f32 %v1092, 0.0
      %v1236 = vmax.f32 %v1094, 0.0
      %v1237 = vmax.f32 %v1096, 0.0
      %v1238 = vmax.f32 %v1100, 0.0
      %v1239 = vmax.f32 %v1102, 0.0
      %v1240 = vmax.f32 %v1104, 0.0
      %v1241 = vmax.f32 %v1106, 0.0
      %v1242 = vmax.f32 %v1110, 0.0
      %v1243 = vmax.f32 %v1112, 0.0
      %v1244 = vmax.f32 %v1114, 0.0
      %v1245 = vmax.f32 %v1116, 0.0
      %v1246 = vmax.f32 %v1118, %v1119
      %v1247 = vmax.f32 %v1120, %v1121
      %v1248 = vmax.f32 %v1122, %v1123
      %v1249 = vmax.f32 %v1124, %v1125
      %v1250 = vmax.f32 %v1126, %v1127
      %v1251 = vmax.f32 %v1128, %v1129
      %v1252 = vmax.f32 %v1130, %v1131
      %v1253 = vmax.f32 %v1132, %v1133
      %v1254 = vmax.f32 %v1134, %v1135
      %v1255 = vmax.f32 %v1136, %v1137
      %v1256 = vmax.f32 %v1138, %v1139
      %v1257 = vmax.f32 %v1140, %v1141
      %v1258 = vmax.f32 %v1142, %v1143
      %v1259 = vmax.f32 %v1144, %v1145
      %v1260 = vmax.f32 %v1146, %v1147
      %v1261 = vmax.f32 %v1148, %v1149
      %v1262 = vmax.f32 %v1150, %v1151
      %v1263 = vmax.f32 %v1152, %v1153
      %v1264 = vmax.f32 %v1154, %v1155
      %v1265 = vmax.f32 %v1156, %v1157
      %v1266 = vmax.f32 %v1158, %v1159
      %v1267 = vmax.f32 %v1160, %v1161
      %v1268 = vmax.f32 %v1162, %v1163
      %v1269 = vmax.f32 %v1164, %v1165
      %v1270 = vmax.f32 %v1166, %v1167
      %v1271 = vmax.f32 %v1168, %v1169
      %v1272 = vmax.f32 %v1170, %v1171
      %v1273 = vmax.f32 %v1172, %v1173
      %v1274 = vmax.f32 %v1174, %v1175
      %v1275 = vmax.f32 %v1176, %v1177
      %v1276 = vmax.f32 %v1178, %v1179
      %v1277 = vmax.f32 %v1180, %v1181
      %v1278 = vmax.f32 %v1182, %v1183
      %v1279 = vmax.f32 %v1184, %v1185
      %v1280 = vmax.f32 %v1186, %v1187
      %v1281 = vmax.f32 %v1188, %v1189
      %v1282 = vmax.f32 %v1190, %v1191
      %v1283 = vmax.f32 %v1192, %v1193
      %v1284 = vmax.f32 %v1194, %v1195
      %v1285 = vmax.f32 %v1196, %v1197
      %v1286 = vmax.f32 %v1198, %v1199
      %v1287 = vmax.f32 %v1200, %v1201
      %v1288 = vmax.f32 %v1202, %v1203
      %v1289 = vmax.f32 %v1204, %v1205
      %v1290 = vmax.f32 %v1206, %v1207
      %v1291 = vmax.f32 %v1208, %v1209
      %v1292 = vmax.f32 %v1210, %v1211
      %v1293 = vmax.f32 %v1212, %v1213
      %v1294 = vmax.f32 %v1214, %v1215
      %v1295 = vmax.f32 %v1216, %v1217
      %v1296 = vmax.f32 %v1218, %v1219
      %v1297 = vmax.f32 %v1220, %v1221
      %v1298 = vmax.f32 %v1222, %v1223
      %v1299 = vmax.f32 %v1224, %v1225
      %v1300 = vmax.f32 %v1226, %v1227
      %v1301 = vmax.f32 %v1228, %v1229
      %v1302 = vmax.f32 %v1230, %v1231
      %v1303 = vmax.f32 %v1232, %v1233
      %v1304 = vmax.f32 %v1234, %v1235
      %v1305 = vmax.f32 %v1236, %v1237
      %v1306 = vmax.f32 %v1238, %v1239
      %v1307 = vmax.f32 %v1240, %v1241
      %v1308 = vmax.f32 %v1242, %v1243
      %v1309 = vmax.f32 %v1244, %v1245
      %v1310 = vmax.f32 %v1246, %v1248
      %v1311 = vmax.f32 %v1247, %v1249
      %v1312 = vmax.f32 %v1250, %v1252
      %v1313 = vmax.f32 %v1251, %v1253
      %v1314 = vmax.f32 %v1254, %v1256
      %v1315 = vmax.f32 %v1255, %v1257
      %v1316 = vmax.f32 %v1258, %v1260
      %v1317 = vmax.f32 %v1259, %v1261
      %v1318 = vmax.f32 %v1262, %v1264
      %v1319 = vmax.f32 %v1263, %v1265
      %v1320 = vmax.f32 %v1266, %v1268
      %v1321 = vmax.f32 %v1267, %v1269
      %v1322 = vmax.f32 %v1270, %v1272
      %v1323 = vmax.f32 %v1271, %v1273
      %v1324 = vmax.f32 %v1274, %v1276
      %v1325 = vmax.f32 %v1275, %v1277
      %v1326 = vmax.f32 %v1278, %v1280
      %v1327 = vmax.f32 %v1279, %v1281
      %v1328 = vmax.f32 %v1282, %v1284
      %v1329 = vmax.f32 %v1283, %v1285
      %v1330 = vmax.f32 %v1286, %v1288
      %v1331 = vmax.f32 %v1287, %v1289
      %v1332 = vmax.f32 %v1290, %v1292
      %v1333 = vmax.f32 %v1291, %v1293
      %v1334 = vmax.f32 %v1294, %v1296
      %v1335 = vmax.f32 %v1295, %v1297
      %v1336 = vmax.f32 %v1298, %v1300
      %v1337 = vmax.f32 %v1299, %v1301
      %v1338 = vmax.f32 %v1302, %v1304
      %v1339 = vmax.f32 %v1303, %v1305
      %v1340 = vmax.f32 %v1306, %v1308
      %v1341 = vmax.f32 %v1307, %v1309
      %v1342 = vpack.c.bf16 %v1311, %v1310
      %v1343 = vpack.c.bf16 %v1313, %v1312
      %v1344 = vpack.c.bf16 %v1315, %v1314
      %v1345 = vpack.c.bf16 %v1317, %v1316
      %v1346 = vpack.c.bf16 %v1319, %v1318
      %v1347 = vpack.c.bf16 %v1321, %v1320
      %v1348 = vpack.c.bf16 %v1323, %v1322
      %v1349 = vpack.c.bf16 %v1325, %v1324
      %v1350 = vpack.c.bf16 %v1327, %v1326
      %v1351 = vpack.c.bf16 %v1329, %v1328
      %v1352 = vpack.c.bf16 %v1331, %v1330
      %v1353 = vpack.c.bf16 %v1333, %v1332
      %v1354 = vpack.c.bf16 %v1335, %v1334
      %v1355 = vpack.c.bf16 %v1337, %v1336
      %v1356 = vpack.c.bf16 %v1339, %v1338
      %v1357 = vpack.c.bf16 %v1341, %v1340
      %v1374 = vunpack.c.l.b16 %v1342
      %v1375 = vunpack.c.h.b16 %v1342
      %v1376 = vunpack.c.l.b16 %v1343
      %v1377 = vunpack.c.h.b16 %v1343
      %v1378 = vunpack.c.l.b16 %v1344
      %v1379 = vunpack.c.h.b16 %v1344
      %v1380 = vunpack.c.l.b16 %v1345
      %v1381 = vunpack.c.h.b16 %v1345
      %v1382 = vunpack.c.l.b16 %v1346
      %v1383 = vunpack.c.h.b16 %v1346
      %v1384 = vunpack.c.l.b16 %v1347
      %v1385 = vunpack.c.h.b16 %v1347
      %v1386 = vunpack.c.l.b16 %v1348
      %v1387 = vunpack.c.h.b16 %v1348
      %v1388 = vunpack.c.l.b16 %v1349
      %v1389 = vunpack.c.h.b16 %v1349
      %v1390 = vunpack.c.l.b16 %v1350
      %v1391 = vunpack.c.h.b16 %v1350
      %v1392 = vunpack.c.l.b16 %v1351
      %v1393 = vunpack.c.h.b16 %v1351
      %v1394 = vunpack.c.l.b16 %v1352
      %v1395 = vunpack.c.h.b16 %v1352
      %v1396 = vunpack.c.l.b16 %v1353
      %v1397 = vunpack.c.h.b16 %v1353
      %v1398 = vunpack.c.l.b16 %v1354
      %v1399 = vunpack.c.h.b16 %v1354
      %v1400 = vunpack.c.l.b16 %v1355
      %v1401 = vunpack.c.h.b16 %v1355
      %v1402 = vunpack.c.l.b16 %v1356
      %v1403 = vunpack.c.h.b16 %v1356
      %v1404 = vunpack.c.l.b16 %v1357
      %v1405 = vunpack.c.h.b16 %v1357
      %v1406 = vpack.c.b16 %v1374, %v1374
      %v1407 = vpack.c.b16 %v1375, %v1375
      %v1408 = vpack.c.b16 %v1376, %v1376
      %v1409 = vpack.c.b16 %v1377, %v1377
      %v1410 = vpack.c.b16 %v1378, %v1378
      %v1411 = vpack.c.b16 %v1379, %v1379
      %v1412 = vpack.c.b16 %v1380, %v1380
      %v1413 = vpack.c.b16 %v1381, %v1381
      %v1414 = vpack.c.b16 %v1382, %v1382
      %v1415 = vpack.c.b16 %v1383, %v1383
      %v1416 = vpack.c.b16 %v1384, %v1384
      %v1417 = vpack.c.b16 %v1385, %v1385
      %v1418 = vpack.c.b16 %v1386, %v1386
      %v1419 = vpack.c.b16 %v1387, %v1387
      %v1420 = vpack.c.b16 %v1388, %v1388
      %v1421 = vpack.c.b16 %v1389, %v1389
      %v1422 = vpack.c.b16 %v1390, %v1390
      %v1423 = vpack.c.b16 %v1391, %v1391
      %v1424 = vpack.c.b16 %v1392, %v1392
      %v1425 = vpack.c.b16 %v1393, %v1393
      %v1426 = vpack.c.b16 %v1394, %v1394
      %v1427 = vpack.c.b16 %v1395, %v1395
      %v1428 = vpack.c.b16 %v1396, %v1396
      %v1429 = vpack.c.b16 %v1397, %v1397
      %v1430 = vpack.c.b16 %v1398, %v1398
      %v1431 = vpack.c.b16 %v1399, %v1399
      %v1432 = vpack.c.b16 %v1400, %v1400
      %v1433 = vpack.c.b16 %v1401, %v1401
      %v1434 = vpack.c.b16 %v1402, %v1402
      %v1435 = vpack.c.b16 %v1403, %v1403
      %v1436 = vpack.c.b16 %v1404, %v1404
      %v1437 = vpack.c.b16 %v1405, %v1405
      %1470 = vst [vmem:[%s175] sm:$0xf] %v1406
      %1471 = vst [vmem:[%s175 + $0x4] sm:$0xf] %v1407
      %1472 = vst [vmem:[%s175 + $0x8] sm:$0xf] %v1408
      %1473 = vst [vmem:[%s175 + $0xc] sm:$0xf] %v1409
      %1474 = vst [vmem:[%s175 + $0x10] sm:$0xf] %v1410
      %1475 = vst [vmem:[%s175 + $0x14] sm:$0xf] %v1411
      %1476 = vst [vmem:[%s175 + $0x18] sm:$0xf] %v1412
      %1477 = vst [vmem:[%s175 + $0x1c] sm:$0xf] %v1413
      %1478 = vst [vmem:[%s175 + $0x20] sm:$0xf] %v1414
      %1479 = vst [vmem:[%s175 + $0x24] sm:$0xf] %v1415
      %1480 = vst [vmem:[%s175 + $0x28] sm:$0xf] %v1416
      %1481 = vst [vmem:[%s175 + $0x2c] sm:$0xf] %v1417
      %1482 = vst [vmem:[%s175 + $0x30] sm:$0xf] %v1418
      %1483 = vst [vmem:[%s175 + $0x34] sm:$0xf] %v1419
      %1484 = vst [vmem:[%s175 + $0x38] sm:$0xf] %v1420
      %1485 = vst [vmem:[%s175 + $0x3c] sm:$0xf] %v1421
      %1486 = vst [vmem:[%s175 + $0x40] sm:$0xf] %v1422
      %1487 = vst [vmem:[%s175 + $0x44] sm:$0xf] %v1423
      %1488 = vst [vmem:[%s175 + $0x48] sm:$0xf] %v1424
      %1489 = vst [vmem:[%s175 + $0x4c] sm:$0xf] %v1425
      %1490 = vst [vmem:[%s175 + $0x50] sm:$0xf] %v1426
      %1491 = vst [vmem:[%s175 + $0x54] sm:$0xf] %v1427
      %1492 = vst [vmem:[%s175 + $0x58] sm:$0xf] %v1428
      %1493 = vst [vmem:[%s175 + $0x5c] sm:$0xf] %v1429
      %1494 = vst [vmem:[%s175 + $0x60] sm:$0xf] %v1430
      %1495 = vst [vmem:[%s175 + $0x64] sm:$0xf] %v1431
      %1496 = vst [vmem:[%s175 + $0x68] sm:$0xf] %v1432
      %1497 = vst [vmem:[%s175 + $0x6c] sm:$0xf] %v1433
      %1498 = vst [vmem:[%s175 + $0x70] sm:$0xf] %v1434
      %1499 = vst [vmem:[%s175 + $0x74] sm:$0xf] %v1435
      %1500 = vst [vmem:[%s175 + $0x78] sm:$0xf] %v1436
      %1501 = vst [vmem:[%s175 + $0x7c] sm:$0xf] %v1437
      %s1502 = smul.u32 32, %s14
      %p1503 = scmp.lt.s32.totalorder %s1502, 63
      %s1504 = scalar_select %p1503, %s1502, 63
      %s1505 = smul.addr %s1504, 4
      %s1506 = scalar_lea.vmem %s3, %s1505
      // Predicated region
      $region33: #{cnn_femnist_forward.3} parent=31 // pred_check
        %p1507 = pneg %p100
      $region34: #{cnn_femnist_forward.3} parent=31 // pred_check_branch
        %1509 = sbr.rel (%p1507) target = $region36
      $region35: #{cnn_femnist_forward.3} parent=31 // pred_region
        %s1510 = smul.u32 32, %s14
      $region36: #{cnn_femnist_forward.3} parent=31 // pred_fallthru
        _
    $region32: #{cnn_femnist_forward.3} parent=5 // pred_fallthru
      _
    %p1511 = scmp.le.s32.totalorder 2, %s9
    // Predicated region
    $region37: #{cnn_femnist_forward.3} parent=5 // pred_check
      %p1512 = pneg %p1511
    $region38: #{cnn_femnist_forward.3} parent=5 // pred_check_branch
      %1514 = sbr.rel (%p1512) target = $region40
    $region39: #{cnn_femnist_forward.3} parent=5 // pred_region
      %s1515 = ssub.s32 %s9, 2
      // Predicated region
      $region41: #{cnn_femnist_forward.3} parent=39 // pred_check
        %p1516 = pneg %p106
      $region42: #{cnn_femnist_forward.3} parent=39 // pred_check_branch
        %1518 = sbr.rel (%p1516) target = $region44
      $region43: #{cnn_femnist_forward.3} parent=39 // pred_region
        %s1519 = smul.u32 32, %s15
        %p1520 = scmp.lt.s32.totalorder %s1519, 63
        %s1521 = scalar_select %p1520, %s1519, 63
        %s1522 = smul.addr %s1521, 4
        %s1523 = scalar_lea.vmem %s3, %s1522
      $region44: #{cnn_femnist_forward.3} parent=39 // pred_fallthru
        _
    $region40: #{cnn_femnist_forward.3} parent=5 // pred_fallthru
      _
  $region6: #{cnn_femnist_forward.3} parent=0 // loop_footer
    %s13 = sadd.s32 1, %s9
  $region7: #{cnn_femnist_forward.3} parent=0 // loop_footer_branch
    %8 = sbr.rel target = $region3
  $region8: #{cnn_femnist_forward.3} parent=0 // loop_exit
    _

// kernel: cnn_femnist_forward.4
$region0: #{cnn_femnist_forward.4}
  #allocation0 [shape = 'u32[]', space=smem, size = 0x4, offset = 0x4, fixed_abs, tag = 'smem constant byte address 0x4 - core index']
  #allocation1 [shape = 'u32[144,128]{1,0:T(1,128)}', space=vmem, size = 0x12000, scoped, tag = 'internal scratch']
  %s0 = inlined_call_operand.vmem [shape: bf16[256,3328], index: 0, kind: input, shape index: {}]
  %s1 = inlined_call_operand.vmem [shape: bf16[3328,256], index: 1, kind: input, shape index: {}]
  %s2 = inlined_call_operand.vmem [shape: f32[1,256], index: 2, kind: input, shape index: {}]
  %s3 = inlined_call_operand.vmem [shape: bf16[128,128], index: 3, kind: output, shape index: {}]
  %s4 = sld [smem:[#allocation0]]
  $region45: #{cnn_femnist_forward.4} parent=0
    _
  %s6 = ssub.s32 1, %s4
  %s7 = scalar_select 0, %s6, %s4
  loop: start=0, step=1, limit=4
  $region2: #{cnn_femnist_forward.4} parent=0 // loop_pre_header
    _
  $region3: #{cnn_femnist_forward.4} parent=0 // loop_header
    %s9 = sphi 0, %s13
    %p10 = scmp.ge.s32.totalorder %s9, 4
    %s19 = sphi 0, %s21
    %s22 = sphi 0, %s19
    %s23 = sphi 0, %s22
    %s39 = sphi 0, %s23
    %s43 = sphi 0, %s43
    %s45 = sphi 0, %s43
    %s46 = sphi 0, %s45
    %s60 = sphi 0, %s46
    %s64 = sphi 0, %s64
    %s66 = sphi 0, %s64
    %s67 = sphi 0, %s66
    %s81 = sphi 0, %s67
    %s87 = sphi 0, %s89
    %s90 = sphi 0, %s87
    %s91 = sphi 0, %s90
    %s107 = sphi 0, %s91
  $region4: #{cnn_femnist_forward.4} parent=0 // loop_header_branch
    %12 = sbr.rel (%p10) target = $region8
  $region5: #{cnn_femnist_forward.4} parent=0 // loop_body
    %s14 = ssub.s32 %s9, 1
    %s15 = ssub.s32 %s9, 2
    %s16 = sadd.s32 %s9, 1
    %s17 = ssub.s32 %s9, %s16
    %p18 = scmp.eq.s32.totalorder %s17, 0
    %s20 = sadd.s32 %s19, 1
    %s21 = scalar_select %p18, %s19, %s20
    %p24 = pneg %p18
    %p25 = scmp.eq.s32.totalorder %s9, 1
    %p26 = por %p24, %p25
    %p27 = scmp.ne.s32.totalorder %s19, %s22
    %p28 = scmp.eq.s32.totalorder %s9, 0
    %p29 = por %p27, %p28
    %p30 = scmp.ne.s32.totalorder %s19, %s22
    %p31 = scmp.eq.s32.totalorder %s14, 1
    %p32 = por %p30, %p31
    %p33 = scmp.ne.s32.totalorder %s22, %s23
    %p34 = scmp.eq.s32.totalorder %s14, 0
    %p35 = por %p33, %p34
    %p36 = scmp.ne.s32.totalorder %s22, %s23
    %p37 = scmp.eq.s32.totalorder %s15, 1
    %p38 = por %p36, %p37
    %p40 = scmp.ne.s32.totalorder %s23, %s39
    %p41 = scmp.eq.s32.totalorder %s15, 0
    %p42 = por %p40, %p41
    %s44 = sadd.s32 %s43, 1
    %p47 = scmp.eq.s32.totalorder %s9, 1
    %p48 = scmp.ne.s32.totalorder %s43, %s45
    %p49 = scmp.eq.s32.totalorder %s9, 0
    %p50 = por %p48, %p49
    %p51 = scmp.ne.s32.totalorder %s43, %s45
    %p52 = scmp.eq.s32.totalorder %s14, 1
    %p53 = por %p51, %p52
    %p54 = scmp.ne.s32.totalorder %s45, %s46
    %p55 = scmp.eq.s32.totalorder %s14, 0
    %p56 = por %p54, %p55
    %p57 = scmp.ne.s32.totalorder %s45, %s46
    %p58 = scmp.eq.s32.totalorder %s15, 1
    %p59 = por %p57, %p58
    %p61 = scmp.ne.s32.totalorder %s46, %s60
    %p62 = scmp.eq.s32.totalorder %s15, 0
    %p63 = por %p61, %p62
    %s65 = sadd.s32 %s64, 1
    %p68 = scmp.eq.s32.totalorder %s9, 1
    %p69 = scmp.ne.s32.totalorder %s64, %s66
    %p70 = scmp.eq.s32.totalorder %s9, 0
    %p71 = por %p69, %p70
    %p72 = scmp.ne.s32.totalorder %s64, %s66
    %p73 = scmp.eq.s32.totalorder %s14, 1
    %p74 = por %p72, %p73
    %p75 = scmp.ne.s32.totalorder %s66, %s67
    %p76 = scmp.eq.s32.totalorder %s14, 0
    %p77 = por %p75, %p76
    %p78 = scmp.ne.s32.totalorder %s66, %s67
    %p79 = scmp.eq.s32.totalorder %s15, 1
    %p80 = por %p78, %p79
    %p82 = scmp.ne.s32.totalorder %s67, %s81
    %p83 = scmp.eq.s32.totalorder %s15, 0
    %p84 = por %p82, %p83
    %s85 = ssub.s32 %s9, %s16
    %p86 = scmp.eq.s32.totalorder %s85, 0
    %s88 = sadd.s32 %s87, 1
    %s89 = scalar_select %p86, %s87, %s88
    %p92 = pneg %p86
    %p93 = scmp.eq.s32.totalorder %s9, 1
    %p94 = por %p92, %p93
    %p95 = scmp.ne.s32.totalorder %s87, %s90
    %p96 = scmp.eq.s32.totalorder %s9, 0
    %p97 = por %p95, %p96
    %p98 = scmp.ne.s32.totalorder %s87, %s90
    %p99 = scmp.eq.s32.totalorder %s14, 1
    %p100 = por %p98, %p99
    %p101 = scmp.ne.s32.totalorder %s90, %s91
    %p102 = scmp.eq.s32.totalorder %s14, 0
    %p103 = por %p101, %p102
    %p104 = scmp.ne.s32.totalorder %s90, %s91
    %p105 = scmp.eq.s32.totalorder %s15, 1
    %p106 = por %p104, %p105
    %p108 = scmp.ne.s32.totalorder %s91, %s107
    %p109 = scmp.eq.s32.totalorder %s15, 0
    %p110 = por %p108, %p109
    %p111 = scmp.le.s32.totalorder 1, %s9
    %p112 = scmp.lt.s32.totalorder %s9, 3
    %p113 = pnand %p111, %p112
    %p114 = pneg %p113
    // Predicated region
    $region9: #{cnn_femnist_forward.4} parent=5 // pred_check
      _
    $region10: #{cnn_femnist_forward.4} parent=5 // pred_check_branch
      %116 = sbr.rel (%p113) target = $region12
    $region11: #{cnn_femnist_forward.4} parent=5 // pred_region
      %s117 = ssub.s32 %s9, 1
      // Predicated region
      $region13: #{cnn_femnist_forward.4} parent=11 // pred_check
        %p118 = pneg %p56
      $region14: #{cnn_femnist_forward.4} parent=11 // pred_check_branch
        %120 = sbr.rel (%p118) target = $region16
      $region15: #{cnn_femnist_forward.4} parent=11 // pred_region
        _
      $region16: #{cnn_femnist_forward.4} parent=11 // pred_fallthru
        _
      // Predicated region
      $region17: #{cnn_femnist_forward.4} parent=11 // pred_check
        %p121 = pneg %p77
      $region18: #{cnn_femnist_forward.4} parent=11 // pred_check_branch
        %123 = sbr.rel (%p121) target = $region20
      $region19: #{cnn_femnist_forward.4} parent=11 // pred_region
        _
      $region20: #{cnn_femnist_forward.4} parent=11 // pred_fallthru
        _
    $region12: #{cnn_femnist_forward.4} parent=5 // pred_fallthru
      _
    %p124 = scmp.lt.s32.totalorder %s9, 2
    // Predicated region
    $region21: #{cnn_femnist_forward.4} parent=5 // pred_check
      %p125 = pneg %p124
    $region22: #{cnn_femnist_forward.4} parent=5 // pred_check_branch
      %127 = sbr.rel (%p125) target = $region24
    $region23: #{cnn_femnist_forward.4} parent=5 // pred_region
      // Predicated region
      $region25: #{cnn_femnist_forward.4} parent=23 // pred_check
        %p128 = pneg %p29
      $region26: #{cnn_femnist_forward.4} parent=23 // pred_check_branch
        %130 = sbr.rel (%p128) target = $region28
      $region27: #{cnn_femnist_forward.4} parent=23 // pred_region
        %s131 = smul.u32 16, %s9
        %p132 = scmp.lt.s32.totalorder %s131, 31
        %s133 = scalar_select %p132, %s131, 31
        %s134 = smul.addr %s133, 26
        %s135 = smul.addr %s134, 4
        %s136 = scalar_lea.vmem %s0, %s135
        %s137 = smul.u32 16, %s9
      $region28: #{cnn_femnist_forward.4} parent=23 // pred_fallthru
        _
    $region24: #{cnn_femnist_forward.4} parent=5 // pred_fallthru
      _
    %p138 = scmp.le.s32.totalorder 1, %s9
    %p139 = scmp.lt.s32.totalorder %s9, 3
    %p140 = pnand %p138, %p139
    %p141 = pneg %p140
    // Predicated region
    $region29: #{cnn_femnist_forward.4} parent=5 // pred_check
      _
    $region30: #{cnn_femnist_forward.4} parent=5 // pred_check_branch
      %143 = sbr.rel (%p140) target = $region32
    $region31: #{cnn_femnist_forward.4} parent=5 // pred_region
      %s144 = ssub.s32 %s9, 1
      %s145 = smul.u32 16, %s14
      %p146 = scmp.lt.s32.totalorder %s145, 31
      %s147 = scalar_select %p146, %s145, 31
      %s148 = smul.addr %s147, 26
      %s149 = smul.addr %s148, 4
      %s150 = scalar_lea.vmem %s0, %s149
      %p151 = pneg %p35
      %p152 = pneg %p32
      %p153 = pneg %p56
      %p154 = pneg %p53
      %p155 = pneg %p77
      %p156 = pneg %p74
      %p157 = pneg %p103
      %p158 = pneg %p100
      %s159 = smul.u32 8, %s14
      %p160 = scmp.lt.s32.totalorder %s159, 15
      %s161 = scalar_select %p160, %s159, 15
      %s162 = smul.addr %s161, 4
      %s163 = scalar_lea.vmem %s3, %s162
      %s164 = smul.u32 16, %s14
      %p165 = scmp.lt.s32.totalorder %s164, 31
      %s166 = scalar_select %p165, %s164, 31
      %s167 = smul.addr %s166, 26
      %s168 = smul.addr %s167, 4
      %s169 = scalar_lea.vmem %s0, %s168
      %s170 = smul.u32 16, %s14
      %s171 = smul.u32 8, %s14
      %p172 = scmp.lt.s32.totalorder %s171, 15
      %s173 = scalar_select %p172, %s171, 15
      %s174 = smul.addr %s173, 4
      %s175 = scalar_lea.vmem %s3, %s174
      %s176 = smul.u32 8, %s14
      %v177 = vld [vmem:[%s169] sm:$0xff]
      %v178 = vld [vmem:[%s169 + $0x8] sm:$0xff]
      %v179 = vld [vmem:[%s169 + $0x10] sm:$0xff]
      %v180 = vld [vmem:[%s169 + $0x18] sm:$0xff]
      %v181 = vld [vmem:[%s169 + $0x20] sm:$0xff]
      %v182 = vld [vmem:[%s169 + $0x28] sm:$0xff]
      %v183 = vld [vmem:[%s169 + $0x30] sm:$0xff]
      %v184 = vld [vmem:[%s169 + $0x38] sm:$0xff]
      %v185 = vld [vmem:[%s169 + $0x40] sm:$0xff]
      %v186 = vld [vmem:[%s169 + $0x48] sm:$0xff]
      %v187 = vld [vmem:[%s169 + $0x50] sm:$0xff]
      %v188 = vld [vmem:[%s169 + $0x58] sm:$0xff]
      %v189 = vld [vmem:[%s169 + $0x60] sm:$0xff]
      %v190 = vld [vmem:[%s169 + $0x68] sm:$0xff]
      %v191 = vld [vmem:[%s169 + $0x70] sm:$0xff]
      %v192 = vld [vmem:[%s169 + $0x78] sm:$0xff]
      %v193 = vld [vmem:[%s169 + $0x80] sm:$0xff]
      %v194 = vld [vmem:[%s169 + $0x88] sm:$0xff]
      %v195 = vld [vmem:[%s169 + $0x90] sm:$0xff]
      %v196 = vld [vmem:[%s169 + $0x98] sm:$0xff]
      %v197 = vld [vmem:[%s169 + $0xa0] sm:$0xff]
      %v198 = vld [vmem:[%s169 + $0xa8] sm:$0xff]
      %v199 = vld [vmem:[%s169 + $0xb0] sm:$0xff]
      %v200 = vld [vmem:[%s169 + $0xb8] sm:$0xff]
      %v201 = vld [vmem:[%s169 + $0xc0] sm:$0xff]
      %v202 = vld [vmem:[%s169 + $0xc8] sm:$0xff]
      %v203 = vld [vmem:[%s169 + $0xd0] sm:$0xff]
      %v204 = vld [vmem:[%s169 + $0xd8] sm:$0xff]
      %v205 = vld [vmem:[%s169 + $0xe0] sm:$0xff]
      %v206 = vld [vmem:[%s169 + $0xe8] sm:$0xff]
      %v207 = vld [vmem:[%s169 + $0xf0] sm:$0xff]
      %v208 = vld [vmem:[%s169 + $0xf8] sm:$0xff]
      %v209 = vld [vmem:[%s169 + $0x100] sm:$0xff]
      %v210 = vld [vmem:[%s169 + $0x108] sm:$0xff]
      %v211 = vld [vmem:[%s169 + $0x110] sm:$0xff]
      %v212 = vld [vmem:[%s169 + $0x118] sm:$0xff]
      %v213 = vld [vmem:[%s169 + $0x120] sm:$0xff]
      %v214 = vld [vmem:[%s169 + $0x128] sm:$0xff]
      %v215 = vld [vmem:[%s169 + $0x130] sm:$0xff]
      %v216 = vld [vmem:[%s169 + $0x138] sm:$0xff]
      %v217 = vld [vmem:[%s169 + $0x140] sm:$0xff]
      %v218 = vld [vmem:[%s169 + $0x148] sm:$0xff]
      %v219 = vld [vmem:[%s169 + $0x150] sm:$0xff]
      %v220 = vld [vmem:[%s169 + $0x158] sm:$0xff]
      %v221 = vld [vmem:[%s169 + $0x160] sm:$0xff]
      %v222 = vld [vmem:[%s169 + $0x168] sm:$0xff]
      %v223 = vld [vmem:[%s169 + $0x170] sm:$0xff]
      %v224 = vld [vmem:[%s169 + $0x178] sm:$0xff]
      %v225 = vld [vmem:[%s169 + $0x180] sm:$0xff]
      %v226 = vld [vmem:[%s169 + $0x188] sm:$0xff]
      %v227 = vld [vmem:[%s169 + $0x190] sm:$0xff]
      %v228 = vld [vmem:[%s169 + $0x198] sm:$0xff]
      %v229 = vld [vmem:[%s169 + $0x1a0] sm:$0xff]
      %v230 = vld [vmem:[%s169 + $0x1a8] sm:$0xff]
      %v231 = vld [vmem:[%s169 + $0x1b0] sm:$0xff]
      %v232 = vld [vmem:[%s169 + $0x1b8] sm:$0xff]
      %v233 = vld [vmem:[%s169 + $0x1c0] sm:$0xff]
      %v234 = vld [vmem:[%s169 + $0x1c8] sm:$0xff]
      %v235 = vld [vmem:[%s169 + $0x1d0] sm:$0xff]
      %v236 = vld [vmem:[%s169 + $0x1d8] sm:$0xff]
      %v237 = vld [vmem:[%s169 + $0x1e0] sm:$0xff]
      %v238 = vld [vmem:[%s169 + $0x1e8] sm:$0xff]
      %v239 = vld [vmem:[%s169 + $0x1f0] sm:$0xff]
      %v240 = vld [vmem:[%s169 + $0x1f8] sm:$0xff]
      %v241 = vld [vmem:[%s169 + $0x200] sm:$0xff]
      %v242 = vld [vmem:[%s169 + $0x208] sm:$0xff]
      %v243 = vld [vmem:[%s169 + $0x210] sm:$0xff]
      %v244 = vld [vmem:[%s169 + $0x218] sm:$0xff]
      %v245 = vld [vmem:[%s169 + $0x220] sm:$0xff]
      %v246 = vld [vmem:[%s169 + $0x228] sm:$0xff]
      %v247 = vld [vmem:[%s169 + $0x230] sm:$0xff]
      %v248 = vld [vmem:[%s169 + $0x238] sm:$0xff]
      %v249 = vld [vmem:[%s169 + $0x240] sm:$0xff]
      %v250 = vld [vmem:[%s169 + $0x248] sm:$0xff]
      %v251 = vld [vmem:[%s169 + $0x250] sm:$0xff]
      %v252 = vld [vmem:[%s169 + $0x258] sm:$0xff]
      %v253 = vld [vmem:[%s169 + $0x260] sm:$0xff]
      %v254 = vld [vmem:[%s169 + $0x268] sm:$0xff]
      %v255 = vld [vmem:[%s169 + $0x270] sm:$0xff]
      %v256 = vld [vmem:[%s169 + $0x278] sm:$0xff]
      %v257 = vld [vmem:[%s169 + $0x280] sm:$0xff]
      %v258 = vld [vmem:[%s169 + $0x288] sm:$0xff]
      %v259 = vld [vmem:[%s169 + $0x290] sm:$0xff]
      %v260 = vld [vmem:[%s169 + $0x298] sm:$0xff]
      %v261 = vld [vmem:[%s169 + $0x2a0] sm:$0xff]
      %v262 = vld [vmem:[%s169 + $0x2a8] sm:$0xff]
      %v263 = vld [vmem:[%s169 + $0x2b0] sm:$0xff]
      %v264 = vld [vmem:[%s169 + $0x2b8] sm:$0xff]
      %v265 = vld [vmem:[%s169 + $0x2c0] sm:$0xff]
      %v266 = vld [vmem:[%s169 + $0x2c8] sm:$0xff]
      %v267 = vld [vmem:[%s169 + $0x2d0] sm:$0xff]
      %v268 = vld [vmem:[%s169 + $0x2d8] sm:$0xff]
      %v269 = vld [vmem:[%s169 + $0x2e0] sm:$0xff]
      %v270 = vld [vmem:[%s169 + $0x2e8] sm:$0xff]
      %v271 = vld [vmem:[%s169 + $0x2f0] sm:$0xff]
      %v272 = vld [vmem:[%s169 + $0x2f8] sm:$0xff]
      %v273 = vld [vmem:[%s169 + $0x300] sm:$0xff]
      %v274 = vld [vmem:[%s169 + $0x308] sm:$0xff]
      %v275 = vld [vmem:[%s169 + $0x310] sm:$0xff]
      %v276 = vld [vmem:[%s169 + $0x318] sm:$0xff]
      %v277 = vld [vmem:[%s169 + $0x320] sm:$0xff]
      %v278 = vld [vmem:[%s169 + $0x328] sm:$0xff]
      %v279 = vld [vmem:[%s169 + $0x330] sm:$0xff]
      %v280 = vld [vmem:[%s169 + $0x338] sm:$0xff]
      %v281 = vld [vmem:[%s169 + $0x340] sm:$0xff]
      %v282 = vld [vmem:[%s169 + $0x348] sm:$0xff]
      %v283 = vld [vmem:[%s169 + $0x350] sm:$0xff]
      %v284 = vld [vmem:[%s169 + $0x358] sm:$0xff]
      %v285 = vld [vmem:[%s169 + $0x360] sm:$0xff]
      %v286 = vld [vmem:[%s169 + $0x368] sm:$0xff]
      %v287 = vld [vmem:[%s169 + $0x370] sm:$0xff]
      %v288 = vld [vmem:[%s169 + $0x378] sm:$0xff]
      %v289 = vld [vmem:[%s169 + $0x380] sm:$0xff]
      %v290 = vld [vmem:[%s169 + $0x388] sm:$0xff]
      %v291 = vld [vmem:[%s169 + $0x390] sm:$0xff]
      %v292 = vld [vmem:[%s169 + $0x398] sm:$0xff]
      %v293 = vld [vmem:[%s169 + $0x3a0] sm:$0xff]
      %v294 = vld [vmem:[%s169 + $0x3a8] sm:$0xff]
      %v295 = vld [vmem:[%s169 + $0x3b0] sm:$0xff]
      %v296 = vld [vmem:[%s169 + $0x3b8] sm:$0xff]
      %v297 = vld [vmem:[%s169 + $0x3c0] sm:$0xff]
      %v298 = vld [vmem:[%s169 + $0x3c8] sm:$0xff]
      %v299 = vld [vmem:[%s169 + $0x3d0] sm:$0xff]
      %v300 = vld [vmem:[%s169 + $0x3d8] sm:$0xff]
      %v301 = vld [vmem:[%s169 + $0x3e0] sm:$0xff]
      %v302 = vld [vmem:[%s169 + $0x3e8] sm:$0xff]
      %v303 = vld [vmem:[%s169 + $0x3f0] sm:$0xff]
      %v304 = vld [vmem:[%s169 + $0x3f8] sm:$0xff]
      %v305 = vld [vmem:[%s169 + $0x400] sm:$0xff]
      %v306 = vld [vmem:[%s169 + $0x408] sm:$0xff]
      %v307 = vld [vmem:[%s169 + $0x410] sm:$0xff]
      %v308 = vld [vmem:[%s169 + $0x418] sm:$0xff]
      %v309 = vld [vmem:[%s169 + $0x420] sm:$0xff]
      %v310 = vld [vmem:[%s169 + $0x428] sm:$0xff]
      %v311 = vld [vmem:[%s169 + $0x430] sm:$0xff]
      %v312 = vld [vmem:[%s169 + $0x438] sm:$0xff]
      %v313 = vld [vmem:[%s169 + $0x440] sm:$0xff]
      %v314 = vld [vmem:[%s169 + $0x448] sm:$0xff]
      %v315 = vld [vmem:[%s169 + $0x450] sm:$0xff]
      %v316 = vld [vmem:[%s169 + $0x458] sm:$0xff]
      %v317 = vld [vmem:[%s169 + $0x460] sm:$0xff]
      %v318 = vld [vmem:[%s169 + $0x468] sm:$0xff]
      %v319 = vld [vmem:[%s169 + $0x470] sm:$0xff]
      %v320 = vld [vmem:[%s169 + $0x478] sm:$0xff]
      %v321 = vld [vmem:[%s169 + $0x480] sm:$0xff]
      %v322 = vld [vmem:[%s169 + $0x488] sm:$0xff]
      %v323 = vld [vmem:[%s169 + $0x490] sm:$0xff]
      %v324 = vld [vmem:[%s169 + $0x498] sm:$0xff]
      %v325 = vld [vmem:[%s169 + $0x4a0] sm:$0xff]
      %v326 = vld [vmem:[%s169 + $0x4a8] sm:$0xff]
      %v327 = vld [vmem:[%s169 + $0x4b0] sm:$0xff]
      %v328 = vld [vmem:[%s169 + $0x4b8] sm:$0xff]
      %v329 = vld [vmem:[%s169 + $0x4c0] sm:$0xff]
      %v330 = vld [vmem:[%s169 + $0x4c8] sm:$0xff]
      %v331 = vld [vmem:[%s169 + $0x4d0] sm:$0xff]
      %v332 = vld [vmem:[%s169 + $0x4d8] sm:$0xff]
      %v333 = vld [vmem:[%s169 + $0x4e0] sm:$0xff]
      %v334 = vld [vmem:[%s169 + $0x4e8] sm:$0xff]
      %v335 = vld [vmem:[%s169 + $0x4f0] sm:$0xff]
      %v336 = vld [vmem:[%s169 + $0x4f8] sm:$0xff]
      %v337 = vld [vmem:[%s169 + $0x500] sm:$0xff]
      %v338 = vld [vmem:[%s169 + $0x508] sm:$0xff]
      %v339 = vld [vmem:[%s169 + $0x510] sm:$0xff]
      %v340 = vld [vmem:[%s169 + $0x518] sm:$0xff]
      %v341 = vld [vmem:[%s169 + $0x520] sm:$0xff]
      %v342 = vld [vmem:[%s169 + $0x528] sm:$0xff]
      %v343 = vld [vmem:[%s169 + $0x530] sm:$0xff]
      %v344 = vld [vmem:[%s169 + $0x538] sm:$0xff]
      %v345 = vld [vmem:[%s169 + $0x540] sm:$0xff]
      %v346 = vld [vmem:[%s169 + $0x548] sm:$0xff]
      %v347 = vld [vmem:[%s169 + $0x550] sm:$0xff]
      %v348 = vld [vmem:[%s169 + $0x558] sm:$0xff]
      %v349 = vld [vmem:[%s169 + $0x560] sm:$0xff]
      %v350 = vld [vmem:[%s169 + $0x568] sm:$0xff]
      %v351 = vld [vmem:[%s169 + $0x570] sm:$0xff]
      %v352 = vld [vmem:[%s169 + $0x578] sm:$0xff]
      %v353 = vld [vmem:[%s169 + $0x580] sm:$0xff]
      %v354 = vld [vmem:[%s169 + $0x588] sm:$0xff]
      %v355 = vld [vmem:[%s169 + $0x590] sm:$0xff]
      %v356 = vld [vmem:[%s169 + $0x598] sm:$0xff]
      %v357 = vld [vmem:[%s169 + $0x5a0] sm:$0xff]
      %v358 = vld [vmem:[%s169 + $0x5a8] sm:$0xff]
      %v359 = vld [vmem:[%s169 + $0x5b0] sm:$0xff]
      %v360 = vld [vmem:[%s169 + $0x5b8] sm:$0xff]
      %v361 = vld [vmem:[%s169 + $0x5c0] sm:$0xff]
      %v362 = vld [vmem:[%s169 + $0x5c8] sm:$0xff]
      %v363 = vld [vmem:[%s169 + $0x5d0] sm:$0xff]
      %v364 = vld [vmem:[%s169 + $0x5d8] sm:$0xff]
      %v365 = vld [vmem:[%s169 + $0x5e0] sm:$0xff]
      %v366 = vld [vmem:[%s169 + $0x5e8] sm:$0xff]
      %v367 = vld [vmem:[%s169 + $0x5f0] sm:$0xff]
      %v368 = vld [vmem:[%s169 + $0x5f8] sm:$0xff]
      %v369 = vld [vmem:[%s169 + $0x600] sm:$0xff]
      %v370 = vld [vmem:[%s169 + $0x608] sm:$0xff]
      %v371 = vld [vmem:[%s169 + $0x610] sm:$0xff]
      %v372 = vld [vmem:[%s169 + $0x618] sm:$0xff]
      %v373 = vld [vmem:[%s169 + $0x620] sm:$0xff]
      %v374 = vld [vmem:[%s169 + $0x628] sm:$0xff]
      %v375 = vld [vmem:[%s169 + $0x630] sm:$0xff]
      %v376 = vld [vmem:[%s169 + $0x638] sm:$0xff]
      %v377 = vld [vmem:[%s169 + $0x640] sm:$0xff]
      %v378 = vld [vmem:[%s169 + $0x648] sm:$0xff]
      %v379 = vld [vmem:[%s169 + $0x650] sm:$0xff]
      %v380 = vld [vmem:[%s169 + $0x658] sm:$0xff]
      %v381 = vld [vmem:[%s169 + $0x660] sm:$0xff]
      %v382 = vld [vmem:[%s169 + $0x668] sm:$0xff]
      %v383 = vld [vmem:[%s169 + $0x670] sm:$0xff]
      %v384 = vld [vmem:[%s169 + $0x678] sm:$0xff]
      %v385 = vld [vmem:[%s1] sm:$0xff]
      %v386 = vld [vmem:[%s1 + $0x8] sm:$0xff]
      %v387 = vld [vmem:[%s1 + $0x10] sm:$0xff]
      %v388 = vld [vmem:[%s1 + $0x18] sm:$0xff]
      %v389 = vld [vmem:[%s1 + $0x20] sm:$0xff]
      %v390 = vld [vmem:[%s1 + $0x28] sm:$0xff]
      %v391 = vld [vmem:[%s1 + $0x30] sm:$0xff]
      %v392 = vld [vmem:[%s1 + $0x38] sm:$0xff]
      %v393 = vld [vmem:[%s1 + $0x40] sm:$0xff]
      %v394 = vld [vmem:[%s1 + $0x48] sm:$0xff]
      %v395 = vld [vmem:[%s1 + $0x50] sm:$0xff]
      %v396 = vld [vmem:[%s1 + $0x58] sm:$0xff]
      %v397 = vld [vmem:[%s1 + $0x60] sm:$0xff]
      %v398 = vld [vmem:[%s1 + $0x68] sm:$0xff]
      %v399 = vld [vmem:[%s1 + $0x70] sm:$0xff]
      %v400 = vld [vmem:[%s1 + $0x78] sm:$0xff]
      %v401 = vld [vmem:[%s1 + $0x80] sm:$0xff]
      %v402 = vld [vmem:[%s1 + $0x88] sm:$0xff]
      %v403 = vld [vmem:[%s1 + $0x90] sm:$0xff]
      %v404 = vld [vmem:[%s1 + $0x98] sm:$0xff]
      %v405 = vld [vmem:[%s1 + $0xa0] sm:$0xff]
      %v406 = vld [vmem:[%s1 + $0xa8] sm:$0xff]
      %v407 = vld [vmem:[%s1 + $0xb0] sm:$0xff]
      %v408 = vld [vmem:[%s1 + $0xb8] sm:$0xff]
      %v409 = vld [vmem:[%s1 + $0xc0] sm:$0xff]
      %v410 = vld [vmem:[%s1 + $0xc8] sm:$0xff]
      %v411 = vld [vmem:[%s1 + $0xd0] sm:$0xff]
      %v412 = vld [vmem:[%s1 + $0xd8] sm:$0xff]
      %v413 = vld [vmem:[%s1 + $0xe0] sm:$0xff]
      %v414 = vld [vmem:[%s1 + $0xe8] sm:$0xff]
      %v415 = vld [vmem:[%s1 + $0xf0] sm:$0xff]
      %v416 = vld [vmem:[%s1 + $0xf8] sm:$0xff]
      %v417 = vld [vmem:[%s1 + $0x100] sm:$0xff]
      %v418 = vld [vmem:[%s1 + $0x108] sm:$0xff]
      %v419 = vld [vmem:[%s1 + $0x110] sm:$0xff]
      %v420 = vld [vmem:[%s1 + $0x118] sm:$0xff]
      %v421 = vld [vmem:[%s1 + $0x120] sm:$0xff]
      %v422 = vld [vmem:[%s1 + $0x128] sm:$0xff]
      %v423 = vld [vmem:[%s1 + $0x130] sm:$0xff]
      %v424 = vld [vmem:[%s1 + $0x138] sm:$0xff]
      %v425 = vld [vmem:[%s1 + $0x140] sm:$0xff]
      %v426 = vld [vmem:[%s1 + $0x148] sm:$0xff]
      %v427 = vld [vmem:[%s1 + $0x150] sm:$0xff]
      %v428 = vld [vmem:[%s1 + $0x158] sm:$0xff]
      %v429 = vld [vmem:[%s1 + $0x160] sm:$0xff]
      %v430 = vld [vmem:[%s1 + $0x168] sm:$0xff]
      %v431 = vld [vmem:[%s1 + $0x170] sm:$0xff]
      %v432 = vld [vmem:[%s1 + $0x178] sm:$0xff]
      %v433 = vld [vmem:[%s1 + $0x180] sm:$0xff]
      %v434 = vld [vmem:[%s1 + $0x188] sm:$0xff]
      %v435 = vld [vmem:[%s1 + $0x190] sm:$0xff]
      %v436 = vld [vmem:[%s1 + $0x198] sm:$0xff]
      %v437 = vld [vmem:[%s1 + $0x1a0] sm:$0xff]
      %v438 = vld [vmem:[%s1 + $0x1a8] sm:$0xff]
      %v439 = vld [vmem:[%s1 + $0x1b0] sm:$0xff]
      %v440 = vld [vmem:[%s1 + $0x1b8] sm:$0xff]
      %v441 = vld [vmem:[%s1 + $0x1c0] sm:$0xff]
      %v442 = vld [vmem:[%s1 + $0x1c8] sm:$0xff]
      %v443 = vld [vmem:[%s1 + $0x1d0] sm:$0xff]
      %v444 = vld [vmem:[%s1 + $0x1d8] sm:$0xff]
      %v445 = vld [vmem:[%s1 + $0x1e0] sm:$0xff]
      %v446 = vld [vmem:[%s1 + $0x1e8] sm:$0xff]
      %v447 = vld [vmem:[%s1 + $0x1f0] sm:$0xff]
      %v448 = vld [vmem:[%s1 + $0x1f8] sm:$0xff]
      %v449 = vld [vmem:[%s1 + $0x200] sm:$0xff]
      %v450 = vld [vmem:[%s1 + $0x208] sm:$0xff]
      %v451 = vld [vmem:[%s1 + $0x210] sm:$0xff]
      %v452 = vld [vmem:[%s1 + $0x218] sm:$0xff]
      %v453 = vld [vmem:[%s1 + $0x220] sm:$0xff]
      %v454 = vld [vmem:[%s1 + $0x228] sm:$0xff]
      %v455 = vld [vmem:[%s1 + $0x230] sm:$0xff]
      %v456 = vld [vmem:[%s1 + $0x238] sm:$0xff]
      %v457 = vld [vmem:[%s1 + $0x240] sm:$0xff]
      %v458 = vld [vmem:[%s1 + $0x248] sm:$0xff]
      %v459 = vld [vmem:[%s1 + $0x250] sm:$0xff]
      %v460 = vld [vmem:[%s1 + $0x258] sm:$0xff]
      %v461 = vld [vmem:[%s1 + $0x260] sm:$0xff]
      %v462 = vld [vmem:[%s1 + $0x268] sm:$0xff]
      %v463 = vld [vmem:[%s1 + $0x270] sm:$0xff]
      %v464 = vld [vmem:[%s1 + $0x278] sm:$0xff]
      %v465 = vld [vmem:[%s1 + $0x280] sm:$0xff]
      %v466 = vld [vmem:[%s1 + $0x288] sm:$0xff]
      %v467 = vld [vmem:[%s1 + $0x290] sm:$0xff]
      %v468 = vld [vmem:[%s1 + $0x298] sm:$0xff]
      %v469 = vld [vmem:[%s1 + $0x2a0] sm:$0xff]
      %v470 = vld [vmem:[%s1 + $0x2a8] sm:$0xff]
      %v471 = vld [vmem:[%s1 + $0x2b0] sm:$0xff]
      %v472 = vld [vmem:[%s1 + $0x2b8] sm:$0xff]
      %v473 = vld [vmem:[%s1 + $0x2c0] sm:$0xff]
      %v474 = vld [vmem:[%s1 + $0x2c8] sm:$0xff]
      %v475 = vld [vmem:[%s1 + $0x2d0] sm:$0xff]
      %v476 = vld [vmem:[%s1 + $0x2d8] sm:$0xff]
      %v477 = vld [vmem:[%s1 + $0x2e0] sm:$0xff]
      %v478 = vld [vmem:[%s1 + $0x2e8] sm:$0xff]
      %v479 = vld [vmem:[%s1 + $0x2f0] sm:$0xff]
      %v480 = vld [vmem:[%s1 + $0x2f8] sm:$0xff]
      %v481 = vld [vmem:[%s1 + $0x300] sm:$0xff]
      %v482 = vld [vmem:[%s1 + $0x308] sm:$0xff]
      %v483 = vld [vmem:[%s1 + $0x310] sm:$0xff]
      %v484 = vld [vmem:[%s1 + $0x318] sm:$0xff]
      %v485 = vld [vmem:[%s1 + $0x320] sm:$0xff]
      %v486 = vld [vmem:[%s1 + $0x328] sm:$0xff]
      %v487 = vld [vmem:[%s1 + $0x330] sm:$0xff]
      %v488 = vld [vmem:[%s1 + $0x338] sm:$0xff]
      %v489 = vld [vmem:[%s1 + $0x340] sm:$0xff]
      %v490 = vld [vmem:[%s1 + $0x348] sm:$0xff]
      %v491 = vld [vmem:[%s1 + $0x350] sm:$0xff]
      %v492 = vld [vmem:[%s1 + $0x358] sm:$0xff]
      %v493 = vld [vmem:[%s1 + $0x360] sm:$0xff]
      %v494 = vld [vmem:[%s1 + $0x368] sm:$0xff]
      %v495 = vld [vmem:[%s1 + $0x370] sm:$0xff]
      %v496 = vld [vmem:[%s1 + $0x378] sm:$0xff]
      %v497 = vld [vmem:[%s1 + $0x380] sm:$0xff]
      %v498 = vld [vmem:[%s1 + $0x388] sm:$0xff]
      %v499 = vld [vmem:[%s1 + $0x390] sm:$0xff]
      %v500 = vld [vmem:[%s1 + $0x398] sm:$0xff]
      %v501 = vld [vmem:[%s1 + $0x3a0] sm:$0xff]
      %v502 = vld [vmem:[%s1 + $0x3a8] sm:$0xff]
      %v503 = vld [vmem:[%s1 + $0x3b0] sm:$0xff]
      %v504 = vld [vmem:[%s1 + $0x3b8] sm:$0xff]
      %v505 = vld [vmem:[%s1 + $0x3c0] sm:$0xff]
      %v506 = vld [vmem:[%s1 + $0x3c8] sm:$0xff]
      %v507 = vld [vmem:[%s1 + $0x3d0] sm:$0xff]
      %v508 = vld [vmem:[%s1 + $0x3d8] sm:$0xff]
      %v509 = vld [vmem:[%s1 + $0x3e0] sm:$0xff]
      %v510 = vld [vmem:[%s1 + $0x3e8] sm:$0xff]
      %v511 = vld [vmem:[%s1 + $0x3f0] sm:$0xff]
      %v512 = vld [vmem:[%s1 + $0x3f8] sm:$0xff]
      %v513 = vld [vmem:[%s1 + $0x400] sm:$0xff]
      %v514 = vld [vmem:[%s1 + $0x408] sm:$0xff]
      %v515 = vld [vmem:[%s1 + $0x410] sm:$0xff]
      %v516 = vld [vmem:[%s1 + $0x418] sm:$0xff]
      %v517 = vld [vmem:[%s1 + $0x420] sm:$0xff]
      %v518 = vld [vmem:[%s1 + $0x428] sm:$0xff]
      %v519 = vld [vmem:[%s1 + $0x430] sm:$0xff]
      %v520 = vld [vmem:[%s1 + $0x438] sm:$0xff]
      %v521 = vld [vmem:[%s1 + $0x440] sm:$0xff]
      %v522 = vld [vmem:[%s1 + $0x448] sm:$0xff]
      %v523 = vld [vmem:[%s1 + $0x450] sm:$0xff]
      %v524 = vld [vmem:[%s1 + $0x458] sm:$0xff]
      %v525 = vld [vmem:[%s1 + $0x460] sm:$0xff]
      %v526 = vld [vmem:[%s1 + $0x468] sm:$0xff]
      %v527 = vld [vmem:[%s1 + $0x470] sm:$0xff]
      %v528 = vld [vmem:[%s1 + $0x478] sm:$0xff]
      %v529 = vld [vmem:[%s1 + $0x480] sm:$0xff]
      %v530 = vld [vmem:[%s1 + $0x488] sm:$0xff]
      %v531 = vld [vmem:[%s1 + $0x490] sm:$0xff]
      %v532 = vld [vmem:[%s1 + $0x498] sm:$0xff]
      %v533 = vld [vmem:[%s1 + $0x4a0] sm:$0xff]
      %v534 = vld [vmem:[%s1 + $0x4a8] sm:$0xff]
      %v535 = vld [vmem:[%s1 + $0x4b0] sm:$0xff]
      %v536 = vld [vmem:[%s1 + $0x4b8] sm:$0xff]
      %v537 = vld [vmem:[%s1 + $0x4c0] sm:$0xff]
      %v538 = vld [vmem:[%s1 + $0x4c8] sm:$0xff]
      %v539 = vld [vmem:[%s1 + $0x4d0] sm:$0xff]
      %v540 = vld [vmem:[%s1 + $0x4d8] sm:$0xff]
      %v541 = vld [vmem:[%s1 + $0x4e0] sm:$0xff]
      %v542 = vld [vmem:[%s1 + $0x4e8] sm:$0xff]
      %v543 = vld [vmem:[%s1 + $0x4f0] sm:$0xff]
      %v544 = vld [vmem:[%s1 + $0x4f8] sm:$0xff]
      %v545 = vld [vmem:[%s1 + $0x500] sm:$0xff]
      %v546 = vld [vmem:[%s1 + $0x508] sm:$0xff]
      %v547 = vld [vmem:[%s1 + $0x510] sm:$0xff]
      %v548 = vld [vmem:[%s1 + $0x518] sm:$0xff]
      %v549 = vld [vmem:[%s1 + $0x520] sm:$0xff]
      %v550 = vld [vmem:[%s1 + $0x528] sm:$0xff]
      %v551 = vld [vmem:[%s1 + $0x530] sm:$0xff]
      %v552 = vld [vmem:[%s1 + $0x538] sm:$0xff]
      %v553 = vld [vmem:[%s1 + $0x540] sm:$0xff]
      %v554 = vld [vmem:[%s1 + $0x548] sm:$0xff]
      %v555 = vld [vmem:[%s1 + $0x550] sm:$0xff]
      %v556 = vld [vmem:[%s1 + $0x558] sm:$0xff]
      %v557 = vld [vmem:[%s1 + $0x560] sm:$0xff]
      %v558 = vld [vmem:[%s1 + $0x568] sm:$0xff]
      %v559 = vld [vmem:[%s1 + $0x570] sm:$0xff]
      %v560 = vld [vmem:[%s1 + $0x578] sm:$0xff]
      %v561 = vld [vmem:[%s1 + $0x580] sm:$0xff]
      %v562 = vld [vmem:[%s1 + $0x588] sm:$0xff]
      %v563 = vld [vmem:[%s1 + $0x590] sm:$0xff]
      %v564 = vld [vmem:[%s1 + $0x598] sm:$0xff]
      %v565 = vld [vmem:[%s1 + $0x5a0] sm:$0xff]
      %v566 = vld [vmem:[%s1 + $0x5a8] sm:$0xff]
      %v567 = vld [vmem:[%s1 + $0x5b0] sm:$0xff]
      %v568 = vld [vmem:[%s1 + $0x5b8] sm:$0xff]
      %v569 = vld [vmem:[%s1 + $0x5c0] sm:$0xff]
      %v570 = vld [vmem:[%s1 + $0x5c8] sm:$0xff]
      %v571 = vld [vmem:[%s1 + $0x5d0] sm:$0xff]
      %v572 = vld [vmem:[%s1 + $0x5d8] sm:$0xff]
      %v573 = vld [vmem:[%s1 + $0x5e0] sm:$0xff]
      %v574 = vld [vmem:[%s1 + $0x5e8] sm:$0xff]
      %v575 = vld [vmem:[%s1 + $0x5f0] sm:$0xff]
      %v576 = vld [vmem:[%s1 + $0x5f8] sm:$0xff]
      %v577 = vld [vmem:[%s1 + $0x600] sm:$0xff]
      %v578 = vld [vmem:[%s1 + $0x608] sm:$0xff]
      %v579 = vld [vmem:[%s1 + $0x610] sm:$0xff]
      %v580 = vld [vmem:[%s1 + $0x618] sm:$0xff]
      %v581 = vld [vmem:[%s1 + $0x620] sm:$0xff]
      %v582 = vld [vmem:[%s1 + $0x628] sm:$0xff]
      %v583 = vld [vmem:[%s1 + $0x630] sm:$0xff]
      %v584 = vld [vmem:[%s1 + $0x638] sm:$0xff]
      %v585 = vld [vmem:[%s1 + $0x640] sm:$0xff]
      %v586 = vld [vmem:[%s1 + $0x648] sm:$0xff]
      %v587 = vld [vmem:[%s1 + $0x650] sm:$0xff]
      %v588 = vld [vmem:[%s1 + $0x658] sm:$0xff]
      %v589 = vld [vmem:[%s1 + $0x660] sm:$0xff]
      %v590 = vld [vmem:[%s1 + $0x668] sm:$0xff]
      %v591 = vld [vmem:[%s1 + $0x670] sm:$0xff]
      %v592 = vld [vmem:[%s1 + $0x678] sm:$0xff]
      %v593 = vld [vmem:[%s1 + $0x680] sm:$0xff]
      %v594 = vld [vmem:[%s1 + $0x688] sm:$0xff]
      %v595 = vld [vmem:[%s1 + $0x690] sm:$0xff]
      %v596 = vld [vmem:[%s1 + $0x698] sm:$0xff]
      %v597 = vld [vmem:[%s1 + $0x6a0] sm:$0xff]
      %v598 = vld [vmem:[%s1 + $0x6a8] sm:$0xff]
      %v599 = vld [vmem:[%s1 + $0x6b0] sm:$0xff]
      %v600 = vld [vmem:[%s1 + $0x6b8] sm:$0xff]
      %v601 = vld [vmem:[%s1 + $0x6c0] sm:$0xff]
      %v602 = vld [vmem:[%s1 + $0x6c8] sm:$0xff]
      %v603 = vld [vmem:[%s1 + $0x6d0] sm:$0xff]
      %v604 = vld [vmem:[%s1 + $0x6d8] sm:$0xff]
      %v605 = vld [vmem:[%s1 + $0x6e0] sm:$0xff]
      %v606 = vld [vmem:[%s1 + $0x6e8] sm:$0xff]
      %v607 = vld [vmem:[%s1 + $0x6f0] sm:$0xff]
      %v608 = vld [vmem:[%s1 + $0x6f8] sm:$0xff]
      %v609 = vld [vmem:[%s1 + $0x700] sm:$0xff]
      %v610 = vld [vmem:[%s1 + $0x708] sm:$0xff]
      %v611 = vld [vmem:[%s1 + $0x710] sm:$0xff]
      %v612 = vld [vmem:[%s1 + $0x718] sm:$0xff]
      %v613 = vld [vmem:[%s1 + $0x720] sm:$0xff]
      %v614 = vld [vmem:[%s1 + $0x728] sm:$0xff]
      %v615 = vld [vmem:[%s1 + $0x730] sm:$0xff]
      %v616 = vld [vmem:[%s1 + $0x738] sm:$0xff]
      %v617 = vld [vmem:[%s1 + $0x740] sm:$0xff]
      %v618 = vld [vmem:[%s1 + $0x748] sm:$0xff]
      %v619 = vld [vmem:[%s1 + $0x750] sm:$0xff]
      %v620 = vld [vmem:[%s1 + $0x758] sm:$0xff]
      %v621 = vld [vmem:[%s1 + $0x760] sm:$0xff]
      %v622 = vld [vmem:[%s1 + $0x768] sm:$0xff]
      %v623 = vld [vmem:[%s1 + $0x770] sm:$0xff]
      %v624 = vld [vmem:[%s1 + $0x778] sm:$0xff]
      %v625 = vld [vmem:[%s1 + $0x780] sm:$0xff]
      %v626 = vld [vmem:[%s1 + $0x788] sm:$0xff]
      %v627 = vld [vmem:[%s1 + $0x790] sm:$0xff]
      %v628 = vld [vmem:[%s1 + $0x798] sm:$0xff]
      %v629 = vld [vmem:[%s1 + $0x7a0] sm:$0xff]
      %v630 = vld [vmem:[%s1 + $0x7a8] sm:$0xff]
      %v631 = vld [vmem:[%s1 + $0x7b0] sm:$0xff]
      %v632 = vld [vmem:[%s1 + $0x7b8] sm:$0xff]
      %v633 = vld [vmem:[%s1 + $0x7c0] sm:$0xff]
      %v634 = vld [vmem:[%s1 + $0x7c8] sm:$0xff]
      %v635 = vld [vmem:[%s1 + $0x7d0] sm:$0xff]
      %v636 = vld [vmem:[%s1 + $0x7d8] sm:$0xff]
      %v637 = vld [vmem:[%s1 + $0x7e0] sm:$0xff]
      %v638 = vld [vmem:[%s1 + $0x7e8] sm:$0xff]
      %v639 = vld [vmem:[%s1 + $0x7f0] sm:$0xff]
      %v640 = vld [vmem:[%s1 + $0x7f8] sm:$0xff]
      %v641 = vld [vmem:[%s1 + $0x800] sm:$0xff]
      %v642 = vld [vmem:[%s1 + $0x808] sm:$0xff]
      %v643 = vld [vmem:[%s1 + $0x810] sm:$0xff]
      %v644 = vld [vmem:[%s1 + $0x818] sm:$0xff]
      %v645 = vld [vmem:[%s1 + $0x820] sm:$0xff]
      %v646 = vld [vmem:[%s1 + $0x828] sm:$0xff]
      %v647 = vld [vmem:[%s1 + $0x830] sm:$0xff]
      %v648 = vld [vmem:[%s1 + $0x838] sm:$0xff]
      %v649 = vld [vmem:[%s1 + $0x840] sm:$0xff]
      %v650 = vld [vmem:[%s1 + $0x848] sm:$0xff]
      %v651 = vld [vmem:[%s1 + $0x850] sm:$0xff]
      %v652 = vld [vmem:[%s1 + $0x858] sm:$0xff]
      %v653 = vld [vmem:[%s1 + $0x860] sm:$0xff]
      %v654 = vld [vmem:[%s1 + $0x868] sm:$0xff]
      %v655 = vld [vmem:[%s1 + $0x870] sm:$0xff]
      %v656 = vld [vmem:[%s1 + $0x878] sm:$0xff]
      %v657 = vld [vmem:[%s1 + $0x880] sm:$0xff]
      %v658 = vld [vmem:[%s1 + $0x888] sm:$0xff]
      %v659 = vld [vmem:[%s1 + $0x890] sm:$0xff]
      %v660 = vld [vmem:[%s1 + $0x898] sm:$0xff]
      %v661 = vld [vmem:[%s1 + $0x8a0] sm:$0xff]
      %v662 = vld [vmem:[%s1 + $0x8a8] sm:$0xff]
      %v663 = vld [vmem:[%s1 + $0x8b0] sm:$0xff]
      %v664 = vld [vmem:[%s1 + $0x8b8] sm:$0xff]
      %v665 = vld [vmem:[%s1 + $0x8c0] sm:$0xff]
      %v666 = vld [vmem:[%s1 + $0x8c8] sm:$0xff]
      %v667 = vld [vmem:[%s1 + $0x8d0] sm:$0xff]
      %v668 = vld [vmem:[%s1 + $0x8d8] sm:$0xff]
      %v669 = vld [vmem:[%s1 + $0x8e0] sm:$0xff]
      %v670 = vld [vmem:[%s1 + $0x8e8] sm:$0xff]
      %v671 = vld [vmem:[%s1 + $0x8f0] sm:$0xff]
      %v672 = vld [vmem:[%s1 + $0x8f8] sm:$0xff]
      %v673 = vld [vmem:[%s1 + $0x900] sm:$0xff]
      %v674 = vld [vmem:[%s1 + $0x908] sm:$0xff]
      %v675 = vld [vmem:[%s1 + $0x910] sm:$0xff]
      %v676 = vld [vmem:[%s1 + $0x918] sm:$0xff]
      %v677 = vld [vmem:[%s1 + $0x920] sm:$0xff]
      %v678 = vld [vmem:[%s1 + $0x928] sm:$0xff]
      %v679 = vld [vmem:[%s1 + $0x930] sm:$0xff]
      %v680 = vld [vmem:[%s1 + $0x938] sm:$0xff]
      %v681 = vld [vmem:[%s1 + $0x940] sm:$0xff]
      %v682 = vld [vmem:[%s1 + $0x948] sm:$0xff]
      %v683 = vld [vmem:[%s1 + $0x950] sm:$0xff]
      %v684 = vld [vmem:[%s1 + $0x958] sm:$0xff]
      %v685 = vld [vmem:[%s1 + $0x960] sm:$0xff]
      %v686 = vld [vmem:[%s1 + $0x968] sm:$0xff]
      %v687 = vld [vmem:[%s1 + $0x970] sm:$0xff]
      %v688 = vld [vmem:[%s1 + $0x978] sm:$0xff]
      %v689 = vld [vmem:[%s1 + $0x980] sm:$0xff]
      %v690 = vld [vmem:[%s1 + $0x988] sm:$0xff]
      %v691 = vld [vmem:[%s1 + $0x990] sm:$0xff]
      %v692 = vld [vmem:[%s1 + $0x998] sm:$0xff]
      %v693 = vld [vmem:[%s1 + $0x9a0] sm:$0xff]
      %v694 = vld [vmem:[%s1 + $0x9a8] sm:$0xff]
      %v695 = vld [vmem:[%s1 + $0x9b0] sm:$0xff]
      %v696 = vld [vmem:[%s1 + $0x9b8] sm:$0xff]
      %v697 = vld [vmem:[%s1 + $0x9c0] sm:$0xff]
      %v698 = vld [vmem:[%s1 + $0x9c8] sm:$0xff]
      %v699 = vld [vmem:[%s1 + $0x9d0] sm:$0xff]
      %v700 = vld [vmem:[%s1 + $0x9d8] sm:$0xff]
      %v701 = vld [vmem:[%s1 + $0x9e0] sm:$0xff]
      %v702 = vld [vmem:[%s1 + $0x9e8] sm:$0xff]
      %v703 = vld [vmem:[%s1 + $0x9f0] sm:$0xff]
      %v704 = vld [vmem:[%s1 + $0x9f8] sm:$0xff]
      %v705 = vld [vmem:[%s1 + $0xa00] sm:$0xff]
      %v706 = vld [vmem:[%s1 + $0xa08] sm:$0xff]
      %v707 = vld [vmem:[%s1 + $0xa10] sm:$0xff]
      %v708 = vld [vmem:[%s1 + $0xa18] sm:$0xff]
      %v709 = vld [vmem:[%s1 + $0xa20] sm:$0xff]
      %v710 = vld [vmem:[%s1 + $0xa28] sm:$0xff]
      %v711 = vld [vmem:[%s1 + $0xa30] sm:$0xff]
      %v712 = vld [vmem:[%s1 + $0xa38] sm:$0xff]
      %v713 = vld [vmem:[%s1 + $0xa40] sm:$0xff]
      %v714 = vld [vmem:[%s1 + $0xa48] sm:$0xff]
      %v715 = vld [vmem:[%s1 + $0xa50] sm:$0xff]
      %v716 = vld [vmem:[%s1 + $0xa58] sm:$0xff]
      %v717 = vld [vmem:[%s1 + $0xa60] sm:$0xff]
      %v718 = vld [vmem:[%s1 + $0xa68] sm:$0xff]
      %v719 = vld [vmem:[%s1 + $0xa70] sm:$0xff]
      %v720 = vld [vmem:[%s1 + $0xa78] sm:$0xff]
      %v721 = vld [vmem:[%s1 + $0xa80] sm:$0xff]
      %v722 = vld [vmem:[%s1 + $0xa88] sm:$0xff]
      %v723 = vld [vmem:[%s1 + $0xa90] sm:$0xff]
      %v724 = vld [vmem:[%s1 + $0xa98] sm:$0xff]
      %v725 = vld [vmem:[%s1 + $0xaa0] sm:$0xff]
      %v726 = vld [vmem:[%s1 + $0xaa8] sm:$0xff]
      %v727 = vld [vmem:[%s1 + $0xab0] sm:$0xff]
      %v728 = vld [vmem:[%s1 + $0xab8] sm:$0xff]
      %v729 = vld [vmem:[%s1 + $0xac0] sm:$0xff]
      %v730 = vld [vmem:[%s1 + $0xac8] sm:$0xff]
      %v731 = vld [vmem:[%s1 + $0xad0] sm:$0xff]
      %v732 = vld [vmem:[%s1 + $0xad8] sm:$0xff]
      %v733 = vld [vmem:[%s1 + $0xae0] sm:$0xff]
      %v734 = vld [vmem:[%s1 + $0xae8] sm:$0xff]
      %v735 = vld [vmem:[%s1 + $0xaf0] sm:$0xff]
      %v736 = vld [vmem:[%s1 + $0xaf8] sm:$0xff]
      %v737 = vld [vmem:[%s1 + $0xb00] sm:$0xff]
      %v738 = vld [vmem:[%s1 + $0xb08] sm:$0xff]
      %v739 = vld [vmem:[%s1 + $0xb10] sm:$0xff]
      %v740 = vld [vmem:[%s1 + $0xb18] sm:$0xff]
      %v741 = vld [vmem:[%s1 + $0xb20] sm:$0xff]
      %v742 = vld [vmem:[%s1 + $0xb28] sm:$0xff]
      %v743 = vld [vmem:[%s1 + $0xb30] sm:$0xff]
      %v744 = vld [vmem:[%s1 + $0xb38] sm:$0xff]
      %v745 = vld [vmem:[%s1 + $0xb40] sm:$0xff]
      %v746 = vld [vmem:[%s1 + $0xb48] sm:$0xff]
      %v747 = vld [vmem:[%s1 + $0xb50] sm:$0xff]
      %v748 = vld [vmem:[%s1 + $0xb58] sm:$0xff]
      %v749 = vld [vmem:[%s1 + $0xb60] sm:$0xff]
      %v750 = vld [vmem:[%s1 + $0xb68] sm:$0xff]
      %v751 = vld [vmem:[%s1 + $0xb70] sm:$0xff]
      %v752 = vld [vmem:[%s1 + $0xb78] sm:$0xff]
      %v753 = vld [vmem:[%s1 + $0xb80] sm:$0xff]
      %v754 = vld [vmem:[%s1 + $0xb88] sm:$0xff]
      %v755 = vld [vmem:[%s1 + $0xb90] sm:$0xff]
      %v756 = vld [vmem:[%s1 + $0xb98] sm:$0xff]
      %v757 = vld [vmem:[%s1 + $0xba0] sm:$0xff]
      %v758 = vld [vmem:[%s1 + $0xba8] sm:$0xff]
      %v759 = vld [vmem:[%s1 + $0xbb0] sm:$0xff]
      %v760 = vld [vmem:[%s1 + $0xbb8] sm:$0xff]
      %v761 = vld [vmem:[%s1 + $0xbc0] sm:$0xff]
      %v762 = vld [vmem:[%s1 + $0xbc8] sm:$0xff]
      %v763 = vld [vmem:[%s1 + $0xbd0] sm:$0xff]
      %v764 = vld [vmem:[%s1 + $0xbd8] sm:$0xff]
      %v765 = vld [vmem:[%s1 + $0xbe0] sm:$0xff]
      %v766 = vld [vmem:[%s1 + $0xbe8] sm:$0xff]
      %v767 = vld [vmem:[%s1 + $0xbf0] sm:$0xff]
      %v768 = vld [vmem:[%s1 + $0xbf8] sm:$0xff]
      %v769 = vld [vmem:[%s1 + $0xc00] sm:$0xff]
      %v770 = vld [vmem:[%s1 + $0xc08] sm:$0xff]
      %v771 = vld [vmem:[%s1 + $0xc10] sm:$0xff]
      %v772 = vld [vmem:[%s1 + $0xc18] sm:$0xff]
      %v773 = vld [vmem:[%s1 + $0xc20] sm:$0xff]
      %v774 = vld [vmem:[%s1 + $0xc28] sm:$0xff]
      %v775 = vld [vmem:[%s1 + $0xc30] sm:$0xff]
      %v776 = vld [vmem:[%s1 + $0xc38] sm:$0xff]
      %v777 = vld [vmem:[%s1 + $0xc40] sm:$0xff]
      %v778 = vld [vmem:[%s1 + $0xc48] sm:$0xff]
      %v779 = vld [vmem:[%s1 + $0xc50] sm:$0xff]
      %v780 = vld [vmem:[%s1 + $0xc58] sm:$0xff]
      %v781 = vld [vmem:[%s1 + $0xc60] sm:$0xff]
      %v782 = vld [vmem:[%s1 + $0xc68] sm:$0xff]
      %v783 = vld [vmem:[%s1 + $0xc70] sm:$0xff]
      %v784 = vld [vmem:[%s1 + $0xc78] sm:$0xff]
      %v785 = vld [vmem:[%s1 + $0xc80] sm:$0xff]
      %v786 = vld [vmem:[%s1 + $0xc88] sm:$0xff]
      %v787 = vld [vmem:[%s1 + $0xc90] sm:$0xff]
      %v788 = vld [vmem:[%s1 + $0xc98] sm:$0xff]
      %v789 = vld [vmem:[%s1 + $0xca0] sm:$0xff]
      %v790 = vld [vmem:[%s1 + $0xca8] sm:$0xff]
      %v791 = vld [vmem:[%s1 + $0xcb0] sm:$0xff]
      %v792 = vld [vmem:[%s1 + $0xcb8] sm:$0xff]
      %v793 = vld [vmem:[%s1 + $0xcc0] sm:$0xff]
      %v794 = vld [vmem:[%s1 + $0xcc8] sm:$0xff]
      %v795 = vld [vmem:[%s1 + $0xcd0] sm:$0xff]
      %v796 = vld [vmem:[%s1 + $0xcd8] sm:$0xff]
      %v797 = vld [vmem:[%s1 + $0xce0] sm:$0xff]
      %v798 = vld [vmem:[%s1 + $0xce8] sm:$0xff]
      %v799 = vld [vmem:[%s1 + $0xcf0] sm:$0xff]
      %v800 = vld [vmem:[%s1 + $0xcf8] sm:$0xff]
      %v801 = vld [vmem:[%s2] sm:$0x3]
      %v803 = vlaneseq
      %v804 = vshrl.u32 %v803, 7
      %v805 = vsub.s32 0, %v804
      %v806 = vrot.slane %v801, %v805
      %v807 = vlaneseq
      %v808 = vshrl.u32 %v807, 7
      %v809 = vsub.s32 1, %v808
      %v810 = vrot.slane %v801, %v809
      %v1021 = vunpack.c.l.b16 %v177
      %v1022 = vunpack.c.h.b16 %v177
      %v1023 = vunpack.c.l.b16 %v178
      %v1024 = vunpack.c.h.b16 %v178
      %v1025 = vunpack.c.l.b16 %v179
      %v1026 = vunpack.c.h.b16 %v179
      %v1027 = vunpack.c.l.b16 %v180
      %v1028 = vunpack.c.h.b16 %v180
      %v1029 = vunpack.c.l.b16 %v181
      %v1030 = vunpack.c.h.b16 %v181
      %v1031 = vunpack.c.l.b16 %v182
      %v1032 = vunpack.c.h.b16 %v182
      %v1033 = vunpack.c.l.b16 %v183
      %v1034 = vunpack.c.h.b16 %v183
      %v1035 = vunpack.c.l.b16 %v184
      %v1036 = vunpack.c.h.b16 %v184
      %v1037 = vunpack.c.l.b16 %v185
      %v1038 = vunpack.c.h.b16 %v185
      %v1039 = vunpack.c.l.b16 %v186
      %v1040 = vunpack.c.h.b16 %v186
      %v1041 = vunpack.c.l.b16 %v187
      %v1042 = vunpack.c.h.b16 %v187
      %v1043 = vunpack.c.l.b16 %v188
      %v1044 = vunpack.c.h.b16 %v188
      %v1045 = vunpack.c.l.b16 %v189
      %v1046 = vunpack.c.h.b16 %v189
      %v1047 = vunpack.c.l.b16 %v190
      %v1048 = vunpack.c.h.b16 %v190
      %v1049 = vunpack.c.l.b16 %v191
      %v1050 = vunpack.c.h.b16 %v191
      %v1051 = vunpack.c.l.b16 %v192
      %v1052 = vunpack.c.h.b16 %v192
      %v1053 = vunpack.c.l.b16 %v193
      %v1054 = vunpack.c.h.b16 %v193
      %v1055 = vunpack.c.l.b16 %v194
      %v1056 = vunpack.c.h.b16 %v194
      %v1057 = vunpack.c.l.b16 %v195
      %v1058 = vunpack.c.h.b16 %v195
      %v1059 = vunpack.c.l.b16 %v196
      %v1060 = vunpack.c.h.b16 %v196
      %v1061 = vunpack.c.l.b16 %v197
      %v1062 = vunpack.c.h.b16 %v197
      %v1063 = vunpack.c.l.b16 %v198
      %v1064 = vunpack.c.h.b16 %v198
      %v1065 = vunpack.c.l.b16 %v199
      %v1066 = vunpack.c.h.b16 %v199
      %v1067 = vunpack.c.l.b16 %v200
      %v1068 = vunpack.c.h.b16 %v200
      %v1069 = vunpack.c.l.b16 %v201
      %v1070 = vunpack.c.h.b16 %v201
      %v1071 = vunpack.c.l.b16 %v202
      %v1072 = vunpack.c.h.b16 %v202
      %v1073 = vunpack.c.l.b16 %v203
      %v1074 = vunpack.c.h.b16 %v203
      %v1075 = vunpack.c.l.b16 %v204
      %v1076 = vunpack.c.h.b16 %v204
      %v1077 = vunpack.c.l.b16 %v205
      %v1078 = vunpack.c.h.b16 %v205
      %v1079 = vunpack.c.l.b16 %v206
      %v1080 = vunpack.c.h.b16 %v206
      %v1081 = vunpack.c.l.b16 %v207
      %v1082 = vunpack.c.h.b16 %v207
      %v1083 = vunpack.c.l.b16 %v208
      %v1084 = vunpack.c.h.b16 %v208
      %v1085 = vunpack.c.l.b16 %v209
      %v1086 = vunpack.c.h.b16 %v209
      %v1087 = vunpack.c.l.b16 %v210
      %v1088 = vunpack.c.h.b16 %v210
      %v1089 = vunpack.c.l.b16 %v211
      %v1090 = vunpack.c.h.b16 %v211
      %v1091 = vunpack.c.l.b16 %v212
      %v1092 = vunpack.c.h.b16 %v212
      %v1093 = vunpack.c.l.b16 %v213
      %v1094 = vunpack.c.h.b16 %v213
      %v1095 = vunpack.c.l.b16 %v214
      %v1096 = vunpack.c.h.b16 %v214
      %v1097 = vunpack.c.l.b16 %v215
      %v1098 = vunpack.c.h.b16 %v215
      %v1099 = vunpack.c.l.b16 %v216
      %v1100 = vunpack.c.h.b16 %v216
      %v1101 = vunpack.c.l.b16 %v217
      %v1102 = vunpack.c.h.b16 %v217
      %v1103 = vunpack.c.l.b16 %v218
      %v1104 = vunpack.c.h.b16 %v218
      %v1105 = vunpack.c.l.b16 %v219
      %v1106 = vunpack.c.h.b16 %v219
      %v1107 = vunpack.c.l.b16 %v220
      %v1108 = vunpack.c.h.b16 %v220
      %v1109 = vunpack.c.l.b16 %v221
      %v1110 = vunpack.c.h.b16 %v221
      %v1111 = vunpack.c.l.b16 %v222
      %v1112 = vunpack.c.h.b16 %v222
      %v1113 = vunpack.c.l.b16 %v223
      %v1114 = vunpack.c.h.b16 %v223
      %v1115 = vunpack.c.l.b16 %v224
      %v1116 = vunpack.c.h.b16 %v224
      %v1117 = vunpack.c.l.b16 %v225
      %v1118 = vunpack.c.h.b16 %v225
      %v1119 = vunpack.c.l.b16 %v226
      %v1120 = vunpack.c.h.b16 %v226
      %v1121 = vunpack.c.l.b16 %v227
      %v1122 = vunpack.c.h.b16 %v227
      %v1123 = vunpack.c.l.b16 %v228
      %v1124 = vunpack.c.h.b16 %v228
      %v1125 = vunpack.c.l.b16 %v229
      %v1126 = vunpack.c.h.b16 %v229
      %v1127 = vunpack.c.l.b16 %v230
      %v1128 = vunpack.c.h.b16 %v230
      %v1129 = vunpack.c.l.b16 %v231
      %v1130 = vunpack.c.h.b16 %v231
      %v1131 = vunpack.c.l.b16 %v232
      %v1132 = vunpack.c.h.b16 %v232
      %v1133 = vunpack.c.l.b16 %v233
      %v1134 = vunpack.c.h.b16 %v233
      %v1135 = vunpack.c.l.b16 %v234
      %v1136 = vunpack.c.h.b16 %v234
      %v1137 = vunpack.c.l.b16 %v235
      %v1138 = vunpack.c.h.b16 %v235
      %v1139 = vunpack.c.l.b16 %v236
      %v1140 = vunpack.c.h.b16 %v236
      %v1141 = vunpack.c.l.b16 %v237
      %v1142 = vunpack.c.h.b16 %v237
      %v1143 = vunpack.c.l.b16 %v238
      %v1144 = vunpack.c.h.b16 %v238
      %v1145 = vunpack.c.l.b16 %v239
      %v1146 = vunpack.c.h.b16 %v239
      %v1147 = vunpack.c.l.b16 %v240
      %v1148 = vunpack.c.h.b16 %v240
      %v1149 = vunpack.c.l.b16 %v241
      %v1150 = vunpack.c.h.b16 %v241
      %v1151 = vunpack.c.l.b16 %v242
      %v1152 = vunpack.c.h.b16 %v242
      %v1153 = vunpack.c.l.b16 %v243
      %v1154 = vunpack.c.h.b16 %v243
      %v1155 = vunpack.c.l.b16 %v244
      %v1156 = vunpack.c.h.b16 %v244
      %v1157 = vunpack.c.l.b16 %v245
      %v1158 = vunpack.c.h.b16 %v245
      %v1159 = vunpack.c.l.b16 %v246
      %v1160 = vunpack.c.h.b16 %v246
      %v1161 = vunpack.c.l.b16 %v247
      %v1162 = vunpack.c.h.b16 %v247
      %v1163 = vunpack.c.l.b16 %v248
      %v1164 = vunpack.c.h.b16 %v248
      %v1165 = vunpack.c.l.b16 %v249
      %v1166 = vunpack.c.h.b16 %v249
      %v1167 = vunpack.c.l.b16 %v250
      %v1168 = vunpack.c.h.b16 %v250
      %v1169 = vunpack.c.l.b16 %v251
      %v1170 = vunpack.c.h.b16 %v251
      %v1171 = vunpack.c.l.b16 %v252
      %v1172 = vunpack.c.h.b16 %v252
      %v1173 = vunpack.c.l.b16 %v253
      %v1174 = vunpack.c.h.b16 %v253
      %v1175 = vunpack.c.l.b16 %v254
      %v1176 = vunpack.c.h.b16 %v254
      %v1177 = vunpack.c.l.b16 %v255
      %v1178 = vunpack.c.h.b16 %v255
      %v1179 = vunpack.c.l.b16 %v256
      %v1180 = vunpack.c.h.b16 %v256
      %v1181 = vunpack.c.l.b16 %v257
      %v1182 = vunpack.c.h.b16 %v257
      %v1183 = vunpack.c.l.b16 %v258
      %v1184 = vunpack.c.h.b16 %v258
      %v1185 = vunpack.c.l.b16 %v259
      %v1186 = vunpack.c.h.b16 %v259
      %v1187 = vunpack.c.l.b16 %v260
      %v1188 = vunpack.c.h.b16 %v260
      %v1189 = vunpack.c.l.b16 %v261
      %v1190 = vunpack.c.h.b16 %v261
      %v1191 = vunpack.c.l.b16 %v262
      %v1192 = vunpack.c.h.b16 %v262
      %v1193 = vunpack.c.l.b16 %v263
      %v1194 = vunpack.c.h.b16 %v263
      %v1195 = vunpack.c.l.b16 %v264
      %v1196 = vunpack.c.h.b16 %v264
      %v1197 = vunpack.c.l.b16 %v265
      %v1198 = vunpack.c.h.b16 %v265
      %v1199 = vunpack.c.l.b16 %v266
      %v1200 = vunpack.c.h.b16 %v266
      %v1201 = vunpack.c.l.b16 %v267
      %v1202 = vunpack.c.h.b16 %v267
      %v1203 = vunpack.c.l.b16 %v268
      %v1204 = vunpack.c.h.b16 %v268
      %v1205 = vunpack.c.l.b16 %v269
      %v1206 = vunpack.c.h.b16 %v269
      %v1207 = vunpack.c.l.b16 %v270
      %v1208 = vunpack.c.h.b16 %v270
      %v1209 = vunpack.c.l.b16 %v271
      %v1210 = vunpack.c.h.b16 %v271
      %v1211 = vunpack.c.l.b16 %v272
      %v1212 = vunpack.c.h.b16 %v272
      %v1213 = vunpack.c.l.b16 %v273
      %v1214 = vunpack.c.h.b16 %v273
      %v1215 = vunpack.c.l.b16 %v274
      %v1216 = vunpack.c.h.b16 %v274
      %v1217 = vunpack.c.l.b16 %v275
      %v1218 = vunpack.c.h.b16 %v275
      %v1219 = vunpack.c.l.b16 %v276
      %v1220 = vunpack.c.h.b16 %v276
      %v1221 = vunpack.c.l.b16 %v277
      %v1222 = vunpack.c.h.b16 %v277
      %v1223 = vunpack.c.l.b16 %v278
      %v1224 = vunpack.c.h.b16 %v278
      %v1225 = vunpack.c.l.b16 %v279
      %v1226 = vunpack.c.h.b16 %v279
      %v1227 = vunpack.c.l.b16 %v280
      %v1228 = vunpack.c.h.b16 %v280
      %v1229 = vunpack.c.l.b16 %v281
      %v1230 = vunpack.c.h.b16 %v281
      %v1231 = vunpack.c.l.b16 %v282
      %v1232 = vunpack.c.h.b16 %v282
      %v1233 = vunpack.c.l.b16 %v283
      %v1234 = vunpack.c.h.b16 %v283
      %v1235 = vunpack.c.l.b16 %v284
      %v1236 = vunpack.c.h.b16 %v284
      %v1237 = vunpack.c.l.b16 %v285
      %v1238 = vunpack.c.h.b16 %v285
      %v1239 = vunpack.c.l.b16 %v286
      %v1240 = vunpack.c.h.b16 %v286
      %v1241 = vunpack.c.l.b16 %v287
      %v1242 = vunpack.c.h.b16 %v287
      %v1243 = vunpack.c.l.b16 %v288
      %v1244 = vunpack.c.h.b16 %v288
      %v1245 = vunpack.c.l.b16 %v289
      %v1246 = vunpack.c.h.b16 %v289
      %v1247 = vunpack.c.l.b16 %v290
      %v1248 = vunpack.c.h.b16 %v290
      %v1249 = vunpack.c.l.b16 %v291
      %v1250 = vunpack.c.h.b16 %v291
      %v1251 = vunpack.c.l.b16 %v292
      %v1252 = vunpack.c.h.b16 %v292
      %v1253 = vunpack.c.l.b16 %v293
      %v1254 = vunpack.c.h.b16 %v293
      %v1255 = vunpack.c.l.b16 %v294
      %v1256 = vunpack.c.h.b16 %v294
      %v1257 = vunpack.c.l.b16 %v295
      %v1258 = vunpack.c.h.b16 %v295
      %v1259 = vunpack.c.l.b16 %v296
      %v1260 = vunpack.c.h.b16 %v296
      %v1261 = vunpack.c.l.b16 %v297
      %v1262 = vunpack.c.h.b16 %v297
      %v1263 = vunpack.c.l.b16 %v298
      %v1264 = vunpack.c.h.b16 %v298
      %v1265 = vunpack.c.l.b16 %v299
      %v1266 = vunpack.c.h.b16 %v299
      %v1267 = vunpack.c.l.b16 %v300
      %v1268 = vunpack.c.h.b16 %v300
      %v1269 = vunpack.c.l.b16 %v301
      %v1270 = vunpack.c.h.b16 %v301
      %v1271 = vunpack.c.l.b16 %v302
      %v1272 = vunpack.c.h.b16 %v302
      %v1273 = vunpack.c.l.b16 %v303
      %v1274 = vunpack.c.h.b16 %v303
      %v1275 = vunpack.c.l.b16 %v304
      %v1276 = vunpack.c.h.b16 %v304
      %v1277 = vunpack.c.l.b16 %v305
      %v1278 = vunpack.c.h.b16 %v305
      %v1279 = vunpack.c.l.b16 %v306
      %v1280 = vunpack.c.h.b16 %v306
      %v1281 = vunpack.c.l.b16 %v307
      %v1282 = vunpack.c.h.b16 %v307
      %v1283 = vunpack.c.l.b16 %v308
      %v1284 = vunpack.c.h.b16 %v308
      %v1285 = vunpack.c.l.b16 %v309
      %v1286 = vunpack.c.h.b16 %v309
      %v1287 = vunpack.c.l.b16 %v310
      %v1288 = vunpack.c.h.b16 %v310
      %v1289 = vunpack.c.l.b16 %v311
      %v1290 = vunpack.c.h.b16 %v311
      %v1291 = vunpack.c.l.b16 %v312
      %v1292 = vunpack.c.h.b16 %v312
      %v1293 = vunpack.c.l.b16 %v313
      %v1294 = vunpack.c.h.b16 %v313
      %v1295 = vunpack.c.l.b16 %v314
      %v1296 = vunpack.c.h.b16 %v314
      %v1297 = vunpack.c.l.b16 %v315
      %v1298 = vunpack.c.h.b16 %v315
      %v1299 = vunpack.c.l.b16 %v316
      %v1300 = vunpack.c.h.b16 %v316
      %v1301 = vunpack.c.l.b16 %v317
      %v1302 = vunpack.c.h.b16 %v317
      %v1303 = vunpack.c.l.b16 %v318
      %v1304 = vunpack.c.h.b16 %v318
      %v1305 = vunpack.c.l.b16 %v319
      %v1306 = vunpack.c.h.b16 %v319
      %v1307 = vunpack.c.l.b16 %v320
      %v1308 = vunpack.c.h.b16 %v320
      %v1309 = vunpack.c.l.b16 %v321
      %v1310 = vunpack.c.h.b16 %v321
      %v1311 = vunpack.c.l.b16 %v322
      %v1312 = vunpack.c.h.b16 %v322
      %v1313 = vunpack.c.l.b16 %v323
      %v1314 = vunpack.c.h.b16 %v323
      %v1315 = vunpack.c.l.b16 %v324
      %v1316 = vunpack.c.h.b16 %v324
      %v1317 = vunpack.c.l.b16 %v325
      %v1318 = vunpack.c.h.b16 %v325
      %v1319 = vunpack.c.l.b16 %v326
      %v1320 = vunpack.c.h.b16 %v326
      %v1321 = vunpack.c.l.b16 %v327
      %v1322 = vunpack.c.h.b16 %v327
      %v1323 = vunpack.c.l.b16 %v328
      %v1324 = vunpack.c.h.b16 %v328
      %v1325 = vunpack.c.l.b16 %v329
      %v1326 = vunpack.c.h.b16 %v329
      %v1327 = vunpack.c.l.b16 %v330
      %v1328 = vunpack.c.h.b16 %v330
      %v1329 = vunpack.c.l.b16 %v331
      %v1330 = vunpack.c.h.b16 %v331
      %v1331 = vunpack.c.l.b16 %v332
      %v1332 = vunpack.c.h.b16 %v332
      %v1333 = vunpack.c.l.b16 %v333
      %v1334 = vunpack.c.h.b16 %v333
      %v1335 = vunpack.c.l.b16 %v334
      %v1336 = vunpack.c.h.b16 %v334
      %v1337 = vunpack.c.l.b16 %v335
      %v1338 = vunpack.c.h.b16 %v335
      %v1339 = vunpack.c.l.b16 %v336
      %v1340 = vunpack.c.h.b16 %v336
      %v1341 = vunpack.c.l.b16 %v337
      %v1342 = vunpack.c.h.b16 %v337
      %v1343 = vunpack.c.l.b16 %v338
      %v1344 = vunpack.c.h.b16 %v338
      %v1345 = vunpack.c.l.b16 %v339
      %v1346 = vunpack.c.h.b16 %v339
      %v1347 = vunpack.c.l.b16 %v340
      %v1348 = vunpack.c.h.b16 %v340
      %v1349 = vunpack.c.l.b16 %v341
      %v1350 = vunpack.c.h.b16 %v341
      %v1351 = vunpack.c.l.b16 %v342
      %v1352 = vunpack.c.h.b16 %v342
      %v1353 = vunpack.c.l.b16 %v343
      %v1354 = vunpack.c.h.b16 %v343
      %v1355 = vunpack.c.l.b16 %v344
      %v1356 = vunpack.c.h.b16 %v344
      %v1357 = vunpack.c.l.b16 %v345
      %v1358 = vunpack.c.h.b16 %v345
      %v1359 = vunpack.c.l.b16 %v346
      %v1360 = vunpack.c.h.b16 %v346
      %v1361 = vunpack.c.l.b16 %v347
      %v1362 = vunpack.c.h.b16 %v347
      %v1363 = vunpack.c.l.b16 %v348
      %v1364 = vunpack.c.h.b16 %v348
      %v1365 = vunpack.c.l.b16 %v349
      %v1366 = vunpack.c.h.b16 %v349
      %v1367 = vunpack.c.l.b16 %v350
      %v1368 = vunpack.c.h.b16 %v350
      %v1369 = vunpack.c.l.b16 %v351
      %v1370 = vunpack.c.h.b16 %v351
      %v1371 = vunpack.c.l.b16 %v352
      %v1372 = vunpack.c.h.b16 %v352
      %v1373 = vunpack.c.l.b16 %v353
      %v1374 = vunpack.c.h.b16 %v353
      %v1375 = vunpack.c.l.b16 %v354
      %v1376 = vunpack.c.h.b16 %v354
      %v1377 = vunpack.c.l.b16 %v355
      %v1378 = vunpack.c.h.b16 %v355
      %v1379 = vunpack.c.l.b16 %v356
      %v1380 = vunpack.c.h.b16 %v356
      %v1381 = vunpack.c.l.b16 %v357
      %v1382 = vunpack.c.h.b16 %v357
      %v1383 = vunpack.c.l.b16 %v358
      %v1384 = vunpack.c.h.b16 %v358
      %v1385 = vunpack.c.l.b16 %v359
      %v1386 = vunpack.c.h.b16 %v359
      %v1387 = vunpack.c.l.b16 %v360
      %v1388 = vunpack.c.h.b16 %v360
      %v1389 = vunpack.c.l.b16 %v361
      %v1390 = vunpack.c.h.b16 %v361
      %v1391 = vunpack.c.l.b16 %v362
      %v1392 = vunpack.c.h.b16 %v362
      %v1393 = vunpack.c.l.b16 %v363
      %v1394 = vunpack.c.h.b16 %v363
      %v1395 = vunpack.c.l.b16 %v364
      %v1396 = vunpack.c.h.b16 %v364
      %v1397 = vunpack.c.l.b16 %v365
      %v1398 = vunpack.c.h.b16 %v365
      %v1399 = vunpack.c.l.b16 %v366
      %v1400 = vunpack.c.h.b16 %v366
      %v1401 = vunpack.c.l.b16 %v367
      %v1402 = vunpack.c.h.b16 %v367
      %v1403 = vunpack.c.l.b16 %v368
      %v1404 = vunpack.c.h.b16 %v368
      %v1405 = vunpack.c.l.b16 %v369
      %v1406 = vunpack.c.h.b16 %v369
      %v1407 = vunpack.c.l.b16 %v370
      %v1408 = vunpack.c.h.b16 %v370
      %v1409 = vunpack.c.l.b16 %v371
      %v1410 = vunpack.c.h.b16 %v371
      %v1411 = vunpack.c.l.b16 %v372
      %v1412 = vunpack.c.h.b16 %v372
      %v1413 = vunpack.c.l.b16 %v373
      %v1414 = vunpack.c.h.b16 %v373
      %v1415 = vunpack.c.l.b16 %v374
      %v1416 = vunpack.c.h.b16 %v374
      %v1417 = vunpack.c.l.b16 %v375
      %v1418 = vunpack.c.h.b16 %v375
      %v1419 = vunpack.c.l.b16 %v376
      %v1420 = vunpack.c.h.b16 %v376
      %v1421 = vunpack.c.l.b16 %v377
      %v1422 = vunpack.c.h.b16 %v377
      %v1423 = vunpack.c.l.b16 %v378
      %v1424 = vunpack.c.h.b16 %v378
      %v1425 = vunpack.c.l.b16 %v379
      %v1426 = vunpack.c.h.b16 %v379
      %v1427 = vunpack.c.l.b16 %v380
      %v1428 = vunpack.c.h.b16 %v380
      %v1429 = vunpack.c.l.b16 %v381
      %v1430 = vunpack.c.h.b16 %v381
      %v1431 = vunpack.c.l.b16 %v382
      %v1432 = vunpack.c.h.b16 %v382
      %v1433 = vunpack.c.l.b16 %v383
      %v1434 = vunpack.c.h.b16 %v383
      %v1435 = vunpack.c.l.b16 %v384
      %v1436 = vunpack.c.h.b16 %v384
      %v1437 = vpack.c.b16 %v1047, %v1021
      %v1438 = vpack.c.b16 %v1048, %v1022
      %v1439 = vpack.c.b16 %v1049, %v1023
      %v1440 = vpack.c.b16 %v1050, %v1024
      %v1441 = vpack.c.b16 %v1051, %v1025
      %v1442 = vpack.c.b16 %v1052, %v1026
      %v1443 = vpack.c.b16 %v1053, %v1027
      %v1444 = vpack.c.b16 %v1054, %v1028
      %v1445 = vpack.c.b16 %v1055, %v1029
      %v1446 = vpack.c.b16 %v1056, %v1030
      %v1447 = vpack.c.b16 %v1057, %v1031
      %v1448 = vpack.c.b16 %v1058, %v1032
      %v1449 = vpack.c.b16 %v1059, %v1033
      %v1450 = vpack.c.b16 %v1060, %v1034
      %v1451 = vpack.c.b16 %v1061, %v1035
      %v1452 = vpack.c.b16 %v1062, %v1036
      %v1453 = vpack.c.b16 %v1063, %v1037
      %v1454 = vpack.c.b16 %v1064, %v1038
      %v1455 = vpack.c.b16 %v1065, %v1039
      %v1456 = vpack.c.b16 %v1066, %v1040
      %v1457 = vpack.c.b16 %v1067, %v1041
      %v1458 = vpack.c.b16 %v1068, %v1042
      %v1459 = vpack.c.b16 %v1069, %v1043
      %v1460 = vpack.c.b16 %v1070, %v1044
      %v1461 = vpack.c.b16 %v1071, %v1045
      %v1462 = vpack.c.b16 %v1072, %v1046
      %v1463 = vpack.c.b16 %v1099, %v1073
      %v1464 = vpack.c.b16 %v1100, %v1074
      %v1465 = vpack.c.b16 %v1101, %v1075
      %v1466 = vpack.c.b16 %v1102, %v1076
      %v1467 = vpack.c.b16 %v1103, %v1077
      %v1468 = vpack.c.b16 %v1104, %v1078
      %v1469 = vpack.c.b16 %v1105, %v1079
      %v1470 = vpack.c.b16 %v1106, %v1080
      %v1471 = vpack.c.b16 %v1107, %v1081
      %v1472 = vpack.c.b16 %v1108, %v1082
      %v1473 = vpack.c.b16 %v1109, %v1083
      %v1474 = vpack.c.b16 %v1110, %v1084
      %v1475 = vpack.c.b16 %v1111, %v1085
      %v1476 = vpack.c.b16 %v1112, %v1086
      %v1477 = vpack.c.b16 %v1113, %v1087
      %v1478 = vpack.c.b16 %v1114, %v1088
      %v1479 = vpack.c.b16 %v1115, %v1089
      %v1480 = vpack.c.b16 %v1116, %v1090
      %v1481 = vpack.c.b16 %v1117, %v1091
      %v1482 = vpack.c.b16 %v1118, %v1092
      %v1483 = vpack.c.b16 %v1119, %v1093
      %v1484 = vpack.c.b16 %v1120, %v1094
      %v1485 = vpack.c.b16 %v1121, %v1095
      %v1486 = vpack.c.b16 %v1122, %v1096
      %v1487 = vpack.c.b16 %v1123, %v1097
      %v1488 = vpack.c.b16 %v1124, %v1098
      %v1489 = vpack.c.b16 %v1151, %v1125
      %v1490 = vpack.c.b16 %v1152, %v1126
      %v1491 = vpack.c.b16 %v1153, %v1127
      %v1492 = vpack.c.b16 %v1154, %v1128
      %v1493 = vpack.c.b16 %v1155, %v1129
      %v1494 = vpack.c.b16 %v1156, %v1130
      %v1495 = vpack.c.b16 %v1157, %v1131
      %v1496 = vpack.c.b16 %v1158, %v1132
      %v1497 = vpack.c.b16 %v1159, %v1133
      %v1498 = vpack.c.b16 %v1160, %v1134
      %v1499 = vpack.c.b16 %v1161, %v1135
      %v1500 = vpack.c.b16 %v1162, %v1136
      %v1501 = vpack.c.b16 %v1163, %v1137
      %v1502 = vpack.c.b16 %v1164, %v1138
      %v1503 = vpack.c.b16 %v1165, %v1139
      %v1504 = vpack.c.b16 %v1166, %v1140
      %v1505 = vpack.c.b16 %v1167, %v1141
      %v1506 = vpack.c.b16 %v1168, %v1142
      %v1507 = vpack.c.b16 %v1169, %v1143
      %v1508 = vpack.c.b16 %v1170, %v1144
      %v1509 = vpack.c.b16 %v1171, %v1145
      %v1510 = vpack.c.b16 %v1172, %v1146
      %v1511 = vpack.c.b16 %v1173, %v1147
      %v1512 = vpack.c.b16 %v1174, %v1148
      %v1513 = vpack.c.b16 %v1175, %v1149
      %v1514 = vpack.c.b16 %v1176, %v1150
      %v1515 = vpack.c.b16 %v1203, %v1177
      %v1516 = vpack.c.b16 %v1204, %v1178
      %v1517 = vpack.c.b16 %v1205, %v1179
      %v1518 = vpack.c.b16 %v1206, %v1180
      %v1519 = vpack.c.b16 %v1207, %v1181
      %v1520 = vpack.c.b16 %v1208, %v1182
      %v1521 = vpack.c.b16 %v1209, %v1183
      %v1522 = vpack.c.b16 %v1210, %v1184
      %v1523 = vpack.c.b16 %v1211, %v1185
      %v1524 = vpack.c.b16 %v1212, %v1186
      %v1525 = vpack.c.b16 %v1213, %v1187
      %v1526 = vpack.c.b16 %v1214, %v1188
      %v1527 = vpack.c.b16 %v1215, %v1189
      %v1528 = vpack.c.b16 %v1216, %v1190
      %v1529 = vpack.c.b16 %v1217, %v1191
      %v1530 = vpack.c.b16 %v1218, %v1192
      %v1531 = vpack.c.b16 %v1219, %v1193
      %v1532 = vpack.c.b16 %v1220, %v1194
      %v1533 = vpack.c.b16 %v1221, %v1195
      %v1534 = vpack.c.b16 %v1222, %v1196
      %v1535 = vpack.c.b16 %v1223, %v1197
      %v1536 = vpack.c.b16 %v1224, %v1198
      %v1537 = vpack.c.b16 %v1225, %v1199
      %v1538 = vpack.c.b16 %v1226, %v1200
      %v1539 = vpack.c.b16 %v1227, %v1201
      %v1540 = vpack.c.b16 %v1228, %v1202
      %v1541 = vpack.c.b16 %v1255, %v1229
      %v1542 = vpack.c.b16 %v1256, %v1230
      %v1543 = vpack.c.b16 %v1257, %v1231
      %v1544 = vpack.c.b16 %v1258, %v1232
      %v1545 = vpack.c.b16 %v1259, %v1233
      %v1546 = vpack.c.b16 %v1260, %v1234
      %v1547 = vpack.c.b16 %v1261, %v1235
      %v1548 = vpack.c.b16 %v1262, %v1236
      %v1549 = vpack.c.b16 %v1263, %v1237
      %v1550 = vpack.c.b16 %v1264, %v1238
      %v1551 = vpack.c.b16 %v1265, %v1239
      %v1552 = vpack.c.b16 %v1266, %v1240
      %v1553 = vpack.c.b16 %v1267, %v1241
      %v1554 = vpack.c.b16 %v1268, %v1242
      %v1555 = vpack.c.b16 %v1269, %v1243
      %v1556 = vpack.c.b16 %v1270, %v1244
      %v1557 = vpack.c.b16 %v1271, %v1245
      %v1558 = vpack.c.b16 %v1272, %v1246
      %v1559 = vpack.c.b16 %v1273, %v1247
      %v1560 = vpack.c.b16 %v1274, %v1248
      %v1561 = vpack.c.b16 %v1275, %v1249
      %v1562 = vpack.c.b16 %v1276, %v1250
      %v1563 = vpack.c.b16 %v1277, %v1251
      %v1564 = vpack.c.b16 %v1278, %v1252
      %v1565 = vpack.c.b16 %v1279, %v1253
      %v1566 = vpack.c.b16 %v1280, %v1254
      %v1567 = vpack.c.b16 %v1307, %v1281
      %v1568 = vpack.c.b16 %v1308, %v1282
      %v1569 = vpack.c.b16 %v1309, %v1283
      %v1570 = vpack.c.b16 %v1310, %v1284
      %v1571 = vpack.c.b16 %v1311, %v1285
      %v1572 = vpack.c.b16 %v1312, %v1286
      %v1573 = vpack.c.b16 %v1313, %v1287
      %v1574 = vpack.c.b16 %v1314, %v1288
      %v1575 = vpack.c.b16 %v1315, %v1289
      %v1576 = vpack.c.b16 %v1316, %v1290
      %v1577 = vpack.c.b16 %v1317, %v1291
      %v1578 = vpack.c.b16 %v1318, %v1292
      %v1579 = vpack.c.b16 %v1319, %v1293
      %v1580 = vpack.c.b16 %v1320, %v1294
      %v1581 = vpack.c.b16 %v1321, %v1295
      %v1582 = vpack.c.b16 %v1322, %v1296
      %v1583 = vpack.c.b16 %v1323, %v1297
      %v1584 = vpack.c.b16 %v1324, %v1298
      %v1585 = vpack.c.b16 %v1325, %v1299
      %v1586 = vpack.c.b16 %v1326, %v1300
      %v1587 = vpack.c.b16 %v1327, %v1301
      %v1588 = vpack.c.b16 %v1328, %v1302
      %v1589 = vpack.c.b16 %v1329, %v1303
      %v1590 = vpack.c.b16 %v1330, %v1304
      %v1591 = vpack.c.b16 %v1331, %v1305
      %v1592 = vpack.c.b16 %v1332, %v1306
      %v1593 = vpack.c.b16 %v1359, %v1333
      %v1594 = vpack.c.b16 %v1360, %v1334
      %v1595 = vpack.c.b16 %v1361, %v1335
      %v1596 = vpack.c.b16 %v1362, %v1336
      %v1597 = vpack.c.b16 %v1363, %v1337
      %v1598 = vpack.c.b16 %v1364, %v1338
      %v1599 = vpack.c.b16 %v1365, %v1339
      %v1600 = vpack.c.b16 %v1366, %v1340
      %v1601 = vpack.c.b16 %v1367, %v1341
      %v1602 = vpack.c.b16 %v1368, %v1342
      %v1603 = vpack.c.b16 %v1369, %v1343
      %v1604 = vpack.c.b16 %v1370, %v1344
      %v1605 = vpack.c.b16 %v1371, %v1345
      %v1606 = vpack.c.b16 %v1372, %v1346
      %v1607 = vpack.c.b16 %v1373, %v1347
      %v1608 = vpack.c.b16 %v1374, %v1348
      %v1609 = vpack.c.b16 %v1375, %v1349
      %v1610 = vpack.c.b16 %v1376, %v1350
      %v1611 = vpack.c.b16 %v1377, %v1351
      %v1612 = vpack.c.b16 %v1378, %v1352
      %v1613 = vpack.c.b16 %v1379, %v1353
      %v1614 = vpack.c.b16 %v1380, %v1354
      %v1615 = vpack.c.b16 %v1381, %v1355
      %v1616 = vpack.c.b16 %v1382, %v1356
      %v1617 = vpack.c.b16 %v1383, %v1357
      %v1618 = vpack.c.b16 %v1384, %v1358
      %v1619 = vpack.c.b16 %v1411, %v1385
      %v1620 = vpack.c.b16 %v1412, %v1386
      %v1621 = vpack.c.b16 %v1413, %v1387
      %v1622 = vpack.c.b16 %v1414, %v1388
      %v1623 = vpack.c.b16 %v1415, %v1389
      %v1624 = vpack.c.b16 %v1416, %v1390
      %v1625 = vpack.c.b16 %v1417, %v1391
      %v1626 = vpack.c.b16 %v1418, %v1392
      %v1627 = vpack.c.b16 %v1419, %v1393
      %v1628 = vpack.c.b16 %v1420, %v1394
      %v1629 = vpack.c.b16 %v1421, %v1395
      %v1630 = vpack.c.b16 %v1422, %v1396
      %v1631 = vpack.c.b16 %v1423, %v1397
      %v1632 = vpack.c.b16 %v1424, %v1398
      %v1633 = vpack.c.b16 %v1425, %v1399
      %v1634 = vpack.c.b16 %v1426, %v1400
      %v1635 = vpack.c.b16 %v1427, %v1401
      %v1636 = vpack.c.b16 %v1428, %v1402
      %v1637 = vpack.c.b16 %v1429, %v1403
      %v1638 = vpack.c.b16 %v1430, %v1404
      %v1639 = vpack.c.b16 %v1431, %v1405
      %v1640 = vpack.c.b16 %v1432, %v1406
      %v1641 = vpack.c.b16 %v1433, %v1407
      %v1642 = vpack.c.b16 %v1434, %v1408
      %v1643 = vpack.c.b16 %v1435, %v1409
      %v1644 = vpack.c.b16 %v1436, %v1410
      %v2269 = vunpack.c.l.b16 %v385
      %v2270 = vunpack.c.h.b16 %v385
      %v2271 = vunpack.c.l.b16 %v386
      %v2272 = vunpack.c.h.b16 %v386
      %v2273 = vunpack.c.l.b16 %v387
      %v2274 = vunpack.c.h.b16 %v387
      %v2275 = vunpack.c.l.b16 %v388
      %v2276 = vunpack.c.h.b16 %v388
      %v2277 = vunpack.c.l.b16 %v389
      %v2278 = vunpack.c.h.b16 %v389
      %v2279 = vunpack.c.l.b16 %v390
      %v2280 = vunpack.c.h.b16 %v390
      %v2281 = vunpack.c.l.b16 %v391
      %v2282 = vunpack.c.h.b16 %v391
      %v2283 = vunpack.c.l.b16 %v392
      %v2284 = vunpack.c.h.b16 %v392
      %v2285 = vunpack.c.l.b16 %v393
      %v2286 = vunpack.c.h.b16 %v393
      %v2287 = vunpack.c.l.b16 %v394
      %v2288 = vunpack.c.h.b16 %v394
      %v2289 = vunpack.c.l.b16 %v395
      %v2290 = vunpack.c.h.b16 %v395
      %v2291 = vunpack.c.l.b16 %v396
      %v2292 = vunpack.c.h.b16 %v396
      %v2293 = vunpack.c.l.b16 %v397
      %v2294 = vunpack.c.h.b16 %v397
      %v2295 = vunpack.c.l.b16 %v398
      %v2296 = vunpack.c.h.b16 %v398
      %v2297 = vunpack.c.l.b16 %v399
      %v2298 = vunpack.c.h.b16 %v399
      %v2299 = vunpack.c.l.b16 %v400
      %v2300 = vunpack.c.h.b16 %v400
      %v2301 = vunpack.c.l.b16 %v401
      %v2302 = vunpack.c.h.b16 %v401
      %v2303 = vunpack.c.l.b16 %v402
      %v2304 = vunpack.c.h.b16 %v402
      %v2305 = vunpack.c.l.b16 %v403
      %v2306 = vunpack.c.h.b16 %v403
      %v2307 = vunpack.c.l.b16 %v404
      %v2308 = vunpack.c.h.b16 %v404
      %v2309 = vunpack.c.l.b16 %v405
      %v2310 = vunpack.c.h.b16 %v405
      %v2311 = vunpack.c.l.b16 %v406
      %v2312 = vunpack.c.h.b16 %v406
      %v2313 = vunpack.c.l.b16 %v407
      %v2314 = vunpack.c.h.b16 %v407
      %v2315 = vunpack.c.l.b16 %v408
      %v2316 = vunpack.c.h.b16 %v408
      %v2317 = vunpack.c.l.b16 %v409
      %v2318 = vunpack.c.h.b16 %v409
      %v2319 = vunpack.c.l.b16 %v410
      %v2320 = vunpack.c.h.b16 %v410
      %v2321 = vunpack.c.l.b16 %v411
      %v2322 = vunpack.c.h.b16 %v411
      %v2323 = vunpack.c.l.b16 %v412
      %v2324 = vunpack.c.h.b16 %v412
      %v2325 = vunpack.c.l.b16 %v413
      %v2326 = vunpack.c.h.b16 %v413
      %v2327 = vunpack.c.l.b16 %v414
      %v2328 = vunpack.c.h.b16 %v414
      %v2329 = vunpack.c.l.b16 %v415
      %v2330 = vunpack.c.h.b16 %v415
      %v2331 = vunpack.c.l.b16 %v416
      %v2332 = vunpack.c.h.b16 %v416
      %v2333 = vunpack.c.l.b16 %v417
      %v2334 = vunpack.c.h.b16 %v417
      %v2335 = vunpack.c.l.b16 %v418
      %v2336 = vunpack.c.h.b16 %v418
      %v2337 = vunpack.c.l.b16 %v419
      %v2338 = vunpack.c.h.b16 %v419
      %v2339 = vunpack.c.l.b16 %v420
      %v2340 = vunpack.c.h.b16 %v420
      %v2341 = vunpack.c.l.b16 %v421
      %v2342 = vunpack.c.h.b16 %v421
      %v2343 = vunpack.c.l.b16 %v422
      %v2344 = vunpack.c.h.b16 %v422
      %v2345 = vunpack.c.l.b16 %v423
      %v2346 = vunpack.c.h.b16 %v423
      %v2347 = vunpack.c.l.b16 %v424
      %v2348 = vunpack.c.h.b16 %v424
      %v2349 = vunpack.c.l.b16 %v425
      %v2350 = vunpack.c.h.b16 %v425
      %v2351 = vunpack.c.l.b16 %v426
      %v2352 = vunpack.c.h.b16 %v426
      %v2353 = vunpack.c.l.b16 %v427
      %v2354 = vunpack.c.h.b16 %v427
      %v2355 = vunpack.c.l.b16 %v428
      %v2356 = vunpack.c.h.b16 %v428
      %v2357 = vunpack.c.l.b16 %v429
      %v2358 = vunpack.c.h.b16 %v429
      %v2359 = vunpack.c.l.b16 %v430
      %v2360 = vunpack.c.h.b16 %v430
      %v2361 = vunpack.c.l.b16 %v431
      %v2362 = vunpack.c.h.b16 %v431
      %v2363 = vunpack.c.l.b16 %v432
      %v2364 = vunpack.c.h.b16 %v432
      %v2365 = vunpack.c.l.b16 %v433
      %v2366 = vunpack.c.h.b16 %v433
      %v2367 = vunpack.c.l.b16 %v434
      %v2368 = vunpack.c.h.b16 %v434
      %v2369 = vunpack.c.l.b16 %v435
      %v2370 = vunpack.c.h.b16 %v435
      %v2371 = vunpack.c.l.b16 %v436
      %v2372 = vunpack.c.h.b16 %v436
      %v2373 = vunpack.c.l.b16 %v437
      %v2374 = vunpack.c.h.b16 %v437
      %v2375 = vunpack.c.l.b16 %v438
      %v2376 = vunpack.c.h.b16 %v438
      %v2377 = vunpack.c.l.b16 %v439
      %v2378 = vunpack.c.h.b16 %v439
      %v2379 = vunpack.c.l.b16 %v440
      %v2380 = vunpack.c.h.b16 %v440
      %v2381 = vunpack.c.l.b16 %v441
      %v2382 = vunpack.c.h.b16 %v441
      %v2383 = vunpack.c.l.b16 %v442
      %v2384 = vunpack.c.h.b16 %v442
      %v2385 = vunpack.c.l.b16 %v443
      %v2386 = vunpack.c.h.b16 %v443
      %v2387 = vunpack.c.l.b16 %v444
      %v2388 = vunpack.c.h.b16 %v444
      %v2389 = vunpack.c.l.b16 %v445
      %v2390 = vunpack.c.h.b16 %v445
      %v2391 = vunpack.c.l.b16 %v446
      %v2392 = vunpack.c.h.b16 %v446
      %v2393 = vunpack.c.l.b16 %v447
      %v2394 = vunpack.c.h.b16 %v447
      %v2395 = vunpack.c.l.b16 %v448
      %v2396 = vunpack.c.h.b16 %v448
      %v2397 = vunpack.c.l.b16 %v449
      %v2398 = vunpack.c.h.b16 %v449
      %v2399 = vunpack.c.l.b16 %v450
      %v2400 = vunpack.c.h.b16 %v450
      %v2401 = vunpack.c.l.b16 %v451
      %v2402 = vunpack.c.h.b16 %v451
      %v2403 = vunpack.c.l.b16 %v452
      %v2404 = vunpack.c.h.b16 %v452
      %v2405 = vunpack.c.l.b16 %v453
      %v2406 = vunpack.c.h.b16 %v453
      %v2407 = vunpack.c.l.b16 %v454
      %v2408 = vunpack.c.h.b16 %v454
      %v2409 = vunpack.c.l.b16 %v455
      %v2410 = vunpack.c.h.b16 %v455
      %v2411 = vunpack.c.l.b16 %v456
      %v2412 = vunpack.c.h.b16 %v456
      %v2413 = vunpack.c.l.b16 %v457
      %v2414 = vunpack.c.h.b16 %v457
      %v2415 = vunpack.c.l.b16 %v458
      %v2416 = vunpack.c.h.b16 %v458
      %v2417 = vunpack.c.l.b16 %v459
      %v2418 = vunpack.c.h.b16 %v459
      %v2419 = vunpack.c.l.b16 %v460
      %v2420 = vunpack.c.h.b16 %v460
      %v2421 = vunpack.c.l.b16 %v461
      %v2422 = vunpack.c.h.b16 %v461
      %v2423 = vunpack.c.l.b16 %v462
      %v2424 = vunpack.c.h.b16 %v462
      %v2425 = vunpack.c.l.b16 %v463
      %v2426 = vunpack.c.h.b16 %v463
      %v2427 = vunpack.c.l.b16 %v464
      %v2428 = vunpack.c.h.b16 %v464
      %v2429 = vunpack.c.l.b16 %v465
      %v2430 = vunpack.c.h.b16 %v465
      %v2431 = vunpack.c.l.b16 %v466
      %v2432 = vunpack.c.h.b16 %v466
      %v2433 = vunpack.c.l.b16 %v467
      %v2434 = vunpack.c.h.b16 %v467
      %v2435 = vunpack.c.l.b16 %v468
      %v2436 = vunpack.c.h.b16 %v468
      %v2437 = vunpack.c.l.b16 %v469
      %v2438 = vunpack.c.h.b16 %v469
      %v2439 = vunpack.c.l.b16 %v470
      %v2440 = vunpack.c.h.b16 %v470
      %v2441 = vunpack.c.l.b16 %v471
      %v2442 = vunpack.c.h.b16 %v471
      %v2443 = vunpack.c.l.b16 %v472
      %v2444 = vunpack.c.h.b16 %v472
      %v2445 = vunpack.c.l.b16 %v473
      %v2446 = vunpack.c.h.b16 %v473
      %v2447 = vunpack.c.l.b16 %v474
      %v2448 = vunpack.c.h.b16 %v474
      %v2449 = vunpack.c.l.b16 %v475
      %v2450 = vunpack.c.h.b16 %v475
      %v2451 = vunpack.c.l.b16 %v476
      %v2452 = vunpack.c.h.b16 %v476
      %v2453 = vunpack.c.l.b16 %v477
      %v2454 = vunpack.c.h.b16 %v477
      %v2455 = vunpack.c.l.b16 %v478
      %v2456 = vunpack.c.h.b16 %v478
      %v2457 = vunpack.c.l.b16 %v479
      %v2458 = vunpack.c.h.b16 %v479
      %v2459 = vunpack.c.l.b16 %v480
      %v2460 = vunpack.c.h.b16 %v480
      %v2461 = vunpack.c.l.b16 %v481
      %v2462 = vunpack.c.h.b16 %v481
      %v2463 = vunpack.c.l.b16 %v482
      %v2464 = vunpack.c.h.b16 %v482
      %v2465 = vunpack.c.l.b16 %v483
      %v2466 = vunpack.c.h.b16 %v483
      %v2467 = vunpack.c.l.b16 %v484
      %v2468 = vunpack.c.h.b16 %v484
      %v2469 = vunpack.c.l.b16 %v485
      %v2470 = vunpack.c.h.b16 %v485
      %v2471 = vunpack.c.l.b16 %v486
      %v2472 = vunpack.c.h.b16 %v486
      %v2473 = vunpack.c.l.b16 %v487
      %v2474 = vunpack.c.h.b16 %v487
      %v2475 = vunpack.c.l.b16 %v488
      %v2476 = vunpack.c.h.b16 %v488
      %v2477 = vunpack.c.l.b16 %v489
      %v2478 = vunpack.c.h.b16 %v489
      %v2479 = vunpack.c.l.b16 %v490
      %v2480 = vunpack.c.h.b16 %v490
      %v2481 = vunpack.c.l.b16 %v491
      %v2482 = vunpack.c.h.b16 %v491
      %v2483 = vunpack.c.l.b16 %v492
      %v2484 = vunpack.c.h.b16 %v492
      %v2485 = vunpack.c.l.b16 %v493
      %v2486 = vunpack.c.h.b16 %v493
      %v2487 = vunpack.c.l.b16 %v494
      %v2488 = vunpack.c.h.b16 %v494
      %v2489 = vunpack.c.l.b16 %v495
      %v2490 = vunpack.c.h.b16 %v495
      %v2491 = vunpack.c.l.b16 %v496
      %v2492 = vunpack.c.h.b16 %v496
      %v2493 = vunpack.c.l.b16 %v497
      %v2494 = vunpack.c.h.b16 %v497
      %v2495 = vunpack.c.l.b16 %v498
      %v2496 = vunpack.c.h.b16 %v498
      %v2497 = vunpack.c.l.b16 %v499
      %v2498 = vunpack.c.h.b16 %v499
      %v2499 = vunpack.c.l.b16 %v500
      %v2500 = vunpack.c.h.b16 %v500
      %v2501 = vunpack.c.l.b16 %v501
      %v2502 = vunpack.c.h.b16 %v501
      %v2503 = vunpack.c.l.b16 %v502
      %v2504 = vunpack.c.h.b16 %v502
      %v2505 = vunpack.c.l.b16 %v503
      %v2506 = vunpack.c.h.b16 %v503
      %v2507 = vunpack.c.l.b16 %v504
      %v2508 = vunpack.c.h.b16 %v504
      %v2509 = vunpack.c.l.b16 %v505
      %v2510 = vunpack.c.h.b16 %v505
      %v2511 = vunpack.c.l.b16 %v506
      %v2512 = vunpack.c.h.b16 %v506
      %v2513 = vunpack.c.l.b16 %v507
      %v2514 = vunpack.c.h.b16 %v507
      %v2515 = vunpack.c.l.b16 %v508
      %v2516 = vunpack.c.h.b16 %v508
      %v2517 = vunpack.c.l.b16 %v509
      %v2518 = vunpack.c.h.b16 %v509
      %v2519 = vunpack.c.l.b16 %v510
      %v2520 = vunpack.c.h.b16 %v510
      %v2521 = vunpack.c.l.b16 %v511
      %v2522 = vunpack.c.h.b16 %v511
      %v2523 = vunpack.c.l.b16 %v512
      %v2524 = vunpack.c.h.b16 %v512
      %v2525 = vunpack.c.l.b16 %v513
      %v2526 = vunpack.c.h.b16 %v513
      %v2527 = vunpack.c.l.b16 %v514
      %v2528 = vunpack.c.h.b16 %v514
      %v2529 = vunpack.c.l.b16 %v515
      %v2530 = vunpack.c.h.b16 %v515
      %v2531 = vunpack.c.l.b16 %v516
      %v2532 = vunpack.c.h.b16 %v516
      %v2533 = vunpack.c.l.b16 %v517
      %v2534 = vunpack.c.h.b16 %v517
      %v2535 = vunpack.c.l.b16 %v518
      %v2536 = vunpack.c.h.b16 %v518
      %v2537 = vunpack.c.l.b16 %v519
      %v2538 = vunpack.c.h.b16 %v519
      %v2539 = vunpack.c.l.b16 %v520
      %v2540 = vunpack.c.h.b16 %v520
      %v2541 = vunpack.c.l.b16 %v521
      %v2542 = vunpack.c.h.b16 %v521
      %v2543 = vunpack.c.l.b16 %v522
      %v2544 = vunpack.c.h.b16 %v522
      %v2545 = vunpack.c.l.b16 %v523
      %v2546 = vunpack.c.h.b16 %v523
      %v2547 = vunpack.c.l.b16 %v524
      %v2548 = vunpack.c.h.b16 %v524
      %v2549 = vunpack.c.l.b16 %v525
      %v2550 = vunpack.c.h.b16 %v525
      %v2551 = vunpack.c.l.b16 %v526
      %v2552 = vunpack.c.h.b16 %v526
      %v2553 = vunpack.c.l.b16 %v527
      %v2554 = vunpack.c.h.b16 %v527
      %v2555 = vunpack.c.l.b16 %v528
      %v2556 = vunpack.c.h.b16 %v528
      %v2557 = vunpack.c.l.b16 %v529
      %v2558 = vunpack.c.h.b16 %v529
      %v2559 = vunpack.c.l.b16 %v530
      %v2560 = vunpack.c.h.b16 %v530
      %v2561 = vunpack.c.l.b16 %v531
      %v2562 = vunpack.c.h.b16 %v531
      %v2563 = vunpack.c.l.b16 %v532
      %v2564 = vunpack.c.h.b16 %v532
      %v2565 = vunpack.c.l.b16 %v533
      %v2566 = vunpack.c.h.b16 %v533
      %v2567 = vunpack.c.l.b16 %v534
      %v2568 = vunpack.c.h.b16 %v534
      %v2569 = vunpack.c.l.b16 %v535
      %v2570 = vunpack.c.h.b16 %v535
      %v2571 = vunpack.c.l.b16 %v536
      %v2572 = vunpack.c.h.b16 %v536
      %v2573 = vunpack.c.l.b16 %v537
      %v2574 = vunpack.c.h.b16 %v537
      %v2575 = vunpack.c.l.b16 %v538
      %v2576 = vunpack.c.h.b16 %v538
      %v2577 = vunpack.c.l.b16 %v539
      %v2578 = vunpack.c.h.b16 %v539
      %v2579 = vunpack.c.l.b16 %v540
      %v2580 = vunpack.c.h.b16 %v540
      %v2581 = vunpack.c.l.b16 %v541
      %v2582 = vunpack.c.h.b16 %v541
      %v2583 = vunpack.c.l.b16 %v542
      %v2584 = vunpack.c.h.b16 %v542
      %v2585 = vunpack.c.l.b16 %v543
      %v2586 = vunpack.c.h.b16 %v543
      %v2587 = vunpack.c.l.b16 %v544
      %v2588 = vunpack.c.h.b16 %v544
      %v2589 = vunpack.c.l.b16 %v545
      %v2590 = vunpack.c.h.b16 %v545
      %v2591 = vunpack.c.l.b16 %v546
      %v2592 = vunpack.c.h.b16 %v546
      %v2593 = vunpack.c.l.b16 %v547
      %v2594 = vunpack.c.h.b16 %v547
      %v2595 = vunpack.c.l.b16 %v548
      %v2596 = vunpack.c.h.b16 %v548
      %v2597 = vunpack.c.l.b16 %v549
      %v2598 = vunpack.c.h.b16 %v549
      %v2599 = vunpack.c.l.b16 %v550
      %v2600 = vunpack.c.h.b16 %v550
      %v2601 = vunpack.c.l.b16 %v551
      %v2602 = vunpack.c.h.b16 %v551
      %v2603 = vunpack.c.l.b16 %v552
      %v2604 = vunpack.c.h.b16 %v552
      %v2605 = vunpack.c.l.b16 %v553
      %v2606 = vunpack.c.h.b16 %v553
      %v2607 = vunpack.c.l.b16 %v554
      %v2608 = vunpack.c.h.b16 %v554
      %v2609 = vunpack.c.l.b16 %v555
      %v2610 = vunpack.c.h.b16 %v555
      %v2611 = vunpack.c.l.b16 %v556
      %v2612 = vunpack.c.h.b16 %v556
      %v2613 = vunpack.c.l.b16 %v557
      %v2614 = vunpack.c.h.b16 %v557
      %v2615 = vunpack.c.l.b16 %v558
      %v2616 = vunpack.c.h.b16 %v558
      %v2617 = vunpack.c.l.b16 %v559
      %v2618 = vunpack.c.h.b16 %v559
      %v2619 = vunpack.c.l.b16 %v560
      %v2620 = vunpack.c.h.b16 %v560
      %v2621 = vunpack.c.l.b16 %v561
      %v2622 = vunpack.c.h.b16 %v561
      %v2623 = vunpack.c.l.b16 %v562
      %v2624 = vunpack.c.h.b16 %v562
      %v2625 = vunpack.c.l.b16 %v563
      %v2626 = vunpack.c.h.b16 %v563
      %v2627 = vunpack.c.l.b16 %v564
      %v2628 = vunpack.c.h.b16 %v564
      %v2629 = vunpack.c.l.b16 %v565
      %v2630 = vunpack.c.h.b16 %v565
      %v2631 = vunpack.c.l.b16 %v566
      %v2632 = vunpack.c.h.b16 %v566
      %v2633 = vunpack.c.l.b16 %v567
      %v2634 = vunpack.c.h.b16 %v567
      %v2635 = vunpack.c.l.b16 %v568
      %v2636 = vunpack.c.h.b16 %v568
      %v2637 = vunpack.c.l.b16 %v569
      %v2638 = vunpack.c.h.b16 %v569
      %v2639 = vunpack.c.l.b16 %v570
      %v2640 = vunpack.c.h.b16 %v570
      %v2641 = vunpack.c.l.b16 %v571
      %v2642 = vunpack.c.h.b16 %v571
      %v2643 = vunpack.c.l.b16 %v572
      %v2644 = vunpack.c.h.b16 %v572
      %v2645 = vunpack.c.l.b16 %v573
      %v2646 = vunpack.c.h.b16 %v573
      %v2647 = vunpack.c.l.b16 %v574
      %v2648 = vunpack.c.h.b16 %v574
      %v2649 = vunpack.c.l.b16 %v575
      %v2650 = vunpack.c.h.b16 %v575
      %v2651 = vunpack.c.l.b16 %v576
      %v2652 = vunpack.c.h.b16 %v576
      %v2653 = vunpack.c.l.b16 %v577
      %v2654 = vunpack.c.h.b16 %v577
      %v2655 = vunpack.c.l.b16 %v578
      %v2656 = vunpack.c.h.b16 %v578
      %v2657 = vunpack.c.l.b16 %v579
      %v2658 = vunpack.c.h.b16 %v579
      %v2659 = vunpack.c.l.b16 %v580
      %v2660 = vunpack.c.h.b16 %v580
      %v2661 = vunpack.c.l.b16 %v581
      %v2662 = vunpack.c.h.b16 %v581
      %v2663 = vunpack.c.l.b16 %v582
      %v2664 = vunpack.c.h.b16 %v582
      %v2665 = vunpack.c.l.b16 %v583
      %v2666 = vunpack.c.h.b16 %v583
      %v2667 = vunpack.c.l.b16 %v584
      %v2668 = vunpack.c.h.b16 %v584
      %v2669 = vunpack.c.l.b16 %v585
      %v2670 = vunpack.c.h.b16 %v585
      %v2671 = vunpack.c.l.b16 %v586
      %v2672 = vunpack.c.h.b16 %v586
      %v2673 = vunpack.c.l.b16 %v587
      %v2674 = vunpack.c.h.b16 %v587
      %v2675 = vunpack.c.l.b16 %v588
      %v2676 = vunpack.c.h.b16 %v588
      %v2677 = vunpack.c.l.b16 %v589
      %v2678 = vunpack.c.h.b16 %v589
      %v2679 = vunpack.c.l.b16 %v590
      %v2680 = vunpack.c.h.b16 %v590
      %v2681 = vunpack.c.l.b16 %v591
      %v2682 = vunpack.c.h.b16 %v591
      %v2683 = vunpack.c.l.b16 %v592
      %v2684 = vunpack.c.h.b16 %v592
      %v2685 = vunpack.c.l.b16 %v593
      %v2686 = vunpack.c.h.b16 %v593
      %v2687 = vunpack.c.l.b16 %v594
      %v2688 = vunpack.c.h.b16 %v594
      %v2689 = vunpack.c.l.b16 %v595
      %v2690 = vunpack.c.h.b16 %v595
      %v2691 = vunpack.c.l.b16 %v596
      %v2692 = vunpack.c.h.b16 %v596
      %v2693 = vunpack.c.l.b16 %v597
      %v2694 = vunpack.c.h.b16 %v597
      %v2695 = vunpack.c.l.b16 %v598
      %v2696 = vunpack.c.h.b16 %v598
      %v2697 = vunpack.c.l.b16 %v599
      %v2698 = vunpack.c.h.b16 %v599
      %v2699 = vunpack.c.l.b16 %v600
      %v2700 = vunpack.c.h.b16 %v600
      %v2701 = vunpack.c.l.b16 %v601
      %v2702 = vunpack.c.h.b16 %v601
      %v2703 = vunpack.c.l.b16 %v602
      %v2704 = vunpack.c.h.b16 %v602
      %v2705 = vunpack.c.l.b16 %v603
      %v2706 = vunpack.c.h.b16 %v603
      %v2707 = vunpack.c.l.b16 %v604
      %v2708 = vunpack.c.h.b16 %v604
      %v2709 = vunpack.c.l.b16 %v605
      %v2710 = vunpack.c.h.b16 %v605
      %v2711 = vunpack.c.l.b16 %v606
      %v2712 = vunpack.c.h.b16 %v606
      %v2713 = vunpack.c.l.b16 %v607
      %v2714 = vunpack.c.h.b16 %v607
      %v2715 = vunpack.c.l.b16 %v608
      %v2716 = vunpack.c.h.b16 %v608
      %v2717 = vunpack.c.l.b16 %v609
      %v2718 = vunpack.c.h.b16 %v609
      %v2719 = vunpack.c.l.b16 %v610
      %v2720 = vunpack.c.h.b16 %v610
      %v2721 = vunpack.c.l.b16 %v611
      %v2722 = vunpack.c.h.b16 %v611
      %v2723 = vunpack.c.l.b16 %v612
      %v2724 = vunpack.c.h.b16 %v612
      %v2725 = vunpack.c.l.b16 %v613
      %v2726 = vunpack.c.h.b16 %v613
      %v2727 = vunpack.c.l.b16 %v614
      %v2728 = vunpack.c.h.b16 %v614
      %v2729 = vunpack.c.l.b16 %v615
      %v2730 = vunpack.c.h.b16 %v615
      %v2731 = vunpack.c.l.b16 %v616
      %v2732 = vunpack.c.h.b16 %v616
      %v2733 = vunpack.c.l.b16 %v617
      %v2734 = vunpack.c.h.b16 %v617
      %v2735 = vunpack.c.l.b16 %v618
      %v2736 = vunpack.c.h.b16 %v618
      %v2737 = vunpack.c.l.b16 %v619
      %v2738 = vunpack.c.h.b16 %v619
      %v2739 = vunpack.c.l.b16 %v620
      %v2740 = vunpack.c.h.b16 %v620
      %v2741 = vunpack.c.l.b16 %v621
      %v2742 = vunpack.c.h.b16 %v621
      %v2743 = vunpack.c.l.b16 %v622
      %v2744 = vunpack.c.h.b16 %v622
      %v2745 = vunpack.c.l.b16 %v623
      %v2746 = vunpack.c.h.b16 %v623
      %v2747 = vunpack.c.l.b16 %v624
      %v2748 = vunpack.c.h.b16 %v624
      %v2749 = vunpack.c.l.b16 %v625
      %v2750 = vunpack.c.h.b16 %v625
      %v2751 = vunpack.c.l.b16 %v626
      %v2752 = vunpack.c.h.b16 %v626
      %v2753 = vunpack.c.l.b16 %v627
      %v2754 = vunpack.c.h.b16 %v627
      %v2755 = vunpack.c.l.b16 %v628
      %v2756 = vunpack.c.h.b16 %v628
      %v2757 = vunpack.c.l.b16 %v629
      %v2758 = vunpack.c.h.b16 %v629
      %v2759 = vunpack.c.l.b16 %v630
      %v2760 = vunpack.c.h.b16 %v630
      %v2761 = vunpack.c.l.b16 %v631
      %v2762 = vunpack.c.h.b16 %v631
      %v2763 = vunpack.c.l.b16 %v632
      %v2764 = vunpack.c.h.b16 %v632
      %v2765 = vunpack.c.l.b16 %v633
      %v2766 = vunpack.c.h.b16 %v633
      %v2767 = vunpack.c.l.b16 %v634
      %v2768 = vunpack.c.h.b16 %v634
      %v2769 = vunpack.c.l.b16 %v635
      %v2770 = vunpack.c.h.b16 %v635
      %v2771 = vunpack.c.l.b16 %v636
      %v2772 = vunpack.c.h.b16 %v636
      %v2773 = vunpack.c.l.b16 %v637
      %v2774 = vunpack.c.h.b16 %v637
      %v2775 = vunpack.c.l.b16 %v638
      %v2776 = vunpack.c.h.b16 %v638
      %v2777 = vunpack.c.l.b16 %v639
      %v2778 = vunpack.c.h.b16 %v639
      %v2779 = vunpack.c.l.b16 %v640
      %v2780 = vunpack.c.h.b16 %v640
      %v2781 = vunpack.c.l.b16 %v641
      %v2782 = vunpack.c.h.b16 %v641
      %v2783 = vunpack.c.l.b16 %v642
      %v2784 = vunpack.c.h.b16 %v642
      %v2785 = vunpack.c.l.b16 %v643
      %v2786 = vunpack.c.h.b16 %v643
      %v2787 = vunpack.c.l.b16 %v644
      %v2788 = vunpack.c.h.b16 %v644
      %v2789 = vunpack.c.l.b16 %v645
      %v2790 = vunpack.c.h.b16 %v645
      %v2791 = vunpack.c.l.b16 %v646
      %v2792 = vunpack.c.h.b16 %v646
      %v2793 = vunpack.c.l.b16 %v647
      %v2794 = vunpack.c.h.b16 %v647
      %v2795 = vunpack.c.l.b16 %v648
      %v2796 = vunpack.c.h.b16 %v648
      %v2797 = vunpack.c.l.b16 %v649
      %v2798 = vunpack.c.h.b16 %v649
      %v2799 = vunpack.c.l.b16 %v650
      %v2800 = vunpack.c.h.b16 %v650
      %v2801 = vunpack.c.l.b16 %v651
      %v2802 = vunpack.c.h.b16 %v651
      %v2803 = vunpack.c.l.b16 %v652
      %v2804 = vunpack.c.h.b16 %v652
      %v2805 = vunpack.c.l.b16 %v653
      %v2806 = vunpack.c.h.b16 %v653
      %v2807 = vunpack.c.l.b16 %v654
      %v2808 = vunpack.c.h.b16 %v654
      %v2809 = vunpack.c.l.b16 %v655
      %v2810 = vunpack.c.h.b16 %v655
      %v2811 = vunpack.c.l.b16 %v656
      %v2812 = vunpack.c.h.b16 %v656
      %v2813 = vunpack.c.l.b16 %v657
      %v2814 = vunpack.c.h.b16 %v657
      %v2815 = vunpack.c.l.b16 %v658
      %v2816 = vunpack.c.h.b16 %v658
      %v2817 = vunpack.c.l.b16 %v659
      %v2818 = vunpack.c.h.b16 %v659
      %v2819 = vunpack.c.l.b16 %v660
      %v2820 = vunpack.c.h.b16 %v660
      %v2821 = vunpack.c.l.b16 %v661
      %v2822 = vunpack.c.h.b16 %v661
      %v2823 = vunpack.c.l.b16 %v662
      %v2824 = vunpack.c.h.b16 %v662
      %v2825 = vunpack.c.l.b16 %v663
      %v2826 = vunpack.c.h.b16 %v663
      %v2827 = vunpack.c.l.b16 %v664
      %v2828 = vunpack.c.h.b16 %v664
      %v2829 = vunpack.c.l.b16 %v665
      %v2830 = vunpack.c.h.b16 %v665
      %v2831 = vunpack.c.l.b16 %v666
      %v2832 = vunpack.c.h.b16 %v666
      %v2833 = vunpack.c.l.b16 %v667
      %v2834 = vunpack.c.h.b16 %v667
      %v2835 = vunpack.c.l.b16 %v668
      %v2836 = vunpack.c.h.b16 %v668
      %v2837 = vunpack.c.l.b16 %v669
      %v2838 = vunpack.c.h.b16 %v669
      %v2839 = vunpack.c.l.b16 %v670
      %v2840 = vunpack.c.h.b16 %v670
      %v2841 = vunpack.c.l.b16 %v671
      %v2842 = vunpack.c.h.b16 %v671
      %v2843 = vunpack.c.l.b16 %v672
      %v2844 = vunpack.c.h.b16 %v672
      %v2845 = vunpack.c.l.b16 %v673
      %v2846 = vunpack.c.h.b16 %v673
      %v2847 = vunpack.c.l.b16 %v674
      %v2848 = vunpack.c.h.b16 %v674
      %v2849 = vunpack.c.l.b16 %v675
      %v2850 = vunpack.c.h.b16 %v675
      %v2851 = vunpack.c.l.b16 %v676
      %v2852 = vunpack.c.h.b16 %v676
      %v2853 = vunpack.c.l.b16 %v677
      %v2854 = vunpack.c.h.b16 %v677
      %v2855 = vunpack.c.l.b16 %v678
      %v2856 = vunpack.c.h.b16 %v678
      %v2857 = vunpack.c.l.b16 %v679
      %v2858 = vunpack.c.h.b16 %v679
      %v2859 = vunpack.c.l.b16 %v680
      %v2860 = vunpack.c.h.b16 %v680
      %v2861 = vunpack.c.l.b16 %v681
      %v2862 = vunpack.c.h.b16 %v681
      %v2863 = vunpack.c.l.b16 %v682
      %v2864 = vunpack.c.h.b16 %v682
      %v2865 = vunpack.c.l.b16 %v683
      %v2866 = vunpack.c.h.b16 %v683
      %v2867 = vunpack.c.l.b16 %v684
      %v2868 = vunpack.c.h.b16 %v684
      %v2869 = vunpack.c.l.b16 %v685
      %v2870 = vunpack.c.h.b16 %v685
      %v2871 = vunpack.c.l.b16 %v686
      %v2872 = vunpack.c.h.b16 %v686
      %v2873 = vunpack.c.l.b16 %v687
      %v2874 = vunpack.c.h.b16 %v687
      %v2875 = vunpack.c.l.b16 %v688
      %v2876 = vunpack.c.h.b16 %v688
      %v2877 = vunpack.c.l.b16 %v689
      %v2878 = vunpack.c.h.b16 %v689
      %v2879 = vunpack.c.l.b16 %v690
      %v2880 = vunpack.c.h.b16 %v690
      %v2881 = vunpack.c.l.b16 %v691
      %v2882 = vunpack.c.h.b16 %v691
      %v2883 = vunpack.c.l.b16 %v692
      %v2884 = vunpack.c.h.b16 %v692
      %v2885 = vunpack.c.l.b16 %v693
      %v2886 = vunpack.c.h.b16 %v693
      %v2887 = vunpack.c.l.b16 %v694
      %v2888 = vunpack.c.h.b16 %v694
      %v2889 = vunpack.c.l.b16 %v695
      %v2890 = vunpack.c.h.b16 %v695
      %v2891 = vunpack.c.l.b16 %v696
      %v2892 = vunpack.c.h.b16 %v696
      %v2893 = vunpack.c.l.b16 %v697
      %v2894 = vunpack.c.h.b16 %v697
      %v2895 = vunpack.c.l.b16 %v698
      %v2896 = vunpack.c.h.b16 %v698
      %v2897 = vunpack.c.l.b16 %v699
      %v2898 = vunpack.c.h.b16 %v699
      %v2899 = vunpack.c.l.b16 %v700
      %v2900 = vunpack.c.h.b16 %v700
      %v2901 = vunpack.c.l.b16 %v701
      %v2902 = vunpack.c.h.b16 %v701
      %v2903 = vunpack.c.l.b16 %v702
      %v2904 = vunpack.c.h.b16 %v702
      %v2905 = vunpack.c.l.b16 %v703
      %v2906 = vunpack.c.h.b16 %v703
      %v2907 = vunpack.c.l.b16 %v704
      %v2908 = vunpack.c.h.b16 %v704
      %v2909 = vunpack.c.l.b16 %v705
      %v2910 = vunpack.c.h.b16 %v705
      %v2911 = vunpack.c.l.b16 %v706
      %v2912 = vunpack.c.h.b16 %v706
      %v2913 = vunpack.c.l.b16 %v707
      %v2914 = vunpack.c.h.b16 %v707
      %v2915 = vunpack.c.l.b16 %v708
      %v2916 = vunpack.c.h.b16 %v708
      %v2917 = vunpack.c.l.b16 %v709
      %v2918 = vunpack.c.h.b16 %v709
      %v2919 = vunpack.c.l.b16 %v710
      %v2920 = vunpack.c.h.b16 %v710
      %v2921 = vunpack.c.l.b16 %v711
      %v2922 = vunpack.c.h.b16 %v711
      %v2923 = vunpack.c.l.b16 %v712
      %v2924 = vunpack.c.h.b16 %v712
      %v2925 = vunpack.c.l.b16 %v713
      %v2926 = vunpack.c.h.b16 %v713
      %v2927 = vunpack.c.l.b16 %v714
      %v2928 = vunpack.c.h.b16 %v714
      %v2929 = vunpack.c.l.b16 %v715
      %v2930 = vunpack.c.h.b16 %v715
      %v2931 = vunpack.c.l.b16 %v716
      %v2932 = vunpack.c.h.b16 %v716
      %v2933 = vunpack.c.l.b16 %v717
      %v2934 = vunpack.c.h.b16 %v717
      %v2935 = vunpack.c.l.b16 %v718
      %v2936 = vunpack.c.h.b16 %v718
      %v2937 = vunpack.c.l.b16 %v719
      %v2938 = vunpack.c.h.b16 %v719
      %v2939 = vunpack.c.l.b16 %v720
      %v2940 = vunpack.c.h.b16 %v720
      %v2941 = vunpack.c.l.b16 %v721
      %v2942 = vunpack.c.h.b16 %v721
      %v2943 = vunpack.c.l.b16 %v722
      %v2944 = vunpack.c.h.b16 %v722
      %v2945 = vunpack.c.l.b16 %v723
      %v2946 = vunpack.c.h.b16 %v723
      %v2947 = vunpack.c.l.b16 %v724
      %v2948 = vunpack.c.h.b16 %v724
      %v2949 = vunpack.c.l.b16 %v725
      %v2950 = vunpack.c.h.b16 %v725
      %v2951 = vunpack.c.l.b16 %v726
      %v2952 = vunpack.c.h.b16 %v726
      %v2953 = vunpack.c.l.b16 %v727
      %v2954 = vunpack.c.h.b16 %v727
      %v2955 = vunpack.c.l.b16 %v728
      %v2956 = vunpack.c.h.b16 %v728
      %v2957 = vunpack.c.l.b16 %v729
      %v2958 = vunpack.c.h.b16 %v729
      %v2959 = vunpack.c.l.b16 %v730
      %v2960 = vunpack.c.h.b16 %v730
      %v2961 = vunpack.c.l.b16 %v731
      %v2962 = vunpack.c.h.b16 %v731
      %v2963 = vunpack.c.l.b16 %v732
      %v2964 = vunpack.c.h.b16 %v732
      %v2965 = vunpack.c.l.b16 %v733
      %v2966 = vunpack.c.h.b16 %v733
      %v2967 = vunpack.c.l.b16 %v734
      %v2968 = vunpack.c.h.b16 %v734
      %v2969 = vunpack.c.l.b16 %v735
      %v2970 = vunpack.c.h.b16 %v735
      %v2971 = vunpack.c.l.b16 %v736
      %v2972 = vunpack.c.h.b16 %v736
      %v2973 = vunpack.c.l.b16 %v737
      %v2974 = vunpack.c.h.b16 %v737
      %v2975 = vunpack.c.l.b16 %v738
      %v2976 = vunpack.c.h.b16 %v738
      %v2977 = vunpack.c.l.b16 %v739
      %v2978 = vunpack.c.h.b16 %v739
      %v2979 = vunpack.c.l.b16 %v740
      %v2980 = vunpack.c.h.b16 %v740
      %v2981 = vunpack.c.l.b16 %v741
      %v2982 = vunpack.c.h.b16 %v741
      %v2983 = vunpack.c.l.b16 %v742
      %v2984 = vunpack.c.h.b16 %v742
      %v2985 = vunpack.c.l.b16 %v743
      %v2986 = vunpack.c.h.b16 %v743
      %v2987 = vunpack.c.l.b16 %v744
      %v2988 = vunpack.c.h.b16 %v744
      %v2989 = vunpack.c.l.b16 %v745
      %v2990 = vunpack.c.h.b16 %v745
      %v2991 = vunpack.c.l.b16 %v746
      %v2992 = vunpack.c.h.b16 %v746
      %v2993 = vunpack.c.l.b16 %v747
      %v2994 = vunpack.c.h.b16 %v747
      %v2995 = vunpack.c.l.b16 %v748
      %v2996 = vunpack.c.h.b16 %v748
      %v2997 = vunpack.c.l.b16 %v749
      %v2998 = vunpack.c.h.b16 %v749
      %v2999 = vunpack.c.l.b16 %v750
      %v3000 = vunpack.c.h.b16 %v750
      %v3001 = vunpack.c.l.b16 %v751
      %v3002 = vunpack.c.h.b16 %v751
      %v3003 = vunpack.c.l.b16 %v752
      %v3004 = vunpack.c.h.b16 %v752
      %v3005 = vunpack.c.l.b16 %v753
      %v3006 = vunpack.c.h.b16 %v753
      %v3007 = vunpack.c.l.b16 %v754
      %v3008 = vunpack.c.h.b16 %v754
      %v3009 = vunpack.c.l.b16 %v755
      %v3010 = vunpack.c.h.b16 %v755
      %v3011 = vunpack.c.l.b16 %v756
      %v3012 = vunpack.c.h.b16 %v756
      %v3013 = vunpack.c.l.b16 %v757
      %v3014 = vunpack.c.h.b16 %v757
      %v3015 = vunpack.c.l.b16 %v758
      %v3016 = vunpack.c.h.b16 %v758
      %v3017 = vunpack.c.l.b16 %v759
      %v3018 = vunpack.c.h.b16 %v759
      %v3019 = vunpack.c.l.b16 %v760
      %v3020 = vunpack.c.h.b16 %v760
      %v3021 = vunpack.c.l.b16 %v761
      %v3022 = vunpack.c.h.b16 %v761
      %v3023 = vunpack.c.l.b16 %v762
      %v3024 = vunpack.c.h.b16 %v762
      %v3025 = vunpack.c.l.b16 %v763
      %v3026 = vunpack.c.h.b16 %v763
      %v3027 = vunpack.c.l.b16 %v764
      %v3028 = vunpack.c.h.b16 %v764
      %v3029 = vunpack.c.l.b16 %v765
      %v3030 = vunpack.c.h.b16 %v765
      %v3031 = vunpack.c.l.b16 %v766
      %v3032 = vunpack.c.h.b16 %v766
      %v3033 = vunpack.c.l.b16 %v767
      %v3034 = vunpack.c.h.b16 %v767
      %v3035 = vunpack.c.l.b16 %v768
      %v3036 = vunpack.c.h.b16 %v768
      %v3037 = vunpack.c.l.b16 %v769
      %v3038 = vunpack.c.h.b16 %v769
      %v3039 = vunpack.c.l.b16 %v770
      %v3040 = vunpack.c.h.b16 %v770
      %v3041 = vunpack.c.l.b16 %v771
      %v3042 = vunpack.c.h.b16 %v771
      %v3043 = vunpack.c.l.b16 %v772
      %v3044 = vunpack.c.h.b16 %v772
      %v3045 = vunpack.c.l.b16 %v773
      %v3046 = vunpack.c.h.b16 %v773
      %v3047 = vunpack.c.l.b16 %v774
      %v3048 = vunpack.c.h.b16 %v774
      %v3049 = vunpack.c.l.b16 %v775
      %v3050 = vunpack.c.h.b16 %v775
      %v3051 = vunpack.c.l.b16 %v776
      %v3052 = vunpack.c.h.b16 %v776
      %v3053 = vunpack.c.l.b16 %v777
      %v3054 = vunpack.c.h.b16 %v777
      %v3055 = vunpack.c.l.b16 %v778
      %v3056 = vunpack.c.h.b16 %v778
      %v3057 = vunpack.c.l.b16 %v779
      %v3058 = vunpack.c.h.b16 %v779
      %v3059 = vunpack.c.l.b16 %v780
      %v3060 = vunpack.c.h.b16 %v780
      %v3061 = vunpack.c.l.b16 %v781
      %v3062 = vunpack.c.h.b16 %v781
      %v3063 = vunpack.c.l.b16 %v782
      %v3064 = vunpack.c.h.b16 %v782
      %v3065 = vunpack.c.l.b16 %v783
      %v3066 = vunpack.c.h.b16 %v783
      %v3067 = vunpack.c.l.b16 %v784
      %v3068 = vunpack.c.h.b16 %v784
      %v3069 = vunpack.c.l.b16 %v785
      %v3070 = vunpack.c.h.b16 %v785
      %v3071 = vunpack.c.l.b16 %v786
      %v3072 = vunpack.c.h.b16 %v786
      %v3073 = vunpack.c.l.b16 %v787
      %v3074 = vunpack.c.h.b16 %v787
      %v3075 = vunpack.c.l.b16 %v788
      %v3076 = vunpack.c.h.b16 %v788
      %v3077 = vunpack.c.l.b16 %v789
      %v3078 = vunpack.c.h.b16 %v789
      %v3079 = vunpack.c.l.b16 %v790
      %v3080 = vunpack.c.h.b16 %v790
      %v3081 = vunpack.c.l.b16 %v791
      %v3082 = vunpack.c.h.b16 %v791
      %v3083 = vunpack.c.l.b16 %v792
      %v3084 = vunpack.c.h.b16 %v792
      %v3085 = vunpack.c.l.b16 %v793
      %v3086 = vunpack.c.h.b16 %v793
      %v3087 = vunpack.c.l.b16 %v794
      %v3088 = vunpack.c.h.b16 %v794
      %v3089 = vunpack.c.l.b16 %v795
      %v3090 = vunpack.c.h.b16 %v795
      %v3091 = vunpack.c.l.b16 %v796
      %v3092 = vunpack.c.h.b16 %v796
      %v3093 = vunpack.c.l.b16 %v797
      %v3094 = vunpack.c.h.b16 %v797
      %v3095 = vunpack.c.l.b16 %v798
      %v3096 = vunpack.c.h.b16 %v798
      %v3097 = vunpack.c.l.b16 %v799
      %v3098 = vunpack.c.h.b16 %v799
      %v3099 = vunpack.c.l.b16 %v800
      %v3100 = vunpack.c.h.b16 %v800
      %v3101 = vpack.c.b16 %v2271, %v2269
      %v3102 = vpack.c.b16 %v2272, %v2270
      %v3103 = vpack.c.b16 %v2275, %v2273
      %v3104 = vpack.c.b16 %v2276, %v2274
      %v3105 = vpack.c.b16 %v2279, %v2277
      %v3106 = vpack.c.b16 %v2280, %v2278
      %v3107 = vpack.c.b16 %v2283, %v2281
      %v3108 = vpack.c.b16 %v2284, %v2282
      %v3109 = vpack.c.b16 %v2287, %v2285
      %v3110 = vpack.c.b16 %v2288, %v2286
      %v3111 = vpack.c.b16 %v2291, %v2289
      %v3112 = vpack.c.b16 %v2292, %v2290
      %v3113 = vpack.c.b16 %v2295, %v2293
      %v3114 = vpack.c.b16 %v2296, %v2294
      %v3115 = vpack.c.b16 %v2299, %v2297
      %v3116 = vpack.c.b16 %v2300, %v2298
      %v3117 = vpack.c.b16 %v2303, %v2301
      %v3118 = vpack.c.b16 %v2304, %v2302
      %v3119 = vpack.c.b16 %v2307, %v2305
      %v3120 = vpack.c.b16 %v2308, %v2306
      %v3121 = vpack.c.b16 %v2311, %v2309
      %v3122 = vpack.c.b16 %v2312, %v2310
      %v3123 = vpack.c.b16 %v2315, %v2313
      %v3124 = vpack.c.b16 %v2316, %v2314
      %v3125 = vpack.c.b16 %v2319, %v2317
      %v3126 = vpack.c.b16 %v2320, %v2318
      %v3127 = vpack.c.b16 %v2323, %v2321
      %v3128 = vpack.c.b16 %v2324, %v2322
      %v3129 = vpack.c.b16 %v2327, %v2325
      %v3130 = vpack.c.b16 %v2328, %v2326
      %v3131 = vpack.c.b16 %v2331, %v2329
      %v3132 = vpack.c.b16 %v2332, %v2330
      %v3133 = vpack.c.b16 %v2335, %v2333
      %v3134 = vpack.c.b16 %v2336, %v2334
      %v3135 = vpack.c.b16 %v2339, %v2337
      %v3136 = vpack.c.b16 %v2340, %v2338
      %v3137 = vpack.c.b16 %v2343, %v2341
      %v3138 = vpack.c.b16 %v2344, %v2342
      %v3139 = vpack.c.b16 %v2347, %v2345
      %v3140 = vpack.c.b16 %v2348, %v2346
      %v3141 = vpack.c.b16 %v2351, %v2349
      %v3142 = vpack.c.b16 %v2352, %v2350
      %v3143 = vpack.c.b16 %v2355, %v2353
      %v3144 = vpack.c.b16 %v2356, %v2354
      %v3145 = vpack.c.b16 %v2359, %v2357
      %v3146 = vpack.c.b16 %v2360, %v2358
      %v3147 = vpack.c.b16 %v2363, %v2361
      %v3148 = vpack.c.b16 %v2364, %v2362
      %v3149 = vpack.c.b16 %v2367, %v2365
      %v3150 = vpack.c.b16 %v2368, %v2366
      %v3151 = vpack.c.b16 %v2371, %v2369
      %v3152 = vpack.c.b16 %v2372, %v2370
      %v3153 = vpack.c.b16 %v2375, %v2373
      %v3154 = vpack.c.b16 %v2376, %v2374
      %v3155 = vpack.c.b16 %v2379, %v2377
      %v3156 = vpack.c.b16 %v2380, %v2378
      %v3157 = vpack.c.b16 %v2383, %v2381
      %v3158 = vpack.c.b16 %v2384, %v2382
      %v3159 = vpack.c.b16 %v2387, %v2385
      %v3160 = vpack.c.b16 %v2388, %v2386
      %v3161 = vpack.c.b16 %v2391, %v2389
      %v3162 = vpack.c.b16 %v2392, %v2390
      %v3163 = vpack.c.b16 %v2395, %v2393
      %v3164 = vpack.c.b16 %v2396, %v2394
      %v3165 = vpack.c.b16 %v2399, %v2397
      %v3166 = vpack.c.b16 %v2400, %v2398
      %v3167 = vpack.c.b16 %v2403, %v2401
      %v3168 = vpack.c.b16 %v2404, %v2402
      %v3169 = vpack.c.b16 %v2407, %v2405
      %v3170 = vpack.c.b16 %v2408, %v2406
      %v3171 = vpack.c.b16 %v2411, %v2409
      %v3172 = vpack.c.b16 %v2412, %v2410
      %v3173 = vpack.c.b16 %v2415, %v2413
      %v3174 = vpack.c.b16 %v2416, %v2414
      %v3175 = vpack.c.b16 %v2419, %v2417
      %v3176 = vpack.c.b16 %v2420, %v2418
      %v3177 = vpack.c.b16 %v2423, %v2421
      %v3178 = vpack.c.b16 %v2424, %v2422
      %v3179 = vpack.c.b16 %v2427, %v2425
      %v3180 = vpack.c.b16 %v2428, %v2426
      %v3181 = vpack.c.b16 %v2431, %v2429
      %v3182 = vpack.c.b16 %v2432, %v2430
      %v3183 = vpack.c.b16 %v2435, %v2433
      %v3184 = vpack.c.b16 %v2436, %v2434
      %v3185 = vpack.c.b16 %v2439, %v2437
      %v3186 = vpack.c.b16 %v2440, %v2438
      %v3187 = vpack.c.b16 %v2443, %v2441
      %v3188 = vpack.c.b16 %v2444, %v2442
      %v3189 = vpack.c.b16 %v2447, %v2445
      %v3190 = vpack.c.b16 %v2448, %v2446
      %v3191 = vpack.c.b16 %v2451, %v2449
      %v3192 = vpack.c.b16 %v2452, %v2450
      %v3193 = vpack.c.b16 %v2455, %v2453
      %v3194 = vpack.c.b16 %v2456, %v2454
      %v3195 = vpack.c.b16 %v2459, %v2457
      %v3196 = vpack.c.b16 %v2460, %v2458
      %v3197 = vpack.c.b16 %v2463, %v2461
      %v3198 = vpack.c.b16 %v2464, %v2462
      %v3199 = vpack.c.b16 %v2467, %v2465
      %v3200 = vpack.c.b16 %v2468, %v2466
      %v3201 = vpack.c.b16 %v2471, %v2469
      %v3202 = vpack.c.b16 %v2472, %v2470
      %v3203 = vpack.c.b16 %v2475, %v2473
      %v3204 = vpack.c.b16 %v2476, %v2474
      %v3205 = vpack.c.b16 %v2479, %v2477
      %v3206 = vpack.c.b16 %v2480, %v2478
      %v3207 = vpack.c.b16 %v2483, %v2481
      %v3208 = vpack.c.b16 %v2484, %v2482
      %v3209 = vpack.c.b16 %v2487, %v2485
      %v3210 = vpack.c.b16 %v2488, %v2486
      %v3211 = vpack.c.b16 %v2491, %v2489
      %v3212 = vpack.c.b16 %v2492, %v2490
      %v3213 = vpack.c.b16 %v2495, %v2493
      %v3214 = vpack.c.b16 %v2496, %v2494
      %v3215 = vpack.c.b16 %v2499, %v2497
      %v3216 = vpack.c.b16 %v2500, %v2498
      %v3217 = vpack.c.b16 %v2503, %v2501
      %v3218 = vpack.c.b16 %v2504, %v2502
      %v3219 = vpack.c.b16 %v2507, %v2505
      %v3220 = vpack.c.b16 %v2508, %v2506
      %v3221 = vpack.c.b16 %v2511, %v2509
      %v3222 = vpack.c.b16 %v2512, %v2510
      %v3223 = vpack.c.b16 %v2515, %v2513
      %v3224 = vpack.c.b16 %v2516, %v2514
      %v3225 = vpack.c.b16 %v2519, %v2517
      %v3226 = vpack.c.b16 %v2520, %v2518
      %v3227 = vpack.c.b16 %v2523, %v2521
      %v3228 = vpack.c.b16 %v2524, %v2522
      %v3229 = vpack.c.b16 %v2527, %v2525
      %v3230 = vpack.c.b16 %v2528, %v2526
      %v3231 = vpack.c.b16 %v2531, %v2529
      %v3232 = vpack.c.b16 %v2532, %v2530
      %v3233 = vpack.c.b16 %v2535, %v2533
      %v3234 = vpack.c.b16 %v2536, %v2534
      %v3235 = vpack.c.b16 %v2539, %v2537
      %v3236 = vpack.c.b16 %v2540, %v2538
      %v3237 = vpack.c.b16 %v2543, %v2541
      %v3238 = vpack.c.b16 %v2544, %v2542
      %v3239 = vpack.c.b16 %v2547, %v2545
      %v3240 = vpack.c.b16 %v2548, %v2546
      %v3241 = vpack.c.b16 %v2551, %v2549
      %v3242 = vpack.c.b16 %v2552, %v2550
      %v3243 = vpack.c.b16 %v2555, %v2553
      %v3244 = vpack.c.b16 %v2556, %v2554
      %v3245 = vpack.c.b16 %v2559, %v2557
      %v3246 = vpack.c.b16 %v2560, %v2558
      %v3247 = vpack.c.b16 %v2563, %v2561
      %v3248 = vpack.c.b16 %v2564, %v2562
      %v3249 = vpack.c.b16 %v2567, %v2565
      %v3250 = vpack.c.b16 %v2568, %v2566
      %v3251 = vpack.c.b16 %v2571, %v2569
      %v3252 = vpack.c.b16 %v2572, %v2570
      %v3253 = vpack.c.b16 %v2575, %v2573
      %v3254 = vpack.c.b16 %v2576, %v2574
      %v3255 = vpack.c.b16 %v2579, %v2577
      %v3256 = vpack.c.b16 %v2580, %v2578
      %v3257 = vpack.c.b16 %v2583, %v2581
      %v3258 = vpack.c.b16 %v2584, %v2582
      %v3259 = vpack.c.b16 %v2587, %v2585
      %v3260 = vpack.c.b16 %v2588, %v2586
      %v3261 = vpack.c.b16 %v2591, %v2589
      %v3262 = vpack.c.b16 %v2592, %v2590
      %v3263 = vpack.c.b16 %v2595, %v2593
      %v3264 = vpack.c.b16 %v2596, %v2594
      %v3265 = vpack.c.b16 %v2599, %v2597
      %v3266 = vpack.c.b16 %v2600, %v2598
      %v3267 = vpack.c.b16 %v2603, %v2601
      %v3268 = vpack.c.b16 %v2604, %v2602
      %v3269 = vpack.c.b16 %v2607, %v2605
      %v3270 = vpack.c.b16 %v2608, %v2606
      %v3271 = vpack.c.b16 %v2611, %v2609
      %v3272 = vpack.c.b16 %v2612, %v2610
      %v3273 = vpack.c.b16 %v2615, %v2613
      %v3274 = vpack.c.b16 %v2616, %v2614
      %v3275 = vpack.c.b16 %v2619, %v2617
      %v3276 = vpack.c.b16 %v2620, %v2618
      %v3277 = vpack.c.b16 %v2623, %v2621
      %v3278 = vpack.c.b16 %v2624, %v2622
      %v3279 = vpack.c.b16 %v2627, %v2625
      %v3280 = vpack.c.b16 %v2628, %v2626
      %v3281 = vpack.c.b16 %v2631, %v2629
      %v3282 = vpack.c.b16 %v2632, %v2630
      %v3283 = vpack.c.b16 %v2635, %v2633
      %v3284 = vpack.c.b16 %v2636, %v2634
      %v3285 = vpack.c.b16 %v2639, %v2637
      %v3286 = vpack.c.b16 %v2640, %v2638
      %v3287 = vpack.c.b16 %v2643, %v2641
      %v3288 = vpack.c.b16 %v2644, %v2642
      %v3289 = vpack.c.b16 %v2647, %v2645
      %v3290 = vpack.c.b16 %v2648, %v2646
      %v3291 = vpack.c.b16 %v2651, %v2649
      %v3292 = vpack.c.b16 %v2652, %v2650
      %v3293 = vpack.c.b16 %v2655, %v2653
      %v3294 = vpack.c.b16 %v2656, %v2654
      %v3295 = vpack.c.b16 %v2659, %v2657
      %v3296 = vpack.c.b16 %v2660, %v2658
      %v3297 = vpack.c.b16 %v2663, %v2661
      %v3298 = vpack.c.b16 %v2664, %v2662
      %v3299 = vpack.c.b16 %v2667, %v2665
      %v3300 = vpack.c.b16 %v2668, %v2666
      %v3301 = vpack.c.b16 %v2671, %v2669
      %v3302 = vpack.c.b16 %v2672, %v2670
      %v3303 = vpack.c.b16 %v2675, %v2673
      %v3304 = vpack.c.b16 %v2676, %v2674
      %v3305 = vpack.c.b16 %v2679, %v2677
      %v3306 = vpack.c.b16 %v2680, %v2678
      %v3307 = vpack.c.b16 %v2683, %v2681
      %v3308 = vpack.c.b16 %v2684, %v2682
      %v3309 = vpack.c.b16 %v2687, %v2685
      %v3310 = vpack.c.b16 %v2688, %v2686
      %v3311 = vpack.c.b16 %v2691, %v2689
      %v3312 = vpack.c.b16 %v2692, %v2690
      %v3313 = vpack.c.b16 %v2695, %v2693
      %v3314 = vpack.c.b16 %v2696, %v2694
      %v3315 = vpack.c.b16 %v2699, %v2697
      %v3316 = vpack.c.b16 %v2700, %v2698
      %v3317 = vpack.c.b16 %v2703, %v2701
      %v3318 = vpack.c.b16 %v2704, %v2702
      %v3319 = vpack.c.b16 %v2707, %v2705
      %v3320 = vpack.c.b16 %v2708, %v2706
      %v3321 = vpack.c.b16 %v2711, %v2709
      %v3322 = vpack.c.b16 %v2712, %v2710
      %v3323 = vpack.c.b16 %v2715, %v2713
      %v3324 = vpack.c.b16 %v2716, %v2714
      %v3325 = vpack.c.b16 %v2719, %v2717
      %v3326 = vpack.c.b16 %v2720, %v2718
      %v3327 = vpack.c.b16 %v2723, %v2721
      %v3328 = vpack.c.b16 %v2724, %v2722
      %v3329 = vpack.c.b16 %v2727, %v2725
      %v3330 = vpack.c.b16 %v2728, %v2726
      %v3331 = vpack.c.b16 %v2731, %v2729
      %v3332 = vpack.c.b16 %v2732, %v2730
      %v3333 = vpack.c.b16 %v2735, %v2733
      %v3334 = vpack.c.b16 %v2736, %v2734
      %v3335 = vpack.c.b16 %v2739, %v2737
      %v3336 = vpack.c.b16 %v2740, %v2738
      %v3337 = vpack.c.b16 %v2743, %v2741
      %v3338 = vpack.c.b16 %v2744, %v2742
      %v3339 = vpack.c.b16 %v2747, %v2745
      %v3340 = vpack.c.b16 %v2748, %v2746
      %v3341 = vpack.c.b16 %v2751, %v2749
      %v3342 = vpack.c.b16 %v2752, %v2750
      %v3343 = vpack.c.b16 %v2755, %v2753
      %v3344 = vpack.c.b16 %v2756, %v2754
      %v3345 = vpack.c.b16 %v2759, %v2757
      %v3346 = vpack.c.b16 %v2760, %v2758
      %v3347 = vpack.c.b16 %v2763, %v2761
      %v3348 = vpack.c.b16 %v2764, %v2762
      %v3349 = vpack.c.b16 %v2767, %v2765
      %v3350 = vpack.c.b16 %v2768, %v2766
      %v3351 = vpack.c.b16 %v2771, %v2769
      %v3352 = vpack.c.b16 %v2772, %v2770
      %v3353 = vpack.c.b16 %v2775, %v2773
      %v3354 = vpack.c.b16 %v2776, %v2774
      %v3355 = vpack.c.b16 %v2779, %v2777
      %v3356 = vpack.c.b16 %v2780, %v2778
      %v3357 = vpack.c.b16 %v2783, %v2781
      %v3358 = vpack.c.b16 %v2784, %v2782
      %v3359 = vpack.c.b16 %v2787, %v2785
      %v3360 = vpack.c.b16 %v2788, %v2786
      %v3361 = vpack.c.b16 %v2791, %v2789
      %v3362 = vpack.c.b16 %v2792, %v2790
      %v3363 = vpack.c.b16 %v2795, %v2793
      %v3364 = vpack.c.b16 %v2796, %v2794
      %v3365 = vpack.c.b16 %v2799, %v2797
      %v3366 = vpack.c.b16 %v2800, %v2798
      %v3367 = vpack.c.b16 %v2803, %v2801
      %v3368 = vpack.c.b16 %v2804, %v2802
      %v3369 = vpack.c.b16 %v2807, %v2805
      %v3370 = vpack.c.b16 %v2808, %v2806
      %v3371 = vpack.c.b16 %v2811, %v2809
      %v3372 = vpack.c.b16 %v2812, %v2810
      %v3373 = vpack.c.b16 %v2815, %v2813
      %v3374 = vpack.c.b16 %v2816, %v2814
      %v3375 = vpack.c.b16 %v2819, %v2817
      %v3376 = vpack.c.b16 %v2820, %v2818
      %v3377 = vpack.c.b16 %v2823, %v2821
      %v3378 = vpack.c.b16 %v2824, %v2822
      %v3379 = vpack.c.b16 %v2827, %v2825
      %v3380 = vpack.c.b16 %v2828, %v2826
      %v3381 = vpack.c.b16 %v2831, %v2829
      %v3382 = vpack.c.b16 %v2832, %v2830
      %v3383 = vpack.c.b16 %v2835, %v2833
      %v3384 = vpack.c.b16 %v2836, %v2834
      %v3385 = vpack.c.b16 %v2839, %v2837
      %v3386 = vpack.c.b16 %v2840, %v2838
      %v3387 = vpack.c.b16 %v2843, %v2841
      %v3388 = vpack.c.b16 %v2844, %v2842
      %v3389 = vpack.c.b16 %v2847, %v2845
      %v3390 = vpack.c.b16 %v2848, %v2846
      %v3391 = vpack.c.b16 %v2851, %v2849
      %v3392 = vpack.c.b16 %v2852, %v2850
      %v3393 = vpack.c.b16 %v2855, %v2853
      %v3394 = vpack.c.b16 %v2856, %v2854
      %v3395 = vpack.c.b16 %v2859, %v2857
      %v3396 = vpack.c.b16 %v2860, %v2858
      %v3397 = vpack.c.b16 %v2863, %v2861
      %v3398 = vpack.c.b16 %v2864, %v2862
      %v3399 = vpack.c.b16 %v2867, %v2865
      %v3400 = vpack.c.b16 %v2868, %v2866
      %v3401 = vpack.c.b16 %v2871, %v2869
      %v3402 = vpack.c.b16 %v2872, %v2870
      %v3403 = vpack.c.b16 %v2875, %v2873
      %v3404 = vpack.c.b16 %v2876, %v2874
      %v3405 = vpack.c.b16 %v2879, %v2877
      %v3406 = vpack.c.b16 %v2880, %v2878
      %v3407 = vpack.c.b16 %v2883, %v2881
      %v3408 = vpack.c.b16 %v2884, %v2882
      %v3409 = vpack.c.b16 %v2887, %v2885
      %v3410 = vpack.c.b16 %v2888, %v2886
      %v3411 = vpack.c.b16 %v2891, %v2889
      %v3412 = vpack.c.b16 %v2892, %v2890
      %v3413 = vpack.c.b16 %v2895, %v2893
      %v3414 = vpack.c.b16 %v2896, %v2894
      %v3415 = vpack.c.b16 %v2899, %v2897
      %v3416 = vpack.c.b16 %v2900, %v2898
      %v3417 = vpack.c.b16 %v2903, %v2901
      %v3418 = vpack.c.b16 %v2904, %v2902
      %v3419 = vpack.c.b16 %v2907, %v2905
      %v3420 = vpack.c.b16 %v2908, %v2906
      %v3421 = vpack.c.b16 %v2911, %v2909
      %v3422 = vpack.c.b16 %v2912, %v2910
      %v3423 = vpack.c.b16 %v2915, %v2913
      %v3424 = vpack.c.b16 %v2916, %v2914
      %v3425 = vpack.c.b16 %v2919, %v2917
      %v3426 = vpack.c.b16 %v2920, %v2918
      %v3427 = vpack.c.b16 %v2923, %v2921
      %v3428 = vpack.c.b16 %v2924, %v2922
      %v3429 = vpack.c.b16 %v2927, %v2925
      %v3430 = vpack.c.b16 %v2928, %v2926
      %v3431 = vpack.c.b16 %v2931, %v2929
      %v3432 = vpack.c.b16 %v2932, %v2930
      %v3433 = vpack.c.b16 %v2935, %v2933
      %v3434 = vpack.c.b16 %v2936, %v2934
      %v3435 = vpack.c.b16 %v2939, %v2937
      %v3436 = vpack.c.b16 %v2940, %v2938
      %v3437 = vpack.c.b16 %v2943, %v2941
      %v3438 = vpack.c.b16 %v2944, %v2942
      %v3439 = vpack.c.b16 %v2947, %v2945
      %v3440 = vpack.c.b16 %v2948, %v2946
      %v3441 = vpack.c.b16 %v2951, %v2949
      %v3442 = vpack.c.b16 %v2952, %v2950
      %v3443 = vpack.c.b16 %v2955, %v2953
      %v3444 = vpack.c.b16 %v2956, %v2954
      %v3445 = vpack.c.b16 %v2959, %v2957
      %v3446 = vpack.c.b16 %v2960, %v2958
      %v3447 = vpack.c.b16 %v2963, %v2961
      %v3448 = vpack.c.b16 %v2964, %v2962
      %v3449 = vpack.c.b16 %v2967, %v2965
      %v3450 = vpack.c.b16 %v2968, %v2966
      %v3451 = vpack.c.b16 %v2971, %v2969
      %v3452 = vpack.c.b16 %v2972, %v2970
      %v3453 = vpack.c.b16 %v2975, %v2973
      %v3454 = vpack.c.b16 %v2976, %v2974
      %v3455 = vpack.c.b16 %v2979, %v2977
      %v3456 = vpack.c.b16 %v2980, %v2978
      %v3457 = vpack.c.b16 %v2983, %v2981
      %v3458 = vpack.c.b16 %v2984, %v2982
      %v3459 = vpack.c.b16 %v2987, %v2985
      %v3460 = vpack.c.b16 %v2988, %v2986
      %v3461 = vpack.c.b16 %v2991, %v2989
      %v3462 = vpack.c.b16 %v2992, %v2990
      %v3463 = vpack.c.b16 %v2995, %v2993
      %v3464 = vpack.c.b16 %v2996, %v2994
      %v3465 = vpack.c.b16 %v2999, %v2997
      %v3466 = vpack.c.b16 %v3000, %v2998
      %v3467 = vpack.c.b16 %v3003, %v3001
      %v3468 = vpack.c.b16 %v3004, %v3002
      %v3469 = vpack.c.b16 %v3007, %v3005
      %v3470 = vpack.c.b16 %v3008, %v3006
      %v3471 = vpack.c.b16 %v3011, %v3009
      %v3472 = vpack.c.b16 %v3012, %v3010
      %v3473 = vpack.c.b16 %v3015, %v3013
      %v3474 = vpack.c.b16 %v3016, %v3014
      %v3475 = vpack.c.b16 %v3019, %v3017
      %v3476 = vpack.c.b16 %v3020, %v3018
      %v3477 = vpack.c.b16 %v3023, %v3021
      %v3478 = vpack.c.b16 %v3024, %v3022
      %v3479 = vpack.c.b16 %v3027, %v3025
      %v3480 = vpack.c.b16 %v3028, %v3026
      %v3481 = vpack.c.b16 %v3031, %v3029
      %v3482 = vpack.c.b16 %v3032, %v3030
      %v3483 = vpack.c.b16 %v3035, %v3033
      %v3484 = vpack.c.b16 %v3036, %v3034
      %v3485 = vpack.c.b16 %v3039, %v3037
      %v3486 = vpack.c.b16 %v3040, %v3038
      %v3487 = vpack.c.b16 %v3043, %v3041
      %v3488 = vpack.c.b16 %v3044, %v3042
      %v3489 = vpack.c.b16 %v3047, %v3045
      %v3490 = vpack.c.b16 %v3048, %v3046
      %v3491 = vpack.c.b16 %v3051, %v3049
      %v3492 = vpack.c.b16 %v3052, %v3050
      %v3493 = vpack.c.b16 %v3055, %v3053
      %v3494 = vpack.c.b16 %v3056, %v3054
      %v3495 = vpack.c.b16 %v3059, %v3057
      %v3496 = vpack.c.b16 %v3060, %v3058
      %v3497 = vpack.c.b16 %v3063, %v3061
      %v3498 = vpack.c.b16 %v3064, %v3062
      %v3499 = vpack.c.b16 %v3067, %v3065
      %v3500 = vpack.c.b16 %v3068, %v3066
      %v3501 = vpack.c.b16 %v3071, %v3069
      %v3502 = vpack.c.b16 %v3072, %v3070
      %v3503 = vpack.c.b16 %v3075, %v3073
      %v3504 = vpack.c.b16 %v3076, %v3074
      %v3505 = vpack.c.b16 %v3079, %v3077
      %v3506 = vpack.c.b16 %v3080, %v3078
      %v3507 = vpack.c.b16 %v3083, %v3081
      %v3508 = vpack.c.b16 %v3084, %v3082
      %v3509 = vpack.c.b16 %v3087, %v3085
      %v3510 = vpack.c.b16 %v3088, %v3086
      %v3511 = vpack.c.b16 %v3091, %v3089
      %v3512 = vpack.c.b16 %v3092, %v3090
      %v3513 = vpack.c.b16 %v3095, %v3093
      %v3514 = vpack.c.b16 %v3096, %v3094
      %v3515 = vpack.c.b16 %v3099, %v3097
      %v3516 = vpack.c.b16 %v3100, %v3098
      %3933 = vmatprep.subr.bf16.mxu0 %v3116
      %3934 = vmatpush1.bf16.msra.mxu0 %v3115
      %3935 = vmatprep.subr.bf16.mxu0 %v3114
      %3936 = vmatpush1.bf16.msra.mxu0 %v3113
      %3937 = vmatprep.subr.bf16.mxu0 %v3112
      %3938 = vmatpush1.bf16.msra.mxu0 %v3111
      %3939 = vmatprep.subr.bf16.mxu0 %v3110
      %3940 = vmatpush1.bf16.msra.mxu0 %v3109
      %3941 = vmatprep.subr.bf16.mxu0 %v3108
      %3942 = vmatpush1.bf16.msra.mxu0 %v3107
      %3943 = vmatprep.subr.bf16.mxu0 %v3106
      %3944 = vmatpush1.bf16.msra.mxu0 %v3105
      %3945 = vmatprep.subr.bf16.mxu0 %v3104
      %3946 = vmatpush1.bf16.msra.mxu0 %v3103
      %3947 = vmatprep.subr.bf16.mxu0 %v3102
      %3948 = vmatpush1.bf16.msra.mxu0 %v3101
      %3949 = vmatprep.subr.bf16.mxu0 %v3132
      %3950 = vmatpush2.bf16.msra.mxu0 %v3131
      %3951 = vmatprep.subr.bf16.mxu0 %v3130
      %3952 = vmatpush2.bf16.msra.mxu0 %v3129
      %3953 = vmatprep.subr.bf16.mxu0 %v3128
      %3954 = vmatpush2.bf16.msra.mxu0 %v3127
      %3955 = vmatprep.subr.bf16.mxu0 %v3126
      %3956 = vmatpush2.bf16.msra.mxu0 %v3125
      %3957 = vmatprep.subr.bf16.mxu0 %v3124
      %3958 = vmatpush2.bf16.msra.mxu0 %v3123
      %3959 = vmatprep.subr.bf16.mxu0 %v3122
      %3960 = vmatpush2.bf16.msra.mxu0 %v3121
      %3961 = vmatprep.subr.bf16.mxu0 %v3120
      %3962 = vmatpush2.bf16.msra.mxu0 %v3119
      %3963 = vmatprep.subr.bf16.mxu0 %v3118
      %3964 = vmatpush2.bf16.msra.mxu0 %v3117
      %3965 = vmatprep.mubr.bf16.mxu0 %v1438
      %3966 = vmatmul.mubr.bf16.gmra.mxu0 %v1437
      %v3967 = vpop.f32.mrf.mxu0
      %v3968 = vadd.f32 %v806, %v3967
      %v3969 = vpop.f32.mrf.mxu0
      %v3970 = vadd.f32 %v810, %v3969
      %v3971 = vpop.f32.mrf.mxu0
      %v3972 = vadd.f32 %v806, %v3971
      %v3973 = vpop.f32.mrf.mxu0
      %v3974 = vadd.f32 %v810, %v3973
      %3975 = vmatprep.mubr.bf16.mxu0 %v1464
      %3976 = vmatmul.mubr.bf16.gmra.mxu0 %v1463
      %v3977 = vpop.f32.mrf.mxu0
      %v3978 = vadd.f32 %v806, %v3977
      %v3979 = vpop.f32.mrf.mxu0
      %v3980 = vadd.f32 %v810, %v3979
      %v3981 = vpop.f32.mrf.mxu0
      %v3982 = vadd.f32 %v806, %v3981
      %v3983 = vpop.f32.mrf.mxu0
      %v3984 = vadd.f32 %v810, %v3983
      %3985 = vmatprep.mubr.bf16.mxu0 %v1490
      %3986 = vmatmul.mubr.bf16.gmra.mxu0 %v1489
      %v3987 = vpop.f32.mrf.mxu0
      %v3988 = vadd.f32 %v806, %v3987
      %v3989 = vpop.f32.mrf.mxu0
      %v3990 = vadd.f32 %v810, %v3989
      %v3991 = vpop.f32.mrf.mxu0
      %v3992 = vadd.f32 %v806, %v3991
      %v3993 = vpop.f32.mrf.mxu0
      %v3994 = vadd.f32 %v810, %v3993
      %3995 = vmatprep.mubr.bf16.mxu0 %v1516
      %3996 = vmatmul.mubr.bf16.gmra.mxu0 %v1515
      %v3997 = vpop.f32.mrf.mxu0
      %v3998 = vadd.f32 %v806, %v3997
      %v3999 = vpop.f32.mrf.mxu0
      %v4000 = vadd.f32 %v810, %v3999
      %v4001 = vpop.f32.mrf.mxu0
      %v4002 = vadd.f32 %v806, %v4001
      %v4003 = vpop.f32.mrf.mxu0
      %v4004 = vadd.f32 %v810, %v4003
      %4005 = vmatprep.mubr.bf16.mxu0 %v1542
      %4006 = vmatmul.mubr.bf16.gmra.mxu0 %v1541
      %v4007 = vpop.f32.mrf.mxu0
      %v4008 = vadd.f32 %v806, %v4007
      %v4009 = vpop.f32.mrf.mxu0
      %v4010 = vadd.f32 %v810, %v4009
      %v4011 = vpop.f32.mrf.mxu0
      %v4012 = vadd.f32 %v806, %v4011
      %v4013 = vpop.f32.mrf.mxu0
      %v4014 = vadd.f32 %v810, %v4013
      %4015 = vmatprep.mubr.bf16.mxu0 %v1568
      %4016 = vmatmul.mubr.bf16.gmra.mxu0 %v1567
      %v4017 = vpop.f32.mrf.mxu0
      %v4018 = vadd.f32 %v806, %v4017
      %v4019 = vpop.f32.mrf.mxu0
      %v4020 = vadd.f32 %v810, %v4019
      %v4021 = vpop.f32.mrf.mxu0
      %v4022 = vadd.f32 %v806, %v4021
      %v4023 = vpop.f32.mrf.mxu0
      %v4024 = vadd.f32 %v810, %v4023
      %4025 = vmatprep.mubr.bf16.mxu0 %v1594
      %4026 = vmatmul.mubr.bf16.gmra.mxu0 %v1593
      %v4027 = vpop.f32.mrf.mxu0
      %v4028 = vadd.f32 %v806, %v4027
      %v4029 = vpop.f32.mrf.mxu0
      %v4030 = vadd.f32 %v810, %v4029
      %v4031 = vpop.f32.mrf.mxu0
      %v4032 = vadd.f32 %v806, %v4031
      %v4033 = vpop.f32.mrf.mxu0
      %v4034 = vadd.f32 %v810, %v4033
      %4035 = vmatprep.mubr.bf16.mxu0 %v1620
      %4036 = vmatmul.mubr.bf16.gmra.mxu0 %v1619
      %v4037 = vpop.f32.mrf.mxu0
      %v4038 = vadd.f32 %v806, %v4037
      %v4039 = vpop.f32.mrf.mxu0
      %v4040 = vadd.f32 %v810, %v4039
      %v4041 = vpop.f32.mrf.mxu0
      %v4042 = vadd.f32 %v806, %v4041
      %v4043 = vpop.f32.mrf.mxu0
      %v4044 = vadd.f32 %v810, %v4043
      %4045 = vdwg.mxu0
      %4046 = vmatprep.subr.bf16.mxu0 %v3148
      %4047 = vmatpush1.bf16.msra.mxu0 %v3147
      %4048 = vmatprep.subr.bf16.mxu0 %v3146
      %4049 = vmatpush1.bf16.msra.mxu0 %v3145
      %4050 = vmatprep.subr.bf16.mxu0 %v3144
      %4051 = vmatpush1.bf16.msra.mxu0 %v3143
      %4052 = vmatprep.subr.bf16.mxu0 %v3142
      %4053 = vmatpush1.bf16.msra.mxu0 %v3141
      %4054 = vmatprep.subr.bf16.mxu0 %v3140
      %4055 = vmatpush1.bf16.msra.mxu0 %v3139
      %4056 = vmatprep.subr.bf16.mxu0 %v3138
      %4057 = vmatpush1.bf16.msra.mxu0 %v3137
      %4058 = vmatprep.subr.bf16.mxu0 %v3136
      %4059 = vmatpush1.bf16.msra.mxu0 %v3135
      %4060 = vmatprep.subr.bf16.mxu0 %v3134
      %4061 = vmatpush1.bf16.msra.mxu0 %v3133
      %4062 = vmatprep.subr.bf16.mxu0 %v3164
      %4063 = vmatpush2.bf16.msra.mxu0 %v3163
      %4064 = vmatprep.subr.bf16.mxu0 %v3162
      %4065 = vmatpush2.bf16.msra.mxu0 %v3161
      %4066 = vmatprep.subr.bf16.mxu0 %v3160
      %4067 = vmatpush2.bf16.msra.mxu0 %v3159
      %4068 = vmatprep.subr.bf16.mxu0 %v3158
      %4069 = vmatpush2.bf16.msra.mxu0 %v3157
      %4070 = vmatprep.subr.bf16.mxu0 %v3156
      %4071 = vmatpush2.bf16.msra.mxu0 %v3155
      %4072 = vmatprep.subr.bf16.mxu0 %v3154
      %4073 = vmatpush2.bf16.msra.mxu0 %v3153
      %4074 = vmatprep.subr.bf16.mxu0 %v3152
      %4075 = vmatpush2.bf16.msra.mxu0 %v3151
      %4076 = vmatprep.subr.bf16.mxu0 %v3150
      %4077 = vmatpush2.bf16.msra.mxu0 %v3149
      %4078 = vmatprep.mubr.bf16.mxu0 %v1440
      %4079 = vmatmul.mubr.bf16.gmra.mxu0 %v1439
      %v4080 = vpop.f32.mrf.mxu0
      %v4081 = vadd.f32 %v3968, %v4080
      %v4082 = vpop.f32.mrf.mxu0
      %v4083 = vadd.f32 %v3970, %v4082
      %v4084 = vpop.f32.mrf.mxu0
      %v4085 = vadd.f32 %v3972, %v4084
      %v4086 = vpop.f32.mrf.mxu0
      %v4087 = vadd.f32 %v3974, %v4086
      %4088 = vmatprep.mubr.bf16.mxu0 %v1466
      %4089 = vmatmul.mubr.bf16.gmra.mxu0 %v1465
      %v4090 = vpop.f32.mrf.mxu0
      %v4091 = vadd.f32 %v3978, %v4090
      %v4092 = vpop.f32.mrf.mxu0
      %v4093 = vadd.f32 %v3980, %v4092
      %v4094 = vpop.f32.mrf.mxu0
      %v4095 = vadd.f32 %v3982, %v4094
      %v4096 = vpop.f32.mrf.mxu0
      %v4097 = vadd.f32 %v3984, %v4096
      %4098 = vmatprep.mubr.bf16.mxu0 %v1492
      %4099 = vmatmul.mubr.bf16.gmra.mxu0 %v1491
      %v4100 = vpop.f32.mrf.mxu0
      %v4101 = vadd.f32 %v3988, %v4100
      %v4102 = vpop.f32.mrf.mxu0
      %v4103 = vadd.f32 %v3990, %v4102
      %v4104 = vpop.f32.mrf.mxu0
      %v4105 = vadd.f32 %v3992, %v4104
      %v4106 = vpop.f32.mrf.mxu0
      %v4107 = vadd.f32 %v3994, %v4106
      %4108 = vmatprep.mubr.bf16.mxu0 %v1518
      %4109 = vmatmul.mubr.bf16.gmra.mxu0 %v1517
      %v4110 = vpop.f32.mrf.mxu0
      %v4111 = vadd.f32 %v3998, %v4110
      %v4112 = vpop.f32.mrf.mxu0
      %v4113 = vadd.f32 %v4000, %v4112
      %v4114 = vpop.f32.mrf.mxu0
      %v4115 = vadd.f32 %v4002, %v4114
      %v4116 = vpop.f32.mrf.mxu0
      %v4117 = vadd.f32 %v4004, %v4116
      %4118 = vmatprep.mubr.bf16.mxu0 %v1544
      %4119 = vmatmul.mubr.bf16.gmra.mxu0 %v1543
      %v4120 = vpop.f32.mrf.mxu0
      %v4121 = vadd.f32 %v4008, %v4120
      %v4122 = vpop.f32.mrf.mxu0
      %v4123 = vadd.f32 %v4010, %v4122
      %v4124 = vpop.f32.mrf.mxu0
      %v4125 = vadd.f32 %v4012, %v4124
      %v4126 = vpop.f32.mrf.mxu0
      %v4127 = vadd.f32 %v4014, %v4126
      %4128 = vmatprep.mubr.bf16.mxu0 %v1570
      %4129 = vmatmul.mubr.bf16.gmra.mxu0 %v1569
      %v4130 = vpop.f32.mrf.mxu0
      %v4131 = vadd.f32 %v4018, %v4130
      %v4132 = vpop.f32.mrf.mxu0
      %v4133 = vadd.f32 %v4020, %v4132
      %v4134 = vpop.f32.mrf.mxu0
      %v4135 = vadd.f32 %v4022, %v4134
      %v4136 = vpop.f32.mrf.mxu0
      %v4137 = vadd.f32 %v4024, %v4136
      %4138 = vmatprep.mubr.bf16.mxu0 %v1596
      %4139 = vmatmul.mubr.bf16.gmra.mxu0 %v1595
      %v4140 = vpop.f32.mrf.mxu0
      %v4141 = vadd.f32 %v4028, %v4140
      %v4142 = vpop.f32.mrf.mxu0
      %v4143 = vadd.f32 %v4030, %v4142
      %v4144 = vpop.f32.mrf.mxu0
      %v4145 = vadd.f32 %v4032, %v4144
      %v4146 = vpop.f32.mrf.mxu0
      %v4147 = vadd.f32 %v4034, %v4146
      %4148 = vmatprep.mubr.bf16.mxu0 %v1622
      %4149 = vmatmul.mubr.bf16.gmra.mxu0 %v1621
      %v4150 = vpop.f32.mrf.mxu0
      %v4151 = vadd.f32 %v4038, %v4150
      %v4152 = vpop.f32.mrf.mxu0
      %v4153 = vadd.f32 %v4040, %v4152
      %v4154 = vpop.f32.mrf.mxu0
      %v4155 = vadd.f32 %v4042, %v4154
      %v4156 = vpop.f32.mrf.mxu0
      %v4157 = vadd.f32 %v4044, %v4156
      %4158 = vdwg.mxu0
      %4159 = vmatprep.subr.bf16.mxu0 %v3180
      %4160 = vmatpush1.bf16.msra.mxu0 %v3179
      %4161 = vmatprep.subr.bf16.mxu0 %v3178
      %4162 = vmatpush1.bf16.msra.mxu0 %v3177
      %4163 = vmatprep.subr.bf16.mxu0 %v3176
      %4164 = vmatpush1.bf16.msra.mxu0 %v3175
      %4165 = vmatprep.subr.bf16.mxu0 %v3174
      %4166 = vmatpush1.bf16.msra.mxu0 %v3173
      %4167 = vmatprep.subr.bf16.mxu0 %v3172
      %4168 = vmatpush1.bf16.msra.mxu0 %v3171
      %4169 = vmatprep.subr.bf16.mxu0 %v3170
      %4170 = vmatpush1.bf16.msra.mxu0 %v3169
      %4171 = vmatprep.subr.bf16.mxu0 %v3168
      %4172 = vmatpush1.bf16.msra.mxu0 %v3167
      %4173 = vmatprep.subr.bf16.mxu0 %v3166
      %4174 = vmatpush1.bf16.msra.mxu0 %v3165
      %4175 = vmatprep.subr.bf16.mxu0 %v3196
      %4176 = vmatpush2.bf16.msra.mxu0 %v3195
      %4177 = vmatprep.subr.bf16.mxu0 %v3194
      %4178 = vmatpush2.bf16.msra.mxu0 %v3193
      %4179 = vmatprep.subr.bf16.mxu0 %v3192
      %4180 = vmatpush2.bf16.msra.mxu0 %v3191
      %4181 = vmatprep.subr.bf16.mxu0 %v3190
      %4182 = vmatpush2.bf16.msra.mxu0 %v3189
      %4183 = vmatprep.subr.bf16.mxu0 %v3188
      %4184 = vmatpush2.bf16.msra.mxu0 %v3187
      %4185 = vmatprep.subr.bf16.mxu0 %v3186
      %4186 = vmatpush2.bf16.msra.mxu0 %v3185
      %4187 = vmatprep.subr.bf16.mxu0 %v3184
      %4188 = vmatpush2.bf16.msra.mxu0 %v3183
      %4189 = vmatprep.subr.bf16.mxu0 %v3182
      %4190 = vmatpush2.bf16.msra.mxu0 %v3181
      %4191 = vmatprep.mubr.bf16.mxu0 %v1442
      %4192 = vmatmul.mubr.bf16.gmra.mxu0 %v1441
      %v4193 = vpop.f32.mrf.mxu0
      %v4194 = vadd.f32 %v4081, %v4193
      %v4195 = vpop.f32.mrf.mxu0
      %v4196 = vadd.f32 %v4083, %v4195
      %v4197 = vpop.f32.mrf.mxu0
      %v4198 = vadd.f32 %v4085, %v4197
      %v4199 = vpop.f32.mrf.mxu0
      %v4200 = vadd.f32 %v4087, %v4199
      %4201 = vmatprep.mubr.bf16.mxu0 %v1468
      %4202 = vmatmul.mubr.bf16.gmra.mxu0 %v1467
      %v4203 = vpop.f32.mrf.mxu0
      %v4204 = vadd.f32 %v4091, %v4203
      %v4205 = vpop.f32.mrf.mxu0
      %v4206 = vadd.f32 %v4093, %v4205
      %v4207 = vpop.f32.mrf.mxu0
      %v4208 = vadd.f32 %v4095, %v4207
      %v4209 = vpop.f32.mrf.mxu0
      %v4210 = vadd.f32 %v4097, %v4209
      %4211 = vmatprep.mubr.bf16.mxu0 %v1494
      %4212 = vmatmul.mubr.bf16.gmra.mxu0 %v1493
      %v4213 = vpop.f32.mrf.mxu0
      %v4214 = vadd.f32 %v4101, %v4213
      %v4215 = vpop.f32.mrf.mxu0
      %v4216 = vadd.f32 %v4103, %v4215
      %v4217 = vpop.f32.mrf.mxu0
      %v4218 = vadd.f32 %v4105, %v4217
      %v4219 = vpop.f32.mrf.mxu0
      %v4220 = vadd.f32 %v4107, %v4219
      %4221 = vmatprep.mubr.bf16.mxu0 %v1520
      %4222 = vmatmul.mubr.bf16.gmra.mxu0 %v1519
      %v4223 = vpop.f32.mrf.mxu0
      %v4224 = vadd.f32 %v4111, %v4223
      %v4225 = vpop.f32.mrf.mxu0
      %v4226 = vadd.f32 %v4113, %v4225
      %v4227 = vpop.f32.mrf.mxu0
      %v4228 = vadd.f32 %v4115, %v4227
      %v4229 = vpop.f32.mrf.mxu0
      %v4230 = vadd.f32 %v4117, %v4229
      %4231 = vmatprep.mubr.bf16.mxu0 %v1546
      %4232 = vmatmul.mubr.bf16.gmra.mxu0 %v1545
      %v4233 = vpop.f32.mrf.mxu0
      %v4234 = vadd.f32 %v4121, %v4233
      %v4235 = vpop.f32.mrf.mxu0
      %v4236 = vadd.f32 %v4123, %v4235
      %v4237 = vpop.f32.mrf.mxu0
      %v4238 = vadd.f32 %v4125, %v4237
      %v4239 = vpop.f32.mrf.mxu0
      %v4240 = vadd.f32 %v4127, %v4239
      %4241 = vmatprep.mubr.bf16.mxu0 %v1572
      %4242 = vmatmul.mubr.bf16.gmra.mxu0 %v1571
      %v4243 = vpop.f32.mrf.mxu0
      %v4244 = vadd.f32 %v4131, %v4243
      %v4245 = vpop.f32.mrf.mxu0
      %v4246 = vadd.f32 %v4133, %v4245
      %v4247 = vpop.f32.mrf.mxu0
      %v4248 = vadd.f32 %v4135, %v4247
      %v4249 = vpop.f32.mrf.mxu0
      %v4250 = vadd.f32 %v4137, %v4249
      %4251 = vmatprep.mubr.bf16.mxu0 %v1598
      %4252 = vmatmul.mubr.bf16.gmra.mxu0 %v1597
      %v4253 = vpop.f32.mrf.mxu0
      %v4254 = vadd.f32 %v4141, %v4253
      %v4255 = vpop.f32.mrf.mxu0
      %v4256 = vadd.f32 %v4143, %v4255
      %v4257 = vpop.f32.mrf.mxu0
      %v4258 = vadd.f32 %v4145, %v4257
      %v4259 = vpop.f32.mrf.mxu0
      %v4260 = vadd.f32 %v4147, %v4259
      %4261 = vmatprep.mubr.bf16.mxu0 %v1624
      %4262 = vmatmul.mubr.bf16.gmra.mxu0 %v1623
      %v4263 = vpop.f32.mrf.mxu0
      %v4264 = vadd.f32 %v4151, %v4263
      %v4265 = vpop.f32.mrf.mxu0
      %v4266 = vadd.f32 %v4153, %v4265
      %v4267 = vpop.f32.mrf.mxu0
      %v4268 = vadd.f32 %v4155, %v4267
      %v4269 = vpop.f32.mrf.mxu0
      %v4270 = vadd.f32 %v4157, %v4269
      %4271 = vdwg.mxu0
      %4272 = vmatprep.subr.bf16.mxu0 %v3212
      %4273 = vmatpush1.bf16.msra.mxu0 %v3211
      %4274 = vmatprep.subr.bf16.mxu0 %v3210
      %4275 = vmatpush1.bf16.msra.mxu0 %v3209
      %4276 = vmatprep.subr.bf16.mxu0 %v3208
      %4277 = vmatpush1.bf16.msra.mxu0 %v3207
      %4278 = vmatprep.subr.bf16.mxu0 %v3206
      %4279 = vmatpush1.bf16.msra.mxu0 %v3205
      %4280 = vmatprep.subr.bf16.mxu0 %v3204
      %4281 = vmatpush1.bf16.msra.mxu0 %v3203
      %4282 = vmatprep.subr.bf16.mxu0 %v3202
      %4283 = vmatpush1.bf16.msra.mxu0 %v3201
      %4284 = vmatprep.subr.bf16.mxu0 %v3200
      %4285 = vmatpush1.bf16.msra.mxu0 %v3199
      %4286 = vmatprep.subr.bf16.mxu0 %v3198
      %4287 = vmatpush1.bf16.msra.mxu0 %v3197
      %4288 = vmatprep.subr.bf16.mxu0 %v3228
      %4289 = vmatpush2.bf16.msra.mxu0 %v3227
      %4290 = vmatprep.subr.bf16.mxu0 %v3226
      %4291 = vmatpush2.bf16.msra.mxu0 %v3225
      %4292 = vmatprep.subr.bf16.mxu0 %v3224
      %4293 = vmatpush2.bf16.msra.mxu0 %v3223
      %4294 = vmatprep.subr.bf16.mxu0 %v3222
      %4295 = vmatpush2.bf16.msra.mxu0 %v3221
      %4296 = vmatprep.subr.bf16.mxu0 %v3220
      %4297 = vmatpush2.bf16.msra.mxu0 %v3219
      %4298 = vmatprep.subr.bf16.mxu0 %v3218
      %4299 = vmatpush2.bf16.msra.mxu0 %v3217
      %4300 = vmatprep.subr.bf16.mxu0 %v3216
      %4301 = vmatpush2.bf16.msra.mxu0 %v3215
      %4302 = vmatprep.subr.bf16.mxu0 %v3214
      %4303 = vmatpush2.bf16.msra.mxu0 %v3213
      %4304 = vmatprep.mubr.bf16.mxu0 %v1444
      %4305 = vmatmul.mubr.bf16.gmra.mxu0 %v1443
      %v4306 = vpop.f32.mrf.mxu0
      %v4307 = vadd.f32 %v4194, %v4306
      %v4308 = vpop.f32.mrf.mxu0
      %v4309 = vadd.f32 %v4196, %v4308
      %v4310 = vpop.f32.mrf.mxu0
      %v4311 = vadd.f32 %v4198, %v4310
      %v4312 = vpop.f32.mrf.mxu0
      %v4313 = vadd.f32 %v4200, %v4312
      %4314 = vmatprep.mubr.bf16.mxu0 %v1470
      %4315 = vmatmul.mubr.bf16.gmra.mxu0 %v1469
      %v4316 = vpop.f32.mrf.mxu0
      %v4317 = vadd.f32 %v4204, %v4316
      %v4318 = vpop.f32.mrf.mxu0
      %v4319 = vadd.f32 %v4206, %v4318
      %v4320 = vpop.f32.mrf.mxu0
      %v4321 = vadd.f32 %v4208, %v4320
      %v4322 = vpop.f32.mrf.mxu0
      %v4323 = vadd.f32 %v4210, %v4322
      %4324 = vmatprep.mubr.bf16.mxu0 %v1496
      %4325 = vmatmul.mubr.bf16.gmra.mxu0 %v1495
      %v4326 = vpop.f32.mrf.mxu0
      %v4327 = vadd.f32 %v4214, %v4326
      %v4328 = vpop.f32.mrf.mxu0
      %v4329 = vadd.f32 %v4216, %v4328
      %v4330 = vpop.f32.mrf.mxu0
      %v4331 = vadd.f32 %v4218, %v4330
      %v4332 = vpop.f32.mrf.mxu0
      %v4333 = vadd.f32 %v4220, %v4332
      %4334 = vmatprep.mubr.bf16.mxu0 %v1522
      %4335 = vmatmul.mubr.bf16.gmra.mxu0 %v1521
      %v4336 = vpop.f32.mrf.mxu0
      %v4337 = vadd.f32 %v4224, %v4336
      %v4338 = vpop.f32.mrf.mxu0
      %v4339 = vadd.f32 %v4226, %v4338
      %v4340 = vpop.f32.mrf.mxu0
      %v4341 = vadd.f32 %v4228, %v4340
      %v4342 = vpop.f32.mrf.mxu0
      %v4343 = vadd.f32 %v4230, %v4342
      %4344 = vmatprep.mubr.bf16.mxu0 %v1548
      %4345 = vmatmul.mubr.bf16.gmra.mxu0 %v1547
      %v4346 = vpop.f32.mrf.mxu0
      %v4347 = vadd.f32 %v4234, %v4346
      %v4348 = vpop.f32.mrf.mxu0
      %v4349 = vadd.f32 %v4236, %v4348
      %v4350 = vpop.f32.mrf.mxu0
      %v4351 = vadd.f32 %v4238, %v4350
      %v4352 = vpop.f32.mrf.mxu0
      %v4353 = vadd.f32 %v4240, %v4352
      %4354 = vmatprep.mubr.bf16.mxu0 %v1574
      %4355 = vmatmul.mubr.bf16.gmra.mxu0 %v1573
      %v4356 = vpop.f32.mrf.mxu0
      %v4357 = vadd.f32 %v4244, %v4356
      %v4358 = vpop.f32.mrf.mxu0
      %v4359 = vadd.f32 %v4246, %v4358
      %v4360 = vpop.f32.mrf.mxu0
      %v4361 = vadd.f32 %v4248, %v4360
      %v4362 = vpop.f32.mrf.mxu0
      %v4363 = vadd.f32 %v4250, %v4362
      %4364 = vmatprep.mubr.bf16.mxu0 %v1600
      %4365 = vmatmul.mubr.bf16.gmra.mxu0 %v1599
      %v4366 = vpop.f32.mrf.mxu0
      %v4367 = vadd.f32 %v4254, %v4366
      %v4368 = vpop.f32.mrf.mxu0
      %v4369 = vadd.f32 %v4256, %v4368
      %v4370 = vpop.f32.mrf.mxu0
      %v4371 = vadd.f32 %v4258, %v4370
      %v4372 = vpop.f32.mrf.mxu0
      %v4373 = vadd.f32 %v4260, %v4372
      %4374 = vmatprep.mubr.bf16.mxu0 %v1626
      %4375 = vmatmul.mubr.bf16.gmra.mxu0 %v1625
      %v4376 = vpop.f32.mrf.mxu0
      %v4377 = vadd.f32 %v4264, %v4376
      %v4378 = vpop.f32.mrf.mxu0
      %v4379 = vadd.f32 %v4266, %v4378
      %v4380 = vpop.f32.mrf.mxu0
      %v4381 = vadd.f32 %v4268, %v4380
      %v4382 = vpop.f32.mrf.mxu0
      %v4383 = vadd.f32 %v4270, %v4382
      %4384 = vdwg.mxu0
      %4385 = vmatprep.subr.bf16.mxu0 %v3244
      %4386 = vmatpush1.bf16.msra.mxu0 %v3243
      %4387 = vmatprep.subr.bf16.mxu0 %v3242
      %4388 = vmatpush1.bf16.msra.mxu0 %v3241
      %4389 = vmatprep.subr.bf16.mxu0 %v3240
      %4390 = vmatpush1.bf16.msra.mxu0 %v3239
      %4391 = vmatprep.subr.bf16.mxu0 %v3238
      %4392 = vmatpush1.bf16.msra.mxu0 %v3237
      %4393 = vmatprep.subr.bf16.mxu0 %v3236
      %4394 = vmatpush1.bf16.msra.mxu0 %v3235
      %4395 = vmatprep.subr.bf16.mxu0 %v3234
      %4396 = vmatpush1.bf16.msra.mxu0 %v3233
      %4397 = vmatprep.subr.bf16.mxu0 %v3232
      %4398 = vmatpush1.bf16.msra.mxu0 %v3231
      %4399 = vmatprep.subr.bf16.mxu0 %v3230
      %4400 = vmatpush1.bf16.msra.mxu0 %v3229
      %4401 = vmatprep.subr.bf16.mxu0 %v3260
      %4402 = vmatpush2.bf16.msra.mxu0 %v3259
      %4403 = vmatprep.subr.bf16.mxu0 %v3258
      %4404 = vmatpush2.bf16.msra.mxu0 %v3257
      %4405 = vmatprep.subr.bf16.mxu0 %v3256
      %4406 = vmatpush2.bf16.msra.mxu0 %v3255
      %4407 = vmatprep.subr.bf16.mxu0 %v3254
      %4408 = vmatpush2.bf16.msra.mxu0 %v3253
      %4409 = vmatprep.subr.bf16.mxu0 %v3252
      %4410 = vmatpush2.bf16.msra.mxu0 %v3251
      %4411 = vmatprep.subr.bf16.mxu0 %v3250
      %4412 = vmatpush2.bf16.msra.mxu0 %v3249
      %4413 = vmatprep.subr.bf16.mxu0 %v3248
      %4414 = vmatpush2.bf16.msra.mxu0 %v3247
      %4415 = vmatprep.subr.bf16.mxu0 %v3246
      %4416 = vmatpush2.bf16.msra.mxu0 %v3245
      %4417 = vmatprep.mubr.bf16.mxu0 %v1446
      %4418 = vmatmul.mubr.bf16.gmra.mxu0 %v1445
      %v4419 = vpop.f32.mrf.mxu0
      %v4420 = vadd.f32 %v4307, %v4419
      %v4421 = vpop.f32.mrf.mxu0
      %v4422 = vadd.f32 %v4309, %v4421
      %v4423 = vpop.f32.mrf.mxu0
      %v4424 = vadd.f32 %v4311, %v4423
      %v4425 = vpop.f32.mrf.mxu0
      %v4426 = vadd.f32 %v4313, %v4425
      %4427 = vmatprep.mubr.bf16.mxu0 %v1472
      %4428 = vmatmul.mubr.bf16.gmra.mxu0 %v1471
      %v4429 = vpop.f32.mrf.mxu0
      %v4430 = vadd.f32 %v4317, %v4429
      %v4431 = vpop.f32.mrf.mxu0
      %v4432 = vadd.f32 %v4319, %v4431
      %v4433 = vpop.f32.mrf.mxu0
      %v4434 = vadd.f32 %v4321, %v4433
      %v4435 = vpop.f32.mrf.mxu0
      %v4436 = vadd.f32 %v4323, %v4435
      %4437 = vmatprep.mubr.bf16.mxu0 %v1498
      %4438 = vmatmul.mubr.bf16.gmra.mxu0 %v1497
      %v4439 = vpop.f32.mrf.mxu0
      %v4440 = vadd.f32 %v4327, %v4439
      %v4441 = vpop.f32.mrf.mxu0
      %v4442 = vadd.f32 %v4329, %v4441
      %v4443 = vpop.f32.mrf.mxu0
      %v4444 = vadd.f32 %v4331, %v4443
      %v4445 = vpop.f32.mrf.mxu0
      %v4446 = vadd.f32 %v4333, %v4445
      %4447 = vmatprep.mubr.bf16.mxu0 %v1524
      %4448 = vmatmul.mubr.bf16.gmra.mxu0 %v1523
      %v4449 = vpop.f32.mrf.mxu0
      %v4450 = vadd.f32 %v4337, %v4449
      %v4451 = vpop.f32.mrf.mxu0
      %v4452 = vadd.f32 %v4339, %v4451
      %v4453 = vpop.f32.mrf.mxu0
      %v4454 = vadd.f32 %v4341, %v4453
      %v4455 = vpop.f32.mrf.mxu0
      %v4456 = vadd.f32 %v4343, %v4455
      %4457 = vmatprep.mubr.bf16.mxu0 %v1550
      %4458 = vmatmul.mubr.bf16.gmra.mxu0 %v1549
      %v4459 = vpop.f32.mrf.mxu0
      %v4460 = vadd.f32 %v4347, %v4459
      %v4461 = vpop.f32.mrf.mxu0
      %v4462 = vadd.f32 %v4349, %v4461
      %v4463 = vpop.f32.mrf.mxu0
      %v4464 = vadd.f32 %v4351, %v4463
      %v4465 = vpop.f32.mrf.mxu0
      %v4466 = vadd.f32 %v4353, %v4465
      %4467 = vmatprep.mubr.bf16.mxu0 %v1576
      %4468 = vmatmul.mubr.bf16.gmra.mxu0 %v1575
      %v4469 = vpop.f32.mrf.mxu0
      %v4470 = vadd.f32 %v4357, %v4469
      %v4471 = vpop.f32.mrf.mxu0
      %v4472 = vadd.f32 %v4359, %v4471
      %v4473 = vpop.f32.mrf.mxu0
      %v4474 = vadd.f32 %v4361, %v4473
      %v4475 = vpop.f32.mrf.mxu0
      %v4476 = vadd.f32 %v4363, %v4475
      %4477 = vmatprep.mubr.bf16.mxu0 %v1602
      %4478 = vmatmul.mubr.bf16.gmra.mxu0 %v1601
      %v4479 = vpop.f32.mrf.mxu0
      %v4480 = vadd.f32 %v4367, %v4479
      %v4481 = vpop.f32.mrf.mxu0
      %v4482 = vadd.f32 %v4369, %v4481
      %v4483 = vpop.f32.mrf.mxu0
      %v4484 = vadd.f32 %v4371, %v4483
      %v4485 = vpop.f32.mrf.mxu0
      %v4486 = vadd.f32 %v4373, %v4485
      %4487 = vmatprep.mubr.bf16.mxu0 %v1628
      %4488 = vmatmul.mubr.bf16.gmra.mxu0 %v1627
      %v4489 = vpop.f32.mrf.mxu0
      %v4490 = vadd.f32 %v4377, %v4489
      %v4491 = vpop.f32.mrf.mxu0
      %v4492 = vadd.f32 %v4379, %v4491
      %v4493 = vpop.f32.mrf.mxu0
      %v4494 = vadd.f32 %v4381, %v4493
      %v4495 = vpop.f32.mrf.mxu0
      %v4496 = vadd.f32 %v4383, %v4495
      %4497 = vdwg.mxu0
      %4498 = vmatprep.subr.bf16.mxu0 %v3276
      %4499 = vmatpush1.bf16.msra.mxu0 %v3275
      %4500 = vmatprep.subr.bf16.mxu0 %v3274
      %4501 = vmatpush1.bf16.msra.mxu0 %v3273
      %4502 = vmatprep.subr.bf16.mxu0 %v3272
      %4503 = vmatpush1.bf16.msra.mxu0 %v3271
      %4504 = vmatprep.subr.bf16.mxu0 %v3270
      %4505 = vmatpush1.bf16.msra.mxu0 %v3269
      %4506 = vmatprep.subr.bf16.mxu0 %v3268
      %4507 = vmatpush1.bf16.msra.mxu0 %v3267
      %4508 = vmatprep.subr.bf16.mxu0 %v3266
      %4509 = vmatpush1.bf16.msra.mxu0 %v3265
      %4510 = vmatprep.subr.bf16.mxu0 %v3264
      %4511 = vmatpush1.bf16.msra.mxu0 %v3263
      %4512 = vmatprep.subr.bf16.mxu0 %v3262
      %4513 = vmatpush1.bf16.msra.mxu0 %v3261
      %4514 = vmatprep.subr.bf16.mxu0 %v3292
      %4515 = vmatpush2.bf16.msra.mxu0 %v3291
      %4516 = vmatprep.subr.bf16.mxu0 %v3290
      %4517 = vmatpush2.bf16.msra.mxu0 %v3289
      %4518 = vmatprep.subr.bf16.mxu0 %v3288
      %4519 = vmatpush2.bf16.msra.mxu0 %v3287
      %4520 = vmatprep.subr.bf16.mxu0 %v3286
      %4521 = vmatpush2.bf16.msra.mxu0 %v3285
      %4522 = vmatprep.subr.bf16.mxu0 %v3284
      %4523 = vmatpush2.bf16.msra.mxu0 %v3283
      %4524 = vmatprep.subr.bf16.mxu0 %v3282
      %4525 = vmatpush2.bf16.msra.mxu0 %v3281
      %4526 = vmatprep.subr.bf16.mxu0 %v3280
      %4527 = vmatpush2.bf16.msra.mxu0 %v3279
      %4528 = vmatprep.subr.bf16.mxu0 %v3278
      %4529 = vmatpush2.bf16.msra.mxu0 %v3277
      %4530 = vmatprep.mubr.bf16.mxu0 %v1448
      %4531 = vmatmul.mubr.bf16.gmra.mxu0 %v1447
      %v4532 = vpop.f32.mrf.mxu0
      %v4533 = vadd.f32 %v4420, %v4532
      %v4534 = vpop.f32.mrf.mxu0
      %v4535 = vadd.f32 %v4422, %v4534
      %v4536 = vpop.f32.mrf.mxu0
      %v4537 = vadd.f32 %v4424, %v4536
      %v4538 = vpop.f32.mrf.mxu0
      %v4539 = vadd.f32 %v4426, %v4538
      %4540 = vmatprep.mubr.bf16.mxu0 %v1474
      %4541 = vmatmul.mubr.bf16.gmra.mxu0 %v1473
      %v4542 = vpop.f32.mrf.mxu0
      %v4543 = vadd.f32 %v4430, %v4542
      %v4544 = vpop.f32.mrf.mxu0
      %v4545 = vadd.f32 %v4432, %v4544
      %v4546 = vpop.f32.mrf.mxu0
      %v4547 = vadd.f32 %v4434, %v4546
      %v4548 = vpop.f32.mrf.mxu0
      %v4549 = vadd.f32 %v4436, %v4548
      %4550 = vmatprep.mubr.bf16.mxu0 %v1500
      %4551 = vmatmul.mubr.bf16.gmra.mxu0 %v1499
      %v4552 = vpop.f32.mrf.mxu0
      %v4553 = vadd.f32 %v4440, %v4552
      %v4554 = vpop.f32.mrf.mxu0
      %v4555 = vadd.f32 %v4442, %v4554
      %v4556 = vpop.f32.mrf.mxu0
      %v4557 = vadd.f32 %v4444, %v4556
      %v4558 = vpop.f32.mrf.mxu0
      %v4559 = vadd.f32 %v4446, %v4558
      %4560 = vmatprep.mubr.bf16.mxu0 %v1526
      %4561 = vmatmul.mubr.bf16.gmra.mxu0 %v1525
      %v4562 = vpop.f32.mrf.mxu0
      %v4563 = vadd.f32 %v4450, %v4562
      %v4564 = vpop.f32.mrf.mxu0
      %v4565 = vadd.f32 %v4452, %v4564
      %v4566 = vpop.f32.mrf.mxu0
      %v4567 = vadd.f32 %v4454, %v4566
      %v4568 = vpop.f32.mrf.mxu0
      %v4569 = vadd.f32 %v4456, %v4568
      %4570 = vmatprep.mubr.bf16.mxu0 %v1552
      %4571 = vmatmul.mubr.bf16.gmra.mxu0 %v1551
      %v4572 = vpop.f32.mrf.mxu0
      %v4573 = vadd.f32 %v4460, %v4572
      %v4574 = vpop.f32.mrf.mxu0
      %v4575 = vadd.f32 %v4462, %v4574
      %v4576 = vpop.f32.mrf.mxu0
      %v4577 = vadd.f32 %v4464, %v4576
      %v4578 = vpop.f32.mrf.mxu0
      %v4579 = vadd.f32 %v4466, %v4578
      %4580 = vmatprep.mubr.bf16.mxu0 %v1578
      %4581 = vmatmul.mubr.bf16.gmra.mxu0 %v1577
      %v4582 = vpop.f32.mrf.mxu0
      %v4583 = vadd.f32 %v4470, %v4582
      %v4584 = vpop.f32.mrf.mxu0
      %v4585 = vadd.f32 %v4472, %v4584
      %v4586 = vpop.f32.mrf.mxu0
      %v4587 = vadd.f32 %v4474, %v4586
      %v4588 = vpop.f32.mrf.mxu0
      %v4589 = vadd.f32 %v4476, %v4588
      %4590 = vmatprep.mubr.bf16.mxu0 %v1604
      %4591 = vmatmul.mubr.bf16.gmra.mxu0 %v1603
      %v4592 = vpop.f32.mrf.mxu0
      %v4593 = vadd.f32 %v4480, %v4592
      %v4594 = vpop.f32.mrf.mxu0
      %v4595 = vadd.f32 %v4482, %v4594
      %v4596 = vpop.f32.mrf.mxu0
      %v4597 = vadd.f32 %v4484, %v4596
      %v4598 = vpop.f32.mrf.mxu0
      %v4599 = vadd.f32 %v4486, %v4598
      %4600 = vmatprep.mubr.bf16.mxu0 %v1630
      %4601 = vmatmul.mubr.bf16.gmra.mxu0 %v1629
      %v4602 = vpop.f32.mrf.mxu0
      %v4603 = vadd.f32 %v4490, %v4602
      %v4604 = vpop.f32.mrf.mxu0
      %v4605 = vadd.f32 %v4492, %v4604
      %v4606 = vpop.f32.mrf.mxu0
      %v4607 = vadd.f32 %v4494, %v4606
      %v4608 = vpop.f32.mrf.mxu0
      %v4609 = vadd.f32 %v4496, %v4608
      %4610 = vdwg.mxu0
      %4611 = vmatprep.subr.bf16.mxu0 %v3308
      %4612 = vmatpush1.bf16.msra.mxu0 %v3307
      %4613 = vmatprep.subr.bf16.mxu0 %v3306
      %4614 = vmatpush1.bf16.msra.mxu0 %v3305
      %4615 = vmatprep.subr.bf16.mxu0 %v3304
      %4616 = vmatpush1.bf16.msra.mxu0 %v3303
      %4617 = vmatprep.subr.bf16.mxu0 %v3302
      %4618 = vmatpush1.bf16.msra.mxu0 %v3301
      %4619 = vmatprep.subr.bf16.mxu0 %v3300
      %4620 = vmatpush1.bf16.msra.mxu0 %v3299
      %4621 = vmatprep.subr.bf16.mxu0 %v3298
      %4622 = vmatpush1.bf16.msra.mxu0 %v3297
      %4623 = vmatprep.subr.bf16.mxu0 %v3296
      %4624 = vmatpush1.bf16.msra.mxu0 %v3295
      %4625 = vmatprep.subr.bf16.mxu0 %v3294
      %4626 = vmatpush1.bf16.msra.mxu0 %v3293
      %4627 = vmatprep.subr.bf16.mxu0 %v3324
      %4628 = vmatpush2.bf16.msra.mxu0 %v3323
      %4629 = vmatprep.subr.bf16.mxu0 %v3322
      %4630 = vmatpush2.bf16.msra.mxu0 %v3321
      %4631 = vmatprep.subr.bf16.mxu0 %v3320
      %4632 = vmatpush2.bf16.msra.mxu0 %v3319
      %4633 = vmatprep.subr.bf16.mxu0 %v3318
      %4634 = vmatpush2.bf16.msra.mxu0 %v3317
      %4635 = vmatprep.subr.bf16.mxu0 %v3316
      %4636 = vmatpush2.bf16.msra.mxu0 %v3315
      %4637 = vmatprep.subr.bf16.mxu0 %v3314
      %4638 = vmatpush2.bf16.msra.mxu0 %v3313
      %4639 = vmatprep.subr.bf16.mxu0 %v3312
      %4640 = vmatpush2.bf16.msra.mxu0 %v3311
      %4641 = vmatprep.subr.bf16.mxu0 %v3310
      %4642 = vmatpush2.bf16.msra.mxu0 %v3309
      %4643 = vmatprep.mubr.bf16.mxu0 %v1450
      %4644 = vmatmul.mubr.bf16.gmra.mxu0 %v1449
      %v4645 = vpop.f32.mrf.mxu0
      %v4646 = vadd.f32 %v4533, %v4645
      %v4647 = vpop.f32.mrf.mxu0
      %v4648 = vadd.f32 %v4535, %v4647
      %v4649 = vpop.f32.mrf.mxu0
      %v4650 = vadd.f32 %v4537, %v4649
      %v4651 = vpop.f32.mrf.mxu0
      %v4652 = vadd.f32 %v4539, %v4651
      %4653 = vmatprep.mubr.bf16.mxu0 %v1476
      %4654 = vmatmul.mubr.bf16.gmra.mxu0 %v1475
      %v4655 = vpop.f32.mrf.mxu0
      %v4656 = vadd.f32 %v4543, %v4655
      %v4657 = vpop.f32.mrf.mxu0
      %v4658 = vadd.f32 %v4545, %v4657
      %v4659 = vpop.f32.mrf.mxu0
      %v4660 = vadd.f32 %v4547, %v4659
      %v4661 = vpop.f32.mrf.mxu0
      %v4662 = vadd.f32 %v4549, %v4661
      %4663 = vmatprep.mubr.bf16.mxu0 %v1502
      %4664 = vmatmul.mubr.bf16.gmra.mxu0 %v1501
      %v4665 = vpop.f32.mrf.mxu0
      %v4666 = vadd.f32 %v4553, %v4665
      %v4667 = vpop.f32.mrf.mxu0
      %v4668 = vadd.f32 %v4555, %v4667
      %v4669 = vpop.f32.mrf.mxu0
      %v4670 = vadd.f32 %v4557, %v4669
      %v4671 = vpop.f32.mrf.mxu0
      %v4672 = vadd.f32 %v4559, %v4671
      %4673 = vmatprep.mubr.bf16.mxu0 %v1528
      %4674 = vmatmul.mubr.bf16.gmra.mxu0 %v1527
      %v4675 = vpop.f32.mrf.mxu0
      %v4676 = vadd.f32 %v4563, %v4675
      %v4677 = vpop.f32.mrf.mxu0
      %v4678 = vadd.f32 %v4565, %v4677
      %v4679 = vpop.f32.mrf.mxu0
      %v4680 = vadd.f32 %v4567, %v4679
      %v4681 = vpop.f32.mrf.mxu0
      %v4682 = vadd.f32 %v4569, %v4681
      %4683 = vmatprep.mubr.bf16.mxu0 %v1554
      %4684 = vmatmul.mubr.bf16.gmra.mxu0 %v1553
      %v4685 = vpop.f32.mrf.mxu0
      %v4686 = vadd.f32 %v4573, %v4685
      %v4687 = vpop.f32.mrf.mxu0
      %v4688 = vadd.f32 %v4575, %v4687
      %v4689 = vpop.f32.mrf.mxu0
      %v4690 = vadd.f32 %v4577, %v4689
      %v4691 = vpop.f32.mrf.mxu0
      %v4692 = vadd.f32 %v4579, %v4691
      %4693 = vmatprep.mubr.bf16.mxu0 %v1580
      %4694 = vmatmul.mubr.bf16.gmra.mxu0 %v1579
      %v4695 = vpop.f32.mrf.mxu0
      %v4696 = vadd.f32 %v4583, %v4695
      %v4697 = vpop.f32.mrf.mxu0
      %v4698 = vadd.f32 %v4585, %v4697
      %v4699 = vpop.f32.mrf.mxu0
      %v4700 = vadd.f32 %v4587, %v4699
      %v4701 = vpop.f32.mrf.mxu0
      %v4702 = vadd.f32 %v4589, %v4701
      %4703 = vmatprep.mubr.bf16.mxu0 %v1606
      %4704 = vmatmul.mubr.bf16.gmra.mxu0 %v1605
      %v4705 = vpop.f32.mrf.mxu0
      %v4706 = vadd.f32 %v4593, %v4705
      %v4707 = vpop.f32.mrf.mxu0
      %v4708 = vadd.f32 %v4595, %v4707
      %v4709 = vpop.f32.mrf.mxu0
      %v4710 = vadd.f32 %v4597, %v4709
      %v4711 = vpop.f32.mrf.mxu0
      %v4712 = vadd.f32 %v4599, %v4711
      %4713 = vmatprep.mubr.bf16.mxu0 %v1632
      %4714 = vmatmul.mubr.bf16.gmra.mxu0 %v1631
      %v4715 = vpop.f32.mrf.mxu0
      %v4716 = vadd.f32 %v4603, %v4715
      %v4717 = vpop.f32.mrf.mxu0
      %v4718 = vadd.f32 %v4605, %v4717
      %v4719 = vpop.f32.mrf.mxu0
      %v4720 = vadd.f32 %v4607, %v4719
      %v4721 = vpop.f32.mrf.mxu0
      %v4722 = vadd.f32 %v4609, %v4721
      %4723 = vdwg.mxu0
      %4724 = vmatprep.subr.bf16.mxu0 %v3340
      %4725 = vmatpush1.bf16.msra.mxu0 %v3339
      %4726 = vmatprep.subr.bf16.mxu0 %v3338
      %4727 = vmatpush1.bf16.msra.mxu0 %v3337
      %4728 = vmatprep.subr.bf16.mxu0 %v3336
      %4729 = vmatpush1.bf16.msra.mxu0 %v3335
      %4730 = vmatprep.subr.bf16.mxu0 %v3334
      %4731 = vmatpush1.bf16.msra.mxu0 %v3333
      %4732 = vmatprep.subr.bf16.mxu0 %v3332
      %4733 = vmatpush1.bf16.msra.mxu0 %v3331
      %4734 = vmatprep.subr.bf16.mxu0 %v3330
      %4735 = vmatpush1.bf16.msra.mxu0 %v3329
      %4736 = vmatprep.subr.bf16.mxu0 %v3328
      %4737 = vmatpush1.bf16.msra.mxu0 %v3327
      %4738 = vmatprep.subr.bf16.mxu0 %v3326
      %4739 = vmatpush1.bf16.msra.mxu0 %v3325
      %4740 = vmatprep.subr.bf16.mxu0 %v3356
      %4741 = vmatpush2.bf16.msra.mxu0 %v3355
      %4742 = vmatprep.subr.bf16.mxu0 %v3354
      %4743 = vmatpush2.bf16.msra.mxu0 %v3353
      %4744 = vmatprep.subr.bf16.mxu0 %v3352
      %4745 = vmatpush2.bf16.msra.mxu0 %v3351
      %4746 = vmatprep.subr.bf16.mxu0 %v3350
      %4747 = vmatpush2.bf16.msra.mxu0 %v3349
      %4748 = vmatprep.subr.bf16.mxu0 %v3348
      %4749 = vmatpush2.bf16.msra.mxu0 %v3347
      %4750 = vmatprep.subr.bf16.mxu0 %v3346
      %4751 = vmatpush2.bf16.msra.mxu0 %v3345
      %4752 = vmatprep.subr.bf16.mxu0 %v3344
      %4753 = vmatpush2.bf16.msra.mxu0 %v3343
      %4754 = vmatprep.subr.bf16.mxu0 %v3342
      %4755 = vmatpush2.bf16.msra.mxu0 %v3341
      %4756 = vmatprep.mubr.bf16.mxu0 %v1452
      %4757 = vmatmul.mubr.bf16.gmra.mxu0 %v1451
      %v4758 = vpop.f32.mrf.mxu0
      %v4759 = vadd.f32 %v4646, %v4758
      %v4760 = vpop.f32.mrf.mxu0
      %v4761 = vadd.f32 %v4648, %v4760
      %v4762 = vpop.f32.mrf.mxu0
      %v4763 = vadd.f32 %v4650, %v4762
      %v4764 = vpop.f32.mrf.mxu0
      %v4765 = vadd.f32 %v4652, %v4764
      %4766 = vmatprep.mubr.bf16.mxu0 %v1478
      %4767 = vmatmul.mubr.bf16.gmra.mxu0 %v1477
      %v4768 = vpop.f32.mrf.mxu0
      %v4769 = vadd.f32 %v4656, %v4768
      %v4770 = vpop.f32.mrf.mxu0
      %v4771 = vadd.f32 %v4658, %v4770
      %v4772 = vpop.f32.mrf.mxu0
      %v4773 = vadd.f32 %v4660, %v4772
      %v4774 = vpop.f32.mrf.mxu0
      %v4775 = vadd.f32 %v4662, %v4774
      %4776 = vmatprep.mubr.bf16.mxu0 %v1504
      %4777 = vmatmul.mubr.bf16.gmra.mxu0 %v1503
      %v4778 = vpop.f32.mrf.mxu0
      %v4779 = vadd.f32 %v4666, %v4778
      %v4780 = vpop.f32.mrf.mxu0
      %v4781 = vadd.f32 %v4668, %v4780
      %v4782 = vpop.f32.mrf.mxu0
      %v4783 = vadd.f32 %v4670, %v4782
      %v4784 = vpop.f32.mrf.mxu0
      %v4785 = vadd.f32 %v4672, %v4784
      %4786 = vmatprep.mubr.bf16.mxu0 %v1530
      %4787 = vmatmul.mubr.bf16.gmra.mxu0 %v1529
      %v4788 = vpop.f32.mrf.mxu0
      %v4789 = vadd.f32 %v4676, %v4788
      %v4790 = vpop.f32.mrf.mxu0
      %v4791 = vadd.f32 %v4678, %v4790
      %v4792 = vpop.f32.mrf.mxu0
      %v4793 = vadd.f32 %v4680, %v4792
      %v4794 = vpop.f32.mrf.mxu0
      %v4795 = vadd.f32 %v4682, %v4794
      %4796 = vmatprep.mubr.bf16.mxu0 %v1556
      %4797 = vmatmul.mubr.bf16.gmra.mxu0 %v1555
      %v4798 = vpop.f32.mrf.mxu0
      %v4799 = vadd.f32 %v4686, %v4798
      %v4800 = vpop.f32.mrf.mxu0
      %v4801 = vadd.f32 %v4688, %v4800
      %v4802 = vpop.f32.mrf.mxu0
      %v4803 = vadd.f32 %v4690, %v4802
      %v4804 = vpop.f32.mrf.mxu0
      %v4805 = vadd.f32 %v4692, %v4804
      %4806 = vmatprep.mubr.bf16.mxu0 %v1582
      %4807 = vmatmul.mubr.bf16.gmra.mxu0 %v1581
      %v4808 = vpop.f32.mrf.mxu0
      %v4809 = vadd.f32 %v4696, %v4808
      %v4810 = vpop.f32.mrf.mxu0
      %v4811 = vadd.f32 %v4698, %v4810
      %v4812 = vpop.f32.mrf.mxu0
      %v4813 = vadd.f32 %v4700, %v4812
      %v4814 = vpop.f32.mrf.mxu0
      %v4815 = vadd.f32 %v4702, %v4814
      %4816 = vmatprep.mubr.bf16.mxu0 %v1608
      %4817 = vmatmul.mubr.bf16.gmra.mxu0 %v1607
      %v4818 = vpop.f32.mrf.mxu0
      %v4819 = vadd.f32 %v4706, %v4818
      %v4820 = vpop.f32.mrf.mxu0
      %v4821 = vadd.f32 %v4708, %v4820
      %v4822 = vpop.f32.mrf.mxu0
      %v4823 = vadd.f32 %v4710, %v4822
      %v4824 = vpop.f32.mrf.mxu0
      %v4825 = vadd.f32 %v4712, %v4824
      %4826 = vmatprep.mubr.bf16.mxu0 %v1634
      %4827 = vmatmul.mubr.bf16.gmra.mxu0 %v1633
      %v4828 = vpop.f32.mrf.mxu0
      %v4829 = vadd.f32 %v4716, %v4828
      %v4830 = vpop.f32.mrf.mxu0
      %v4831 = vadd.f32 %v4718, %v4830
      %v4832 = vpop.f32.mrf.mxu0
      %v4833 = vadd.f32 %v4720, %v4832
      %v4834 = vpop.f32.mrf.mxu0
      %v4835 = vadd.f32 %v4722, %v4834
      %4836 = vdwg.mxu0
      %4837 = vmatprep.subr.bf16.mxu0 %v3372
      %4838 = vmatpush1.bf16.msra.mxu0 %v3371
      %4839 = vmatprep.subr.bf16.mxu0 %v3370
      %4840 = vmatpush1.bf16.msra.mxu0 %v3369
      %4841 = vmatprep.subr.bf16.mxu0 %v3368
      %4842 = vmatpush1.bf16.msra.mxu0 %v3367
      %4843 = vmatprep.subr.bf16.mxu0 %v3366
      %4844 = vmatpush1.bf16.msra.mxu0 %v3365
      %4845 = vmatprep.subr.bf16.mxu0 %v3364
      %4846 = vmatpush1.bf16.msra.mxu0 %v3363
      %4847 = vmatprep.subr.bf16.mxu0 %v3362
      %4848 = vmatpush1.bf16.msra.mxu0 %v3361
      %4849 = vmatprep.subr.bf16.mxu0 %v3360
      %4850 = vmatpush1.bf16.msra.mxu0 %v3359
      %4851 = vmatprep.subr.bf16.mxu0 %v3358
      %4852 = vmatpush1.bf16.msra.mxu0 %v3357
      %4853 = vmatprep.subr.bf16.mxu0 %v3388
      %4854 = vmatpush2.bf16.msra.mxu0 %v3387
      %4855 = vmatprep.subr.bf16.mxu0 %v3386
      %4856 = vmatpush2.bf16.msra.mxu0 %v3385
      %4857 = vmatprep.subr.bf16.mxu0 %v3384
      %4858 = vmatpush2.bf16.msra.mxu0 %v3383
      %4859 = vmatprep.subr.bf16.mxu0 %v3382
      %4860 = vmatpush2.bf16.msra.mxu0 %v3381
      %4861 = vmatprep.subr.bf16.mxu0 %v3380
      %4862 = vmatpush2.bf16.msra.mxu0 %v3379
      %4863 = vmatprep.subr.bf16.mxu0 %v3378
      %4864 = vmatpush2.bf16.msra.mxu0 %v3377
      %4865 = vmatprep.subr.bf16.mxu0 %v3376
      %4866 = vmatpush2.bf16.msra.mxu0 %v3375
      %4867 = vmatprep.subr.bf16.mxu0 %v3374
      %4868 = vmatpush2.bf16.msra.mxu0 %v3373
      %4869 = vmatprep.mubr.bf16.mxu0 %v1454
      %4870 = vmatmul.mubr.bf16.gmra.mxu0 %v1453
      %v4871 = vpop.f32.mrf.mxu0
      %v4872 = vadd.f32 %v4759, %v4871
      %v4873 = vpop.f32.mrf.mxu0
      %v4874 = vadd.f32 %v4761, %v4873
      %v4875 = vpop.f32.mrf.mxu0
      %v4876 = vadd.f32 %v4763, %v4875
      %v4877 = vpop.f32.mrf.mxu0
      %v4878 = vadd.f32 %v4765, %v4877
      %4879 = vmatprep.mubr.bf16.mxu0 %v1480
      %4880 = vmatmul.mubr.bf16.gmra.mxu0 %v1479
      %v4881 = vpop.f32.mrf.mxu0
      %v4882 = vadd.f32 %v4769, %v4881
      %v4883 = vpop.f32.mrf.mxu0
      %v4884 = vadd.f32 %v4771, %v4883
      %v4885 = vpop.f32.mrf.mxu0
      %v4886 = vadd.f32 %v4773, %v4885
      %v4887 = vpop.f32.mrf.mxu0
      %v4888 = vadd.f32 %v4775, %v4887
      %4889 = vmatprep.mubr.bf16.mxu0 %v1506
      %4890 = vmatmul.mubr.bf16.gmra.mxu0 %v1505
      %v4891 = vpop.f32.mrf.mxu0
      %v4892 = vadd.f32 %v4779, %v4891
      %v4893 = vpop.f32.mrf.mxu0
      %v4894 = vadd.f32 %v4781, %v4893
      %v4895 = vpop.f32.mrf.mxu0
      %v4896 = vadd.f32 %v4783, %v4895
      %v4897 = vpop.f32.mrf.mxu0
      %v4898 = vadd.f32 %v4785, %v4897
      %4899 = vmatprep.mubr.bf16.mxu0 %v1532
      %4900 = vmatmul.mubr.bf16.gmra.mxu0 %v1531
      %v4901 = vpop.f32.mrf.mxu0
      %v4902 = vadd.f32 %v4789, %v4901
      %v4903 = vpop.f32.mrf.mxu0
      %v4904 = vadd.f32 %v4791, %v4903
      %v4905 = vpop.f32.mrf.mxu0
      %v4906 = vadd.f32 %v4793, %v4905
      %v4907 = vpop.f32.mrf.mxu0
      %v4908 = vadd.f32 %v4795, %v4907
      %4909 = vmatprep.mubr.bf16.mxu0 %v1558
      %4910 = vmatmul.mubr.bf16.gmra.mxu0 %v1557
      %v4911 = vpop.f32.mrf.mxu0
      %v4912 = vadd.f32 %v4799, %v4911
      %v4913 = vpop.f32.mrf.mxu0
      %v4914 = vadd.f32 %v4801, %v4913
      %v4915 = vpop.f32.mrf.mxu0
      %v4916 = vadd.f32 %v4803, %v4915
      %v4917 = vpop.f32.mrf.mxu0
      %v4918 = vadd.f32 %v4805, %v4917
      %4919 = vmatprep.mubr.bf16.mxu0 %v1584
      %4920 = vmatmul.mubr.bf16.gmra.mxu0 %v1583
      %v4921 = vpop.f32.mrf.mxu0
      %v4922 = vadd.f32 %v4809, %v4921
      %v4923 = vpop.f32.mrf.mxu0
      %v4924 = vadd.f32 %v4811, %v4923
      %v4925 = vpop.f32.mrf.mxu0
      %v4926 = vadd.f32 %v4813, %v4925
      %v4927 = vpop.f32.mrf.mxu0
      %v4928 = vadd.f32 %v4815, %v4927
      %4929 = vmatprep.mubr.bf16.mxu0 %v1610
      %4930 = vmatmul.mubr.bf16.gmra.mxu0 %v1609
      %v4931 = vpop.f32.mrf.mxu0
      %v4932 = vadd.f32 %v4819, %v4931
      %v4933 = vpop.f32.mrf.mxu0
      %v4934 = vadd.f32 %v4821, %v4933
      %v4935 = vpop.f32.mrf.mxu0
      %v4936 = vadd.f32 %v4823, %v4935
      %v4937 = vpop.f32.mrf.mxu0
      %v4938 = vadd.f32 %v4825, %v4937
      %4939 = vmatprep.mubr.bf16.mxu0 %v1636
      %4940 = vmatmul.mubr.bf16.gmra.mxu0 %v1635
      %v4941 = vpop.f32.mrf.mxu0
      %v4942 = vadd.f32 %v4829, %v4941
      %v4943 = vpop.f32.mrf.mxu0
      %v4944 = vadd.f32 %v4831, %v4943
      %v4945 = vpop.f32.mrf.mxu0
      %v4946 = vadd.f32 %v4833, %v4945
      %v4947 = vpop.f32.mrf.mxu0
      %v4948 = vadd.f32 %v4835, %v4947
      %4949 = vdwg.mxu0
      %4950 = vmatprep.subr.bf16.mxu0 %v3404
      %4951 = vmatpush1.bf16.msra.mxu0 %v3403
      %4952 = vmatprep.subr.bf16.mxu0 %v3402
      %4953 = vmatpush1.bf16.msra.mxu0 %v3401
      %4954 = vmatprep.subr.bf16.mxu0 %v3400
      %4955 = vmatpush1.bf16.msra.mxu0 %v3399
      %4956 = vmatprep.subr.bf16.mxu0 %v3398
      %4957 = vmatpush1.bf16.msra.mxu0 %v3397
      %4958 = vmatprep.subr.bf16.mxu0 %v3396
      %4959 = vmatpush1.bf16.msra.mxu0 %v3395
      %4960 = vmatprep.subr.bf16.mxu0 %v3394
      %4961 = vmatpush1.bf16.msra.mxu0 %v3393
      %4962 = vmatprep.subr.bf16.mxu0 %v3392
      %4963 = vmatpush1.bf16.msra.mxu0 %v3391
      %4964 = vmatprep.subr.bf16.mxu0 %v3390
      %4965 = vmatpush1.bf16.msra.mxu0 %v3389
      %4966 = vmatprep.subr.bf16.mxu0 %v3420
      %4967 = vmatpush2.bf16.msra.mxu0 %v3419
      %4968 = vmatprep.subr.bf16.mxu0 %v3418
      %4969 = vmatpush2.bf16.msra.mxu0 %v3417
      %4970 = vmatprep.subr.bf16.mxu0 %v3416
      %4971 = vmatpush2.bf16.msra.mxu0 %v3415
      %4972 = vmatprep.subr.bf16.mxu0 %v3414
      %4973 = vmatpush2.bf16.msra.mxu0 %v3413
      %4974 = vmatprep.subr.bf16.mxu0 %v3412
      %4975 = vmatpush2.bf16.msra.mxu0 %v3411
      %4976 = vmatprep.subr.bf16.mxu0 %v3410
      %4977 = vmatpush2.bf16.msra.mxu0 %v3409
      %4978 = vmatprep.subr.bf16.mxu0 %v3408
      %4979 = vmatpush2.bf16.msra.mxu0 %v3407
      %4980 = vmatprep.subr.bf16.mxu0 %v3406
      %4981 = vmatpush2.bf16.msra.mxu0 %v3405
      %4982 = vmatprep.mubr.bf16.mxu0 %v1456
      %4983 = vmatmul.mubr.bf16.gmra.mxu0 %v1455
      %v4984 = vpop.f32.mrf.mxu0
      %v4985 = vadd.f32 %v4872, %v4984
      %v4986 = vpop.f32.mrf.mxu0
      %v4987 = vadd.f32 %v4874, %v4986
      %v4988 = vpop.f32.mrf.mxu0
      %v4989 = vadd.f32 %v4876, %v4988
      %v4990 = vpop.f32.mrf.mxu0
      %v4991 = vadd.f32 %v4878, %v4990
      %4992 = vmatprep.mubr.bf16.mxu0 %v1482
      %4993 = vmatmul.mubr.bf16.gmra.mxu0 %v1481
      %v4994 = vpop.f32.mrf.mxu0
      %v4995 = vadd.f32 %v4882, %v4994
      %v4996 = vpop.f32.mrf.mxu0
      %v4997 = vadd.f32 %v4884, %v4996
      %v4998 = vpop.f32.mrf.mxu0
      %v4999 = vadd.f32 %v4886, %v4998
      %v5000 = vpop.f32.mrf.mxu0
      %v5001 = vadd.f32 %v4888, %v5000
      %5002 = vmatprep.mubr.bf16.mxu0 %v1508
      %5003 = vmatmul.mubr.bf16.gmra.mxu0 %v1507
      %v5004 = vpop.f32.mrf.mxu0
      %v5005 = vadd.f32 %v4892, %v5004
      %v5006 = vpop.f32.mrf.mxu0
      %v5007 = vadd.f32 %v4894, %v5006
      %v5008 = vpop.f32.mrf.mxu0
      %v5009 = vadd.f32 %v4896, %v5008
      %v5010 = vpop.f32.mrf.mxu0
      %v5011 = vadd.f32 %v4898, %v5010
      %5012 = vmatprep.mubr.bf16.mxu0 %v1534
      %5013 = vmatmul.mubr.bf16.gmra.mxu0 %v1533
      %v5014 = vpop.f32.mrf.mxu0
      %v5015 = vadd.f32 %v4902, %v5014
      %v5016 = vpop.f32.mrf.mxu0
      %v5017 = vadd.f32 %v4904, %v5016
      %v5018 = vpop.f32.mrf.mxu0
      %v5019 = vadd.f32 %v4906, %v5018
      %v5020 = vpop.f32.mrf.mxu0
      %v5021 = vadd.f32 %v4908, %v5020
      %5022 = vmatprep.mubr.bf16.mxu0 %v1560
      %5023 = vmatmul.mubr.bf16.gmra.mxu0 %v1559
      %v5024 = vpop.f32.mrf.mxu0
      %v5025 = vadd.f32 %v4912, %v5024
      %v5026 = vpop.f32.mrf.mxu0
      %v5027 = vadd.f32 %v4914, %v5026
      %v5028 = vpop.f32.mrf.mxu0
      %v5029 = vadd.f32 %v4916, %v5028
      %v5030 = vpop.f32.mrf.mxu0
      %v5031 = vadd.f32 %v4918, %v5030
      %5032 = vmatprep.mubr.bf16.mxu0 %v1586
      %5033 = vmatmul.mubr.bf16.gmra.mxu0 %v1585
      %v5034 = vpop.f32.mrf.mxu0
      %v5035 = vadd.f32 %v4922, %v5034
      %v5036 = vpop.f32.mrf.mxu0
      %v5037 = vadd.f32 %v4924, %v5036
      %v5038 = vpop.f32.mrf.mxu0
      %v5039 = vadd.f32 %v4926, %v5038
      %v5040 = vpop.f32.mrf.mxu0
      %v5041 = vadd.f32 %v4928, %v5040
      %5042 = vmatprep.mubr.bf16.mxu0 %v1612
      %5043 = vmatmul.mubr.bf16.gmra.mxu0 %v1611
      %v5044 = vpop.f32.mrf.mxu0
      %v5045 = vadd.f32 %v4932, %v5044
      %v5046 = vpop.f32.mrf.mxu0
      %v5047 = vadd.f32 %v4934, %v5046
      %v5048 = vpop.f32.mrf.mxu0
      %v5049 = vadd.f32 %v4936, %v5048
      %v5050 = vpop.f32.mrf.mxu0
      %v5051 = vadd.f32 %v4938, %v5050
      %5052 = vmatprep.mubr.bf16.mxu0 %v1638
      %5053 = vmatmul.mubr.bf16.gmra.mxu0 %v1637
      %v5054 = vpop.f32.mrf.mxu0
      %v5055 = vadd.f32 %v4942, %v5054
      %v5056 = vpop.f32.mrf.mxu0
      %v5057 = vadd.f32 %v4944, %v5056
      %v5058 = vpop.f32.mrf.mxu0
      %v5059 = vadd.f32 %v4946, %v5058
      %v5060 = vpop.f32.mrf.mxu0
      %v5061 = vadd.f32 %v4948, %v5060
      %5062 = vdwg.mxu0
      %5063 = vmatprep.subr.bf16.mxu0 %v3436
      %5064 = vmatpush1.bf16.msra.mxu0 %v3435
      %5065 = vmatprep.subr.bf16.mxu0 %v3434
      %5066 = vmatpush1.bf16.msra.mxu0 %v3433
      %5067 = vmatprep.subr.bf16.mxu0 %v3432
      %5068 = vmatpush1.bf16.msra.mxu0 %v3431
      %5069 = vmatprep.subr.bf16.mxu0 %v3430
      %5070 = vmatpush1.bf16.msra.mxu0 %v3429
      %5071 = vmatprep.subr.bf16.mxu0 %v3428
      %5072 = vmatpush1.bf16.msra.mxu0 %v3427
      %5073 = vmatprep.subr.bf16.mxu0 %v3426
      %5074 = vmatpush1.bf16.msra.mxu0 %v3425
      %5075 = vmatprep.subr.bf16.mxu0 %v3424
      %5076 = vmatpush1.bf16.msra.mxu0 %v3423
      %5077 = vmatprep.subr.bf16.mxu0 %v3422
      %5078 = vmatpush1.bf16.msra.mxu0 %v3421
      %5079 = vmatprep.subr.bf16.mxu0 %v3452
      %5080 = vmatpush2.bf16.msra.mxu0 %v3451
      %5081 = vmatprep.subr.bf16.mxu0 %v3450
      %5082 = vmatpush2.bf16.msra.mxu0 %v3449
      %5083 = vmatprep.subr.bf16.mxu0 %v3448
      %5084 = vmatpush2.bf16.msra.mxu0 %v3447
      %5085 = vmatprep.subr.bf16.mxu0 %v3446
      %5086 = vmatpush2.bf16.msra.mxu0 %v3445
      %5087 = vmatprep.subr.bf16.mxu0 %v3444
      %5088 = vmatpush2.bf16.msra.mxu0 %v3443
      %5089 = vmatprep.subr.bf16.mxu0 %v3442
      %5090 = vmatpush2.bf16.msra.mxu0 %v3441
      %5091 = vmatprep.subr.bf16.mxu0 %v3440
      %5092 = vmatpush2.bf16.msra.mxu0 %v3439
      %5093 = vmatprep.subr.bf16.mxu0 %v3438
      %5094 = vmatpush2.bf16.msra.mxu0 %v3437
      %5095 = vmatprep.mubr.bf16.mxu0 %v1458
      %5096 = vmatmul.mubr.bf16.gmra.mxu0 %v1457
      %v5097 = vpop.f32.mrf.mxu0
      %v5098 = vadd.f32 %v4985, %v5097
      %v5099 = vpop.f32.mrf.mxu0
      %v5100 = vadd.f32 %v4987, %v5099
      %v5101 = vpop.f32.mrf.mxu0
      %v5102 = vadd.f32 %v4989, %v5101
      %v5103 = vpop.f32.mrf.mxu0
      %v5104 = vadd.f32 %v4991, %v5103
      %5105 = vmatprep.mubr.bf16.mxu0 %v1484
      %5106 = vmatmul.mubr.bf16.gmra.mxu0 %v1483
      %v5107 = vpop.f32.mrf.mxu0
      %v5108 = vadd.f32 %v4995, %v5107
      %v5109 = vpop.f32.mrf.mxu0
      %v5110 = vadd.f32 %v4997, %v5109
      %v5111 = vpop.f32.mrf.mxu0
      %v5112 = vadd.f32 %v4999, %v5111
      %v5113 = vpop.f32.mrf.mxu0
      %v5114 = vadd.f32 %v5001, %v5113
      %5115 = vmatprep.mubr.bf16.mxu0 %v1510
      %5116 = vmatmul.mubr.bf16.gmra.mxu0 %v1509
      %v5117 = vpop.f32.mrf.mxu0
      %v5118 = vadd.f32 %v5005, %v5117
      %v5119 = vpop.f32.mrf.mxu0
      %v5120 = vadd.f32 %v5007, %v5119
      %v5121 = vpop.f32.mrf.mxu0
      %v5122 = vadd.f32 %v5009, %v5121
      %v5123 = vpop.f32.mrf.mxu0
      %v5124 = vadd.f32 %v5011, %v5123
      %5125 = vmatprep.mubr.bf16.mxu0 %v1536
      %5126 = vmatmul.mubr.bf16.gmra.mxu0 %v1535
      %v5127 = vpop.f32.mrf.mxu0
      %v5128 = vadd.f32 %v5015, %v5127
      %v5129 = vpop.f32.mrf.mxu0
      %v5130 = vadd.f32 %v5017, %v5129
      %v5131 = vpop.f32.mrf.mxu0
      %v5132 = vadd.f32 %v5019, %v5131
      %v5133 = vpop.f32.mrf.mxu0
      %v5134 = vadd.f32 %v5021, %v5133
      %5135 = vmatprep.mubr.bf16.mxu0 %v1562
      %5136 = vmatmul.mubr.bf16.gmra.mxu0 %v1561
      %v5137 = vpop.f32.mrf.mxu0
      %v5138 = vadd.f32 %v5025, %v5137
      %v5139 = vpop.f32.mrf.mxu0
      %v5140 = vadd.f32 %v5027, %v5139
      %v5141 = vpop.f32.mrf.mxu0
      %v5142 = vadd.f32 %v5029, %v5141
      %v5143 = vpop.f32.mrf.mxu0
      %v5144 = vadd.f32 %v5031, %v5143
      %5145 = vmatprep.mubr.bf16.mxu0 %v1588
      %5146 = vmatmul.mubr.bf16.gmra.mxu0 %v1587
      %v5147 = vpop.f32.mrf.mxu0
      %v5148 = vadd.f32 %v5035, %v5147
      %v5149 = vpop.f32.mrf.mxu0
      %v5150 = vadd.f32 %v5037, %v5149
      %v5151 = vpop.f32.mrf.mxu0
      %v5152 = vadd.f32 %v5039, %v5151
      %v5153 = vpop.f32.mrf.mxu0
      %v5154 = vadd.f32 %v5041, %v5153
      %5155 = vmatprep.mubr.bf16.mxu0 %v1614
      %5156 = vmatmul.mubr.bf16.gmra.mxu0 %v1613
      %v5157 = vpop.f32.mrf.mxu0
      %v5158 = vadd.f32 %v5045, %v5157
      %v5159 = vpop.f32.mrf.mxu0
      %v5160 = vadd.f32 %v5047, %v5159
      %v5161 = vpop.f32.mrf.mxu0
      %v5162 = vadd.f32 %v5049, %v5161
      %v5163 = vpop.f32.mrf.mxu0
      %v5164 = vadd.f32 %v5051, %v5163
      %5165 = vmatprep.mubr.bf16.mxu0 %v1640
      %5166 = vmatmul.mubr.bf16.gmra.mxu0 %v1639
      %v5167 = vpop.f32.mrf.mxu0
      %v5168 = vadd.f32 %v5055, %v5167
      %v5169 = vpop.f32.mrf.mxu0
      %v5170 = vadd.f32 %v5057, %v5169
      %v5171 = vpop.f32.mrf.mxu0
      %v5172 = vadd.f32 %v5059, %v5171
      %v5173 = vpop.f32.mrf.mxu0
      %v5174 = vadd.f32 %v5061, %v5173
      %5175 = vdwg.mxu0
      %5176 = vmatprep.subr.bf16.mxu0 %v3468
      %5177 = vmatpush1.bf16.msra.mxu0 %v3467
      %5178 = vmatprep.subr.bf16.mxu0 %v3466
      %5179 = vmatpush1.bf16.msra.mxu0 %v3465
      %5180 = vmatprep.subr.bf16.mxu0 %v3464
      %5181 = vmatpush1.bf16.msra.mxu0 %v3463
      %5182 = vmatprep.subr.bf16.mxu0 %v3462
      %5183 = vmatpush1.bf16.msra.mxu0 %v3461
      %5184 = vmatprep.subr.bf16.mxu0 %v3460
      %5185 = vmatpush1.bf16.msra.mxu0 %v3459
      %5186 = vmatprep.subr.bf16.mxu0 %v3458
      %5187 = vmatpush1.bf16.msra.mxu0 %v3457
      %5188 = vmatprep.subr.bf16.mxu0 %v3456
      %5189 = vmatpush1.bf16.msra.mxu0 %v3455
      %5190 = vmatprep.subr.bf16.mxu0 %v3454
      %5191 = vmatpush1.bf16.msra.mxu0 %v3453
      %5192 = vmatprep.subr.bf16.mxu0 %v3484
      %5193 = vmatpush2.bf16.msra.mxu0 %v3483
      %5194 = vmatprep.subr.bf16.mxu0 %v3482
      %5195 = vmatpush2.bf16.msra.mxu0 %v3481
      %5196 = vmatprep.subr.bf16.mxu0 %v3480
      %5197 = vmatpush2.bf16.msra.mxu0 %v3479
      %5198 = vmatprep.subr.bf16.mxu0 %v3478
      %5199 = vmatpush2.bf16.msra.mxu0 %v3477
      %5200 = vmatprep.subr.bf16.mxu0 %v3476
      %5201 = vmatpush2.bf16.msra.mxu0 %v3475
      %5202 = vmatprep.subr.bf16.mxu0 %v3474
      %5203 = vmatpush2.bf16.msra.mxu0 %v3473
      %5204 = vmatprep.subr.bf16.mxu0 %v3472
      %5205 = vmatpush2.bf16.msra.mxu0 %v3471
      %5206 = vmatprep.subr.bf16.mxu0 %v3470
      %5207 = vmatpush2.bf16.msra.mxu0 %v3469
      %5208 = vmatprep.mubr.bf16.mxu0 %v1460
      %5209 = vmatmul.mubr.bf16.gmra.mxu0 %v1459
      %v5210 = vpop.f32.mrf.mxu0
      %v5211 = vadd.f32 %v5098, %v5210
      %v5212 = vpop.f32.mrf.mxu0
      %v5213 = vadd.f32 %v5100, %v5212
      %v5214 = vpop.f32.mrf.mxu0
      %v5215 = vadd.f32 %v5102, %v5214
      %v5216 = vpop.f32.mrf.mxu0
      %v5217 = vadd.f32 %v5104, %v5216
      %5218 = vmatprep.mubr.bf16.mxu0 %v1486
      %5219 = vmatmul.mubr.bf16.gmra.mxu0 %v1485
      %v5220 = vpop.f32.mrf.mxu0
      %v5221 = vadd.f32 %v5108, %v5220
      %v5222 = vpop.f32.mrf.mxu0
      %v5223 = vadd.f32 %v5110, %v5222
      %v5224 = vpop.f32.mrf.mxu0
      %v5225 = vadd.f32 %v5112, %v5224
      %v5226 = vpop.f32.mrf.mxu0
      %v5227 = vadd.f32 %v5114, %v5226
      %5228 = vmatprep.mubr.bf16.mxu0 %v1512
      %5229 = vmatmul.mubr.bf16.gmra.mxu0 %v1511
      %v5230 = vpop.f32.mrf.mxu0
      %v5231 = vadd.f32 %v5118, %v5230
      %v5232 = vpop.f32.mrf.mxu0
      %v5233 = vadd.f32 %v5120, %v5232
      %v5234 = vpop.f32.mrf.mxu0
      %v5235 = vadd.f32 %v5122, %v5234
      %v5236 = vpop.f32.mrf.mxu0
      %v5237 = vadd.f32 %v5124, %v5236
      %5238 = vmatprep.mubr.bf16.mxu0 %v1538
      %5239 = vmatmul.mubr.bf16.gmra.mxu0 %v1537
      %v5240 = vpop.f32.mrf.mxu0
      %v5241 = vadd.f32 %v5128, %v5240
      %v5242 = vpop.f32.mrf.mxu0
      %v5243 = vadd.f32 %v5130, %v5242
      %v5244 = vpop.f32.mrf.mxu0
      %v5245 = vadd.f32 %v5132, %v5244
      %v5246 = vpop.f32.mrf.mxu0
      %v5247 = vadd.f32 %v5134, %v5246
      %5248 = vmatprep.mubr.bf16.mxu0 %v1564
      %5249 = vmatmul.mubr.bf16.gmra.mxu0 %v1563
      %v5250 = vpop.f32.mrf.mxu0
      %v5251 = vadd.f32 %v5138, %v5250
      %v5252 = vpop.f32.mrf.mxu0
      %v5253 = vadd.f32 %v5140, %v5252
      %v5254 = vpop.f32.mrf.mxu0
      %v5255 = vadd.f32 %v5142, %v5254
      %v5256 = vpop.f32.mrf.mxu0
      %v5257 = vadd.f32 %v5144, %v5256
      %5258 = vmatprep.mubr.bf16.mxu0 %v1590
      %5259 = vmatmul.mubr.bf16.gmra.mxu0 %v1589
      %v5260 = vpop.f32.mrf.mxu0
      %v5261 = vadd.f32 %v5148, %v5260
      %v5262 = vpop.f32.mrf.mxu0
      %v5263 = vadd.f32 %v5150, %v5262
      %v5264 = vpop.f32.mrf.mxu0
      %v5265 = vadd.f32 %v5152, %v5264
      %v5266 = vpop.f32.mrf.mxu0
      %v5267 = vadd.f32 %v5154, %v5266
      %5268 = vmatprep.mubr.bf16.mxu0 %v1616
      %5269 = vmatmul.mubr.bf16.gmra.mxu0 %v1615
      %v5270 = vpop.f32.mrf.mxu0
      %v5271 = vadd.f32 %v5158, %v5270
      %v5272 = vpop.f32.mrf.mxu0
      %v5273 = vadd.f32 %v5160, %v5272
      %v5274 = vpop.f32.mrf.mxu0
      %v5275 = vadd.f32 %v5162, %v5274
      %v5276 = vpop.f32.mrf.mxu0
      %v5277 = vadd.f32 %v5164, %v5276
      %5278 = vmatprep.mubr.bf16.mxu0 %v1642
      %5279 = vmatmul.mubr.bf16.gmra.mxu0 %v1641
      %v5280 = vpop.f32.mrf.mxu0
      %v5281 = vadd.f32 %v5168, %v5280
      %v5282 = vpop.f32.mrf.mxu0
      %v5283 = vadd.f32 %v5170, %v5282
      %v5284 = vpop.f32.mrf.mxu0
      %v5285 = vadd.f32 %v5172, %v5284
      %v5286 = vpop.f32.mrf.mxu0
      %v5287 = vadd.f32 %v5174, %v5286
      %5288 = vdwg.mxu0
      %5289 = vmatprep.subr.bf16.mxu0 %v3500
      %5290 = vmatpush1.bf16.msra.mxu0 %v3499
      %5291 = vmatprep.subr.bf16.mxu0 %v3498
      %5292 = vmatpush1.bf16.msra.mxu0 %v3497
      %5293 = vmatprep.subr.bf16.mxu0 %v3496
      %5294 = vmatpush1.bf16.msra.mxu0 %v3495
      %5295 = vmatprep.subr.bf16.mxu0 %v3494
      %5296 = vmatpush1.bf16.msra.mxu0 %v3493
      %5297 = vmatprep.subr.bf16.mxu0 %v3492
      %5298 = vmatpush1.bf16.msra.mxu0 %v3491
      %5299 = vmatprep.subr.bf16.mxu0 %v3490
      %5300 = vmatpush1.bf16.msra.mxu0 %v3489
      %5301 = vmatprep.subr.bf16.mxu0 %v3488
      %5302 = vmatpush1.bf16.msra.mxu0 %v3487
      %5303 = vmatprep.subr.bf16.mxu0 %v3486
      %5304 = vmatpush1.bf16.msra.mxu0 %v3485
      %5305 = vmatprep.subr.bf16.mxu0 %v3516
      %5306 = vmatpush2.bf16.msra.mxu0 %v3515
      %5307 = vmatprep.subr.bf16.mxu0 %v3514
      %5308 = vmatpush2.bf16.msra.mxu0 %v3513
      %5309 = vmatprep.subr.bf16.mxu0 %v3512
      %5310 = vmatpush2.bf16.msra.mxu0 %v3511
      %5311 = vmatprep.subr.bf16.mxu0 %v3510
      %5312 = vmatpush2.bf16.msra.mxu0 %v3509
      %5313 = vmatprep.subr.bf16.mxu0 %v3508
      %5314 = vmatpush2.bf16.msra.mxu0 %v3507
      %5315 = vmatprep.subr.bf16.mxu0 %v3506
      %5316 = vmatpush2.bf16.msra.mxu0 %v3505
      %5317 = vmatprep.subr.bf16.mxu0 %v3504
      %5318 = vmatpush2.bf16.msra.mxu0 %v3503
      %5319 = vmatprep.subr.bf16.mxu0 %v3502
      %5320 = vmatpush2.bf16.msra.mxu0 %v3501
      %5321 = vmatprep.mubr.bf16.mxu0 %v1462
      %5322 = vmatmul.mubr.bf16.gmra.mxu0 %v1461
      %v5323 = vpop.f32.mrf.mxu0
      %v5324 = vadd.f32 %v5211, %v5323
      %v5325 = vpop.f32.mrf.mxu0
      %v5326 = vadd.f32 %v5213, %v5325
      %v5327 = vpop.f32.mrf.mxu0
      %v5328 = vadd.f32 %v5215, %v5327
      %v5329 = vpop.f32.mrf.mxu0
      %v5330 = vadd.f32 %v5217, %v5329
      %5331 = vmatprep.mubr.bf16.mxu0 %v1488
      %5332 = vmatmul.mubr.bf16.gmra.mxu0 %v1487
      %v5333 = vpop.f32.mrf.mxu0
      %v5334 = vadd.f32 %v5221, %v5333
      %v5335 = vpop.f32.mrf.mxu0
      %v5336 = vadd.f32 %v5223, %v5335
      %v5337 = vpop.f32.mrf.mxu0
      %v5338 = vadd.f32 %v5225, %v5337
      %v5339 = vpop.f32.mrf.mxu0
      %v5340 = vadd.f32 %v5227, %v5339
      %5341 = vmatprep.mubr.bf16.mxu0 %v1514
      %5342 = vmatmul.mubr.bf16.gmra.mxu0 %v1513
      %v5343 = vpop.f32.mrf.mxu0
      %v5344 = vadd.f32 %v5231, %v5343
      %v5345 = vpop.f32.mrf.mxu0
      %v5346 = vadd.f32 %v5233, %v5345
      %v5347 = vpop.f32.mrf.mxu0
      %v5348 = vadd.f32 %v5235, %v5347
      %v5349 = vpop.f32.mrf.mxu0
      %v5350 = vadd.f32 %v5237, %v5349
      %5351 = vmatprep.mubr.bf16.mxu0 %v1540
      %5352 = vmatmul.mubr.bf16.gmra.mxu0 %v1539
      %v5353 = vpop.f32.mrf.mxu0
      %v5354 = vadd.f32 %v5241, %v5353
      %v5355 = vpop.f32.mrf.mxu0
      %v5356 = vadd.f32 %v5243, %v5355
      %v5357 = vpop.f32.mrf.mxu0
      %v5358 = vadd.f32 %v5245, %v5357
      %v5359 = vpop.f32.mrf.mxu0
      %v5360 = vadd.f32 %v5247, %v5359
      %5361 = vmatprep.mubr.bf16.mxu0 %v1566
      %5362 = vmatmul.mubr.bf16.gmra.mxu0 %v1565
      %v5363 = vpop.f32.mrf.mxu0
      %v5364 = vadd.f32 %v5251, %v5363
      %v5365 = vpop.f32.mrf.mxu0
      %v5366 = vadd.f32 %v5253, %v5365
      %v5367 = vpop.f32.mrf.mxu0
      %v5368 = vadd.f32 %v5255, %v5367
      %v5369 = vpop.f32.mrf.mxu0
      %v5370 = vadd.f32 %v5257, %v5369
      %5371 = vmatprep.mubr.bf16.mxu0 %v1592
      %5372 = vmatmul.mubr.bf16.gmra.mxu0 %v1591
      %v5373 = vpop.f32.mrf.mxu0
      %v5374 = vadd.f32 %v5261, %v5373
      %v5375 = vpop.f32.mrf.mxu0
      %v5376 = vadd.f32 %v5263, %v5375
      %v5377 = vpop.f32.mrf.mxu0
      %v5378 = vadd.f32 %v5265, %v5377
      %v5379 = vpop.f32.mrf.mxu0
      %v5380 = vadd.f32 %v5267, %v5379
      %5381 = vmatprep.mubr.bf16.mxu0 %v1618
      %5382 = vmatmul.mubr.bf16.gmra.mxu0 %v1617
      %v5383 = vpop.f32.mrf.mxu0
      %v5384 = vadd.f32 %v5271, %v5383
      %v5385 = vpop.f32.mrf.mxu0
      %v5386 = vadd.f32 %v5273, %v5385
      %v5387 = vpop.f32.mrf.mxu0
      %v5388 = vadd.f32 %v5275, %v5387
      %v5389 = vpop.f32.mrf.mxu0
      %v5390 = vadd.f32 %v5277, %v5389
      %5391 = vmatprep.mubr.bf16.mxu0 %v1644
      %5392 = vmatmul.mubr.bf16.gmra.mxu0 %v1643
      %v5393 = vpop.f32.mrf.mxu0
      %v5394 = vadd.f32 %v5281, %v5393
      %v5395 = vpop.f32.mrf.mxu0
      %v5396 = vadd.f32 %v5283, %v5395
      %v5397 = vpop.f32.mrf.mxu0
      %v5398 = vadd.f32 %v5285, %v5397
      %v5399 = vpop.f32.mrf.mxu0
      %v5400 = vadd.f32 %v5287, %v5399
      %5401 = vdwg.mxu0
      %v5402 = vmax.f32 %v5324, 0.0
      %v5403 = vmax.f32 %v5326, 0.0
      %v5404 = vmax.f32 %v5328, 0.0
      %v5405 = vmax.f32 %v5330, 0.0
      %v5406 = vmax.f32 %v5334, 0.0
      %v5407 = vmax.f32 %v5336, 0.0
      %v5408 = vmax.f32 %v5338, 0.0
      %v5409 = vmax.f32 %v5340, 0.0
      %v5410 = vmax.f32 %v5344, 0.0
      %v5411 = vmax.f32 %v5346, 0.0
      %v5412 = vmax.f32 %v5348, 0.0
      %v5413 = vmax.f32 %v5350, 0.0
      %v5414 = vmax.f32 %v5354, 0.0
      %v5415 = vmax.f32 %v5356, 0.0
      %v5416 = vmax.f32 %v5358, 0.0
      %v5417 = vmax.f32 %v5360, 0.0
      %v5418 = vmax.f32 %v5364, 0.0
      %v5419 = vmax.f32 %v5366, 0.0
      %v5420 = vmax.f32 %v5368, 0.0
      %v5421 = vmax.f32 %v5370, 0.0
      %v5422 = vmax.f32 %v5374, 0.0
      %v5423 = vmax.f32 %v5376, 0.0
      %v5424 = vmax.f32 %v5378, 0.0
      %v5425 = vmax.f32 %v5380, 0.0
      %v5426 = vmax.f32 %v5384, 0.0
      %v5427 = vmax.f32 %v5386, 0.0
      %v5428 = vmax.f32 %v5388, 0.0
      %v5429 = vmax.f32 %v5390, 0.0
      %v5430 = vmax.f32 %v5394, 0.0
      %v5431 = vmax.f32 %v5396, 0.0
      %v5432 = vmax.f32 %v5398, 0.0
      %v5433 = vmax.f32 %v5400, 0.0
      %v5434 = vmax.f32 %v5402, %v5403
      %v5435 = vmax.f32 %v5404, %v5405
      %v5436 = vmax.f32 %v5406, %v5407
      %v5437 = vmax.f32 %v5408, %v5409
      %v5438 = vmax.f32 %v5410, %v5411
      %v5439 = vmax.f32 %v5412, %v5413
      %v5440 = vmax.f32 %v5414, %v5415
      %v5441 = vmax.f32 %v5416, %v5417
      %v5442 = vmax.f32 %v5418, %v5419
      %v5443 = vmax.f32 %v5420, %v5421
      %v5444 = vmax.f32 %v5422, %v5423
      %v5445 = vmax.f32 %v5424, %v5425
      %v5446 = vmax.f32 %v5426, %v5427
      %v5447 = vmax.f32 %v5428, %v5429
      %v5448 = vmax.f32 %v5430, %v5431
      %v5449 = vmax.f32 %v5432, %v5433
      %v5450 = vmax.f32 %v5434, %v5435
      %v5451 = vmax.f32 %v5436, %v5437
      %v5452 = vmax.f32 %v5438, %v5439
      %v5453 = vmax.f32 %v5440, %v5441
      %v5454 = vmax.f32 %v5442, %v5443
      %v5455 = vmax.f32 %v5444, %v5445
      %v5456 = vmax.f32 %v5446, %v5447
      %v5457 = vmax.f32 %v5448, %v5449
      %v5458 = vpack.c.bf16 %v5451, %v5450
      %v5459 = vpack.c.bf16 %v5453, %v5452
      %v5460 = vpack.c.bf16 %v5455, %v5454
      %v5461 = vpack.c.bf16 %v5457, %v5456
      %v5466 = vunpack.c.l.b16 %v5458
      %v5467 = vunpack.c.h.b16 %v5458
      %v5468 = vunpack.c.l.b16 %v5459
      %v5469 = vunpack.c.h.b16 %v5459
      %v5470 = vunpack.c.l.b16 %v5460
      %v5471 = vunpack.c.h.b16 %v5460
      %v5472 = vunpack.c.l.b16 %v5461
      %v5473 = vunpack.c.h.b16 %v5461
      %v5474 = vpack.c.b16 %v5466, %v5466
      %v5475 = vpack.c.b16 %v5467, %v5467
      %v5476 = vpack.c.b16 %v5468, %v5468
      %v5477 = vpack.c.b16 %v5469, %v5469
      %v5478 = vpack.c.b16 %v5470, %v5470
      %v5479 = vpack.c.b16 %v5471, %v5471
      %v5480 = vpack.c.b16 %v5472, %v5472
      %v5481 = vpack.c.b16 %v5473, %v5473
      %5490 = vst [vmem:[%s175] sm:$0xf] %v5474
      %5491 = vst [vmem:[%s175 + $0x4] sm:$0xf] %v5475
      %5492 = vst [vmem:[%s175 + $0x8] sm:$0xf] %v5476
      %5493 = vst [vmem:[%s175 + $0xc] sm:$0xf] %v5477
      %5494 = vst [vmem:[%s175 + $0x10] sm:$0xf] %v5478
      %5495 = vst [vmem:[%s175 + $0x14] sm:$0xf] %v5479
      %5496 = vst [vmem:[%s175 + $0x18] sm:$0xf] %v5480
      %5497 = vst [vmem:[%s175 + $0x1c] sm:$0xf] %v5481
      %s5498 = smul.u32 8, %s14
      %p5499 = scmp.lt.s32.totalorder %s5498, 15
      %s5500 = scalar_select %p5499, %s5498, 15
      %s5501 = smul.addr %s5500, 4
      %s5502 = scalar_lea.vmem %s3, %s5501
      // Predicated region
      $region33: #{cnn_femnist_forward.4} parent=31 // pred_check
        %p5503 = pneg %p100
      $region34: #{cnn_femnist_forward.4} parent=31 // pred_check_branch
        %5505 = sbr.rel (%p5503) target = $region36
      $region35: #{cnn_femnist_forward.4} parent=31 // pred_region
        %s5506 = smul.u32 8, %s14
      $region36: #{cnn_femnist_forward.4} parent=31 // pred_fallthru
        _
    $region32: #{cnn_femnist_forward.4} parent=5 // pred_fallthru
      _
    %p5507 = scmp.le.s32.totalorder 2, %s9
    // Predicated region
    $region37: #{cnn_femnist_forward.4} parent=5 // pred_check
      %p5508 = pneg %p5507
    $region38: #{cnn_femnist_forward.4} parent=5 // pred_check_branch
      %5510 = sbr.rel (%p5508) target = $region40
    $region39: #{cnn_femnist_forward.4} parent=5 // pred_region
      %s5511 = ssub.s32 %s9, 2
      // Predicated region
      $region41: #{cnn_femnist_forward.4} parent=39 // pred_check
        %p5512 = pneg %p106
      $region42: #{cnn_femnist_forward.4} parent=39 // pred_check_branch
        %5514 = sbr.rel (%p5512) target = $region44
      $region43: #{cnn_femnist_forward.4} parent=39 // pred_region
        %s5515 = smul.u32 8, %s15
        %p5516 = scmp.lt.s32.totalorder %s5515, 15
        %s5517 = scalar_select %p5516, %s5515, 15
        %s5518 = smul.addr %s5517, 4
        %s5519 = scalar_lea.vmem %s3, %s5518
      $region44: #{cnn_femnist_forward.4} parent=39 // pred_fallthru
        _
    $region40: #{cnn_femnist_forward.4} parent=5 // pred_fallthru
      _
  $region6: #{cnn_femnist_forward.4} parent=0 // loop_footer
    %s13 = sadd.s32 1, %s9
  $region7: #{cnn_femnist_forward.4} parent=0 // loop_footer_branch
    %8 = sbr.rel target = $region3
  $region8: #{cnn_femnist_forward.4} parent=0 // loop_exit
    _

// kernel: cnn_femnist_forward.5
$region0: #{cnn_femnist_forward.5}
  #allocation0 [shape = 'u32[]', space=smem, size = 0x4, offset = 0x4, fixed_abs, tag = 'smem constant byte address 0x4 - core index']
  #allocation1 [shape = 'u32[144,128]{1,0:T(1,128)}', space=vmem, size = 0x12000, scoped, tag = 'internal scratch']
  #allocation2 [shape = 'f32[8,384]{1,0:T(8,128)}', space=vmem, size = 0x3000, scoped, tag = 'scratch operand']
  %s0 = inlined_call_operand.vmem [shape: bf16[8,8192], index: 0, kind: input, shape index: {}]
  %s1 = inlined_call_operand.vmem [shape: bf16[8192,384], index: 1, kind: input, shape index: {}]
  %s2 = inlined_call_operand.vmem [shape: f32[1,384], index: 2, kind: input, shape index: {}]
  %s3 = inlined_call_operand.vmem [shape: bf16[384,192], index: 3, kind: input, shape index: {}]
  %s4 = inlined_call_operand.vmem [shape: f32[1,192], index: 4, kind: input, shape index: {}]
  %s5 = inlined_call_operand.vmem [shape: bf16[192,128], index: 5, kind: input, shape index: {}]
  %s6 = inlined_call_operand.vmem [shape: f32[1,128], index: 6, kind: input, shape index: {}]
  %s7 = inlined_call_operand.vmem [shape: f32[8,128], index: 7, kind: output, shape index: {}]
  %s8 = sld [smem:[#allocation0]]
  $region69: #{cnn_femnist_forward.5} parent=0
    _
  %s10 = ssub.s32 1, %s8
  %s11 = scalar_select 0, %s10, %s8
  loop: start=0, step=1, limit=10
  $region2: #{cnn_femnist_forward.5} parent=0 // loop_pre_header
    _
  $region3: #{cnn_femnist_forward.5} parent=0 // loop_header
    %s13 = sphi 0, %s17
    %p14 = scmp.ge.s32.totalorder %s13, 10
    %s23 = sphi 0, %s25
    %s26 = sphi 0, %s23
    %s27 = sphi 0, %s26
    %s43 = sphi 0, %s27
    %s49 = sphi 0, %s51
    %s52 = sphi 0, %s49
    %s53 = sphi 0, %s52
    %s69 = sphi 0, %s53
    %s73 = sphi 0, %s73
    %s75 = sphi 0, %s73
    %s76 = sphi 0, %s75
    %s90 = sphi 0, %s76
    %s94 = sphi 0, %s94
    %s96 = sphi 0, %s94
    %s97 = sphi 0, %s96
    %s111 = sphi 0, %s97
    %s115 = sphi 0, %s115
    %s117 = sphi 0, %s115
    %s118 = sphi 0, %s117
    %s132 = sphi 0, %s118
    %s136 = sphi 0, %s136
    %s138 = sphi 0, %s136
    %s139 = sphi 0, %s138
    %s153 = sphi 0, %s139
    %s157 = sphi 0, %s157
    %s159 = sphi 0, %s157
    %s160 = sphi 0, %s159
    %s174 = sphi 0, %s160
    %s178 = sphi 0, %s178
    %s180 = sphi 0, %s178
    %s181 = sphi 0, %s180
    %s195 = sphi 0, %s181
  $region4: #{cnn_femnist_forward.5} parent=0 // loop_header_branch
    %16 = sbr.rel (%p14) target = $region8
  $region5: #{cnn_femnist_forward.5} parent=0 // loop_body
    %s18 = ssub.s32 %s13, 1
    %s19 = ssub.s32 %s13, 2
    %s20 = sadd.s32 %s13, 1
    %s21 = ssub.s32 %s13, %s20
    %p22 = scmp.eq.s32.totalorder %s21, 0
    %s24 = sadd.s32 %s23, 1
    %s25 = scalar_select %p22, %s23, %s24
    %p28 = pneg %p22
    %p29 = scmp.eq.s32.totalorder %s13, 7
    %p30 = por %p28, %p29
    %p31 = scmp.ne.s32.totalorder %s23, %s26
    %p32 = scmp.eq.s32.totalorder %s13, 0
    %p33 = por %p31, %p32
    %p34 = scmp.ne.s32.totalorder %s23, %s26
    %p35 = scmp.eq.s32.totalorder %s18, 7
    %p36 = por %p34, %p35
    %p37 = scmp.ne.s32.totalorder %s26, %s27
    %p38 = scmp.eq.s32.totalorder %s18, 0
    %p39 = por %p37, %p38
    %p40 = scmp.ne.s32.totalorder %s26, %s27
    %p41 = scmp.eq.s32.totalorder %s19, 7
    %p42 = por %p40, %p41
    %p44 = scmp.ne.s32.totalorder %s27, %s43
    %p45 = scmp.eq.s32.totalorder %s19, 0
    %p46 = por %p44, %p45
    %s47 = ssub.s32 %s13, %s20
    %p48 = scmp.eq.s32.totalorder %s47, 0
    %s50 = sadd.s32 %s49, 1
    %s51 = scalar_select %p48, %s49, %s50
    %p54 = pneg %p48
    %p55 = scmp.eq.s32.totalorder %s13, 7
    %p56 = por %p54, %p55
    %p57 = scmp.ne.s32.totalorder %s49, %s52
    %p58 = scmp.eq.s32.totalorder %s13, 0
    %p59 = por %p57, %p58
    %p60 = scmp.ne.s32.totalorder %s49, %s52
    %p61 = scmp.eq.s32.totalorder %s18, 7
    %p62 = por %p60, %p61
    %p63 = scmp.ne.s32.totalorder %s52, %s53
    %p64 = scmp.eq.s32.totalorder %s18, 0
    %p65 = por %p63, %p64
    %p66 = scmp.ne.s32.totalorder %s52, %s53
    %p67 = scmp.eq.s32.totalorder %s19, 7
    %p68 = por %p66, %p67
    %p70 = scmp.ne.s32.totalorder %s53, %s69
    %p71 = scmp.eq.s32.totalorder %s19, 0
    %p72 = por %p70, %p71
    %s74 = sadd.s32 %s73, 1
    %p77 = scmp.eq.s32.totalorder %s13, 7
    %p78 = scmp.ne.s32.totalorder %s73, %s75
    %p79 = scmp.eq.s32.totalorder %s13, 0
    %p80 = por %p78, %p79
    %p81 = scmp.ne.s32.totalorder %s73, %s75
    %p82 = scmp.eq.s32.totalorder %s18, 7
    %p83 = por %p81, %p82
    %p84 = scmp.ne.s32.totalorder %s75, %s76
    %p85 = scmp.eq.s32.totalorder %s18, 0
    %p86 = por %p84, %p85
    %p87 = scmp.ne.s32.totalorder %s75, %s76
    %p88 = scmp.eq.s32.totalorder %s19, 7
    %p89 = por %p87, %p88
    %p91 = scmp.ne.s32.totalorder %s76, %s90
    %p92 = scmp.eq.s32.totalorder %s19, 0
    %p93 = por %p91, %p92
    %s95 = sadd.s32 %s94, 1
    %p98 = scmp.eq.s32.totalorder %s13, 7
    %p99 = scmp.ne.s32.totalorder %s94, %s96
    %p100 = scmp.eq.s32.totalorder %s13, 0
    %p101 = por %p99, %p100
    %p102 = scmp.ne.s32.totalorder %s94, %s96
    %p103 = scmp.eq.s32.totalorder %s18, 7
    %p104 = por %p102, %p103
    %p105 = scmp.ne.s32.totalorder %s96, %s97
    %p106 = scmp.eq.s32.totalorder %s18, 0
    %p107 = por %p105, %p106
    %p108 = scmp.ne.s32.totalorder %s96, %s97
    %p109 = scmp.eq.s32.totalorder %s19, 7
    %p110 = por %p108, %p109
    %p112 = scmp.ne.s32.totalorder %s97, %s111
    %p113 = scmp.eq.s32.totalorder %s19, 0
    %p114 = por %p112, %p113
    %s116 = sadd.s32 %s115, 1
    %p119 = scmp.eq.s32.totalorder %s13, 7
    %p120 = scmp.ne.s32.totalorder %s115, %s117
    %p121 = scmp.eq.s32.totalorder %s13, 0
    %p122 = por %p120, %p121
    %p123 = scmp.ne.s32.totalorder %s115, %s117
    %p124 = scmp.eq.s32.totalorder %s18, 7
    %p125 = por %p123, %p124
    %p126 = scmp.ne.s32.totalorder %s117, %s118
    %p127 = scmp.eq.s32.totalorder %s18, 0
    %p128 = por %p126, %p127
    %p129 = scmp.ne.s32.totalorder %s117, %s118
    %p130 = scmp.eq.s32.totalorder %s19, 7
    %p131 = por %p129, %p130
    %p133 = scmp.ne.s32.totalorder %s118, %s132
    %p134 = scmp.eq.s32.totalorder %s19, 0
    %p135 = por %p133, %p134
    %s137 = sadd.s32 %s136, 1
    %p140 = scmp.eq.s32.totalorder %s13, 7
    %p141 = scmp.ne.s32.totalorder %s136, %s138
    %p142 = scmp.eq.s32.totalorder %s13, 0
    %p143 = por %p141, %p142
    %p144 = scmp.ne.s32.totalorder %s136, %s138
    %p145 = scmp.eq.s32.totalorder %s18, 7
    %p146 = por %p144, %p145
    %p147 = scmp.ne.s32.totalorder %s138, %s139
    %p148 = scmp.eq.s32.totalorder %s18, 0
    %p149 = por %p147, %p148
    %p150 = scmp.ne.s32.totalorder %s138, %s139
    %p151 = scmp.eq.s32.totalorder %s19, 7
    %p152 = por %p150, %p151
    %p154 = scmp.ne.s32.totalorder %s139, %s153
    %p155 = scmp.eq.s32.totalorder %s19, 0
    %p156 = por %p154, %p155
    %s158 = sadd.s32 %s157, 1
    %p161 = scmp.eq.s32.totalorder %s13, 7
    %p162 = scmp.ne.s32.totalorder %s157, %s159
    %p163 = scmp.eq.s32.totalorder %s13, 0
    %p164 = por %p162, %p163
    %p165 = scmp.ne.s32.totalorder %s157, %s159
    %p166 = scmp.eq.s32.totalorder %s18, 7
    %p167 = por %p165, %p166
    %p168 = scmp.ne.s32.totalorder %s159, %s160
    %p169 = scmp.eq.s32.totalorder %s18, 0
    %p170 = por %p168, %p169
    %p171 = scmp.ne.s32.totalorder %s159, %s160
    %p172 = scmp.eq.s32.totalorder %s19, 7
    %p173 = por %p171, %p172
    %p175 = scmp.ne.s32.totalorder %s160, %s174
    %p176 = scmp.eq.s32.totalorder %s19, 0
    %p177 = por %p175, %p176
    %s179 = sadd.s32 %s178, 1
    %p182 = scmp.eq.s32.totalorder %s13, 7
    %p183 = scmp.ne.s32.totalorder %s178, %s180
    %p184 = scmp.eq.s32.totalorder %s13, 0
    %p185 = por %p183, %p184
    %p186 = scmp.ne.s32.totalorder %s178, %s180
    %p187 = scmp.eq.s32.totalorder %s18, 7
    %p188 = por %p186, %p187
    %p189 = scmp.ne.s32.totalorder %s180, %s181
    %p190 = scmp.eq.s32.totalorder %s18, 0
    %p191 = por %p189, %p190
    %p192 = scmp.ne.s32.totalorder %s180, %s181
    %p193 = scmp.eq.s32.totalorder %s19, 7
    %p194 = por %p192, %p193
    %p196 = scmp.ne.s32.totalorder %s181, %s195
    %p197 = scmp.eq.s32.totalorder %s19, 0
    %p198 = por %p196, %p197
    %p199 = scmp.le.s32.totalorder 1, %s13
    %p200 = scmp.lt.s32.totalorder %s13, 9
    %p201 = pnand %p199, %p200
    %p202 = pneg %p201
    // Predicated region
    $region9: #{cnn_femnist_forward.5} parent=5 // pred_check
      _
    $region10: #{cnn_femnist_forward.5} parent=5 // pred_check_branch
      %204 = sbr.rel (%p201) target = $region12
    $region11: #{cnn_femnist_forward.5} parent=5 // pred_region
      %s205 = ssub.s32 %s13, 1
      // Predicated region
      $region13: #{cnn_femnist_forward.5} parent=11 // pred_check
        %p206 = pneg %p86
      $region14: #{cnn_femnist_forward.5} parent=11 // pred_check_branch
        %208 = sbr.rel (%p206) target = $region16
      $region15: #{cnn_femnist_forward.5} parent=11 // pred_region
        _
      $region16: #{cnn_femnist_forward.5} parent=11 // pred_fallthru
        _
      // Predicated region
      $region17: #{cnn_femnist_forward.5} parent=11 // pred_check
        %p209 = pneg %p107
      $region18: #{cnn_femnist_forward.5} parent=11 // pred_check_branch
        %211 = sbr.rel (%p209) target = $region20
      $region19: #{cnn_femnist_forward.5} parent=11 // pred_region
        _
      $region20: #{cnn_femnist_forward.5} parent=11 // pred_fallthru
        _
      // Predicated region
      $region21: #{cnn_femnist_forward.5} parent=11 // pred_check
        %p212 = pneg %p128
      $region22: #{cnn_femnist_forward.5} parent=11 // pred_check_branch
        %214 = sbr.rel (%p212) target = $region24
      $region23: #{cnn_femnist_forward.5} parent=11 // pred_region
        _
      $region24: #{cnn_femnist_forward.5} parent=11 // pred_fallthru
        _
      // Predicated region
      $region25: #{cnn_femnist_forward.5} parent=11 // pred_check
        %p215 = pneg %p149
      $region26: #{cnn_femnist_forward.5} parent=11 // pred_check_branch
        %217 = sbr.rel (%p215) target = $region28
      $region27: #{cnn_femnist_forward.5} parent=11 // pred_region
        _
      $region28: #{cnn_femnist_forward.5} parent=11 // pred_fallthru
        _
      // Predicated region
      $region29: #{cnn_femnist_forward.5} parent=11 // pred_check
        %p218 = pneg %p170
      $region30: #{cnn_femnist_forward.5} parent=11 // pred_check_branch
        %220 = sbr.rel (%p218) target = $region32
      $region31: #{cnn_femnist_forward.5} parent=11 // pred_region
        _
      $region32: #{cnn_femnist_forward.5} parent=11 // pred_fallthru
        _
    $region12: #{cnn_femnist_forward.5} parent=5 // pred_fallthru
      _
    %p221 = scmp.lt.s32.totalorder %s13, 8
    // Predicated region
    $region33: #{cnn_femnist_forward.5} parent=5 // pred_check
      %p222 = pneg %p221
    $region34: #{cnn_femnist_forward.5} parent=5 // pred_check_branch
      %224 = sbr.rel (%p222) target = $region36
    $region35: #{cnn_femnist_forward.5} parent=5 // pred_region
      // Predicated region
      $region37: #{cnn_femnist_forward.5} parent=35 // pred_check
        %p225 = pneg %p33
      $region38: #{cnn_femnist_forward.5} parent=35 // pred_check_branch
        %227 = sbr.rel (%p225) target = $region40
      $region39: #{cnn_femnist_forward.5} parent=35 // pred_region
        %s228 = smul.u32 8, %s13
        %p229 = scmp.lt.s32.totalorder %s228, 63
        %s230 = scalar_select %p229, %s228, 63
        %s231 = smul.addr %s230, 4
        %s232 = scalar_lea.vmem %s0, %s231
        %s233 = smul.u32 8, %s13
      $region40: #{cnn_femnist_forward.5} parent=35 // pred_fallthru
        _
      // Predicated region
      $region41: #{cnn_femnist_forward.5} parent=35 // pred_check
        %p234 = pneg %p59
      $region42: #{cnn_femnist_forward.5} parent=35 // pred_check_branch
        %236 = sbr.rel (%p234) target = $region44
      $region43: #{cnn_femnist_forward.5} parent=35 // pred_region
        %s237 = smul.u32 128, %s13
        %p238 = scmp.lt.s32.totalorder %s237, 1023
        %s239 = scalar_select %p238, %s237, 1023
        %s240 = smul.addr %s239, 3
        %s241 = smul.addr %s240, 4
        %s242 = scalar_lea.vmem %s1, %s241
        %s243 = smul.u32 128, %s13
      $region44: #{cnn_femnist_forward.5} parent=35 // pred_fallthru
        _
    $region36: #{cnn_femnist_forward.5} parent=5 // pred_fallthru
      _
    %p244 = scmp.le.s32.totalorder 1, %s13
    %p245 = scmp.lt.s32.totalorder %s13, 9
    %p246 = pnand %p244, %p245
    %p247 = pneg %p246
    // Predicated region
    $region45: #{cnn_femnist_forward.5} parent=5 // pred_check
      _
    $region46: #{cnn_femnist_forward.5} parent=5 // pred_check_branch
      %249 = sbr.rel (%p246) target = $region48
    $region47: #{cnn_femnist_forward.5} parent=5 // pred_region
      %s250 = ssub.s32 %s13, 1
      %s251 = smul.u32 8, %s18
      %p252 = scmp.lt.s32.totalorder %s251, 63
      %s253 = scalar_select %p252, %s251, 63
      %s254 = smul.addr %s253, 4
      %s255 = scalar_lea.vmem %s0, %s254
      %p256 = pneg %p39
      %p257 = pneg %p36
      %s258 = smul.u32 128, %s18
      %p259 = scmp.lt.s32.totalorder %s258, 1023
      %s260 = scalar_select %p259, %s258, 1023
      %s261 = smul.addr %s260, 3
      %s262 = smul.addr %s261, 4
      %s263 = scalar_lea.vmem %s1, %s262
      %p264 = pneg %p65
      %p265 = pneg %p62
      %p266 = pneg %p86
      %p267 = pneg %p83
      %p268 = pneg %p107
      %p269 = pneg %p104
      %p270 = pneg %p128
      %p271 = pneg %p125
      %p272 = pneg %p149
      %p273 = pneg %p146
      %p274 = pneg %p170
      %p275 = pneg %p167
      %p276 = pneg %p191
      %p277 = pneg %p188
      %s278 = smul.u32 8, %s18
      %p279 = scmp.lt.s32.totalorder %s278, 63
      %s280 = scalar_select %p279, %s278, 63
      %s281 = smul.addr %s280, 4
      %s282 = scalar_lea.vmem %s0, %s281
      %s283 = smul.u32 8, %s18
      %s284 = smul.u32 128, %s18
      %p285 = scmp.lt.s32.totalorder %s284, 1023
      %s286 = scalar_select %p285, %s284, 1023
      %s287 = smul.addr %s286, 3
      %s288 = smul.addr %s287, 4
      %s289 = scalar_lea.vmem %s1, %s288
      %s290 = smul.u32 128, %s18
      %p292 = scmp.eq.s32.totalorder %s18, 0
      // Predicated region
      $region49: #{cnn_femnist_forward.5} parent=47 // pred_check
        %p293 = pneg %p292
      $region50: #{cnn_femnist_forward.5} parent=47 // pred_check_branch
        %295 = sbr.rel (%p293) target = $region52
      $region51: #{cnn_femnist_forward.5} parent=47 // pred_region
        %296 = vst [vmem:[#allocation2] sm:$0xff] 0.0
        %297 = vst [vmem:[#allocation2 + $0x8] sm:$0xff] 0.0
        %298 = vst [vmem:[#allocation2 + $0x10] sm:$0xff] 0.0
      $region52: #{cnn_femnist_forward.5} parent=47 // pred_fallthru
        _
      %v299 = vld [vmem:[#allocation2] sm:$0xff]
      %v300 = vld [vmem:[#allocation2 + $0x8] sm:$0xff]
      %v301 = vld [vmem:[#allocation2 + $0x10] sm:$0xff]
      %v302 = vld [vmem:[%s282] sm:$0xff]
      %v303 = vld [vmem:[%s282 + $0x8] sm:$0xff]
      %v304 = vld [vmem:[%s282 + $0x10] sm:$0xff]
      %v305 = vld [vmem:[%s282 + $0x18] sm:$0xff]
      %v306 = vld [vmem:[%s289] sm:$0xff]
      %v307 = vld [vmem:[%s289 + $0x8] sm:$0xf]
      %v308 = vld [vmem:[%s289 + $0xc] sm:$0xff]
      %v309 = vld [vmem:[%s289 + $0x14] sm:$0xf]
      %v310 = vld [vmem:[%s289 + $0x18] sm:$0xff]
      %v311 = vld [vmem:[%s289 + $0x20] sm:$0xf]
      %v312 = vld [vmem:[%s289 + $0x24] sm:$0xff]
      %v313 = vld [vmem:[%s289 + $0x2c] sm:$0xf]
      %v314 = vld [vmem:[%s289 + $0x30] sm:$0xff]
      %v315 = vld [vmem:[%s289 + $0x38] sm:$0xf]
      %v316 = vld [vmem:[%s289 + $0x3c] sm:$0xff]
      %v317 = vld [vmem:[%s289 + $0x44] sm:$0xf]
      %v318 = vld [vmem:[%s289 + $0x48] sm:$0xff]
      %v319 = vld [vmem:[%s289 + $0x50] sm:$0xf]
      %v320 = vld [vmem:[%s289 + $0x54] sm:$0xff]
      %v321 = vld [vmem:[%s289 + $0x5c] sm:$0xf]
      %v322 = vld [vmem:[%s289 + $0x60] sm:$0xff]
      %v323 = vld [vmem:[%s289 + $0x68] sm:$0xf]
      %v324 = vld [vmem:[%s289 + $0x6c] sm:$0xff]
      %v325 = vld [vmem:[%s289 + $0x74] sm:$0xf]
      %v326 = vld [vmem:[%s289 + $0x78] sm:$0xff]
      %v327 = vld [vmem:[%s289 + $0x80] sm:$0xf]
      %v328 = vld [vmem:[%s289 + $0x84] sm:$0xff]
      %v329 = vld [vmem:[%s289 + $0x8c] sm:$0xf]
      %v330 = vld [vmem:[%s289 + $0x90] sm:$0xff]
      %v331 = vld [vmem:[%s289 + $0x98] sm:$0xf]
      %v332 = vld [vmem:[%s289 + $0x9c] sm:$0xff]
      %v333 = vld [vmem:[%s289 + $0xa4] sm:$0xf]
      %v334 = vld [vmem:[%s289 + $0xa8] sm:$0xff]
      %v335 = vld [vmem:[%s289 + $0xb0] sm:$0xf]
      %v336 = vld [vmem:[%s289 + $0xb4] sm:$0xff]
      %v337 = vld [vmem:[%s289 + $0xbc] sm:$0xf]
      %v338 = vld [vmem:[%s289 + $0xc0] sm:$0xff]
      %v339 = vld [vmem:[%s289 + $0xc8] sm:$0xf]
      %v340 = vld [vmem:[%s289 + $0xcc] sm:$0xff]
      %v341 = vld [vmem:[%s289 + $0xd4] sm:$0xf]
      %v342 = vld [vmem:[%s289 + $0xd8] sm:$0xff]
      %v343 = vld [vmem:[%s289 + $0xe0] sm:$0xf]
      %v344 = vld [vmem:[%s289 + $0xe4] sm:$0xff]
      %v345 = vld [vmem:[%s289 + $0xec] sm:$0xf]
      %v346 = vld [vmem:[%s289 + $0xf0] sm:$0xff]
      %v347 = vld [vmem:[%s289 + $0xf8] sm:$0xf]
      %v348 = vld [vmem:[%s289 + $0xfc] sm:$0xff]
      %v349 = vld [vmem:[%s289 + $0x104] sm:$0xf]
      %v350 = vld [vmem:[%s289 + $0x108] sm:$0xff]
      %v351 = vld [vmem:[%s289 + $0x110] sm:$0xf]
      %v352 = vld [vmem:[%s289 + $0x114] sm:$0xff]
      %v353 = vld [vmem:[%s289 + $0x11c] sm:$0xf]
      %v354 = vld [vmem:[%s289 + $0x120] sm:$0xff]
      %v355 = vld [vmem:[%s289 + $0x128] sm:$0xf]
      %v356 = vld [vmem:[%s289 + $0x12c] sm:$0xff]
      %v357 = vld [vmem:[%s289 + $0x134] sm:$0xf]
      %v358 = vld [vmem:[%s289 + $0x138] sm:$0xff]
      %v359 = vld [vmem:[%s289 + $0x140] sm:$0xf]
      %v360 = vld [vmem:[%s289 + $0x144] sm:$0xff]
      %v361 = vld [vmem:[%s289 + $0x14c] sm:$0xf]
      %v362 = vld [vmem:[%s289 + $0x150] sm:$0xff]
      %v363 = vld [vmem:[%s289 + $0x158] sm:$0xf]
      %v364 = vld [vmem:[%s289 + $0x15c] sm:$0xff]
      %v365 = vld [vmem:[%s289 + $0x164] sm:$0xf]
      %v366 = vld [vmem:[%s289 + $0x168] sm:$0xff]
      %v367 = vld [vmem:[%s289 + $0x170] sm:$0xf]
      %v368 = vld [vmem:[%s289 + $0x174] sm:$0xff]
      %v369 = vld [vmem:[%s289 + $0x17c] sm:$0xf]
      %v370 = vld [vmem:[%s289 + $0x180] sm:$0xff]
      %v371 = vld [vmem:[%s289 + $0x188] sm:$0xf]
      %v372 = vld [vmem:[%s289 + $0x18c] sm:$0xff]
      %v373 = vld [vmem:[%s289 + $0x194] sm:$0xf]
      %v374 = vld [vmem:[%s289 + $0x198] sm:$0xff]
      %v375 = vld [vmem:[%s289 + $0x1a0] sm:$0xf]
      %v376 = vld [vmem:[%s289 + $0x1a4] sm:$0xff]
      %v377 = vld [vmem:[%s289 + $0x1ac] sm:$0xf]
      %v378 = vld [vmem:[%s289 + $0x1b0] sm:$0xff]
      %v379 = vld [vmem:[%s289 + $0x1b8] sm:$0xf]
      %v380 = vld [vmem:[%s289 + $0x1bc] sm:$0xff]
      %v381 = vld [vmem:[%s289 + $0x1c4] sm:$0xf]
      %v382 = vld [vmem:[%s289 + $0x1c8] sm:$0xff]
      %v383 = vld [vmem:[%s289 + $0x1d0] sm:$0xf]
      %v384 = vld [vmem:[%s289 + $0x1d4] sm:$0xff]
      %v385 = vld [vmem:[%s289 + $0x1dc] sm:$0xf]
      %v386 = vld [vmem:[%s289 + $0x1e0] sm:$0xff]
      %v387 = vld [vmem:[%s289 + $0x1e8] sm:$0xf]
      %v388 = vld [vmem:[%s289 + $0x1ec] sm:$0xff]
      %v389 = vld [vmem:[%s289 + $0x1f4] sm:$0xf]
      %v390 = vld [vmem:[%s289 + $0x1f8] sm:$0xff]
      %v391 = vld [vmem:[%s289 + $0x200] sm:$0xf]
      %v392 = vld [vmem:[%s289 + $0x204] sm:$0xff]
      %v393 = vld [vmem:[%s289 + $0x20c] sm:$0xf]
      %v394 = vld [vmem:[%s289 + $0x210] sm:$0xff]
      %v395 = vld [vmem:[%s289 + $0x218] sm:$0xf]
      %v396 = vld [vmem:[%s289 + $0x21c] sm:$0xff]
      %v397 = vld [vmem:[%s289 + $0x224] sm:$0xf]
      %v398 = vld [vmem:[%s289 + $0x228] sm:$0xff]
      %v399 = vld [vmem:[%s289 + $0x230] sm:$0xf]
      %v400 = vld [vmem:[%s289 + $0x234] sm:$0xff]
      %v401 = vld [vmem:[%s289 + $0x23c] sm:$0xf]
      %v402 = vld [vmem:[%s289 + $0x240] sm:$0xff]
      %v403 = vld [vmem:[%s289 + $0x248] sm:$0xf]
      %v404 = vld [vmem:[%s289 + $0x24c] sm:$0xff]
      %v405 = vld [vmem:[%s289 + $0x254] sm:$0xf]
      %v406 = vld [vmem:[%s289 + $0x258] sm:$0xff]
      %v407 = vld [vmem:[%s289 + $0x260] sm:$0xf]
      %v408 = vld [vmem:[%s289 + $0x264] sm:$0xff]
      %v409 = vld [vmem:[%s289 + $0x26c] sm:$0xf]
      %v410 = vld [vmem:[%s289 + $0x270] sm:$0xff]
      %v411 = vld [vmem:[%s289 + $0x278] sm:$0xf]
      %v412 = vld [vmem:[%s289 + $0x27c] sm:$0xff]
      %v413 = vld [vmem:[%s289 + $0x284] sm:$0xf]
      %v414 = vld [vmem:[%s289 + $0x288] sm:$0xff]
      %v415 = vld [vmem:[%s289 + $0x290] sm:$0xf]
      %v416 = vld [vmem:[%s289 + $0x294] sm:$0xff]
      %v417 = vld [vmem:[%s289 + $0x29c] sm:$0xf]
      %v418 = vld [vmem:[%s289 + $0x2a0] sm:$0xff]
      %v419 = vld [vmem:[%s289 + $0x2a8] sm:$0xf]
      %v420 = vld [vmem:[%s289 + $0x2ac] sm:$0xff]
      %v421 = vld [vmem:[%s289 + $0x2b4] sm:$0xf]
      %v422 = vld [vmem:[%s289 + $0x2b8] sm:$0xff]
      %v423 = vld [vmem:[%s289 + $0x2c0] sm:$0xf]
      %v424 = vld [vmem:[%s289 + $0x2c4] sm:$0xff]
      %v425 = vld [vmem:[%s289 + $0x2cc] sm:$0xf]
      %v426 = vld [vmem:[%s289 + $0x2d0] sm:$0xff]
      %v427 = vld [vmem:[%s289 + $0x2d8] sm:$0xf]
      %v428 = vld [vmem:[%s289 + $0x2dc] sm:$0xff]
      %v429 = vld [vmem:[%s289 + $0x2e4] sm:$0xf]
      %v430 = vld [vmem:[%s289 + $0x2e8] sm:$0xff]
      %v431 = vld [vmem:[%s289 + $0x2f0] sm:$0xf]
      %v432 = vld [vmem:[%s289 + $0x2f4] sm:$0xff]
      %v433 = vld [vmem:[%s289 + $0x2fc] sm:$0xf]
      %v434 = vld [vmem:[%s289 + $0x300] sm:$0xff]
      %v435 = vld [vmem:[%s289 + $0x308] sm:$0xf]
      %v436 = vld [vmem:[%s289 + $0x30c] sm:$0xff]
      %v437 = vld [vmem:[%s289 + $0x314] sm:$0xf]
      %v438 = vld [vmem:[%s289 + $0x318] sm:$0xff]
      %v439 = vld [vmem:[%s289 + $0x320] sm:$0xf]
      %v440 = vld [vmem:[%s289 + $0x324] sm:$0xff]
      %v441 = vld [vmem:[%s289 + $0x32c] sm:$0xf]
      %v442 = vld [vmem:[%s289 + $0x330] sm:$0xff]
      %v443 = vld [vmem:[%s289 + $0x338] sm:$0xf]
      %v444 = vld [vmem:[%s289 + $0x33c] sm:$0xff]
      %v445 = vld [vmem:[%s289 + $0x344] sm:$0xf]
      %v446 = vld [vmem:[%s289 + $0x348] sm:$0xff]
      %v447 = vld [vmem:[%s289 + $0x350] sm:$0xf]
      %v448 = vld [vmem:[%s289 + $0x354] sm:$0xff]
      %v449 = vld [vmem:[%s289 + $0x35c] sm:$0xf]
      %v450 = vld [vmem:[%s289 + $0x360] sm:$0xff]
      %v451 = vld [vmem:[%s289 + $0x368] sm:$0xf]
      %v452 = vld [vmem:[%s289 + $0x36c] sm:$0xff]
      %v453 = vld [vmem:[%s289 + $0x374] sm:$0xf]
      %v454 = vld [vmem:[%s289 + $0x378] sm:$0xff]
      %v455 = vld [vmem:[%s289 + $0x380] sm:$0xf]
      %v456 = vld [vmem:[%s289 + $0x384] sm:$0xff]
      %v457 = vld [vmem:[%s289 + $0x38c] sm:$0xf]
      %v458 = vld [vmem:[%s289 + $0x390] sm:$0xff]
      %v459 = vld [vmem:[%s289 + $0x398] sm:$0xf]
      %v460 = vld [vmem:[%s289 + $0x39c] sm:$0xff]
      %v461 = vld [vmem:[%s289 + $0x3a4] sm:$0xf]
      %v462 = vld [vmem:[%s289 + $0x3a8] sm:$0xff]
      %v463 = vld [vmem:[%s289 + $0x3b0] sm:$0xf]
      %v464 = vld [vmem:[%s289 + $0x3b4] sm:$0xff]
      %v465 = vld [vmem:[%s289 + $0x3bc] sm:$0xf]
      %v466 = vld [vmem:[%s289 + $0x3c0] sm:$0xff]
      %v467 = vld [vmem:[%s289 + $0x3c8] sm:$0xf]
      %v468 = vld [vmem:[%s289 + $0x3cc] sm:$0xff]
      %v469 = vld [vmem:[%s289 + $0x3d4] sm:$0xf]
      %v470 = vld [vmem:[%s289 + $0x3d8] sm:$0xff]
      %v471 = vld [vmem:[%s289 + $0x3e0] sm:$0xf]
      %v472 = vld [vmem:[%s289 + $0x3e4] sm:$0xff]
      %v473 = vld [vmem:[%s289 + $0x3ec] sm:$0xf]
      %v474 = vld [vmem:[%s289 + $0x3f0] sm:$0xff]
      %v475 = vld [vmem:[%s289 + $0x3f8] sm:$0xf]
      %v476 = vld [vmem:[%s289 + $0x3fc] sm:$0xff]
      %v477 = vld [vmem:[%s289 + $0x404] sm:$0xf]
      %v478 = vld [vmem:[%s289 + $0x408] sm:$0xff]
      %v479 = vld [vmem:[%s289 + $0x410] sm:$0xf]
      %v480 = vld [vmem:[%s289 + $0x414] sm:$0xff]
      %v481 = vld [vmem:[%s289 + $0x41c] sm:$0xf]
      %v482 = vld [vmem:[%s289 + $0x420] sm:$0xff]
      %v483 = vld [vmem:[%s289 + $0x428] sm:$0xf]
      %v484 = vld [vmem:[%s289 + $0x42c] sm:$0xff]
      %v485 = vld [vmem:[%s289 + $0x434] sm:$0xf]
      %v486 = vld [vmem:[%s289 + $0x438] sm:$0xff]
      %v487 = vld [vmem:[%s289 + $0x440] sm:$0xf]
      %v488 = vld [vmem:[%s289 + $0x444] sm:$0xff]
      %v489 = vld [vmem:[%s289 + $0x44c] sm:$0xf]
      %v490 = vld [vmem:[%s289 + $0x450] sm:$0xff]
      %v491 = vld [vmem:[%s289 + $0x458] sm:$0xf]
      %v492 = vld [vmem:[%s289 + $0x45c] sm:$0xff]
      %v493 = vld [vmem:[%s289 + $0x464] sm:$0xf]
      %v494 = vld [vmem:[%s289 + $0x468] sm:$0xff]
      %v495 = vld [vmem:[%s289 + $0x470] sm:$0xf]
      %v496 = vld [vmem:[%s289 + $0x474] sm:$0xff]
      %v497 = vld [vmem:[%s289 + $0x47c] sm:$0xf]
      %v498 = vld [vmem:[%s289 + $0x480] sm:$0xff]
      %v499 = vld [vmem:[%s289 + $0x488] sm:$0xf]
      %v500 = vld [vmem:[%s289 + $0x48c] sm:$0xff]
      %v501 = vld [vmem:[%s289 + $0x494] sm:$0xf]
      %v502 = vld [vmem:[%s289 + $0x498] sm:$0xff]
      %v503 = vld [vmem:[%s289 + $0x4a0] sm:$0xf]
      %v504 = vld [vmem:[%s289 + $0x4a4] sm:$0xff]
      %v505 = vld [vmem:[%s289 + $0x4ac] sm:$0xf]
      %v506 = vld [vmem:[%s289 + $0x4b0] sm:$0xff]
      %v507 = vld [vmem:[%s289 + $0x4b8] sm:$0xf]
      %v508 = vld [vmem:[%s289 + $0x4bc] sm:$0xff]
      %v509 = vld [vmem:[%s289 + $0x4c4] sm:$0xf]
      %v510 = vld [vmem:[%s289 + $0x4c8] sm:$0xff]
      %v511 = vld [vmem:[%s289 + $0x4d0] sm:$0xf]
      %v512 = vld [vmem:[%s289 + $0x4d4] sm:$0xff]
      %v513 = vld [vmem:[%s289 + $0x4dc] sm:$0xf]
      %v514 = vld [vmem:[%s289 + $0x4e0] sm:$0xff]
      %v515 = vld [vmem:[%s289 + $0x4e8] sm:$0xf]
      %v516 = vld [vmem:[%s289 + $0x4ec] sm:$0xff]
      %v517 = vld [vmem:[%s289 + $0x4f4] sm:$0xf]
      %v518 = vld [vmem:[%s289 + $0x4f8] sm:$0xff]
      %v519 = vld [vmem:[%s289 + $0x500] sm:$0xf]
      %v520 = vld [vmem:[%s289 + $0x504] sm:$0xff]
      %v521 = vld [vmem:[%s289 + $0x50c] sm:$0xf]
      %v522 = vld [vmem:[%s289 + $0x510] sm:$0xff]
      %v523 = vld [vmem:[%s289 + $0x518] sm:$0xf]
      %v524 = vld [vmem:[%s289 + $0x51c] sm:$0xff]
      %v525 = vld [vmem:[%s289 + $0x524] sm:$0xf]
      %v526 = vld [vmem:[%s289 + $0x528] sm:$0xff]
      %v527 = vld [vmem:[%s289 + $0x530] sm:$0xf]
      %v528 = vld [vmem:[%s289 + $0x534] sm:$0xff]
      %v529 = vld [vmem:[%s289 + $0x53c] sm:$0xf]
      %v530 = vld [vmem:[%s289 + $0x540] sm:$0xff]
      %v531 = vld [vmem:[%s289 + $0x548] sm:$0xf]
      %v532 = vld [vmem:[%s289 + $0x54c] sm:$0xff]
      %v533 = vld [vmem:[%s289 + $0x554] sm:$0xf]
      %v534 = vld [vmem:[%s289 + $0x558] sm:$0xff]
      %v535 = vld [vmem:[%s289 + $0x560] sm:$0xf]
      %v536 = vld [vmem:[%s289 + $0x564] sm:$0xff]
      %v537 = vld [vmem:[%s289 + $0x56c] sm:$0xf]
      %v538 = vld [vmem:[%s289 + $0x570] sm:$0xff]
      %v539 = vld [vmem:[%s289 + $0x578] sm:$0xf]
      %v540 = vld [vmem:[%s289 + $0x57c] sm:$0xff]
      %v541 = vld [vmem:[%s289 + $0x584] sm:$0xf]
      %v542 = vld [vmem:[%s289 + $0x588] sm:$0xff]
      %v543 = vld [vmem:[%s289 + $0x590] sm:$0xf]
      %v544 = vld [vmem:[%s289 + $0x594] sm:$0xff]
      %v545 = vld [vmem:[%s289 + $0x59c] sm:$0xf]
      %v546 = vld [vmem:[%s289 + $0x5a0] sm:$0xff]
      %v547 = vld [vmem:[%s289 + $0x5a8] sm:$0xf]
      %v548 = vld [vmem:[%s289 + $0x5ac] sm:$0xff]
      %v549 = vld [vmem:[%s289 + $0x5b4] sm:$0xf]
      %v550 = vld [vmem:[%s289 + $0x5b8] sm:$0xff]
      %v551 = vld [vmem:[%s289 + $0x5c0] sm:$0xf]
      %v552 = vld [vmem:[%s289 + $0x5c4] sm:$0xff]
      %v553 = vld [vmem:[%s289 + $0x5cc] sm:$0xf]
      %v554 = vld [vmem:[%s289 + $0x5d0] sm:$0xff]
      %v555 = vld [vmem:[%s289 + $0x5d8] sm:$0xf]
      %v556 = vld [vmem:[%s289 + $0x5dc] sm:$0xff]
      %v557 = vld [vmem:[%s289 + $0x5e4] sm:$0xf]
      %v558 = vld [vmem:[%s289 + $0x5e8] sm:$0xff]
      %v559 = vld [vmem:[%s289 + $0x5f0] sm:$0xf]
      %v560 = vld [vmem:[%s289 + $0x5f4] sm:$0xff]
      %v561 = vld [vmem:[%s289 + $0x5fc] sm:$0xf]
      %v566 = vunpack.c.l.b16 %v302
      %v567 = vunpack.c.h.b16 %v302
      %v568 = vunpack.c.l.b16 %v303
      %v569 = vunpack.c.h.b16 %v303
      %v570 = vunpack.c.l.b16 %v304
      %v571 = vunpack.c.h.b16 %v304
      %v572 = vunpack.c.l.b16 %v305
      %v573 = vunpack.c.h.b16 %v305
      %v574 = vpack.c.b16 %v566, %v566
      %v575 = vpack.c.b16 %v567, %v567
      %v576 = vpack.c.b16 %v568, %v568
      %v577 = vpack.c.b16 %v569, %v569
      %v578 = vpack.c.b16 %v570, %v570
      %v579 = vpack.c.b16 %v571, %v571
      %v580 = vpack.c.b16 %v572, %v572
      %v581 = vpack.c.b16 %v573, %v573
      %v846 = vunpack.c.l.b16 %v306
      %v847 = vunpack.c.h.b16 %v306
      %v848 = vunpack.c.l.b16 %v307
      %v849 = vunpack.c.l.b16 %v308
      %v850 = vunpack.c.h.b16 %v308
      %v851 = vunpack.c.l.b16 %v309
      %v852 = vunpack.c.l.b16 %v310
      %v853 = vunpack.c.h.b16 %v310
      %v854 = vunpack.c.l.b16 %v311
      %v855 = vunpack.c.l.b16 %v312
      %v856 = vunpack.c.h.b16 %v312
      %v857 = vunpack.c.l.b16 %v313
      %v858 = vunpack.c.l.b16 %v314
      %v859 = vunpack.c.h.b16 %v314
      %v860 = vunpack.c.l.b16 %v315
      %v861 = vunpack.c.l.b16 %v316
      %v862 = vunpack.c.h.b16 %v316
      %v863 = vunpack.c.l.b16 %v317
      %v864 = vunpack.c.l.b16 %v318
      %v865 = vunpack.c.h.b16 %v318
      %v866 = vunpack.c.l.b16 %v319
      %v867 = vunpack.c.l.b16 %v320
      %v868 = vunpack.c.h.b16 %v320
      %v869 = vunpack.c.l.b16 %v321
      %v870 = vunpack.c.l.b16 %v322
      %v871 = vunpack.c.h.b16 %v322
      %v872 = vunpack.c.l.b16 %v323
      %v873 = vunpack.c.l.b16 %v324
      %v874 = vunpack.c.h.b16 %v324
      %v875 = vunpack.c.l.b16 %v325
      %v876 = vunpack.c.l.b16 %v326
      %v877 = vunpack.c.h.b16 %v326
      %v878 = vunpack.c.l.b16 %v327
      %v879 = vunpack.c.l.b16 %v328
      %v880 = vunpack.c.h.b16 %v328
      %v881 = vunpack.c.l.b16 %v329
      %v882 = vunpack.c.l.b16 %v330
      %v883 = vunpack.c.h.b16 %v330
      %v884 = vunpack.c.l.b16 %v331
      %v885 = vunpack.c.l.b16 %v332
      %v886 = vunpack.c.h.b16 %v332
      %v887 = vunpack.c.l.b16 %v333
      %v888 = vunpack.c.l.b16 %v334
      %v889 = vunpack.c.h.b16 %v334
      %v890 = vunpack.c.l.b16 %v335
      %v891 = vunpack.c.l.b16 %v336
      %v892 = vunpack.c.h.b16 %v336
      %v893 = vunpack.c.l.b16 %v337
      %v894 = vunpack.c.l.b16 %v338
      %v895 = vunpack.c.h.b16 %v338
      %v896 = vunpack.c.l.b16 %v339
      %v897 = vunpack.c.l.b16 %v340
      %v898 = vunpack.c.h.b16 %v340
      %v899 = vunpack.c.l.b16 %v341
      %v900 = vunpack.c.l.b16 %v342
      %v901 = vunpack.c.h.b16 %v342
      %v902 = vunpack.c.l.b16 %v343
      %v903 = vunpack.c.l.b16 %v344
      %v904 = vunpack.c.h.b16 %v344
      %v905 = vunpack.c.l.b16 %v345
      %v906 = vunpack.c.l.b16 %v346
      %v907 = vunpack.c.h.b16 %v346
      %v908 = vunpack.c.l.b16 %v347
      %v909 = vunpack.c.l.b16 %v348
      %v910 = vunpack.c.h.b16 %v348
      %v911 = vunpack.c.l.b16 %v349
      %v912 = vunpack.c.l.b16 %v350
      %v913 = vunpack.c.h.b16 %v350
      %v914 = vunpack.c.l.b16 %v351
      %v915 = vunpack.c.l.b16 %v352
      %v916 = vunpack.c.h.b16 %v352
      %v917 = vunpack.c.l.b16 %v353
      %v918 = vunpack.c.l.b16 %v354
      %v919 = vunpack.c.h.b16 %v354
      %v920 = vunpack.c.l.b16 %v355
      %v921 = vunpack.c.l.b16 %v356
      %v922 = vunpack.c.h.b16 %v356
      %v923 = vunpack.c.l.b16 %v357
      %v924 = vunpack.c.l.b16 %v358
      %v925 = vunpack.c.h.b16 %v358
      %v926 = vunpack.c.l.b16 %v359
      %v927 = vunpack.c.l.b16 %v360
      %v928 = vunpack.c.h.b16 %v360
      %v929 = vunpack.c.l.b16 %v361
      %v930 = vunpack.c.l.b16 %v362
      %v931 = vunpack.c.h.b16 %v362
      %v932 = vunpack.c.l.b16 %v363
      %v933 = vunpack.c.l.b16 %v364
      %v934 = vunpack.c.h.b16 %v364
      %v935 = vunpack.c.l.b16 %v365
      %v936 = vunpack.c.l.b16 %v366
      %v937 = vunpack.c.h.b16 %v366
      %v938 = vunpack.c.l.b16 %v367
      %v939 = vunpack.c.l.b16 %v368
      %v940 = vunpack.c.h.b16 %v368
      %v941 = vunpack.c.l.b16 %v369
      %v942 = vunpack.c.l.b16 %v370
      %v943 = vunpack.c.h.b16 %v370
      %v944 = vunpack.c.l.b16 %v371
      %v945 = vunpack.c.l.b16 %v372
      %v946 = vunpack.c.h.b16 %v372
      %v947 = vunpack.c.l.b16 %v373
      %v948 = vunpack.c.l.b16 %v374
      %v949 = vunpack.c.h.b16 %v374
      %v950 = vunpack.c.l.b16 %v375
      %v951 = vunpack.c.l.b16 %v376
      %v952 = vunpack.c.h.b16 %v376
      %v953 = vunpack.c.l.b16 %v377
      %v954 = vunpack.c.l.b16 %v378
      %v955 = vunpack.c.h.b16 %v378
      %v956 = vunpack.c.l.b16 %v379
      %v957 = vunpack.c.l.b16 %v380
      %v958 = vunpack.c.h.b16 %v380
      %v959 = vunpack.c.l.b16 %v381
      %v960 = vunpack.c.l.b16 %v382
      %v961 = vunpack.c.h.b16 %v382
      %v962 = vunpack.c.l.b16 %v383
      %v963 = vunpack.c.l.b16 %v384
      %v964 = vunpack.c.h.b16 %v384
      %v965 = vunpack.c.l.b16 %v385
      %v966 = vunpack.c.l.b16 %v386
      %v967 = vunpack.c.h.b16 %v386
      %v968 = vunpack.c.l.b16 %v387
      %v969 = vunpack.c.l.b16 %v388
      %v970 = vunpack.c.h.b16 %v388
      %v971 = vunpack.c.l.b16 %v389
      %v972 = vunpack.c.l.b16 %v390
      %v973 = vunpack.c.h.b16 %v390
      %v974 = vunpack.c.l.b16 %v391
      %v975 = vunpack.c.l.b16 %v392
      %v976 = vunpack.c.h.b16 %v392
      %v977 = vunpack.c.l.b16 %v393
      %v978 = vunpack.c.l.b16 %v394
      %v979 = vunpack.c.h.b16 %v394
      %v980 = vunpack.c.l.b16 %v395
      %v981 = vunpack.c.l.b16 %v396
      %v982 = vunpack.c.h.b16 %v396
      %v983 = vunpack.c.l.b16 %v397
      %v984 = vunpack.c.l.b16 %v398
      %v985 = vunpack.c.h.b16 %v398
      %v986 = vunpack.c.l.b16 %v399
      %v987 = vunpack.c.l.b16 %v400
      %v988 = vunpack.c.h.b16 %v400
      %v989 = vunpack.c.l.b16 %v401
      %v990 = vunpack.c.l.b16 %v402
      %v991 = vunpack.c.h.b16 %v402
      %v992 = vunpack.c.l.b16 %v403
      %v993 = vunpack.c.l.b16 %v404
      %v994 = vunpack.c.h.b16 %v404
      %v995 = vunpack.c.l.b16 %v405
      %v996 = vunpack.c.l.b16 %v406
      %v997 = vunpack.c.h.b16 %v406
      %v998 = vunpack.c.l.b16 %v407
      %v999 = vunpack.c.l.b16 %v408
      %v1000 = vunpack.c.h.b16 %v408
      %v1001 = vunpack.c.l.b16 %v409
      %v1002 = vunpack.c.l.b16 %v410
      %v1003 = vunpack.c.h.b16 %v410
      %v1004 = vunpack.c.l.b16 %v411
      %v1005 = vunpack.c.l.b16 %v412
      %v1006 = vunpack.c.h.b16 %v412
      %v1007 = vunpack.c.l.b16 %v413
      %v1008 = vunpack.c.l.b16 %v414
      %v1009 = vunpack.c.h.b16 %v414
      %v1010 = vunpack.c.l.b16 %v415
      %v1011 = vunpack.c.l.b16 %v416
      %v1012 = vunpack.c.h.b16 %v416
      %v1013 = vunpack.c.l.b16 %v417
      %v1014 = vunpack.c.l.b16 %v418
      %v1015 = vunpack.c.h.b16 %v418
      %v1016 = vunpack.c.l.b16 %v419
      %v1017 = vunpack.c.l.b16 %v420
      %v1018 = vunpack.c.h.b16 %v420
      %v1019 = vunpack.c.l.b16 %v421
      %v1020 = vunpack.c.l.b16 %v422
      %v1021 = vunpack.c.h.b16 %v422
      %v1022 = vunpack.c.l.b16 %v423
      %v1023 = vunpack.c.l.b16 %v424
      %v1024 = vunpack.c.h.b16 %v424
      %v1025 = vunpack.c.l.b16 %v425
      %v1026 = vunpack.c.l.b16 %v426
      %v1027 = vunpack.c.h.b16 %v426
      %v1028 = vunpack.c.l.b16 %v427
      %v1029 = vunpack.c.l.b16 %v428
      %v1030 = vunpack.c.h.b16 %v428
      %v1031 = vunpack.c.l.b16 %v429
      %v1032 = vunpack.c.l.b16 %v430
      %v1033 = vunpack.c.h.b16 %v430
      %v1034 = vunpack.c.l.b16 %v431
      %v1035 = vunpack.c.l.b16 %v432
      %v1036 = vunpack.c.h.b16 %v432
      %v1037 = vunpack.c.l.b16 %v433
      %v1038 = vunpack.c.l.b16 %v434
      %v1039 = vunpack.c.h.b16 %v434
      %v1040 = vunpack.c.l.b16 %v435
      %v1041 = vunpack.c.l.b16 %v436
      %v1042 = vunpack.c.h.b16 %v436
      %v1043 = vunpack.c.l.b16 %v437
      %v1044 = vunpack.c.l.b16 %v438
      %v1045 = vunpack.c.h.b16 %v438
      %v1046 = vunpack.c.l.b16 %v439
      %v1047 = vunpack.c.l.b16 %v440
      %v1048 = vunpack.c.h.b16 %v440
      %v1049 = vunpack.c.l.b16 %v441
      %v1050 = vunpack.c.l.b16 %v442
      %v1051 = vunpack.c.h.b16 %v442
      %v1052 = vunpack.c.l.b16 %v443
      %v1053 = vunpack.c.l.b16 %v444
      %v1054 = vunpack.c.h.b16 %v444
      %v1055 = vunpack.c.l.b16 %v445
      %v1056 = vunpack.c.l.b16 %v446
      %v1057 = vunpack.c.h.b16 %v446
      %v1058 = vunpack.c.l.b16 %v447
      %v1059 = vunpack.c.l.b16 %v448
      %v1060 = vunpack.c.h.b16 %v448
      %v1061 = vunpack.c.l.b16 %v449
      %v1062 = vunpack.c.l.b16 %v450
      %v1063 = vunpack.c.h.b16 %v450
      %v1064 = vunpack.c.l.b16 %v451
      %v1065 = vunpack.c.l.b16 %v452
      %v1066 = vunpack.c.h.b16 %v452
      %v1067 = vunpack.c.l.b16 %v453
      %v1068 = vunpack.c.l.b16 %v454
      %v1069 = vunpack.c.h.b16 %v454
      %v1070 = vunpack.c.l.b16 %v455
      %v1071 = vunpack.c.l.b16 %v456
      %v1072 = vunpack.c.h.b16 %v456
      %v1073 = vunpack.c.l.b16 %v457
      %v1074 = vunpack.c.l.b16 %v458
      %v1075 = vunpack.c.h.b16 %v458
      %v1076 = vunpack.c.l.b16 %v459
      %v1077 = vunpack.c.l.b16 %v460
      %v1078 = vunpack.c.h.b16 %v460
      %v1079 = vunpack.c.l.b16 %v461
      %v1080 = vunpack.c.l.b16 %v462
      %v1081 = vunpack.c.h.b16 %v462
      %v1082 = vunpack.c.l.b16 %v463
      %v1083 = vunpack.c.l.b16 %v464
      %v1084 = vunpack.c.h.b16 %v464
      %v1085 = vunpack.c.l.b16 %v465
      %v1086 = vunpack.c.l.b16 %v466
      %v1087 = vunpack.c.h.b16 %v466
      %v1088 = vunpack.c.l.b16 %v467
      %v1089 = vunpack.c.l.b16 %v468
      %v1090 = vunpack.c.h.b16 %v468
      %v1091 = vunpack.c.l.b16 %v469
      %v1092 = vunpack.c.l.b16 %v470
      %v1093 = vunpack.c.h.b16 %v470
      %v1094 = vunpack.c.l.b16 %v471
      %v1095 = vunpack.c.l.b16 %v472
      %v1096 = vunpack.c.h.b16 %v472
      %v1097 = vunpack.c.l.b16 %v473
      %v1098 = vunpack.c.l.b16 %v474
      %v1099 = vunpack.c.h.b16 %v474
      %v1100 = vunpack.c.l.b16 %v475
      %v1101 = vunpack.c.l.b16 %v476
      %v1102 = vunpack.c.h.b16 %v476
      %v1103 = vunpack.c.l.b16 %v477
      %v1104 = vunpack.c.l.b16 %v478
      %v1105 = vunpack.c.h.b16 %v478
      %v1106 = vunpack.c.l.b16 %v479
      %v1107 = vunpack.c.l.b16 %v480
      %v1108 = vunpack.c.h.b16 %v480
      %v1109 = vunpack.c.l.b16 %v481
      %v1110 = vunpack.c.l.b16 %v482
      %v1111 = vunpack.c.h.b16 %v482
      %v1112 = vunpack.c.l.b16 %v483
      %v1113 = vunpack.c.l.b16 %v484
      %v1114 = vunpack.c.h.b16 %v484
      %v1115 = vunpack.c.l.b16 %v485
      %v1116 = vunpack.c.l.b16 %v486
      %v1117 = vunpack.c.h.b16 %v486
      %v1118 = vunpack.c.l.b16 %v487
      %v1119 = vunpack.c.l.b16 %v488
      %v1120 = vunpack.c.h.b16 %v488
      %v1121 = vunpack.c.l.b16 %v489
      %v1122 = vunpack.c.l.b16 %v490
      %v1123 = vunpack.c.h.b16 %v490
      %v1124 = vunpack.c.l.b16 %v491
      %v1125 = vunpack.c.l.b16 %v492
      %v1126 = vunpack.c.h.b16 %v492
      %v1127 = vunpack.c.l.b16 %v493
      %v1128 = vunpack.c.l.b16 %v494
      %v1129 = vunpack.c.h.b16 %v494
      %v1130 = vunpack.c.l.b16 %v495
      %v1131 = vunpack.c.l.b16 %v496
      %v1132 = vunpack.c.h.b16 %v496
      %v1133 = vunpack.c.l.b16 %v497
      %v1134 = vunpack.c.l.b16 %v498
      %v1135 = vunpack.c.h.b16 %v498
      %v1136 = vunpack.c.l.b16 %v499
      %v1137 = vunpack.c.l.b16 %v500
      %v1138 = vunpack.c.h.b16 %v500
      %v1139 = vunpack.c.l.b16 %v501
      %v1140 = vunpack.c.l.b16 %v502
      %v1141 = vunpack.c.h.b16 %v502
      %v1142 = vunpack.c.l.b16 %v503
      %v1143 = vunpack.c.l.b16 %v504
      %v1144 = vunpack.c.h.b16 %v504
      %v1145 = vunpack.c.l.b16 %v505
      %v1146 = vunpack.c.l.b16 %v506
      %v1147 = vunpack.c.h.b16 %v506
      %v1148 = vunpack.c.l.b16 %v507
      %v1149 = vunpack.c.l.b16 %v508
      %v1150 = vunpack.c.h.b16 %v508
      %v1151 = vunpack.c.l.b16 %v509
      %v1152 = vunpack.c.l.b16 %v510
      %v1153 = vunpack.c.h.b16 %v510
      %v1154 = vunpack.c.l.b16 %v511
      %v1155 = vunpack.c.l.b16 %v512
      %v1156 = vunpack.c.h.b16 %v512
      %v1157 = vunpack.c.l.b16 %v513
      %v1158 = vunpack.c.l.b16 %v514
      %v1159 = vunpack.c.h.b16 %v514
      %v1160 = vunpack.c.l.b16 %v515
      %v1161 = vunpack.c.l.b16 %v516
      %v1162 = vunpack.c.h.b16 %v516
      %v1163 = vunpack.c.l.b16 %v517
      %v1164 = vunpack.c.l.b16 %v518
      %v1165 = vunpack.c.h.b16 %v518
      %v1166 = vunpack.c.l.b16 %v519
      %v1167 = vunpack.c.l.b16 %v520
      %v1168 = vunpack.c.h.b16 %v520
      %v1169 = vunpack.c.l.b16 %v521
      %v1170 = vunpack.c.l.b16 %v522
      %v1171 = vunpack.c.h.b16 %v522
      %v1172 = vunpack.c.l.b16 %v523
      %v1173 = vunpack.c.l.b16 %v524
      %v1174 = vunpack.c.h.b16 %v524
      %v1175 = vunpack.c.l.b16 %v525
      %v1176 = vunpack.c.l.b16 %v526
      %v1177 = vunpack.c.h.b16 %v526
      %v1178 = vunpack.c.l.b16 %v527
      %v1179 = vunpack.c.l.b16 %v528
      %v1180 = vunpack.c.h.b16 %v528
      %v1181 = vunpack.c.l.b16 %v529
      %v1182 = vunpack.c.l.b16 %v530
      %v1183 = vunpack.c.h.b16 %v530
      %v1184 = vunpack.c.l.b16 %v531
      %v1185 = vunpack.c.l.b16 %v532
      %v1186 = vunpack.c.h.b16 %v532
      %v1187 = vunpack.c.l.b16 %v533
      %v1188 = vunpack.c.l.b16 %v534
      %v1189 = vunpack.c.h.b16 %v534
      %v1190 = vunpack.c.l.b16 %v535
      %v1191 = vunpack.c.l.b16 %v536
      %v1192 = vunpack.c.h.b16 %v536
      %v1193 = vunpack.c.l.b16 %v537
      %v1194 = vunpack.c.l.b16 %v538
      %v1195 = vunpack.c.h.b16 %v538
      %v1196 = vunpack.c.l.b16 %v539
      %v1197 = vunpack.c.l.b16 %v540
      %v1198 = vunpack.c.h.b16 %v540
      %v1199 = vunpack.c.l.b16 %v541
      %v1200 = vunpack.c.l.b16 %v542
      %v1201 = vunpack.c.h.b16 %v542
      %v1202 = vunpack.c.l.b16 %v543
      %v1203 = vunpack.c.l.b16 %v544
      %v1204 = vunpack.c.h.b16 %v544
      %v1205 = vunpack.c.l.b16 %v545
      %v1206 = vunpack.c.l.b16 %v546
      %v1207 = vunpack.c.h.b16 %v546
      %v1208 = vunpack.c.l.b16 %v547
      %v1209 = vunpack.c.l.b16 %v548
      %v1210 = vunpack.c.h.b16 %v548
      %v1211 = vunpack.c.l.b16 %v549
      %v1212 = vunpack.c.l.b16 %v550
      %v1213 = vunpack.c.h.b16 %v550
      %v1214 = vunpack.c.l.b16 %v551
      %v1215 = vunpack.c.l.b16 %v552
      %v1216 = vunpack.c.h.b16 %v552
      %v1217 = vunpack.c.l.b16 %v553
      %v1218 = vunpack.c.l.b16 %v554
      %v1219 = vunpack.c.h.b16 %v554
      %v1220 = vunpack.c.l.b16 %v555
      %v1221 = vunpack.c.l.b16 %v556
      %v1222 = vunpack.c.h.b16 %v556
      %v1223 = vunpack.c.l.b16 %v557
      %v1224 = vunpack.c.l.b16 %v558
      %v1225 = vunpack.c.h.b16 %v558
      %v1226 = vunpack.c.l.b16 %v559
      %v1227 = vunpack.c.l.b16 %v560
      %v1228 = vunpack.c.h.b16 %v560
      %v1229 = vunpack.c.l.b16 %v561
      %v1230 = vpack.c.b16 %v849, %v846
      %v1231 = vpack.c.b16 %v850, %v847
      %v1232 = vpack.c.b16 %v851, %v848
      %v1233 = vpack.c.b16 %v855, %v852
      %v1234 = vpack.c.b16 %v856, %v853
      %v1235 = vpack.c.b16 %v857, %v854
      %v1236 = vpack.c.b16 %v861, %v858
      %v1237 = vpack.c.b16 %v862, %v859
      %v1238 = vpack.c.b16 %v863, %v860
      %v1239 = vpack.c.b16 %v867, %v864
      %v1240 = vpack.c.b16 %v868, %v865
      %v1241 = vpack.c.b16 %v869, %v866
      %v1242 = vpack.c.b16 %v873, %v870
      %v1243 = vpack.c.b16 %v874, %v871
      %v1244 = vpack.c.b16 %v875, %v872
      %v1245 = vpack.c.b16 %v879, %v876
      %v1246 = vpack.c.b16 %v880, %v877
      %v1247 = vpack.c.b16 %v881, %v878
      %v1248 = vpack.c.b16 %v885, %v882
      %v1249 = vpack.c.b16 %v886, %v883
      %v1250 = vpack.c.b16 %v887, %v884
      %v1251 = vpack.c.b16 %v891, %v888
      %v1252 = vpack.c.b16 %v892, %v889
      %v1253 = vpack.c.b16 %v893, %v890
      %v1254 = vpack.c.b16 %v897, %v894
      %v1255 = vpack.c.b16 %v898, %v895
      %v1256 = vpack.c.b16 %v899, %v896
      %v1257 = vpack.c.b16 %v903, %v900
      %v1258 = vpack.c.b16 %v904, %v901
      %v1259 = vpack.c.b16 %v905, %v902
      %v1260 = vpack.c.b16 %v909, %v906
      %v1261 = vpack.c.b16 %v910, %v907
      %v1262 = vpack.c.b16 %v911, %v908
      %v1263 = vpack.c.b16 %v915, %v912
      %v1264 = vpack.c.b16 %v916, %v913
      %v1265 = vpack.c.b16 %v917, %v914
      %v1266 = vpack.c.b16 %v921, %v918
      %v1267 = vpack.c.b16 %v922, %v919
      %v1268 = vpack.c.b16 %v923, %v920
      %v1269 = vpack.c.b16 %v927, %v924
      %v1270 = vpack.c.b16 %v928, %v925
      %v1271 = vpack.c.b16 %v929, %v926
      %v1272 = vpack.c.b16 %v933, %v930
      %v1273 = vpack.c.b16 %v934, %v931
      %v1274 = vpack.c.b16 %v935, %v932
      %v1275 = vpack.c.b16 %v939, %v936
      %v1276 = vpack.c.b16 %v940, %v937
      %v1277 = vpack.c.b16 %v941, %v938
      %v1278 = vpack.c.b16 %v945, %v942
      %v1279 = vpack.c.b16 %v946, %v943
      %v1280 = vpack.c.b16 %v947, %v944
      %v1281 = vpack.c.b16 %v951, %v948
      %v1282 = vpack.c.b16 %v952, %v949
      %v1283 = vpack.c.b16 %v953, %v950
      %v1284 = vpack.c.b16 %v957, %v954
      %v1285 = vpack.c.b16 %v958, %v955
      %v1286 = vpack.c.b16 %v959, %v956
      %v1287 = vpack.c.b16 %v963, %v960
      %v1288 = vpack.c.b16 %v964, %v961
      %v1289 = vpack.c.b16 %v965, %v962
      %v1290 = vpack.c.b16 %v969, %v966
      %v1291 = vpack.c.b16 %v970, %v967
      %v1292 = vpack.c.b16 %v971, %v968
      %v1293 = vpack.c.b16 %v975, %v972
      %v1294 = vpack.c.b16 %v976, %v973
      %v1295 = vpack.c.b16 %v977, %v974
      %v1296 = vpack.c.b16 %v981, %v978
      %v1297 = vpack.c.b16 %v982, %v979
      %v1298 = vpack.c.b16 %v983, %v980
      %v1299 = vpack.c.b16 %v987, %v984
      %v1300 = vpack.c.b16 %v988, %v985
      %v1301 = vpack.c.b16 %v989, %v986
      %v1302 = vpack.c.b16 %v993, %v990
      %v1303 = vpack.c.b16 %v994, %v991
      %v1304 = vpack.c.b16 %v995, %v992
      %v1305 = vpack.c.b16 %v999, %v996
      %v1306 = vpack.c.b16 %v1000, %v997
      %v1307 = vpack.c.b16 %v1001, %v998
      %v1308 = vpack.c.b16 %v1005, %v1002
      %v1309 = vpack.c.b16 %v1006, %v1003
      %v1310 = vpack.c.b16 %v1007, %v1004
      %v1311 = vpack.c.b16 %v1011, %v1008
      %v1312 = vpack.c.b16 %v1012, %v1009
      %v1313 = vpack.c.b16 %v1013, %v1010
      %v1314 = vpack.c.b16 %v1017, %v1014
      %v1315 = vpack.c.b16 %v1018, %v1015
      %v1316 = vpack.c.b16 %v1019, %v1016
      %v1317 = vpack.c.b16 %v1023, %v1020
      %v1318 = vpack.c.b16 %v1024, %v1021
      %v1319 = vpack.c.b16 %v1025, %v1022
      %v1320 = vpack.c.b16 %v1029, %v1026
      %v1321 = vpack.c.b16 %v1030, %v1027
      %v1322 = vpack.c.b16 %v1031, %v1028
      %v1323 = vpack.c.b16 %v1035, %v1032
      %v1324 = vpack.c.b16 %v1036, %v1033
      %v1325 = vpack.c.b16 %v1037, %v1034
      %v1326 = vpack.c.b16 %v1041, %v1038
      %v1327 = vpack.c.b16 %v1042, %v1039
      %v1328 = vpack.c.b16 %v1043, %v1040
      %v1329 = vpack.c.b16 %v1047, %v1044
      %v1330 = vpack.c.b16 %v1048, %v1045
      %v1331 = vpack.c.b16 %v1049, %v1046
      %v1332 = vpack.c.b16 %v1053, %v1050
      %v1333 = vpack.c.b16 %v1054, %v1051
      %v1334 = vpack.c.b16 %v1055, %v1052
      %v1335 = vpack.c.b16 %v1059, %v1056
      %v1336 = vpack.c.b16 %v1060, %v1057
      %v1337 = vpack.c.b16 %v1061, %v1058
      %v1338 = vpack.c.b16 %v1065, %v1062
      %v1339 = vpack.c.b16 %v1066, %v1063
      %v1340 = vpack.c.b16 %v1067, %v1064
      %v1341 = vpack.c.b16 %v1071, %v1068
      %v1342 = vpack.c.b16 %v1072, %v1069
      %v1343 = vpack.c.b16 %v1073, %v1070
      %v1344 = vpack.c.b16 %v1077, %v1074
      %v1345 = vpack.c.b16 %v1078, %v1075
      %v1346 = vpack.c.b16 %v1079, %v1076
      %v1347 = vpack.c.b16 %v1083, %v1080
      %v1348 = vpack.c.b16 %v1084, %v1081
      %v1349 = vpack.c.b16 %v1085, %v1082
      %v1350 = vpack.c.b16 %v1089, %v1086
      %v1351 = vpack.c.b16 %v1090, %v1087
      %v1352 = vpack.c.b16 %v1091, %v1088
      %v1353 = vpack.c.b16 %v1095, %v1092
      %v1354 = vpack.c.b16 %v1096, %v1093
      %v1355 = vpack.c.b16 %v1097, %v1094
      %v1356 = vpack.c.b16 %v1101, %v1098
      %v1357 = vpack.c.b16 %v1102, %v1099
      %v1358 = vpack.c.b16 %v1103, %v1100
      %v1359 = vpack.c.b16 %v1107, %v1104
      %v1360 = vpack.c.b16 %v1108, %v1105
      %v1361 = vpack.c.b16 %v1109, %v1106
      %v1362 = vpack.c.b16 %v1113, %v1110
      %v1363 = vpack.c.b16 %v1114, %v1111
      %v1364 = vpack.c.b16 %v1115, %v1112
      %v1365 = vpack.c.b16 %v1119, %v1116
      %v1366 = vpack.c.b16 %v1120, %v1117
      %v1367 = vpack.c.b16 %v1121, %v1118
      %v1368 = vpack.c.b16 %v1125, %v1122
      %v1369 = vpack.c.b16 %v1126, %v1123
      %v1370 = vpack.c.b16 %v1127, %v1124
      %v1371 = vpack.c.b16 %v1131, %v1128
      %v1372 = vpack.c.b16 %v1132, %v1129
      %v1373 = vpack.c.b16 %v1133, %v1130
      %v1374 = vpack.c.b16 %v1137, %v1134
      %v1375 = vpack.c.b16 %v1138, %v1135
      %v1376 = vpack.c.b16 %v1139, %v1136
      %v1377 = vpack.c.b16 %v1143, %v1140
      %v1378 = vpack.c.b16 %v1144, %v1141
      %v1379 = vpack.c.b16 %v1145, %v1142
      %v1380 = vpack.c.b16 %v1149, %v1146
      %v1381 = vpack.c.b16 %v1150, %v1147
      %v1382 = vpack.c.b16 %v1151, %v1148
      %v1383 = vpack.c.b16 %v1155, %v1152
      %v1384 = vpack.c.b16 %v1156, %v1153
      %v1385 = vpack.c.b16 %v1157, %v1154
      %v1386 = vpack.c.b16 %v1161, %v1158
      %v1387 = vpack.c.b16 %v1162, %v1159
      %v1388 = vpack.c.b16 %v1163, %v1160
      %v1389 = vpack.c.b16 %v1167, %v1164
      %v1390 = vpack.c.b16 %v1168, %v1165
      %v1391 = vpack.c.b16 %v1169, %v1166
      %v1392 = vpack.c.b16 %v1173, %v1170
      %v1393 = vpack.c.b16 %v1174, %v1171
      %v1394 = vpack.c.b16 %v1175, %v1172
      %v1395 = vpack.c.b16 %v1179, %v1176
      %v1396 = vpack.c.b16 %v1180, %v1177
      %v1397 = vpack.c.b16 %v1181, %v1178
      %v1398 = vpack.c.b16 %v1185, %v1182
      %v1399 = vpack.c.b16 %v1186, %v1183
      %v1400 = vpack.c.b16 %v1187, %v1184
      %v1401 = vpack.c.b16 %v1191, %v1188
      %v1402 = vpack.c.b16 %v1192, %v1189
      %v1403 = vpack.c.b16 %v1193, %v1190
      %v1404 = vpack.c.b16 %v1197, %v1194
      %v1405 = vpack.c.b16 %v1198, %v1195
      %v1406 = vpack.c.b16 %v1199, %v1196
      %v1407 = vpack.c.b16 %v1203, %v1200
      %v1408 = vpack.c.b16 %v1204, %v1201
      %v1409 = vpack.c.b16 %v1205, %v1202
      %v1410 = vpack.c.b16 %v1209, %v1206
      %v1411 = vpack.c.b16 %v1210, %v1207
      %v1412 = vpack.c.b16 %v1211, %v1208
      %v1413 = vpack.c.b16 %v1215, %v1212
      %v1414 = vpack.c.b16 %v1216, %v1213
      %v1415 = vpack.c.b16 %v1217, %v1214
      %v1416 = vpack.c.b16 %v1221, %v1218
      %v1417 = vpack.c.b16 %v1222, %v1219
      %v1418 = vpack.c.b16 %v1223, %v1220
      %v1419 = vpack.c.b16 %v1227, %v1224
      %v1420 = vpack.c.b16 %v1228, %v1225
      %v1421 = vpack.c.b16 %v1229, %v1226
      %1614 = vmatprep.subr.bf16.mxu0 %v1252
      %1615 = vmatpush1.bf16.msra.mxu0 %v1251
      %1616 = vmatprep.subr.bf16.mxu0 %v1249
      %1617 = vmatpush1.bf16.msra.mxu0 %v1248
      %1618 = vmatprep.subr.bf16.mxu0 %v1246
      %1619 = vmatpush1.bf16.msra.mxu0 %v1245
      %1620 = vmatprep.subr.bf16.mxu0 %v1243
      %1621 = vmatpush1.bf16.msra.mxu0 %v1242
      %1622 = vmatprep.subr.bf16.mxu0 %v1240
      %1623 = vmatpush1.bf16.msra.mxu0 %v1239
      %1624 = vmatprep.subr.bf16.mxu0 %v1237
      %1625 = vmatpush1.bf16.msra.mxu0 %v1236
      %1626 = vmatprep.subr.bf16.mxu0 %v1234
      %1627 = vmatpush1.bf16.msra.mxu0 %v1233
      %1628 = vmatprep.subr.bf16.mxu0 %v1231
      %1629 = vmatpush1.bf16.msra.mxu0 %v1230
      %1630 = vmatprep.subr.bf16.mxu0 %v1276
      %1631 = vmatpush2.bf16.msra.mxu0 %v1275
      %1632 = vmatprep.subr.bf16.mxu0 %v1273
      %1633 = vmatpush2.bf16.msra.mxu0 %v1272
      %1634 = vmatprep.subr.bf16.mxu0 %v1270
      %1635 = vmatpush2.bf16.msra.mxu0 %v1269
      %1636 = vmatprep.subr.bf16.mxu0 %v1267
      %1637 = vmatpush2.bf16.msra.mxu0 %v1266
      %1638 = vmatprep.subr.bf16.mxu0 %v1264
      %1639 = vmatpush2.bf16.msra.mxu0 %v1263
      %1640 = vmatprep.subr.bf16.mxu0 %v1261
      %1641 = vmatpush2.bf16.msra.mxu0 %v1260
      %1642 = vmatprep.subr.bf16.mxu0 %v1258
      %1643 = vmatpush2.bf16.msra.mxu0 %v1257
      %1644 = vmatprep.subr.bf16.mxu0 %v1255
      %1645 = vmatpush2.bf16.msra.mxu0 %v1254
      %1646 = vmatprep.mubr.bf16.mxu0 %v575
      %1647 = vmatmul.mubr.bf16.gmra.mxu0 %v574
      %v1648 = vpop.f32.mrf.mxu0
      %v1649 = vadd.f32 0.0, %v1648
      %v1650 = vpop.f32.mrf.mxu0
      %v1651 = vadd.f32 0.0, %v1650
      %v1652 = vpop.f32.mrf.mxu0
      %v1653 = vpop.f32.mrf.mxu0
      %1654 = vdwg.mxu0
      %1655 = vmatprep.subr.bf16.mxu0 %v1300
      %1656 = vmatpush1.bf16.msra.mxu0 %v1299
      %1657 = vmatprep.subr.bf16.mxu0 %v1297
      %1658 = vmatpush1.bf16.msra.mxu0 %v1296
      %1659 = vmatprep.subr.bf16.mxu0 %v1294
      %1660 = vmatpush1.bf16.msra.mxu0 %v1293
      %1661 = vmatprep.subr.bf16.mxu0 %v1291
      %1662 = vmatpush1.bf16.msra.mxu0 %v1290
      %1663 = vmatprep.subr.bf16.mxu0 %v1288
      %1664 = vmatpush1.bf16.msra.mxu0 %v1287
      %1665 = vmatprep.subr.bf16.mxu0 %v1285
      %1666 = vmatpush1.bf16.msra.mxu0 %v1284
      %1667 = vmatprep.subr.bf16.mxu0 %v1282
      %1668 = vmatpush1.bf16.msra.mxu0 %v1281
      %1669 = vmatprep.subr.bf16.mxu0 %v1279
      %1670 = vmatpush1.bf16.msra.mxu0 %v1278
      %1671 = vmatprep.subr.bf16.mxu0 %v1324
      %1672 = vmatpush2.bf16.msra.mxu0 %v1323
      %1673 = vmatprep.subr.bf16.mxu0 %v1321
      %1674 = vmatpush2.bf16.msra.mxu0 %v1320
      %1675 = vmatprep.subr.bf16.mxu0 %v1318
      %1676 = vmatpush2.bf16.msra.mxu0 %v1317
      %1677 = vmatprep.subr.bf16.mxu0 %v1315
      %1678 = vmatpush2.bf16.msra.mxu0 %v1314
      %1679 = vmatprep.subr.bf16.mxu0 %v1312
      %1680 = vmatpush2.bf16.msra.mxu0 %v1311
      %1681 = vmatprep.subr.bf16.mxu0 %v1309
      %1682 = vmatpush2.bf16.msra.mxu0 %v1308
      %1683 = vmatprep.subr.bf16.mxu0 %v1306
      %1684 = vmatpush2.bf16.msra.mxu0 %v1305
      %1685 = vmatprep.subr.bf16.mxu0 %v1303
      %1686 = vmatpush2.bf16.msra.mxu0 %v1302
      %1687 = vmatprep.mubr.bf16.mxu0 %v577
      %1688 = vmatmul.mubr.bf16.gmra.mxu0 %v576
      %v1689 = vpop.f32.mrf.mxu0
      %v1690 = vadd.f32 %v1649, %v1689
      %v1691 = vpop.f32.mrf.mxu0
      %v1692 = vadd.f32 %v1651, %v1691
      %v1693 = vpop.f32.mrf.mxu0
      %v1694 = vpop.f32.mrf.mxu0
      %1695 = vdwg.mxu0
      %1696 = vmatprep.subr.bf16.mxu0 %v1348
      %1697 = vmatpush1.bf16.msra.mxu0 %v1347
      %1698 = vmatprep.subr.bf16.mxu0 %v1345
      %1699 = vmatpush1.bf16.msra.mxu0 %v1344
      %1700 = vmatprep.subr.bf16.mxu0 %v1342
      %1701 = vmatpush1.bf16.msra.mxu0 %v1341
      %1702 = vmatprep.subr.bf16.mxu0 %v1339
      %1703 = vmatpush1.bf16.msra.mxu0 %v1338
      %1704 = vmatprep.subr.bf16.mxu0 %v1336
      %1705 = vmatpush1.bf16.msra.mxu0 %v1335
      %1706 = vmatprep.subr.bf16.mxu0 %v1333
      %1707 = vmatpush1.bf16.msra.mxu0 %v1332
      %1708 = vmatprep.subr.bf16.mxu0 %v1330
      %1709 = vmatpush1.bf16.msra.mxu0 %v1329
      %1710 = vmatprep.subr.bf16.mxu0 %v1327
      %1711 = vmatpush1.bf16.msra.mxu0 %v1326
      %1712 = vmatprep.subr.bf16.mxu0 %v1372
      %1713 = vmatpush2.bf16.msra.mxu0 %v1371
      %1714 = vmatprep.subr.bf16.mxu0 %v1369
      %1715 = vmatpush2.bf16.msra.mxu0 %v1368
      %1716 = vmatprep.subr.bf16.mxu0 %v1366
      %1717 = vmatpush2.bf16.msra.mxu0 %v1365
      %1718 = vmatprep.subr.bf16.mxu0 %v1363
      %1719 = vmatpush2.bf16.msra.mxu0 %v1362
      %1720 = vmatprep.subr.bf16.mxu0 %v1360
      %1721 = vmatpush2.bf16.msra.mxu0 %v1359
      %1722 = vmatprep.subr.bf16.mxu0 %v1357
      %1723 = vmatpush2.bf16.msra.mxu0 %v1356
      %1724 = vmatprep.subr.bf16.mxu0 %v1354
      %1725 = vmatpush2.bf16.msra.mxu0 %v1353
      %1726 = vmatprep.subr.bf16.mxu0 %v1351
      %1727 = vmatpush2.bf16.msra.mxu0 %v1350
      %1728 = vmatprep.mubr.bf16.mxu0 %v579
      %1729 = vmatmul.mubr.bf16.gmra.mxu0 %v578
      %v1730 = vpop.f32.mrf.mxu0
      %v1731 = vadd.f32 %v1690, %v1730
      %v1732 = vpop.f32.mrf.mxu0
      %v1733 = vadd.f32 %v1692, %v1732
      %v1734 = vpop.f32.mrf.mxu0
      %v1735 = vpop.f32.mrf.mxu0
      %1736 = vdwg.mxu0
      %1737 = vmatprep.subr.bf16.mxu0 %v1396
      %1738 = vmatpush1.bf16.msra.mxu0 %v1395
      %1739 = vmatprep.subr.bf16.mxu0 %v1393
      %1740 = vmatpush1.bf16.msra.mxu0 %v1392
      %1741 = vmatprep.subr.bf16.mxu0 %v1390
      %1742 = vmatpush1.bf16.msra.mxu0 %v1389
      %1743 = vmatprep.subr.bf16.mxu0 %v1387
      %1744 = vmatpush1.bf16.msra.mxu0 %v1386
      %1745 = vmatprep.subr.bf16.mxu0 %v1384
      %1746 = vmatpush1.bf16.msra.mxu0 %v1383
      %1747 = vmatprep.subr.bf16.mxu0 %v1381
      %1748 = vmatpush1.bf16.msra.mxu0 %v1380
      %1749 = vmatprep.subr.bf16.mxu0 %v1378
      %1750 = vmatpush1.bf16.msra.mxu0 %v1377
      %1751 = vmatprep.subr.bf16.mxu0 %v1375
      %1752 = vmatpush1.bf16.msra.mxu0 %v1374
      %1753 = vmatprep.subr.bf16.mxu0 %v1420
      %1754 = vmatpush2.bf16.msra.mxu0 %v1419
      %1755 = vmatprep.subr.bf16.mxu0 %v1417
      %1756 = vmatpush2.bf16.msra.mxu0 %v1416
      %1757 = vmatprep.subr.bf16.mxu0 %v1414
      %1758 = vmatpush2.bf16.msra.mxu0 %v1413
      %1759 = vmatprep.subr.bf16.mxu0 %v1411
      %1760 = vmatpush2.bf16.msra.mxu0 %v1410
      %1761 = vmatprep.subr.bf16.mxu0 %v1408
      %1762 = vmatpush2.bf16.msra.mxu0 %v1407
      %1763 = vmatprep.subr.bf16.mxu0 %v1405
      %1764 = vmatpush2.bf16.msra.mxu0 %v1404
      %1765 = vmatprep.subr.bf16.mxu0 %v1402
      %1766 = vmatpush2.bf16.msra.mxu0 %v1401
      %1767 = vmatprep.subr.bf16.mxu0 %v1399
      %1768 = vmatpush2.bf16.msra.mxu0 %v1398
      %1769 = vmatprep.mubr.bf16.mxu0 %v581
      %1770 = vmatmul.mubr.bf16.gmra.mxu0 %v580
      %v1771 = vpop.f32.mrf.mxu0
      %v1772 = vadd.f32 %v1731, %v1771
      %v1773 = vpop.f32.mrf.mxu0
      %v1774 = vadd.f32 %v1733, %v1773
      %v1775 = vpop.f32.mrf.mxu0
      %v1776 = vpop.f32.mrf.mxu0
      %1777 = vdwg.mxu0
      %1778 = vmatprep.subr.bf16.mxu0 0
      %1779 = vmatpush1.bf16.msra.mxu0 %v1253
      %1780 = vmatprep.subr.bf16.mxu0 0
      %1781 = vmatpush1.bf16.msra.mxu0 %v1250
      %1782 = vmatprep.subr.bf16.mxu0 0
      %1783 = vmatpush1.bf16.msra.mxu0 %v1247
      %1784 = vmatprep.subr.bf16.mxu0 0
      %1785 = vmatpush1.bf16.msra.mxu0 %v1244
      %1786 = vmatprep.subr.bf16.mxu0 0
      %1787 = vmatpush1.bf16.msra.mxu0 %v1241
      %1788 = vmatprep.subr.bf16.mxu0 0
      %1789 = vmatpush1.bf16.msra.mxu0 %v1238
      %1790 = vmatprep.subr.bf16.mxu0 0
      %1791 = vmatpush1.bf16.msra.mxu0 %v1235
      %1792 = vmatprep.subr.bf16.mxu0 0
      %1793 = vmatpush1.bf16.msra.mxu0 %v1232
      %1794 = vmatprep.subr.bf16.mxu0 0
      %1795 = vmatpush2.bf16.msra.mxu0 %v1277
      %1796 = vmatprep.subr.bf16.mxu0 0
      %1797 = vmatpush2.bf16.msra.mxu0 %v1274
      %1798 = vmatprep.subr.bf16.mxu0 0
      %1799 = vmatpush2.bf16.msra.mxu0 %v1271
      %1800 = vmatprep.subr.bf16.mxu0 0
      %1801 = vmatpush2.bf16.msra.mxu0 %v1268
      %1802 = vmatprep.subr.bf16.mxu0 0
      %1803 = vmatpush2.bf16.msra.mxu0 %v1265
      %1804 = vmatprep.subr.bf16.mxu0 0
      %1805 = vmatpush2.bf16.msra.mxu0 %v1262
      %1806 = vmatprep.subr.bf16.mxu0 0
      %1807 = vmatpush2.bf16.msra.mxu0 %v1259
      %1808 = vmatprep.subr.bf16.mxu0 0
      %1809 = vmatpush2.bf16.msra.mxu0 %v1256
      %1810 = vmatprep.mubr.bf16.mxu0 %v575
      %1811 = vmatmul.mubr.bf16.gmra.mxu0 %v574
      %v1812 = vpop.f32.mrf.mxu0
      %v1813 = vadd.f32 0.0, %v1812
      %v1814 = vpop.f32.mrf.mxu0
      %v1815 = vpop.f32.mrf.mxu0
      %v1816 = vpop.f32.mrf.mxu0
      %1817 = vdwg.mxu0
      %1818 = vmatprep.subr.bf16.mxu0 0
      %1819 = vmatpush1.bf16.msra.mxu0 %v1301
      %1820 = vmatprep.subr.bf16.mxu0 0
      %1821 = vmatpush1.bf16.msra.mxu0 %v1298
      %1822 = vmatprep.subr.bf16.mxu0 0
      %1823 = vmatpush1.bf16.msra.mxu0 %v1295
      %1824 = vmatprep.subr.bf16.mxu0 0
      %1825 = vmatpush1.bf16.msra.mxu0 %v1292
      %1826 = vmatprep.subr.bf16.mxu0 0
      %1827 = vmatpush1.bf16.msra.mxu0 %v1289
      %1828 = vmatprep.subr.bf16.mxu0 0
      %1829 = vmatpush1.bf16.msra.mxu0 %v1286
      %1830 = vmatprep.subr.bf16.mxu0 0
      %1831 = vmatpush1.bf16.msra.mxu0 %v1283
      %1832 = vmatprep.subr.bf16.mxu0 0
      %1833 = vmatpush1.bf16.msra.mxu0 %v1280
      %1834 = vmatprep.subr.bf16.mxu0 0
      %1835 = vmatpush2.bf16.msra.mxu0 %v1325
      %1836 = vmatprep.subr.bf16.mxu0 0
      %1837 = vmatpush2.bf16.msra.mxu0 %v1322
      %1838 = vmatprep.subr.bf16.mxu0 0
      %1839 = vmatpush2.bf16.msra.mxu0 %v1319
      %1840 = vmatprep.subr.bf16.mxu0 0
      %1841 = vmatpush2.bf16.msra.mxu0 %v1316
      %1842 = vmatprep.subr.bf16.mxu0 0
      %1843 = vmatpush2.bf16.msra.mxu0 %v1313
      %1844 = vmatprep.subr.bf16.mxu0 0
      %1845 = vmatpush2.bf16.msra.mxu0 %v1310
      %1846 = vmatprep.subr.bf16.mxu0 0
      %1847 = vmatpush2.bf16.msra.mxu0 %v1307
      %1848 = vmatprep.subr.bf16.mxu0 0
      %1849 = vmatpush2.bf16.msra.mxu0 %v1304
      %1850 = vmatprep.mubr.bf16.mxu0 %v577
      %1851 = vmatmul.mubr.bf16.gmra.mxu0 %v576
      %v1852 = vpop.f32.mrf.mxu0
      %v1853 = vadd.f32 %v1813, %v1852
      %v1854 = vpop.f32.mrf.mxu0
      %v1855 = vpop.f32.mrf.mxu0
      %v1856 = vpop.f32.mrf.mxu0
      %1857 = vdwg.mxu0
      %1858 = vmatprep.subr.bf16.mxu0 0
      %1859 = vmatpush1.bf16.msra.mxu0 %v1349
      %1860 = vmatprep.subr.bf16.mxu0 0
      %1861 = vmatpush1.bf16.msra.mxu0 %v1346
      %1862 = vmatprep.subr.bf16.mxu0 0
      %1863 = vmatpush1.bf16.msra.mxu0 %v1343
      %1864 = vmatprep.subr.bf16.mxu0 0
      %1865 = vmatpush1.bf16.msra.mxu0 %v1340
      %1866 = vmatprep.subr.bf16.mxu0 0
      %1867 = vmatpush1.bf16.msra.mxu0 %v1337
      %1868 = vmatprep.subr.bf16.mxu0 0
      %1869 = vmatpush1.bf16.msra.mxu0 %v1334
      %1870 = vmatprep.subr.bf16.mxu0 0
      %1871 = vmatpush1.bf16.msra.mxu0 %v1331
      %1872 = vmatprep.subr.bf16.mxu0 0
      %1873 = vmatpush1.bf16.msra.mxu0 %v1328
      %1874 = vmatprep.subr.bf16.mxu0 0
      %1875 = vmatpush2.bf16.msra.mxu0 %v1373
      %1876 = vmatprep.subr.bf16.mxu0 0
      %1877 = vmatpush2.bf16.msra.mxu0 %v1370
      %1878 = vmatprep.subr.bf16.mxu0 0
      %1879 = vmatpush2.bf16.msra.mxu0 %v1367
      %1880 = vmatprep.subr.bf16.mxu0 0
      %1881 = vmatpush2.bf16.msra.mxu0 %v1364
      %1882 = vmatprep.subr.bf16.mxu0 0
      %1883 = vmatpush2.bf16.msra.mxu0 %v1361
      %1884 = vmatprep.subr.bf16.mxu0 0
      %1885 = vmatpush2.bf16.msra.mxu0 %v1358
      %1886 = vmatprep.subr.bf16.mxu0 0
      %1887 = vmatpush2.bf16.msra.mxu0 %v1355
      %1888 = vmatprep.subr.bf16.mxu0 0
      %1889 = vmatpush2.bf16.msra.mxu0 %v1352
      %1890 = vmatprep.mubr.bf16.mxu0 %v579
      %1891 = vmatmul.mubr.bf16.gmra.mxu0 %v578
      %v1892 = vpop.f32.mrf.mxu0
      %v1893 = vadd.f32 %v1853, %v1892
      %v1894 = vpop.f32.mrf.mxu0
      %v1895 = vpop.f32.mrf.mxu0
      %v1896 = vpop.f32.mrf.mxu0
      %1897 = vdwg.mxu0
      %1898 = vmatprep.subr.bf16.mxu0 0
      %1899 = vmatpush1.bf16.msra.mxu0 %v1397
      %1900 = vmatprep.subr.bf16.mxu0 0
      %1901 = vmatpush1.bf16.msra.mxu0 %v1394
      %1902 = vmatprep.subr.bf16.mxu0 0
      %1903 = vmatpush1.bf16.msra.mxu0 %v1391
      %1904 = vmatprep.subr.bf16.mxu0 0
      %1905 = vmatpush1.bf16.msra.mxu0 %v1388
      %1906 = vmatprep.subr.bf16.mxu0 0
      %1907 = vmatpush1.bf16.msra.mxu0 %v1385
      %1908 = vmatprep.subr.bf16.mxu0 0
      %1909 = vmatpush1.bf16.msra.mxu0 %v1382
      %1910 = vmatprep.subr.bf16.mxu0 0
      %1911 = vmatpush1.bf16.msra.mxu0 %v1379
      %1912 = vmatprep.subr.bf16.mxu0 0
      %1913 = vmatpush1.bf16.msra.mxu0 %v1376
      %1914 = vmatprep.subr.bf16.mxu0 0
      %1915 = vmatpush2.bf16.msra.mxu0 %v1421
      %1916 = vmatprep.subr.bf16.mxu0 0
      %1917 = vmatpush2.bf16.msra.mxu0 %v1418
      %1918 = vmatprep.subr.bf16.mxu0 0
      %1919 = vmatpush2.bf16.msra.mxu0 %v1415
      %1920 = vmatprep.subr.bf16.mxu0 0
      %1921 = vmatpush2.bf16.msra.mxu0 %v1412
      %1922 = vmatprep.subr.bf16.mxu0 0
      %1923 = vmatpush2.bf16.msra.mxu0 %v1409
      %1924 = vmatprep.subr.bf16.mxu0 0
      %1925 = vmatpush2.bf16.msra.mxu0 %v1406
      %1926 = vmatprep.subr.bf16.mxu0 0
      %1927 = vmatpush2.bf16.msra.mxu0 %v1403
      %1928 = vmatprep.subr.bf16.mxu0 0
      %1929 = vmatpush2.bf16.msra.mxu0 %v1400
      %1930 = vmatprep.mubr.bf16.mxu0 %v581
      %1931 = vmatmul.mubr.bf16.gmra.mxu0 %v580
      %v1932 = vpop.f32.mrf.mxu0
      %v1933 = vadd.f32 %v1893, %v1932
      %v1934 = vpop.f32.mrf.mxu0
      %v1935 = vpop.f32.mrf.mxu0
      %v1936 = vpop.f32.mrf.mxu0
      %1937 = vdwg.mxu0
      %v1938 = vadd.f32 %v299, %v1772
      %v1939 = vadd.f32 %v300, %v1774
      %v1940 = vadd.f32 %v301, %v1933
      %1941 = vst [vmem:[#allocation2] sm:$0xff] %v1938
      %1942 = vst [vmem:[#allocation2 + $0x8] sm:$0xff] %v1939
      %1943 = vst [vmem:[#allocation2 + $0x10] sm:$0xff] %v1940
      %p1944 = scmp.eq.s32.totalorder %s18, 7
      // Predicated region
      $region53: #{cnn_femnist_forward.5} parent=47 // pred_check
        %p1945 = pneg %p1944
      $region54: #{cnn_femnist_forward.5} parent=47 // pred_check_branch
        %1947 = sbr.rel (%p1945) target = $region56
      $region55: #{cnn_femnist_forward.5} parent=47 // pred_region
        %v1948 = vld [vmem:[#allocation2] sm:$0xff]
        %v1949 = vld [vmem:[#allocation2 + $0x8] sm:$0xff]
        %v1950 = vld [vmem:[#allocation2 + $0x10] sm:$0xff]
        %v1951 = vld [vmem:[%s2] sm:$0x7]
        %v1953 = vlaneseq
        %v1954 = vshrl.u32 %v1953, 7
        %v1955 = vsub.s32 0, %v1954
        %v1956 = vrot.slane %v1951, %v1955
        %v1957 = vlaneseq
        %v1958 = vshrl.u32 %v1957, 7
        %v1959 = vsub.s32 1, %v1958
        %v1960 = vrot.slane %v1951, %v1959
        %v1961 = vlaneseq
        %v1962 = vshrl.u32 %v1961, 7
        %v1963 = vsub.s32 2, %v1962
        %v1964 = vrot.slane %v1951, %v1963
        %v1968 = vadd.f32 %v1948, %v1956
        %v1969 = vadd.f32 %v1949, %v1960
        %v1970 = vadd.f32 %v1950, %v1964
        %v1971 = vmax.f32 %v1968, 0.0
        %v1972 = vmax.f32 %v1969, 0.0
        %v1973 = vmax.f32 %v1970, 0.0
        %v1974 = vpack.c.bf16 %v1971, %v1971
        %v1975 = vpack.c.bf16 %v1972, %v1972
        %v1976 = vpack.c.bf16 %v1973, %v1973
        %v1977 = vld [vmem:[%s3] sm:$0xff]
        %v1978 = vld [vmem:[%s3 + $0x8] sm:$0xff]
        %v1979 = vld [vmem:[%s3 + $0x10] sm:$0xff]
        %v1980 = vld [vmem:[%s3 + $0x18] sm:$0xff]
        %v1981 = vld [vmem:[%s3 + $0x20] sm:$0xff]
        %v1982 = vld [vmem:[%s3 + $0x28] sm:$0xff]
        %v1983 = vld [vmem:[%s3 + $0x30] sm:$0xff]
        %v1984 = vld [vmem:[%s3 + $0x38] sm:$0xff]
        %v1985 = vld [vmem:[%s3 + $0x40] sm:$0xff]
        %v1986 = vld [vmem:[%s3 + $0x48] sm:$0xff]
        %v1987 = vld [vmem:[%s3 + $0x50] sm:$0xff]
        %v1988 = vld [vmem:[%s3 + $0x58] sm:$0xff]
        %v1989 = vld [vmem:[%s3 + $0x60] sm:$0xff]
        %v1990 = vld [vmem:[%s3 + $0x68] sm:$0xff]
        %v1991 = vld [vmem:[%s3 + $0x70] sm:$0xff]
        %v1992 = vld [vmem:[%s3 + $0x78] sm:$0xff]
        %v1993 = vld [vmem:[%s3 + $0x80] sm:$0xff]
        %v1994 = vld [vmem:[%s3 + $0x88] sm:$0xff]
        %v1995 = vld [vmem:[%s3 + $0x90] sm:$0xff]
        %v1996 = vld [vmem:[%s3 + $0x98] sm:$0xff]
        %v1997 = vld [vmem:[%s3 + $0xa0] sm:$0xff]
        %v1998 = vld [vmem:[%s3 + $0xa8] sm:$0xff]
        %v1999 = vld [vmem:[%s3 + $0xb0] sm:$0xff]
        %v2000 = vld [vmem:[%s3 + $0xb8] sm:$0xff]
        %v2001 = vld [vmem:[%s3 + $0xc0] sm:$0xff]
        %v2002 = vld [vmem:[%s3 + $0xc8] sm:$0xff]
        %v2003 = vld [vmem:[%s3 + $0xd0] sm:$0xff]
        %v2004 = vld [vmem:[%s3 + $0xd8] sm:$0xff]
        %v2005 = vld [vmem:[%s3 + $0xe0] sm:$0xff]
        %v2006 = vld [vmem:[%s3 + $0xe8] sm:$0xff]
        %v2007 = vld [vmem:[%s3 + $0xf0] sm:$0xff]
        %v2008 = vld [vmem:[%s3 + $0xf8] sm:$0xff]
        %v2009 = vld [vmem:[%s3 + $0x100] sm:$0xff]
        %v2010 = vld [vmem:[%s3 + $0x108] sm:$0xff]
        %v2011 = vld [vmem:[%s3 + $0x110] sm:$0xff]
        %v2012 = vld [vmem:[%s3 + $0x118] sm:$0xff]
        %v2013 = vld [vmem:[%s3 + $0x120] sm:$0xff]
        %v2014 = vld [vmem:[%s3 + $0x128] sm:$0xff]
        %v2015 = vld [vmem:[%s3 + $0x130] sm:$0xff]
        %v2016 = vld [vmem:[%s3 + $0x138] sm:$0xff]
        %v2017 = vld [vmem:[%s3 + $0x140] sm:$0xff]
        %v2018 = vld [vmem:[%s3 + $0x148] sm:$0xff]
        %v2019 = vld [vmem:[%s3 + $0x150] sm:$0xff]
        %v2020 = vld [vmem:[%s3 + $0x158] sm:$0xff]
        %v2021 = vld [vmem:[%s3 + $0x160] sm:$0xff]
        %v2022 = vld [vmem:[%s3 + $0x168] sm:$0xff]
        %v2023 = vld [vmem:[%s3 + $0x170] sm:$0xff]
        %v2024 = vld [vmem:[%s3 + $0x178] sm:$0xff]
        %v2025 = vld [vmem:[%s4] sm:$0x3]
        %v2027 = vlaneseq
        %v2028 = vshrl.u32 %v2027, 7
        %v2029 = vsub.s32 0, %v2028
        %v2030 = vrot.slane %v2025, %v2029
        %v2031 = vlaneseq
        %v2032 = vshrl.u32 %v2031, 7
        %v2033 = vsub.s32 1, %v2032
        %v2034 = vrot.slane %v2025, %v2033
        %v2085 = vunpack.c.l.b16 %v1977
        %v2086 = vunpack.c.h.b16 %v1977
        %v2087 = vunpack.c.l.b16 %v1978
        %v2088 = vunpack.c.h.b16 %v1978
        %v2089 = vunpack.c.l.b16 %v1979
        %v2090 = vunpack.c.h.b16 %v1979
        %v2091 = vunpack.c.l.b16 %v1980
        %v2092 = vunpack.c.h.b16 %v1980
        %v2093 = vunpack.c.l.b16 %v1981
        %v2094 = vunpack.c.h.b16 %v1981
        %v2095 = vunpack.c.l.b16 %v1982
        %v2096 = vunpack.c.h.b16 %v1982
        %v2097 = vunpack.c.l.b16 %v1983
        %v2098 = vunpack.c.h.b16 %v1983
        %v2099 = vunpack.c.l.b16 %v1984
        %v2100 = vunpack.c.h.b16 %v1984
        %v2101 = vunpack.c.l.b16 %v1985
        %v2102 = vunpack.c.h.b16 %v1985
        %v2103 = vunpack.c.l.b16 %v1986
        %v2104 = vunpack.c.h.b16 %v1986
        %v2105 = vunpack.c.l.b16 %v1987
        %v2106 = vunpack.c.h.b16 %v1987
        %v2107 = vunpack.c.l.b16 %v1988
        %v2108 = vunpack.c.h.b16 %v1988
        %v2109 = vunpack.c.l.b16 %v1989
        %v2110 = vunpack.c.h.b16 %v1989
        %v2111 = vunpack.c.l.b16 %v1990
        %v2112 = vunpack.c.h.b16 %v1990
        %v2113 = vunpack.c.l.b16 %v1991
        %v2114 = vunpack.c.h.b16 %v1991
        %v2115 = vunpack.c.l.b16 %v1992
        %v2116 = vunpack.c.h.b16 %v1992
        %v2117 = vunpack.c.l.b16 %v1993
        %v2118 = vunpack.c.h.b16 %v1993
        %v2119 = vunpack.c.l.b16 %v1994
        %v2120 = vunpack.c.h.b16 %v1994
        %v2121 = vunpack.c.l.b16 %v1995
        %v2122 = vunpack.c.h.b16 %v1995
        %v2123 = vunpack.c.l.b16 %v1996
        %v2124 = vunpack.c.h.b16 %v1996
        %v2125 = vunpack.c.l.b16 %v1997
        %v2126 = vunpack.c.h.b16 %v1997
        %v2127 = vunpack.c.l.b16 %v1998
        %v2128 = vunpack.c.h.b16 %v1998
        %v2129 = vunpack.c.l.b16 %v1999
        %v2130 = vunpack.c.h.b16 %v1999
        %v2131 = vunpack.c.l.b16 %v2000
        %v2132 = vunpack.c.h.b16 %v2000
        %v2133 = vunpack.c.l.b16 %v2001
        %v2134 = vunpack.c.h.b16 %v2001
        %v2135 = vunpack.c.l.b16 %v2002
        %v2136 = vunpack.c.h.b16 %v2002
        %v2137 = vunpack.c.l.b16 %v2003
        %v2138 = vunpack.c.h.b16 %v2003
        %v2139 = vunpack.c.l.b16 %v2004
        %v2140 = vunpack.c.h.b16 %v2004
        %v2141 = vunpack.c.l.b16 %v2005
        %v2142 = vunpack.c.h.b16 %v2005
        %v2143 = vunpack.c.l.b16 %v2006
        %v2144 = vunpack.c.h.b16 %v2006
        %v2145 = vunpack.c.l.b16 %v2007
        %v2146 = vunpack.c.h.b16 %v2007
        %v2147 = vunpack.c.l.b16 %v2008
        %v2148 = vunpack.c.h.b16 %v2008
        %v2149 = vunpack.c.l.b16 %v2009
        %v2150 = vunpack.c.h.b16 %v2009
        %v2151 = vunpack.c.l.b16 %v2010
        %v2152 = vunpack.c.h.b16 %v2010
        %v2153 = vunpack.c.l.b16 %v2011
        %v2154 = vunpack.c.h.b16 %v2011
        %v2155 = vunpack.c.l.b16 %v2012
        %v2156 = vunpack.c.h.b16 %v2012
        %v2157 = vunpack.c.l.b16 %v2013
        %v2158 = vunpack.c.h.b16 %v2013
        %v2159 = vunpack.c.l.b16 %v2014
        %v2160 = vunpack.c.h.b16 %v2014
        %v2161 = vunpack.c.l.b16 %v2015
        %v2162 = vunpack.c.h.b16 %v2015
        %v2163 = vunpack.c.l.b16 %v2016
        %v2164 = vunpack.c.h.b16 %v2016
        %v2165 = vunpack.c.l.b16 %v2017
        %v2166 = vunpack.c.h.b16 %v2017
        %v2167 = vunpack.c.l.b16 %v2018
        %v2168 = vunpack.c.h.b16 %v2018
        %v2169 = vunpack.c.l.b16 %v2019
        %v2170 = vunpack.c.h.b16 %v2019
        %v2171 = vunpack.c.l.b16 %v2020
        %v2172 = vunpack.c.h.b16 %v2020
        %v2173 = vunpack.c.l.b16 %v2021
        %v2174 = vunpack.c.h.b16 %v2021
        %v2175 = vunpack.c.l.b16 %v2022
        %v2176 = vunpack.c.h.b16 %v2022
        %v2177 = vunpack.c.l.b16 %v2023
        %v2178 = vunpack.c.h.b16 %v2023
        %v2179 = vunpack.c.l.b16 %v2024
        %v2180 = vunpack.c.h.b16 %v2024
        %v2181 = vpack.c.b16 %v2087, %v2085
        %v2182 = vpack.c.b16 %v2088, %v2086
        %v2183 = vpack.c.b16 %v2091, %v2089
        %v2184 = vpack.c.b16 %v2092, %v2090
        %v2185 = vpack.c.b16 %v2095, %v2093
        %v2186 = vpack.c.b16 %v2096, %v2094
        %v2187 = vpack.c.b16 %v2099, %v2097
        %v2188 = vpack.c.b16 %v2100, %v2098
        %v2189 = vpack.c.b16 %v2103, %v2101
        %v2190 = vpack.c.b16 %v2104, %v2102
        %v2191 = vpack.c.b16 %v2107, %v2105
        %v2192 = vpack.c.b16 %v2108, %v2106
        %v2193 = vpack.c.b16 %v2111, %v2109
        %v2194 = vpack.c.b16 %v2112, %v2110
        %v2195 = vpack.c.b16 %v2115, %v2113
        %v2196 = vpack.c.b16 %v2116, %v2114
        %v2197 = vpack.c.b16 %v2119, %v2117
        %v2198 = vpack.c.b16 %v2120, %v2118
        %v2199 = vpack.c.b16 %v2123, %v2121
        %v2200 = vpack.c.b16 %v2124, %v2122
        %v2201 = vpack.c.b16 %v2127, %v2125
        %v2202 = vpack.c.b16 %v2128, %v2126
        %v2203 = vpack.c.b16 %v2131, %v2129
        %v2204 = vpack.c.b16 %v2132, %v2130
        %v2205 = vpack.c.b16 %v2135, %v2133
        %v2206 = vpack.c.b16 %v2136, %v2134
        %v2207 = vpack.c.b16 %v2139, %v2137
        %v2208 = vpack.c.b16 %v2140, %v2138
        %v2209 = vpack.c.b16 %v2143, %v2141
        %v2210 = vpack.c.b16 %v2144, %v2142
        %v2211 = vpack.c.b16 %v2147, %v2145
        %v2212 = vpack.c.b16 %v2148, %v2146
        %v2213 = vpack.c.b16 %v2151, %v2149
        %v2214 = vpack.c.b16 %v2152, %v2150
        %v2215 = vpack.c.b16 %v2155, %v2153
        %v2216 = vpack.c.b16 %v2156, %v2154
        %v2217 = vpack.c.b16 %v2159, %v2157
        %v2218 = vpack.c.b16 %v2160, %v2158
        %v2219 = vpack.c.b16 %v2163, %v2161
        %v2220 = vpack.c.b16 %v2164, %v2162
        %v2221 = vpack.c.b16 %v2167, %v2165
        %v2222 = vpack.c.b16 %v2168, %v2166
        %v2223 = vpack.c.b16 %v2171, %v2169
        %v2224 = vpack.c.b16 %v2172, %v2170
        %v2225 = vpack.c.b16 %v2175, %v2173
        %v2226 = vpack.c.b16 %v2176, %v2174
        %v2227 = vpack.c.b16 %v2179, %v2177
        %v2228 = vpack.c.b16 %v2180, %v2178
        %2277 = vmatprep.subr.bf16.mxu0 %v2196
        %2278 = vmatpush1.bf16.msra.mxu0 %v2195
        %2279 = vmatprep.subr.bf16.mxu0 %v2194
        %2280 = vmatpush1.bf16.msra.mxu0 %v2193
        %2281 = vmatprep.subr.bf16.mxu0 %v2192
        %2282 = vmatpush1.bf16.msra.mxu0 %v2191
        %2283 = vmatprep.subr.bf16.mxu0 %v2190
        %2284 = vmatpush1.bf16.msra.mxu0 %v2189
        %2285 = vmatprep.subr.bf16.mxu0 %v2188
        %2286 = vmatpush1.bf16.msra.mxu0 %v2187
        %2287 = vmatprep.subr.bf16.mxu0 %v2186
        %2288 = vmatpush1.bf16.msra.mxu0 %v2185
        %2289 = vmatprep.subr.bf16.mxu0 %v2184
        %2290 = vmatpush1.bf16.msra.mxu0 %v2183
        %2291 = vmatprep.subr.bf16.mxu0 %v2182
        %2292 = vmatpush1.bf16.msra.mxu0 %v2181
        %2293 = vmatprep.subr.bf16.mxu0 %v2212
        %2294 = vmatpush2.bf16.msra.mxu0 %v2211
        %2295 = vmatprep.subr.bf16.mxu0 %v2210
        %2296 = vmatpush2.bf16.msra.mxu0 %v2209
        %2297 = vmatprep.subr.bf16.mxu0 %v2208
        %2298 = vmatpush2.bf16.msra.mxu0 %v2207
        %2299 = vmatprep.subr.bf16.mxu0 %v2206
        %2300 = vmatpush2.bf16.msra.mxu0 %v2205
        %2301 = vmatprep.subr.bf16.mxu0 %v2204
        %2302 = vmatpush2.bf16.msra.mxu0 %v2203
        %2303 = vmatprep.subr.bf16.mxu0 %v2202
        %2304 = vmatpush2.bf16.msra.mxu0 %v2201
        %2305 = vmatprep.subr.bf16.mxu0 %v2200
        %2306 = vmatpush2.bf16.msra.mxu0 %v2199
        %2307 = vmatprep.subr.bf16.mxu0 %v2198
        %2308 = vmatpush2.bf16.msra.mxu0 %v2197
        %2309 = vmatprep.mubr.bf16.mxu0 %v1975
        %2310 = vmatmul.mubr.bf16.gmra.mxu0 %v1974
        %v2311 = vpop.f32.mrf.mxu0
        %v2312 = vadd.f32 %v2030, %v2311
        %v2313 = vpop.f32.mrf.mxu0
        %v2314 = vadd.f32 %v2034, %v2313
        %v2315 = vpop.f32.mrf.mxu0
        %v2316 = vpop.f32.mrf.mxu0
        %2317 = vdwg.mxu0
        %2318 = vmatprep.subr.bf16.mxu0 %v2228
        %2319 = vmatpush1.bf16.msra.mxu0 %v2227
        %2320 = vmatprep.subr.bf16.mxu0 %v2226
        %2321 = vmatpush1.bf16.msra.mxu0 %v2225
        %2322 = vmatprep.subr.bf16.mxu0 %v2224
        %2323 = vmatpush1.bf16.msra.mxu0 %v2223
        %2324 = vmatprep.subr.bf16.mxu0 %v2222
        %2325 = vmatpush1.bf16.msra.mxu0 %v2221
        %2326 = vmatprep.subr.bf16.mxu0 %v2220
        %2327 = vmatpush1.bf16.msra.mxu0 %v2219
        %2328 = vmatprep.subr.bf16.mxu0 %v2218
        %2329 = vmatpush1.bf16.msra.mxu0 %v2217
        %2330 = vmatprep.subr.bf16.mxu0 %v2216
        %2331 = vmatpush1.bf16.msra.mxu0 %v2215
        %2332 = vmatprep.subr.bf16.mxu0 %v2214
        %2333 = vmatpush1.bf16.msra.mxu0 %v2213
        %2334 = vmatprep.subr.bf16.mxu0 0
        %2335 = vmatpush2.bf16.msra.mxu0 0
        %2336 = vmatprep.subr.bf16.mxu0 0
        %2337 = vmatpush2.bf16.msra.mxu0 0
        %2338 = vmatprep.subr.bf16.mxu0 0
        %2339 = vmatpush2.bf16.msra.mxu0 0
        %2340 = vmatprep.subr.bf16.mxu0 0
        %2341 = vmatpush2.bf16.msra.mxu0 0
        %2342 = vmatprep.subr.bf16.mxu0 0
        %2343 = vmatpush2.bf16.msra.mxu0 0
        %2344 = vmatprep.subr.bf16.mxu0 0
        %2345 = vmatpush2.bf16.msra.mxu0 0
        %2346 = vmatprep.subr.bf16.mxu0 0
        %2347 = vmatpush2.bf16.msra.mxu0 0
        %2348 = vmatprep.subr.bf16.mxu0 0
        %2349 = vmatpush2.bf16.msra.mxu0 0
        %2350 = vmatprep.mubr.bf16.mxu0 0
        %2351 = vmatmul.mubr.bf16.gmra.mxu0 %v1976
        %v2352 = vpop.f32.mrf.mxu0
        %v2353 = vadd.f32 %v2312, %v2352
        %v2354 = vpop.f32.mrf.mxu0
        %v2355 = vadd.f32 %v2314, %v2354
        %v2356 = vpop.f32.mrf.mxu0
        %v2357 = vpop.f32.mrf.mxu0
        %2358 = vdwg.mxu0
        %v2359 = vmax.f32 %v2353, 0.0
        %v2360 = vmax.f32 %v2355, 0.0
        %v2361 = vpack.c.bf16 %v2359, %v2359
        %v2362 = vpack.c.bf16 %v2360, %v2360
        %v2363 = vld [vmem:[%s5] sm:$0xf]
        %v2364 = vld [vmem:[%s5 + $0x4] sm:$0xf]
        %v2365 = vld [vmem:[%s5 + $0x8] sm:$0xf]
        %v2366 = vld [vmem:[%s5 + $0xc] sm:$0xf]
        %v2367 = vld [vmem:[%s5 + $0x10] sm:$0xf]
        %v2368 = vld [vmem:[%s5 + $0x14] sm:$0xf]
        %v2369 = vld [vmem:[%s5 + $0x18] sm:$0xf]
        %v2370 = vld [vmem:[%s5 + $0x1c] sm:$0xf]
        %v2371 = vld [vmem:[%s5 + $0x20] sm:$0xf]
        %v2372 = vld [vmem:[%s5 + $0x24] sm:$0xf]
        %v2373 = vld [vmem:[%s5 + $0x28] sm:$0xf]
        %v2374 = vld [vmem:[%s5 + $0x2c] sm:$0xf]
        %v2375 = vld [vmem:[%s5 + $0x30] sm:$0xf]
        %v2376 = vld [vmem:[%s5 + $0x34] sm:$0xf]
        %v2377 = vld [vmem:[%s5 + $0x38] sm:$0xf]
        %v2378 = vld [vmem:[%s5 + $0x3c] sm:$0xf]
        %v2379 = vld [vmem:[%s5 + $0x40] sm:$0xf]
        %v2380 = vld [vmem:[%s5 + $0x44] sm:$0xf]
        %v2381 = vld [vmem:[%s5 + $0x48] sm:$0xf]
        %v2382 = vld [vmem:[%s5 + $0x4c] sm:$0xf]
        %v2383 = vld [vmem:[%s5 + $0x50] sm:$0xf]
        %v2384 = vld [vmem:[%s5 + $0x54] sm:$0xf]
        %v2385 = vld [vmem:[%s5 + $0x58] sm:$0xf]
        %v2386 = vld [vmem:[%s5 + $0x5c] sm:$0xf]
        %v2387 = vld [vmem:[%s6] sm:$0x1]
        %v2389 = vlaneseq
        %v2390 = vshrl.u32 %v2389, 7
        %v2391 = vsub.s32 0, %v2390
        %v2392 = vrot.slane %v2387, %v2391
        %v2418 = vunpack.c.l.b16 %v2363
        %v2419 = vunpack.c.l.b16 %v2364
        %v2420 = vunpack.c.l.b16 %v2365
        %v2421 = vunpack.c.l.b16 %v2366
        %v2422 = vunpack.c.l.b16 %v2367
        %v2423 = vunpack.c.l.b16 %v2368
        %v2424 = vunpack.c.l.b16 %v2369
        %v2425 = vunpack.c.l.b16 %v2370
        %v2426 = vunpack.c.l.b16 %v2371
        %v2427 = vunpack.c.l.b16 %v2372
        %v2428 = vunpack.c.l.b16 %v2373
        %v2429 = vunpack.c.l.b16 %v2374
        %v2430 = vunpack.c.l.b16 %v2375
        %v2431 = vunpack.c.l.b16 %v2376
        %v2432 = vunpack.c.l.b16 %v2377
        %v2433 = vunpack.c.l.b16 %v2378
        %v2434 = vunpack.c.l.b16 %v2379
        %v2435 = vunpack.c.l.b16 %v2380
        %v2436 = vunpack.c.l.b16 %v2381
        %v2437 = vunpack.c.l.b16 %v2382
        %v2438 = vunpack.c.l.b16 %v2383
        %v2439 = vunpack.c.l.b16 %v2384
        %v2440 = vunpack.c.l.b16 %v2385
        %v2441 = vunpack.c.l.b16 %v2386
        %v2442 = vpack.c.b16 %v2419, %v2418
        %v2443 = vpack.c.b16 %v2421, %v2420
        %v2444 = vpack.c.b16 %v2423, %v2422
        %v2445 = vpack.c.b16 %v2425, %v2424
        %v2446 = vpack.c.b16 %v2427, %v2426
        %v2447 = vpack.c.b16 %v2429, %v2428
        %v2448 = vpack.c.b16 %v2431, %v2430
        %v2449 = vpack.c.b16 %v2433, %v2432
        %v2450 = vpack.c.b16 %v2435, %v2434
        %v2451 = vpack.c.b16 %v2437, %v2436
        %v2452 = vpack.c.b16 %v2439, %v2438
        %v2453 = vpack.c.b16 %v2441, %v2440
        %vm2466 = vcmask 523264
        %v2468 = vsel %vm2466, %v2362, 0
        %2470 = vmatprep.subr.bf16.mxu0 0
        %2471 = vmatpush1.bf16.msra.mxu0 %v2449
        %2472 = vmatprep.subr.bf16.mxu0 0
        %2473 = vmatpush1.bf16.msra.mxu0 %v2448
        %2474 = vmatprep.subr.bf16.mxu0 0
        %2475 = vmatpush1.bf16.msra.mxu0 %v2447
        %2476 = vmatprep.subr.bf16.mxu0 0
        %2477 = vmatpush1.bf16.msra.mxu0 %v2446
        %2478 = vmatprep.subr.bf16.mxu0 0
        %2479 = vmatpush1.bf16.msra.mxu0 %v2445
        %2480 = vmatprep.subr.bf16.mxu0 0
        %2481 = vmatpush1.bf16.msra.mxu0 %v2444
        %2482 = vmatprep.subr.bf16.mxu0 0
        %2483 = vmatpush1.bf16.msra.mxu0 %v2443
        %2484 = vmatprep.subr.bf16.mxu0 0
        %2485 = vmatpush1.bf16.msra.mxu0 %v2442
        %2486 = vmatprep.subr.bf16.mxu0 0
        %2487 = vmatpush2.bf16.msra.mxu0 0
        %2488 = vmatprep.subr.bf16.mxu0 0
        %2489 = vmatpush2.bf16.msra.mxu0 0
        %2490 = vmatprep.subr.bf16.mxu0 0
        %2491 = vmatpush2.bf16.msra.mxu0 0
        %2492 = vmatprep.subr.bf16.mxu0 0
        %2493 = vmatpush2.bf16.msra.mxu0 0
        %2494 = vmatprep.subr.bf16.mxu0 0
        %2495 = vmatpush2.bf16.msra.mxu0 %v2453
        %2496 = vmatprep.subr.bf16.mxu0 0
        %2497 = vmatpush2.bf16.msra.mxu0 %v2452
        %2498 = vmatprep.subr.bf16.mxu0 0
        %2499 = vmatpush2.bf16.msra.mxu0 %v2451
        %2500 = vmatprep.subr.bf16.mxu0 0
        %2501 = vmatpush2.bf16.msra.mxu0 %v2450
        %2502 = vmatprep.mubr.bf16.mxu0 %v2468
        %2503 = vmatmul.mubr.bf16.gmra.mxu0 %v2361
        %v2504 = vpop.f32.mrf.mxu0
        %v2505 = vadd.f32 %v2392, %v2504
        %v2506 = vpop.f32.mrf.mxu0
        %v2507 = vpop.f32.mrf.mxu0
        %v2508 = vpop.f32.mrf.mxu0
        %2509 = vdwg.mxu0
        %2510 = vst [vmem:[%s7] sm:$0xff] %v2505
      $region56: #{cnn_femnist_forward.5} parent=47 // pred_fallthru
        _
      // Predicated region
      $region57: #{cnn_femnist_forward.5} parent=47 // pred_check
        %p2511 = pneg %p188
      $region58: #{cnn_femnist_forward.5} parent=47 // pred_check_branch
        %2513 = sbr.rel (%p2511) target = $region60
      $region59: #{cnn_femnist_forward.5} parent=47 // pred_region
        _
      $region60: #{cnn_femnist_forward.5} parent=47 // pred_fallthru
        _
      // Predicated region
      $region61: #{cnn_femnist_forward.5} parent=47 // pred_check
        %p2514 = pneg %p188
      $region62: #{cnn_femnist_forward.5} parent=47 // pred_check_branch
        %2516 = sbr.rel (%p2514) target = $region64
      $region63: #{cnn_femnist_forward.5} parent=47 // pred_region
        _
      $region64: #{cnn_femnist_forward.5} parent=47 // pred_fallthru
        _
    $region48: #{cnn_femnist_forward.5} parent=5 // pred_fallthru
      _
    %p2517 = scmp.le.s32.totalorder 2, %s13
    // Predicated region
    $region65: #{cnn_femnist_forward.5} parent=5 // pred_check
      %p2518 = pneg %p2517
    $region66: #{cnn_femnist_forward.5} parent=5 // pred_check_branch
      %2520 = sbr.rel (%p2518) target = $region68
    $region67: #{cnn_femnist_forward.5} parent=5 // pred_region
      %s2521 = ssub.s32 %s13, 2
    $region68: #{cnn_femnist_forward.5} parent=5 // pred_fallthru
      _
  $region6: #{cnn_femnist_forward.5} parent=0 // loop_footer
    %s17 = sadd.s32 1, %s13
  $region7: #{cnn_femnist_forward.5} parent=0 // loop_footer_branch
    %12 = sbr.rel target = $region3
  $region8: #{cnn_femnist_forward.5} parent=0 // loop_exit
    _

</llo_original>
